<compile_context>
chip_gen: v5e
topology: v5e:2x2
jax: 0.10.0
libtpu: 0.0.40
codegen_flags: <defaults>
</compile_context>

<pallas_src>
import jax
import jax.numpy as jnp
from jax.experimental import pallas as pl
from jax.experimental.pallas import tpu as pltpu

CHANNELS = (8, 16, 32)      # true output channels of the synthetic extractor
CIN = 3

_VMEM_LIMIT = 32 * 1024 * 1024   # modest; working set is a few MB (v7x has 64 MiB)


def _ceil8(c):
    return (c + 7) // 8 * 8


# ----------------------------- Pallas kernel --------------------------------

def _conv3x3_relu_gram_kernel(x_ref, w_ref, b_ref, feat_ref, gram_ref):
    # x_ref:    (1, h+2, w+2, cin)   bf16 spatially pre-padded input, one image
    # w_ref:    (9, cin, cout)       bf16 taps, row t = kh*3 + kw    (resident)
    # b_ref:    (1, cout)            f32 bias                        (resident)
    # feat_ref: (1, h, w, cout)      bf16 relu(conv) feature map (maxpool path)
    # gram_ref: (1, cout, cout)      f32 un-normalized gram  F^T F
    _, h, w, cout = feat_ref.shape
    cin = x_ref.shape[-1]

    acc = None
    for kw in range(3):
        # One shifted sub-window per kw (3 total, not 9); the kh slice below is
        # on the free leading axis of the loaded value.
        xs = x_ref[0, :, kw:kw + w, :]                       # (h+2, w, cin) bf16
        for kh in range(3):
            patch = xs[kh:kh + h].reshape(h * w, cin)        # free: w % 8 == 0
            p = jnp.dot(patch, w_ref[kh * 3 + kw],
                        preferred_element_type=jnp.float32)
            acc = p if acc is None else acc + p              # value-carried f32 acc

    act = jnp.maximum(acc + b_ref[...], 0.0)                 # (h*w, cout) f32
    feat_ref[0] = act.reshape(h, w, cout).astype(jnp.bfloat16)

    # Fused gram: contract over the HW axis while activations are still in VMEM.
    dn = (((0,), (0,)), ((), ()))
    gram_ref[0] = jax.lax.dot_general(act, act, dn,
                                      preferred_element_type=jnp.float32)


# ------------------------------ JAX wrappers ---------------------------------

def conv_stage(x_padded, w9, bias):
    """3x3 conv (stride 1, spatially pre-padded) + ReLU + fused per-image gram."""
    b2, hp, wp, cin = x_padded.shape
    h, w = hp - 2, wp - 2
    cout = w9.shape[-1]
    return pl.pallas_call(
        _conv3x3_relu_gram_kernel,
        out_shape=(jax.ShapeDtypeStruct((b2, h, w, cout), jnp.bfloat16),
                   jax.ShapeDtypeStruct((b2, cout, cout), jnp.float32)),
        grid=(b2,),
        in_specs=[
            pl.BlockSpec((1, hp, wp, cin), lambda b: (b, 0, 0, 0)),
            pl.BlockSpec((9, cin, cout), lambda b: (0, 0, 0)),   # resident weights
            pl.BlockSpec((1, cout), lambda b: (0, 0)),           # resident bias
        ],
        out_specs=(
            pl.BlockSpec((1, h, w, cout), lambda b: (b, 0, 0, 0)),
            pl.BlockSpec((1, cout, cout), lambda b: (b, 0, 0)),
        ),
        compiler_params=pltpu.CompilerParams(
            dimension_semantics=("parallel",),
            vmem_limit_bytes=_VMEM_LIMIT),
    )(x_padded, w9, bias)


def maxpool2x2(x_nhwc):
    n, h, w, c = x_nhwc.shape
    return jnp.max(x_nhwc.reshape(n, h // 2, 2, w // 2, 2, c), axis=(2, 4))


# -------------------- synthetic VGG-style feature extractor ------------------

def init_extractor_params(key, cin=CIN, channels=CHANNELS):
    ws, bs = [], []
    c_prev = cin
    keys = jax.random.split(key, 2 * len(channels))
    for i, cout in enumerate(channels):
        kw_, kb_ = keys[2 * i], keys[2 * i + 1]
        cin_p = _ceil8(c_prev)
        w = jax.random.normal(kw_, (3, 3, c_prev, cout), jnp.float32)
        w = w * (0.2 / jnp.sqrt(9.0 * c_prev))
        b = jax.random.normal(kb_, (cout,), jnp.float32) * 0.01
        # zero-pad only the K (input-channel) dim to a multiple of 8; padded
        # input channels are zero so they contribute exactly nothing.
        w_p = jnp.zeros((3, 3, cin_p, cout), jnp.float32).at[:, :, :c_prev, :].set(w)
        ws.append(w_p.reshape(9, cin_p, cout).astype(jnp.bfloat16))
        bs.append(b.reshape(1, cout))
        c_prev = cout
    return {"w": ws, "b": bs}


def style_feature_loss(x_nchw, y_nchw, params):
    n = x_nchw.shape[0]
    # fuse x and y into one 2N batch for the extractor
    z = jnp.concatenate([x_nchw, y_nchw], axis=0)
    z = jnp.transpose(z, (0, 2, 3, 1))                               # NCHW -> NHWC
    cin_p = _ceil8(z.shape[-1])
    z = jnp.pad(z, ((0, 0), (0, 0), (0, 0), (0, cin_p - z.shape[-1])))
    cur = z.astype(jnp.bfloat16)                                     # bf16 in HBM

    loss = jnp.float32(0.0)
    num_stages = len(params["w"])
    for i in range(num_stages):
        cur_p = jnp.pad(cur, ((0, 0), (1, 1), (1, 1), (0, 0)))       # 1px spatial pad
        feat, gram = conv_stage(cur_p, params["w"][i], params["b"][i])
        _, h, w, c = feat.shape                                      # true c, h, w
        g = gram / jnp.float32(c * h * w)                            # gram normalization
        d = g[:n] - g[n:]
        loss = loss + jnp.mean(d * d)                                # MSE over (n, c, c)
        if i < num_stages - 1:
            cur = maxpool2x2(feat)                                   # bf16, true width
    return loss


# --------------------------------- main ---------------------------------------

if __name__ == "__main__":
    key = jax.random.PRNGKey(0)
    kx, ky, kp = jax.random.split(key, 3)

    # small NCHW images, VGG-style 3 input channels (32x32 so every stage's
    # spatial width is a multiple of 8 -> clean sublane-aligned reshapes)
    x = jax.random.normal(kx, (2, 3, 32, 32), jnp.float32)
    y = jax.random.normal(ky, (2, 3, 32, 32), jnp.float32)
    params = init_extractor_params(kp)

    loss_fn = jax.jit(style_feature_loss)
    loss = jax.block_until_ready(loss_fn(x, y, params))

    assert jnp.isfinite(loss), "loss is not finite"
    print("KERNEL_OK")
</pallas_src>

<mosaic_0001>
module attributes {stable_mosaic.version = 11 : i64} {
  func.func @_conv3x3_relu_gram_kernel(%arg0: i32, %arg1: memref<1x34x34x8xbf16, #tpu.memory_space<vmem>>, %arg2: memref<9x8x8xbf16, #tpu.memory_space<vmem>>, %arg3: memref<1x8xf32, #tpu.memory_space<vmem>>, %arg4: memref<1x32x32x8xbf16, #tpu.memory_space<vmem>>, %arg5: memref<1x8x8xf32, #tpu.memory_space<vmem>>) attributes {dimension_semantics = [#tpu.dimension_semantics<parallel>], iteration_bounds = array<i64: 4>, scalar_prefetch = 0 : i64, scratch_operands = 0 : i64, tpu.core_type = #tpu.core_type<tc>, window_params = [{transform_indices = @transform_0, window_bounds = array<i64: 1, 34, 34, 8>}, {pipeline_mode = #tpu.pipeline_mode<synchronous>, transform_indices = @transform_1, window_bounds = array<i64: 9, 8, 8>}, {pipeline_mode = #tpu.pipeline_mode<synchronous>, transform_indices = @transform_2, window_bounds = array<i64: 1, 8>}, {transform_indices = @transform_3, window_bounds = array<i64: 1, 32, 32, 8>}, {transform_indices = @transform_4, window_bounds = array<i64: 1, 8, 8>}]} {
    %c0 = arith.constant 0 : index
    %c0_0 = arith.constant 0 : index
    %c0_1 = arith.constant 0 : index
    %c0_2 = arith.constant 0 : index
    %0 = vector.load %arg1[%c0, %c0_0, %c0_1, %c0_2] : memref<1x34x34x8xbf16, #tpu.memory_space<vmem>>, vector<1x34x32x8xbf16>
    %1 = vector.shape_cast %0 : vector<1x34x32x8xbf16> to vector<34x32x8xbf16>
    %2 = vector.extract_strided_slice %1 {offsets = [0, 0, 0], sizes = [32, 32, 8], strides = [1, 1, 1]} : vector<34x32x8xbf16> to vector<32x32x8xbf16>
    %3 = vector.shape_cast %2 : vector<32x32x8xbf16> to vector<1024x8xbf16>
    %c0_3 = arith.constant 0 : index
    %c0_4 = arith.constant 0 : index
    %c0_5 = arith.constant 0 : index
    %4 = vector.load %arg2[%c0_3, %c0_4, %c0_5] : memref<9x8x8xbf16, #tpu.memory_space<vmem>>, vector<1x8x8xbf16>
    %5 = vector.shape_cast %4 : vector<1x8x8xbf16> to vector<8x8xbf16>
    %cst = arith.constant dense<0.000000e+00> : vector<1024x8xf32>
    %6 = tpu.matmul %3, %5, %cst {dimension_numbers = #tpu.dot_dimension_numbers<[1], [0], [0], [1], [0, 0, 1, 1], [], []>} : vector<1024x8xbf16>, vector<8x8xbf16>, vector<1024x8xf32> -> vector<1024x8xf32>
    %7 = vector.extract_strided_slice %1 {offsets = [1, 0, 0], sizes = [32, 32, 8], strides = [1, 1, 1]} : vector<34x32x8xbf16> to vector<32x32x8xbf16>
    %8 = vector.shape_cast %7 : vector<32x32x8xbf16> to vector<1024x8xbf16>
    %c3 = arith.constant 3 : index
    %c0_6 = arith.constant 0 : index
    %c0_7 = arith.constant 0 : index
    %9 = vector.load %arg2[%c3, %c0_6, %c0_7] : memref<9x8x8xbf16, #tpu.memory_space<vmem>>, vector<1x8x8xbf16>
    %10 = vector.shape_cast %9 : vector<1x8x8xbf16> to vector<8x8xbf16>
    %cst_8 = arith.constant dense<0.000000e+00> : vector<1024x8xf32>
    %11 = tpu.matmul %8, %10, %cst_8 {dimension_numbers = #tpu.dot_dimension_numbers<[1], [0], [0], [1], [0, 0, 1, 1], [], []>} : vector<1024x8xbf16>, vector<8x8xbf16>, vector<1024x8xf32> -> vector<1024x8xf32>
    %12 = arith.addf %6, %11 : vector<1024x8xf32>
    %13 = vector.extract_strided_slice %1 {offsets = [2, 0, 0], sizes = [32, 32, 8], strides = [1, 1, 1]} : vector<34x32x8xbf16> to vector<32x32x8xbf16>
    %14 = vector.shape_cast %13 : vector<32x32x8xbf16> to vector<1024x8xbf16>
    %c6 = arith.constant 6 : index
    %c0_9 = arith.constant 0 : index
    %c0_10 = arith.constant 0 : index
    %15 = vector.load %arg2[%c6, %c0_9, %c0_10] : memref<9x8x8xbf16, #tpu.memory_space<vmem>>, vector<1x8x8xbf16>
    %16 = vector.shape_cast %15 : vector<1x8x8xbf16> to vector<8x8xbf16>
    %cst_11 = arith.constant dense<0.000000e+00> : vector<1024x8xf32>
    %17 = tpu.matmul %14, %16, %cst_11 {dimension_numbers = #tpu.dot_dimension_numbers<[1], [0], [0], [1], [0, 0, 1, 1], [], []>} : vector<1024x8xbf16>, vector<8x8xbf16>, vector<1024x8xf32> -> vector<1024x8xf32>
    %18 = arith.addf %12, %17 : vector<1024x8xf32>
    %c0_12 = arith.constant 0 : index
    %c0_13 = arith.constant 0 : index
    %c1 = arith.constant 1 : index
    %c0_14 = arith.constant 0 : index
    %19 = vector.load %arg1[%c0_12, %c0_13, %c1, %c0_14] : memref<1x34x34x8xbf16, #tpu.memory_space<vmem>>, vector<1x34x32x8xbf16>
    %20 = vector.shape_cast %19 : vector<1x34x32x8xbf16> to vector<34x32x8xbf16>
    %21 = vector.extract_strided_slice %20 {offsets = [0, 0, 0], sizes = [32, 32, 8], strides = [1, 1, 1]} : vector<34x32x8xbf16> to vector<32x32x8xbf16>
    %22 = vector.shape_cast %21 : vector<32x32x8xbf16> to vector<1024x8xbf16>
    %c1_15 = arith.constant 1 : index
    %c0_16 = arith.constant 0 : index
    %c0_17 = arith.constant 0 : index
    %23 = vector.load %arg2[%c1_15, %c0_16, %c0_17] : memref<9x8x8xbf16, #tpu.memory_space<vmem>>, vector<1x8x8xbf16>
    %24 = vector.shape_cast %23 : vector<1x8x8xbf16> to vector<8x8xbf16>
    %cst_18 = arith.constant dense<0.000000e+00> : vector<1024x8xf32>
    %25 = tpu.matmul %22, %24, %cst_18 {dimension_numbers = #tpu.dot_dimension_numbers<[1], [0], [0], [1], [0, 0, 1, 1], [], []>} : vector<1024x8xbf16>, vector<8x8xbf16>, vector<1024x8xf32> -> vector<1024x8xf32>
    %26 = arith.addf %18, %25 : vector<1024x8xf32>
    %27 = vector.extract_strided_slice %20 {offsets = [1, 0, 0], sizes = [32, 32, 8], strides = [1, 1, 1]} : vector<34x32x8xbf16> to vector<32x32x8xbf16>
    %28 = vector.shape_cast %27 : vector<32x32x8xbf16> to vector<1024x8xbf16>
    %c4 = arith.constant 4 : index
    %c0_19 = arith.constant 0 : index
    %c0_20 = arith.constant 0 : index
    %29 = vector.load %arg2[%c4, %c0_19, %c0_20] : memref<9x8x8xbf16, #tpu.memory_space<vmem>>, vector<1x8x8xbf16>
    %30 = vector.shape_cast %29 : vector<1x8x8xbf16> to vector<8x8xbf16>
    %cst_21 = arith.constant dense<0.000000e+00> : vector<1024x8xf32>
    %31 = tpu.matmul %28, %30, %cst_21 {dimension_numbers = #tpu.dot_dimension_numbers<[1], [0], [0], [1], [0, 0, 1, 1], [], []>} : vector<1024x8xbf16>, vector<8x8xbf16>, vector<1024x8xf32> -> vector<1024x8xf32>
    %32 = arith.addf %26, %31 : vector<1024x8xf32>
    %33 = vector.extract_strided_slice %20 {offsets = [2, 0, 0], sizes = [32, 32, 8], strides = [1, 1, 1]} : vector<34x32x8xbf16> to vector<32x32x8xbf16>
    %34 = vector.shape_cast %33 : vector<32x32x8xbf16> to vector<1024x8xbf16>
    %c7 = arith.constant 7 : index
    %c0_22 = arith.constant 0 : index
    %c0_23 = arith.constant 0 : index
    %35 = vector.load %arg2[%c7, %c0_22, %c0_23] : memref<9x8x8xbf16, #tpu.memory_space<vmem>>, vector<1x8x8xbf16>
    %36 = vector.shape_cast %35 : vector<1x8x8xbf16> to vector<8x8xbf16>
    %cst_24 = arith.constant dense<0.000000e+00> : vector<1024x8xf32>
    %37 = tpu.matmul %34, %36, %cst_24 {dimension_numbers = #tpu.dot_dimension_numbers<[1], [0], [0], [1], [0, 0, 1, 1], [], []>} : vector<1024x8xbf16>, vector<8x8xbf16>, vector<1024x8xf32> -> vector<1024x8xf32>
    %38 = arith.addf %32, %37 : vector<1024x8xf32>
    %c0_25 = arith.constant 0 : index
    %c0_26 = arith.constant 0 : index
    %c2 = arith.constant 2 : index
    %c0_27 = arith.constant 0 : index
    %39 = vector.load %arg1[%c0_25, %c0_26, %c2, %c0_27] : memref<1x34x34x8xbf16, #tpu.memory_space<vmem>>, vector<1x34x32x8xbf16>
    %40 = vector.shape_cast %39 : vector<1x34x32x8xbf16> to vector<34x32x8xbf16>
    %41 = vector.extract_strided_slice %40 {offsets = [0, 0, 0], sizes = [32, 32, 8], strides = [1, 1, 1]} : vector<34x32x8xbf16> to vector<32x32x8xbf16>
    %42 = vector.shape_cast %41 : vector<32x32x8xbf16> to vector<1024x8xbf16>
    %c2_28 = arith.constant 2 : index
    %c0_29 = arith.constant 0 : index
    %c0_30 = arith.constant 0 : index
    %43 = vector.load %arg2[%c2_28, %c0_29, %c0_30] : memref<9x8x8xbf16, #tpu.memory_space<vmem>>, vector<1x8x8xbf16>
    %44 = vector.shape_cast %43 : vector<1x8x8xbf16> to vector<8x8xbf16>
    %cst_31 = arith.constant dense<0.000000e+00> : vector<1024x8xf32>
    %45 = tpu.matmul %42, %44, %cst_31 {dimension_numbers = #tpu.dot_dimension_numbers<[1], [0], [0], [1], [0, 0, 1, 1], [], []>} : vector<1024x8xbf16>, vector<8x8xbf16>, vector<1024x8xf32> -> vector<1024x8xf32>
    %46 = arith.addf %38, %45 : vector<1024x8xf32>
    %47 = vector.extract_strided_slice %40 {offsets = [1, 0, 0], sizes = [32, 32, 8], strides = [1, 1, 1]} : vector<34x32x8xbf16> to vector<32x32x8xbf16>
    %48 = vector.shape_cast %47 : vector<32x32x8xbf16> to vector<1024x8xbf16>
    %c5 = arith.constant 5 : index
    %c0_32 = arith.constant 0 : index
    %c0_33 = arith.constant 0 : index
    %49 = vector.load %arg2[%c5, %c0_32, %c0_33] : memref<9x8x8xbf16, #tpu.memory_space<vmem>>, vector<1x8x8xbf16>
    %50 = vector.shape_cast %49 : vector<1x8x8xbf16> to vector<8x8xbf16>
    %cst_34 = arith.constant dense<0.000000e+00> : vector<1024x8xf32>
    %51 = tpu.matmul %48, %50, %cst_34 {dimension_numbers = #tpu.dot_dimension_numbers<[1], [0], [0], [1], [0, 0, 1, 1], [], []>} : vector<1024x8xbf16>, vector<8x8xbf16>, vector<1024x8xf32> -> vector<1024x8xf32>
    %52 = arith.addf %46, %51 : vector<1024x8xf32>
    %53 = vector.extract_strided_slice %40 {offsets = [2, 0, 0], sizes = [32, 32, 8], strides = [1, 1, 1]} : vector<34x32x8xbf16> to vector<32x32x8xbf16>
    %54 = vector.shape_cast %53 : vector<32x32x8xbf16> to vector<1024x8xbf16>
    %c8 = arith.constant 8 : index
    %c0_35 = arith.constant 0 : index
    %c0_36 = arith.constant 0 : index
    %55 = vector.load %arg2[%c8, %c0_35, %c0_36] : memref<9x8x8xbf16, #tpu.memory_space<vmem>>, vector<1x8x8xbf16>
    %56 = vector.shape_cast %55 : vector<1x8x8xbf16> to vector<8x8xbf16>
    %cst_37 = arith.constant dense<0.000000e+00> : vector<1024x8xf32>
    %57 = tpu.matmul %54, %56, %cst_37 {dimension_numbers = #tpu.dot_dimension_numbers<[1], [0], [0], [1], [0, 0, 1, 1], [], []>} : vector<1024x8xbf16>, vector<8x8xbf16>, vector<1024x8xf32> -> vector<1024x8xf32>
    %58 = arith.addf %52, %57 : vector<1024x8xf32>
    %c0_38 = arith.constant 0 : index
    %c0_39 = arith.constant 0 : index
    %59 = vector.load %arg3[%c0_38, %c0_39] : memref<1x8xf32, #tpu.memory_space<vmem>>, vector<1x8xf32>
    %60 = vector.broadcast %59 : vector<1x8xf32> to vector<1024x8xf32>
    %61 = arith.addf %58, %60 : vector<1024x8xf32>
    %cst_40 = arith.constant 0.000000e+00 : f32
    %62 = vector.broadcast %cst_40 : f32 to vector<1024x8xf32>
    %63 = arith.maximumf %61, %62 : vector<1024x8xf32>
    %64 = vector.shape_cast %63 : vector<1024x8xf32> to vector<32x32x8xf32>
    %65 = arith.truncf %64 : vector<32x32x8xf32> to vector<32x32x8xbf16>
    %c0_41 = arith.constant 0 : index
    %c0_42 = arith.constant 0 : index
    %c0_43 = arith.constant 0 : index
    %c0_44 = arith.constant 0 : index
    %66 = vector.load %arg4[%c0_41, %c0_42, %c0_43, %c0_44] : memref<1x32x32x8xbf16, #tpu.memory_space<vmem>>, vector<1x32x32x8xbf16>
    %67 = vector.shape_cast %66 : vector<1x32x32x8xbf16> to vector<32x32x8xbf16>
    %68 = vector.shape_cast %65 : vector<32x32x8xbf16> to vector<1x32x32x8xbf16>
    tpu.vector_store %arg4[%c0_41, %c0_42, %c0_43, %c0_44], %68 {strides = array<i32>} : memref<1x32x32x8xbf16, #tpu.memory_space<vmem>>, vector<1x32x32x8xbf16>,
    %cst_45 = arith.constant dense<0.000000e+00> : vector<8x8xf32>
    %69 = tpu.matmul %63, %63, %cst_45 {dimension_numbers = #tpu.dot_dimension_numbers<[0], [0], [1], [1], [0, 1, 1, 1], [], []>} : vector<1024x8xf32>, vector<1024x8xf32>, vector<8x8xf32> -> vector<8x8xf32>
    %c0_46 = arith.constant 0 : index
    %c0_47 = arith.constant 0 : index
    %c0_48 = arith.constant 0 : index
    %70 = vector.load %arg5[%c0_46, %c0_47, %c0_48] : memref<1x8x8xf32, #tpu.memory_space<vmem>>, vector<1x8x8xf32>
    %71 = vector.shape_cast %70 : vector<1x8x8xf32> to vector<8x8xf32>
    %72 = vector.shape_cast %69 : vector<8x8xf32> to vector<1x8x8xf32>
    tpu.vector_store %arg5[%c0_46, %c0_47, %c0_48], %72 {strides = array<i32>} : memref<1x8x8xf32, #tpu.memory_space<vmem>>, vector<1x8x8xf32>,
    return
  }
  func.func @transform_0(%arg0: i32) -> (i32, i32, i32, i32) {
    %c0_i32 = arith.constant 0 : i32
    %c0_i32_0 = arith.constant 0 : i32
    %c0_i32_1 = arith.constant 0 : i32
    %c0_i32_2 = arith.constant 0 : i32
    return %arg0, %c0_i32, %c0_i32_0, %c0_i32_1 : i32, i32, i32, i32
  }
  func.func @transform_1(%arg0: i32) -> (i32, i32, i32) {
    %c0_i32 = arith.constant 0 : i32
    %c0_i32_0 = arith.constant 0 : i32
    %c0_i32_1 = arith.constant 0 : i32
    %c0_i32_2 = arith.constant 0 : i32
    return %c0_i32, %c0_i32_0, %c0_i32_1 : i32, i32, i32
  }
  func.func @transform_2(%arg0: i32) -> (i32, i32) {
    %c0_i32 = arith.constant 0 : i32
    %c0_i32_0 = arith.constant 0 : i32
    %c0_i32_1 = arith.constant 0 : i32
    return %c0_i32, %c0_i32_0 : i32, i32
  }
  func.func @transform_3(%arg0: i32) -> (i32, i32, i32, i32) {
    %c0_i32 = arith.constant 0 : i32
    %c0_i32_0 = arith.constant 0 : i32
    %c0_i32_1 = arith.constant 0 : i32
    %c0_i32_2 = arith.constant 0 : i32
    return %arg0, %c0_i32, %c0_i32_0, %c0_i32_1 : i32, i32, i32, i32
  }
  func.func @transform_4(%arg0: i32) -> (i32, i32, i32) {
    %c0_i32 = arith.constant 0 : i32
    %c0_i32_0 = arith.constant 0 : i32
    %c0_i32_1 = arith.constant 0 : i32
    return %arg0, %c0_i32, %c0_i32_0 : i32, i32, i32
  }
}

module attributes {stable_mosaic.version = 11 : i64} {
  func.func @_conv3x3_relu_gram_kernel(%arg0: i32, %arg1: memref<1x18x18x8xbf16, #tpu.memory_space<vmem>>, %arg2: memref<9x8x16xbf16, #tpu.memory_space<vmem>>, %arg3: memref<1x16xf32, #tpu.memory_space<vmem>>, %arg4: memref<1x16x16x16xbf16, #tpu.memory_space<vmem>>, %arg5: memref<1x16x16xf32, #tpu.memory_space<vmem>>) attributes {dimension_semantics = [#tpu.dimension_semantics<parallel>], iteration_bounds = array<i64: 4>, scalar_prefetch = 0 : i64, scratch_operands = 0 : i64, tpu.core_type = #tpu.core_type<tc>, window_params = [{transform_indices = @transform_0, window_bounds = array<i64: 1, 18, 18, 8>}, {pipeline_mode = #tpu.pipeline_mode<synchronous>, transform_indices = @transform_1, window_bounds = array<i64: 9, 8, 16>}, {pipeline_mode = #tpu.pipeline_mode<synchronous>, transform_indices = @transform_2, window_bounds = array<i64: 1, 16>}, {transform_indices = @transform_3, window_bounds = array<i64: 1, 16, 16, 16>}, {transform_indices = @transform_4, window_bounds = array<i64: 1, 16, 16>}]} {
    %c0 = arith.constant 0 : index
    %c0_0 = arith.constant 0 : index
    %c0_1 = arith.constant 0 : index
    %c0_2 = arith.constant 0 : index
    %0 = vector.load %arg1[%c0, %c0_0, %c0_1, %c0_2] : memref<1x18x18x8xbf16, #tpu.memory_space<vmem>>, vector<1x18x16x8xbf16>
    %1 = vector.shape_cast %0 : vector<1x18x16x8xbf16> to vector<18x16x8xbf16>
    %2 = vector.extract_strided_slice %1 {offsets = [0, 0, 0], sizes = [16, 16, 8], strides = [1, 1, 1]} : vector<18x16x8xbf16> to vector<16x16x8xbf16>
    %3 = vector.shape_cast %2 : vector<16x16x8xbf16> to vector<256x8xbf16>
    %c0_3 = arith.constant 0 : index
    %c0_4 = arith.constant 0 : index
    %c0_5 = arith.constant 0 : index
    %4 = vector.load %arg2[%c0_3, %c0_4, %c0_5] : memref<9x8x16xbf16, #tpu.memory_space<vmem>>, vector<1x8x16xbf16>
    %5 = vector.shape_cast %4 : vector<1x8x16xbf16> to vector<8x16xbf16>
    %cst = arith.constant dense<0.000000e+00> : vector<256x16xf32>
    %6 = tpu.matmul %3, %5, %cst {dimension_numbers = #tpu.dot_dimension_numbers<[1], [0], [0], [1], [0, 0, 1, 1], [], []>} : vector<256x8xbf16>, vector<8x16xbf16>, vector<256x16xf32> -> vector<256x16xf32>
    %7 = vector.extract_strided_slice %1 {offsets = [1, 0, 0], sizes = [16, 16, 8], strides = [1, 1, 1]} : vector<18x16x8xbf16> to vector<16x16x8xbf16>
    %8 = vector.shape_cast %7 : vector<16x16x8xbf16> to vector<256x8xbf16>
    %c3 = arith.constant 3 : index
    %c0_6 = arith.constant 0 : index
    %c0_7 = arith.constant 0 : index
    %9 = vector.load %arg2[%c3, %c0_6, %c0_7] : memref<9x8x16xbf16, #tpu.memory_space<vmem>>, vector<1x8x16xbf16>
    %10 = vector.shape_cast %9 : vector<1x8x16xbf16> to vector<8x16xbf16>
    %cst_8 = arith.constant dense<0.000000e+00> : vector<256x16xf32>
    %11 = tpu.matmul %8, %10, %cst_8 {dimension_numbers = #tpu.dot_dimension_numbers<[1], [0], [0], [1], [0, 0, 1, 1], [], []>} : vector<256x8xbf16>, vector<8x16xbf16>, vector<256x16xf32> -> vector<256x16xf32>
    %12 = arith.addf %6, %11 : vector<256x16xf32>
    %13 = vector.extract_strided_slice %1 {offsets = [2, 0, 0], sizes = [16, 16, 8], strides = [1, 1, 1]} : vector<18x16x8xbf16> to vector<16x16x8xbf16>
    %14 = vector.shape_cast %13 : vector<16x16x8xbf16> to vector<256x8xbf16>
    %c6 = arith.constant 6 : index
    %c0_9 = arith.constant 0 : index
    %c0_10 = arith.constant 0 : index
    %15 = vector.load %arg2[%c6, %c0_9, %c0_10] : memref<9x8x16xbf16, #tpu.memory_space<vmem>>, vector<1x8x16xbf16>
    %16 = vector.shape_cast %15 : vector<1x8x16xbf16> to vector<8x16xbf16>
    %cst_11 = arith.constant dense<0.000000e+00> : vector<256x16xf32>
    %17 = tpu.matmul %14, %16, %cst_11 {dimension_numbers = #tpu.dot_dimension_numbers<[1], [0], [0], [1], [0, 0, 1, 1], [], []>} : vector<256x8xbf16>, vector<8x16xbf16>, vector<256x16xf32> -> vector<256x16xf32>
    %18 = arith.addf %12, %17 : vector<256x16xf32>
    %c0_12 = arith.constant 0 : index
    %c0_13 = arith.constant 0 : index
    %c1 = arith.constant 1 : index
    %c0_14 = arith.constant 0 : index
    %19 = vector.load %arg1[%c0_12, %c0_13, %c1, %c0_14] : memref<1x18x18x8xbf16, #tpu.memory_space<vmem>>, vector<1x18x16x8xbf16>
    %20 = vector.shape_cast %19 : vector<1x18x16x8xbf16> to vector<18x16x8xbf16>
    %21 = vector.extract_strided_slice %20 {offsets = [0, 0, 0], sizes = [16, 16, 8], strides = [1, 1, 1]} : vector<18x16x8xbf16> to vector<16x16x8xbf16>
    %22 = vector.shape_cast %21 : vector<16x16x8xbf16> to vector<256x8xbf16>
    %c1_15 = arith.constant 1 : index
    %c0_16 = arith.constant 0 : index
    %c0_17 = arith.constant 0 : index
    %23 = vector.load %arg2[%c1_15, %c0_16, %c0_17] : memref<9x8x16xbf16, #tpu.memory_space<vmem>>, vector<1x8x16xbf16>
    %24 = vector.shape_cast %23 : vector<1x8x16xbf16> to vector<8x16xbf16>
    %cst_18 = arith.constant dense<0.000000e+00> : vector<256x16xf32>
    %25 = tpu.matmul %22, %24, %cst_18 {dimension_numbers = #tpu.dot_dimension_numbers<[1], [0], [0], [1], [0, 0, 1, 1], [], []>} : vector<256x8xbf16>, vector<8x16xbf16>, vector<256x16xf32> -> vector<256x16xf32>
    %26 = arith.addf %18, %25 : vector<256x16xf32>
    %27 = vector.extract_strided_slice %20 {offsets = [1, 0, 0], sizes = [16, 16, 8], strides = [1, 1, 1]} : vector<18x16x8xbf16> to vector<16x16x8xbf16>
    %28 = vector.shape_cast %27 : vector<16x16x8xbf16> to vector<256x8xbf16>
    %c4 = arith.constant 4 : index
    %c0_19 = arith.constant 0 : index
    %c0_20 = arith.constant 0 : index
    %29 = vector.load %arg2[%c4, %c0_19, %c0_20] : memref<9x8x16xbf16, #tpu.memory_space<vmem>>, vector<1x8x16xbf16>
    %30 = vector.shape_cast %29 : vector<1x8x16xbf16> to vector<8x16xbf16>
    %cst_21 = arith.constant dense<0.000000e+00> : vector<256x16xf32>
    %31 = tpu.matmul %28, %30, %cst_21 {dimension_numbers = #tpu.dot_dimension_numbers<[1], [0], [0], [1], [0, 0, 1, 1], [], []>} : vector<256x8xbf16>, vector<8x16xbf16>, vector<256x16xf32> -> vector<256x16xf32>
    %32 = arith.addf %26, %31 : vector<256x16xf32>
    %33 = vector.extract_strided_slice %20 {offsets = [2, 0, 0], sizes = [16, 16, 8], strides = [1, 1, 1]} : vector<18x16x8xbf16> to vector<16x16x8xbf16>
    %34 = vector.shape_cast %33 : vector<16x16x8xbf16> to vector<256x8xbf16>
    %c7 = arith.constant 7 : index
    %c0_22 = arith.constant 0 : index
    %c0_23 = arith.constant 0 : index
    %35 = vector.load %arg2[%c7, %c0_22, %c0_23] : memref<9x8x16xbf16, #tpu.memory_space<vmem>>, vector<1x8x16xbf16>
    %36 = vector.shape_cast %35 : vector<1x8x16xbf16> to vector<8x16xbf16>
    %cst_24 = arith.constant dense<0.000000e+00> : vector<256x16xf32>
    %37 = tpu.matmul %34, %36, %cst_24 {dimension_numbers = #tpu.dot_dimension_numbers<[1], [0], [0], [1], [0, 0, 1, 1], [], []>} : vector<256x8xbf16>, vector<8x16xbf16>, vector<256x16xf32> -> vector<256x16xf32>
    %38 = arith.addf %32, %37 : vector<256x16xf32>
    %c0_25 = arith.constant 0 : index
    %c0_26 = arith.constant 0 : index
    %c2 = arith.constant 2 : index
    %c0_27 = arith.constant 0 : index
    %39 = vector.load %arg1[%c0_25, %c0_26, %c2, %c0_27] : memref<1x18x18x8xbf16, #tpu.memory_space<vmem>>, vector<1x18x16x8xbf16>
    %40 = vector.shape_cast %39 : vector<1x18x16x8xbf16> to vector<18x16x8xbf16>
    %41 = vector.extract_strided_slice %40 {offsets = [0, 0, 0], sizes = [16, 16, 8], strides = [1, 1, 1]} : vector<18x16x8xbf16> to vector<16x16x8xbf16>
    %42 = vector.shape_cast %41 : vector<16x16x8xbf16> to vector<256x8xbf16>
    %c2_28 = arith.constant 2 : index
    %c0_29 = arith.constant 0 : index
    %c0_30 = arith.constant 0 : index
    %43 = vector.load %arg2[%c2_28, %c0_29, %c0_30] : memref<9x8x16xbf16, #tpu.memory_space<vmem>>, vector<1x8x16xbf16>
    %44 = vector.shape_cast %43 : vector<1x8x16xbf16> to vector<8x16xbf16>
    %cst_31 = arith.constant dense<0.000000e+00> : vector<256x16xf32>
    %45 = tpu.matmul %42, %44, %cst_31 {dimension_numbers = #tpu.dot_dimension_numbers<[1], [0], [0], [1], [0, 0, 1, 1], [], []>} : vector<256x8xbf16>, vector<8x16xbf16>, vector<256x16xf32> -> vector<256x16xf32>
    %46 = arith.addf %38, %45 : vector<256x16xf32>
    %47 = vector.extract_strided_slice %40 {offsets = [1, 0, 0], sizes = [16, 16, 8], strides = [1, 1, 1]} : vector<18x16x8xbf16> to vector<16x16x8xbf16>
    %48 = vector.shape_cast %47 : vector<16x16x8xbf16> to vector<256x8xbf16>
    %c5 = arith.constant 5 : index
    %c0_32 = arith.constant 0 : index
    %c0_33 = arith.constant 0 : index
    %49 = vector.load %arg2[%c5, %c0_32, %c0_33] : memref<9x8x16xbf16, #tpu.memory_space<vmem>>, vector<1x8x16xbf16>
    %50 = vector.shape_cast %49 : vector<1x8x16xbf16> to vector<8x16xbf16>
    %cst_34 = arith.constant dense<0.000000e+00> : vector<256x16xf32>
    %51 = tpu.matmul %48, %50, %cst_34 {dimension_numbers = #tpu.dot_dimension_numbers<[1], [0], [0], [1], [0, 0, 1, 1], [], []>} : vector<256x8xbf16>, vector<8x16xbf16>, vector<256x16xf32> -> vector<256x16xf32>
    %52 = arith.addf %46, %51 : vector<256x16xf32>
    %53 = vector.extract_strided_slice %40 {offsets = [2, 0, 0], sizes = [16, 16, 8], strides = [1, 1, 1]} : vector<18x16x8xbf16> to vector<16x16x8xbf16>
    %54 = vector.shape_cast %53 : vector<16x16x8xbf16> to vector<256x8xbf16>
    %c8 = arith.constant 8 : index
    %c0_35 = arith.constant 0 : index
    %c0_36 = arith.constant 0 : index
    %55 = vector.load %arg2[%c8, %c0_35, %c0_36] : memref<9x8x16xbf16, #tpu.memory_space<vmem>>, vector<1x8x16xbf16>
    %56 = vector.shape_cast %55 : vector<1x8x16xbf16> to vector<8x16xbf16>
    %cst_37 = arith.constant dense<0.000000e+00> : vector<256x16xf32>
    %57 = tpu.matmul %54, %56, %cst_37 {dimension_numbers = #tpu.dot_dimension_numbers<[1], [0], [0], [1], [0, 0, 1, 1], [], []>} : vector<256x8xbf16>, vector<8x16xbf16>, vector<256x16xf32> -> vector<256x16xf32>
    %58 = arith.addf %52, %57 : vector<256x16xf32>
    %c0_38 = arith.constant 0 : index
    %c0_39 = arith.constant 0 : index
    %59 = vector.load %arg3[%c0_38, %c0_39] : memref<1x16xf32, #tpu.memory_space<vmem>>, vector<1x16xf32>
    %60 = vector.broadcast %59 : vector<1x16xf32> to vector<256x16xf32>
    %61 = arith.addf %58, %60 : vector<256x16xf32>
    %cst_40 = arith.constant 0.000000e+00 : f32
    %62 = vector.broadcast %cst_40 : f32 to vector<256x16xf32>
    %63 = arith.maximumf %61, %62 : vector<256x16xf32>
    %64 = vector.shape_cast %63 : vector<256x16xf32> to vector<16x16x16xf32>
    %65 = arith.truncf %64 : vector<16x16x16xf32> to vector<16x16x16xbf16>
    %c0_41 = arith.constant 0 : index
    %c0_42 = arith.constant 0 : index
    %c0_43 = arith.constant 0 : index
    %c0_44 = arith.constant 0 : index
    %66 = vector.load %arg4[%c0_41, %c0_42, %c0_43, %c0_44] : memref<1x16x16x16xbf16, #tpu.memory_space<vmem>>, vector<1x16x16x16xbf16>
    %67 = vector.shape_cast %66 : vector<1x16x16x16xbf16> to vector<16x16x16xbf16>
    %68 = vector.shape_cast %65 : vector<16x16x16xbf16> to vector<1x16x16x16xbf16>
    tpu.vector_store %arg4[%c0_41, %c0_42, %c0_43, %c0_44], %68 {strides = array<i32>} : memref<1x16x16x16xbf16, #tpu.memory_space<vmem>>, vector<1x16x16x16xbf16>,
    %cst_45 = arith.constant dense<0.000000e+00> : vector<16x16xf32>
    %69 = tpu.matmul %63, %63, %cst_45 {dimension_numbers = #tpu.dot_dimension_numbers<[0], [0], [1], [1], [0, 1, 1, 1], [], []>} : vector<256x16xf32>, vector<256x16xf32>, vector<16x16xf32> -> vector<16x16xf32>
    %c0_46 = arith.constant 0 : index
    %c0_47 = arith.constant 0 : index
    %c0_48 = arith.constant 0 : index
    %70 = vector.load %arg5[%c0_46, %c0_47, %c0_48] : memref<1x16x16xf32, #tpu.memory_space<vmem>>, vector<1x16x16xf32>
    %71 = vector.shape_cast %70 : vector<1x16x16xf32> to vector<16x16xf32>
    %72 = vector.shape_cast %69 : vector<16x16xf32> to vector<1x16x16xf32>
    tpu.vector_store %arg5[%c0_46, %c0_47, %c0_48], %72 {strides = array<i32>} : memref<1x16x16xf32, #tpu.memory_space<vmem>>, vector<1x16x16xf32>,
    return
  }
  func.func @transform_0(%arg0: i32) -> (i32, i32, i32, i32) {
    %c0_i32 = arith.constant 0 : i32
    %c0_i32_0 = arith.constant 0 : i32
    %c0_i32_1 = arith.constant 0 : i32
    %c0_i32_2 = arith.constant 0 : i32
    return %arg0, %c0_i32, %c0_i32_0, %c0_i32_1 : i32, i32, i32, i32
  }
  func.func @transform_1(%arg0: i32) -> (i32, i32, i32) {
    %c0_i32 = arith.constant 0 : i32
    %c0_i32_0 = arith.constant 0 : i32
    %c0_i32_1 = arith.constant 0 : i32
    %c0_i32_2 = arith.constant 0 : i32
    return %c0_i32, %c0_i32_0, %c0_i32_1 : i32, i32, i32
  }
  func.func @transform_2(%arg0: i32) -> (i32, i32) {
    %c0_i32 = arith.constant 0 : i32
    %c0_i32_0 = arith.constant 0 : i32
    %c0_i32_1 = arith.constant 0 : i32
    return %c0_i32, %c0_i32_0 : i32, i32
  }
  func.func @transform_3(%arg0: i32) -> (i32, i32, i32, i32) {
    %c0_i32 = arith.constant 0 : i32
    %c0_i32_0 = arith.constant 0 : i32
    %c0_i32_1 = arith.constant 0 : i32
    %c0_i32_2 = arith.constant 0 : i32
    return %arg0, %c0_i32, %c0_i32_0, %c0_i32_1 : i32, i32, i32, i32
  }
  func.func @transform_4(%arg0: i32) -> (i32, i32, i32) {
    %c0_i32 = arith.constant 0 : i32
    %c0_i32_0 = arith.constant 0 : i32
    %c0_i32_1 = arith.constant 0 : i32
    return %arg0, %c0_i32, %c0_i32_0 : i32, i32, i32
  }
}

module attributes {stable_mosaic.version = 11 : i64} {
  func.func @_conv3x3_relu_gram_kernel(%arg0: i32, %arg1: memref<1x10x10x16xbf16, #tpu.memory_space<vmem>>, %arg2: memref<9x16x32xbf16, #tpu.memory_space<vmem>>, %arg3: memref<1x32xf32, #tpu.memory_space<vmem>>, %arg4: memref<1x8x8x32xbf16, #tpu.memory_space<vmem>>, %arg5: memref<1x32x32xf32, #tpu.memory_space<vmem>>) attributes {dimension_semantics = [#tpu.dimension_semantics<parallel>], iteration_bounds = array<i64: 4>, scalar_prefetch = 0 : i64, scratch_operands = 0 : i64, tpu.core_type = #tpu.core_type<tc>, window_params = [{transform_indices = @transform_0, window_bounds = array<i64: 1, 10, 10, 16>}, {pipeline_mode = #tpu.pipeline_mode<synchronous>, transform_indices = @transform_1, window_bounds = array<i64: 9, 16, 32>}, {pipeline_mode = #tpu.pipeline_mode<synchronous>, transform_indices = @transform_2, window_bounds = array<i64: 1, 32>}, {transform_indices = @transform_3, window_bounds = array<i64: 1, 8, 8, 32>}, {transform_indices = @transform_4, window_bounds = array<i64: 1, 32, 32>}]} {
    %c0 = arith.constant 0 : index
    %c0_0 = arith.constant 0 : index
    %c0_1 = arith.constant 0 : index
    %c0_2 = arith.constant 0 : index
    %0 = vector.load %arg1[%c0, %c0_0, %c0_1, %c0_2] : memref<1x10x10x16xbf16, #tpu.memory_space<vmem>>, vector<1x10x8x16xbf16>
    %1 = vector.shape_cast %0 : vector<1x10x8x16xbf16> to vector<10x8x16xbf16>
    %2 = vector.extract_strided_slice %1 {offsets = [0, 0, 0], sizes = [8, 8, 16], strides = [1, 1, 1]} : vector<10x8x16xbf16> to vector<8x8x16xbf16>
    %3 = vector.shape_cast %2 : vector<8x8x16xbf16> to vector<64x16xbf16>
    %c0_3 = arith.constant 0 : index
    %c0_4 = arith.constant 0 : index
    %c0_5 = arith.constant 0 : index
    %4 = vector.load %arg2[%c0_3, %c0_4, %c0_5] : memref<9x16x32xbf16, #tpu.memory_space<vmem>>, vector<1x16x32xbf16>
    %5 = vector.shape_cast %4 : vector<1x16x32xbf16> to vector<16x32xbf16>
    %cst = arith.constant dense<0.000000e+00> : vector<64x32xf32>
    %6 = tpu.matmul %3, %5, %cst {dimension_numbers = #tpu.dot_dimension_numbers<[1], [0], [0], [1], [0, 0, 1, 1], [], []>} : vector<64x16xbf16>, vector<16x32xbf16>, vector<64x32xf32> -> vector<64x32xf32>
    %7 = vector.extract_strided_slice %1 {offsets = [1, 0, 0], sizes = [8, 8, 16], strides = [1, 1, 1]} : vector<10x8x16xbf16> to vector<8x8x16xbf16>
    %8 = vector.shape_cast %7 : vector<8x8x16xbf16> to vector<64x16xbf16>
    %c3 = arith.constant 3 : index
    %c0_6 = arith.constant 0 : index
    %c0_7 = arith.constant 0 : index
    %9 = vector.load %arg2[%c3, %c0_6, %c0_7] : memref<9x16x32xbf16, #tpu.memory_space<vmem>>, vector<1x16x32xbf16>
    %10 = vector.shape_cast %9 : vector<1x16x32xbf16> to vector<16x32xbf16>
    %cst_8 = arith.constant dense<0.000000e+00> : vector<64x32xf32>
    %11 = tpu.matmul %8, %10, %cst_8 {dimension_numbers = #tpu.dot_dimension_numbers<[1], [0], [0], [1], [0, 0, 1, 1], [], []>} : vector<64x16xbf16>, vector<16x32xbf16>, vector<64x32xf32> -> vector<64x32xf32>
    %12 = arith.addf %6, %11 : vector<64x32xf32>
    %13 = vector.extract_strided_slice %1 {offsets = [2, 0, 0], sizes = [8, 8, 16], strides = [1, 1, 1]} : vector<10x8x16xbf16> to vector<8x8x16xbf16>
    %14 = vector.shape_cast %13 : vector<8x8x16xbf16> to vector<64x16xbf16>
    %c6 = arith.constant 6 : index
    %c0_9 = arith.constant 0 : index
    %c0_10 = arith.constant 0 : index
    %15 = vector.load %arg2[%c6, %c0_9, %c0_10] : memref<9x16x32xbf16, #tpu.memory_space<vmem>>, vector<1x16x32xbf16>
    %16 = vector.shape_cast %15 : vector<1x16x32xbf16> to vector<16x32xbf16>
    %cst_11 = arith.constant dense<0.000000e+00> : vector<64x32xf32>
    %17 = tpu.matmul %14, %16, %cst_11 {dimension_numbers = #tpu.dot_dimension_numbers<[1], [0], [0], [1], [0, 0, 1, 1], [], []>} : vector<64x16xbf16>, vector<16x32xbf16>, vector<64x32xf32> -> vector<64x32xf32>
    %18 = arith.addf %12, %17 : vector<64x32xf32>
    %c0_12 = arith.constant 0 : index
    %c0_13 = arith.constant 0 : index
    %c1 = arith.constant 1 : index
    %c0_14 = arith.constant 0 : index
    %19 = vector.load %arg1[%c0_12, %c0_13, %c1, %c0_14] : memref<1x10x10x16xbf16, #tpu.memory_space<vmem>>, vector<1x10x8x16xbf16>
    %20 = vector.shape_cast %19 : vector<1x10x8x16xbf16> to vector<10x8x16xbf16>
    %21 = vector.extract_strided_slice %20 {offsets = [0, 0, 0], sizes = [8, 8, 16], strides = [1, 1, 1]} : vector<10x8x16xbf16> to vector<8x8x16xbf16>
    %22 = vector.shape_cast %21 : vector<8x8x16xbf16> to vector<64x16xbf16>
    %c1_15 = arith.constant 1 : index
    %c0_16 = arith.constant 0 : index
    %c0_17 = arith.constant 0 : index
    %23 = vector.load %arg2[%c1_15, %c0_16, %c0_17] : memref<9x16x32xbf16, #tpu.memory_space<vmem>>, vector<1x16x32xbf16>
    %24 = vector.shape_cast %23 : vector<1x16x32xbf16> to vector<16x32xbf16>
    %cst_18 = arith.constant dense<0.000000e+00> : vector<64x32xf32>
    %25 = tpu.matmul %22, %24, %cst_18 {dimension_numbers = #tpu.dot_dimension_numbers<[1], [0], [0], [1], [0, 0, 1, 1], [], []>} : vector<64x16xbf16>, vector<16x32xbf16>, vector<64x32xf32> -> vector<64x32xf32>
    %26 = arith.addf %18, %25 : vector<64x32xf32>
    %27 = vector.extract_strided_slice %20 {offsets = [1, 0, 0], sizes = [8, 8, 16], strides = [1, 1, 1]} : vector<10x8x16xbf16> to vector<8x8x16xbf16>
    %28 = vector.shape_cast %27 : vector<8x8x16xbf16> to vector<64x16xbf16>
    %c4 = arith.constant 4 : index
    %c0_19 = arith.constant 0 : index
    %c0_20 = arith.constant 0 : index
    %29 = vector.load %arg2[%c4, %c0_19, %c0_20] : memref<9x16x32xbf16, #tpu.memory_space<vmem>>, vector<1x16x32xbf16>
    %30 = vector.shape_cast %29 : vector<1x16x32xbf16> to vector<16x32xbf16>
    %cst_21 = arith.constant dense<0.000000e+00> : vector<64x32xf32>
    %31 = tpu.matmul %28, %30, %cst_21 {dimension_numbers = #tpu.dot_dimension_numbers<[1], [0], [0], [1], [0, 0, 1, 1], [], []>} : vector<64x16xbf16>, vector<16x32xbf16>, vector<64x32xf32> -> vector<64x32xf32>
    %32 = arith.addf %26, %31 : vector<64x32xf32>
    %33 = vector.extract_strided_slice %20 {offsets = [2, 0, 0], sizes = [8, 8, 16], strides = [1, 1, 1]} : vector<10x8x16xbf16> to vector<8x8x16xbf16>
    %34 = vector.shape_cast %33 : vector<8x8x16xbf16> to vector<64x16xbf16>
    %c7 = arith.constant 7 : index
    %c0_22 = arith.constant 0 : index
    %c0_23 = arith.constant 0 : index
    %35 = vector.load %arg2[%c7, %c0_22, %c0_23] : memref<9x16x32xbf16, #tpu.memory_space<vmem>>, vector<1x16x32xbf16>
    %36 = vector.shape_cast %35 : vector<1x16x32xbf16> to vector<16x32xbf16>
    %cst_24 = arith.constant dense<0.000000e+00> : vector<64x32xf32>
    %37 = tpu.matmul %34, %36, %cst_24 {dimension_numbers = #tpu.dot_dimension_numbers<[1], [0], [0], [1], [0, 0, 1, 1], [], []>} : vector<64x16xbf16>, vector<16x32xbf16>, vector<64x32xf32> -> vector<64x32xf32>
    %38 = arith.addf %32, %37 : vector<64x32xf32>
    %c0_25 = arith.constant 0 : index
    %c0_26 = arith.constant 0 : index
    %c2 = arith.constant 2 : index
    %c0_27 = arith.constant 0 : index
    %39 = vector.load %arg1[%c0_25, %c0_26, %c2, %c0_27] : memref<1x10x10x16xbf16, #tpu.memory_space<vmem>>, vector<1x10x8x16xbf16>
    %40 = vector.shape_cast %39 : vector<1x10x8x16xbf16> to vector<10x8x16xbf16>
    %41 = vector.extract_strided_slice %40 {offsets = [0, 0, 0], sizes = [8, 8, 16], strides = [1, 1, 1]} : vector<10x8x16xbf16> to vector<8x8x16xbf16>
    %42 = vector.shape_cast %41 : vector<8x8x16xbf16> to vector<64x16xbf16>
    %c2_28 = arith.constant 2 : index
    %c0_29 = arith.constant 0 : index
    %c0_30 = arith.constant 0 : index
    %43 = vector.load %arg2[%c2_28, %c0_29, %c0_30] : memref<9x16x32xbf16, #tpu.memory_space<vmem>>, vector<1x16x32xbf16>
    %44 = vector.shape_cast %43 : vector<1x16x32xbf16> to vector<16x32xbf16>
    %cst_31 = arith.constant dense<0.000000e+00> : vector<64x32xf32>
    %45 = tpu.matmul %42, %44, %cst_31 {dimension_numbers = #tpu.dot_dimension_numbers<[1], [0], [0], [1], [0, 0, 1, 1], [], []>} : vector<64x16xbf16>, vector<16x32xbf16>, vector<64x32xf32> -> vector<64x32xf32>
    %46 = arith.addf %38, %45 : vector<64x32xf32>
    %47 = vector.extract_strided_slice %40 {offsets = [1, 0, 0], sizes = [8, 8, 16], strides = [1, 1, 1]} : vector<10x8x16xbf16> to vector<8x8x16xbf16>
    %48 = vector.shape_cast %47 : vector<8x8x16xbf16> to vector<64x16xbf16>
    %c5 = arith.constant 5 : index
    %c0_32 = arith.constant 0 : index
    %c0_33 = arith.constant 0 : index
    %49 = vector.load %arg2[%c5, %c0_32, %c0_33] : memref<9x16x32xbf16, #tpu.memory_space<vmem>>, vector<1x16x32xbf16>
    %50 = vector.shape_cast %49 : vector<1x16x32xbf16> to vector<16x32xbf16>
    %cst_34 = arith.constant dense<0.000000e+00> : vector<64x32xf32>
    %51 = tpu.matmul %48, %50, %cst_34 {dimension_numbers = #tpu.dot_dimension_numbers<[1], [0], [0], [1], [0, 0, 1, 1], [], []>} : vector<64x16xbf16>, vector<16x32xbf16>, vector<64x32xf32> -> vector<64x32xf32>
    %52 = arith.addf %46, %51 : vector<64x32xf32>
    %53 = vector.extract_strided_slice %40 {offsets = [2, 0, 0], sizes = [8, 8, 16], strides = [1, 1, 1]} : vector<10x8x16xbf16> to vector<8x8x16xbf16>
    %54 = vector.shape_cast %53 : vector<8x8x16xbf16> to vector<64x16xbf16>
    %c8 = arith.constant 8 : index
    %c0_35 = arith.constant 0 : index
    %c0_36 = arith.constant 0 : index
    %55 = vector.load %arg2[%c8, %c0_35, %c0_36] : memref<9x16x32xbf16, #tpu.memory_space<vmem>>, vector<1x16x32xbf16>
    %56 = vector.shape_cast %55 : vector<1x16x32xbf16> to vector<16x32xbf16>
    %cst_37 = arith.constant dense<0.000000e+00> : vector<64x32xf32>
    %57 = tpu.matmul %54, %56, %cst_37 {dimension_numbers = #tpu.dot_dimension_numbers<[1], [0], [0], [1], [0, 0, 1, 1], [], []>} : vector<64x16xbf16>, vector<16x32xbf16>, vector<64x32xf32> -> vector<64x32xf32>
    %58 = arith.addf %52, %57 : vector<64x32xf32>
    %c0_38 = arith.constant 0 : index
    %c0_39 = arith.constant 0 : index
    %59 = vector.load %arg3[%c0_38, %c0_39] : memref<1x32xf32, #tpu.memory_space<vmem>>, vector<1x32xf32>
    %60 = vector.broadcast %59 : vector<1x32xf32> to vector<64x32xf32>
    %61 = arith.addf %58, %60 : vector<64x32xf32>
    %cst_40 = arith.constant 0.000000e+00 : f32
    %62 = vector.broadcast %cst_40 : f32 to vector<64x32xf32>
    %63 = arith.maximumf %61, %62 : vector<64x32xf32>
    %64 = vector.shape_cast %63 : vector<64x32xf32> to vector<8x8x32xf32>
    %65 = arith.truncf %64 : vector<8x8x32xf32> to vector<8x8x32xbf16>
    %c0_41 = arith.constant 0 : index
    %c0_42 = arith.constant 0 : index
    %c0_43 = arith.constant 0 : index
    %c0_44 = arith.constant 0 : index
    %66 = vector.load %arg4[%c0_41, %c0_42, %c0_43, %c0_44] : memref<1x8x8x32xbf16, #tpu.memory_space<vmem>>, vector<1x8x8x32xbf16>
    %67 = vector.shape_cast %66 : vector<1x8x8x32xbf16> to vector<8x8x32xbf16>
    %68 = vector.shape_cast %65 : vector<8x8x32xbf16> to vector<1x8x8x32xbf16>
    tpu.vector_store %arg4[%c0_41, %c0_42, %c0_43, %c0_44], %68 {strides = array<i32>} : memref<1x8x8x32xbf16, #tpu.memory_space<vmem>>, vector<1x8x8x32xbf16>,
    %cst_45 = arith.constant dense<0.000000e+00> : vector<32x32xf32>
    %69 = tpu.matmul %63, %63, %cst_45 {dimension_numbers = #tpu.dot_dimension_numbers<[0], [0], [1], [1], [0, 1, 1, 1], [], []>} : vector<64x32xf32>, vector<64x32xf32>, vector<32x32xf32> -> vector<32x32xf32>
    %c0_46 = arith.constant 0 : index
    %c0_47 = arith.constant 0 : index
    %c0_48 = arith.constant 0 : index
    %70 = vector.load %arg5[%c0_46, %c0_47, %c0_48] : memref<1x32x32xf32, #tpu.memory_space<vmem>>, vector<1x32x32xf32>
    %71 = vector.shape_cast %70 : vector<1x32x32xf32> to vector<32x32xf32>
    %72 = vector.shape_cast %69 : vector<32x32xf32> to vector<1x32x32xf32>
    tpu.vector_store %arg5[%c0_46, %c0_47, %c0_48], %72 {strides = array<i32>} : memref<1x32x32xf32, #tpu.memory_space<vmem>>, vector<1x32x32xf32>,
    return
  }
  func.func @transform_0(%arg0: i32) -> (i32, i32, i32, i32) {
    %c0_i32 = arith.constant 0 : i32
    %c0_i32_0 = arith.constant 0 : i32
    %c0_i32_1 = arith.constant 0 : i32
    %c0_i32_2 = arith.constant 0 : i32
    return %arg0, %c0_i32, %c0_i32_0, %c0_i32_1 : i32, i32, i32, i32
  }
  func.func @transform_1(%arg0: i32) -> (i32, i32, i32) {
    %c0_i32 = arith.constant 0 : i32
    %c0_i32_0 = arith.constant 0 : i32
    %c0_i32_1 = arith.constant 0 : i32
    %c0_i32_2 = arith.constant 0 : i32
    return %c0_i32, %c0_i32_0, %c0_i32_1 : i32, i32, i32
  }
  func.func @transform_2(%arg0: i32) -> (i32, i32) {
    %c0_i32 = arith.constant 0 : i32
    %c0_i32_0 = arith.constant 0 : i32
    %c0_i32_1 = arith.constant 0 : i32
    return %c0_i32, %c0_i32_0 : i32, i32
  }
  func.func @transform_3(%arg0: i32) -> (i32, i32, i32, i32) {
    %c0_i32 = arith.constant 0 : i32
    %c0_i32_0 = arith.constant 0 : i32
    %c0_i32_1 = arith.constant 0 : i32
    %c0_i32_2 = arith.constant 0 : i32
    return %arg0, %c0_i32, %c0_i32_0, %c0_i32_1 : i32, i32, i32, i32
  }
  func.func @transform_4(%arg0: i32) -> (i32, i32, i32) {
    %c0_i32 = arith.constant 0 : i32
    %c0_i32_0 = arith.constant 0 : i32
    %c0_i32_1 = arith.constant 0 : i32
    return %arg0, %c0_i32, %c0_i32_0 : i32, i32, i32
  }
}

</mosaic_0001>

<llo_original>
// kernel: style_feature_loss.4
$region0: #{style_feature_loss.4}
  #allocation0 [shape = 'u32[]', space=smem, size = 0x4, offset = 0x4, fixed_abs, tag = 'smem constant byte address 0x4 - core index']
  #allocation1 [shape = 'u32[72,128]{1,0:T(1,128)}', space=vmem, size = 0x9000, scoped, tag = 'internal scratch']
  %s0 = inlined_call_operand.vmem [shape: bf16[4,18,18,8], index: 0, kind: input, shape index: {}]
  %s1 = inlined_call_operand.vmem [shape: bf16[9,8,16], index: 1, kind: input, shape index: {}]
  %s2 = inlined_call_operand.vmem [shape: f32[1,16], index: 2, kind: input, shape index: {}]
  %s3 = inlined_call_operand.vmem [shape: bf16[4,16,16,16], index: 3, kind: output, shape index: {0}]
  %s4 = inlined_call_operand.vmem [shape: f32[4,16,16], index: 4, kind: output, shape index: {1}]
  %5 = xla_tuple %s3, %s4
  %s6 = sld [smem:[#allocation0]]
  $region53: #{style_feature_loss.4} parent=0
    _
  %s8 = ssub.s32 1, %s6
  %s9 = scalar_select 0, %s8, %s6
  loop: start=0, step=1, limit=6
  $region2: #{style_feature_loss.4} parent=0 // loop_pre_header
    _
  $region3: #{style_feature_loss.4} parent=0 // loop_header
    %s11 = sphi 0, %s15
    %p12 = scmp.ge.s32.totalorder %s11, 6
    %s21 = sphi 0, %s23
    %s24 = sphi 0, %s21
    %s25 = sphi 0, %s24
    %s41 = sphi 0, %s25
    %s45 = sphi 0, %s45
    %s47 = sphi 0, %s45
    %s48 = sphi 0, %s47
    %s62 = sphi 0, %s48
    %s66 = sphi 0, %s66
    %s68 = sphi 0, %s66
    %s69 = sphi 0, %s68
    %s83 = sphi 0, %s69
    %s89 = sphi 0, %s91
    %s92 = sphi 0, %s89
    %s93 = sphi 0, %s92
    %s109 = sphi 0, %s93
    %s115 = sphi 0, %s117
    %s118 = sphi 0, %s115
    %s119 = sphi 0, %s118
    %s135 = sphi 0, %s119
  $region4: #{style_feature_loss.4} parent=0 // loop_header_branch
    %14 = sbr.rel (%p12) target = $region8
  $region5: #{style_feature_loss.4} parent=0 // loop_body
    %s16 = ssub.s32 %s11, 1
    %s17 = ssub.s32 %s11, 2
    %s18 = sadd.s32 %s11, 1
    %s19 = ssub.s32 %s11, %s18
    %p20 = scmp.eq.s32.totalorder %s19, 0
    %s22 = sadd.s32 %s21, 1
    %s23 = scalar_select %p20, %s21, %s22
    %p26 = pneg %p20
    %p27 = scmp.eq.s32.totalorder %s11, 3
    %p28 = por %p26, %p27
    %p29 = scmp.ne.s32.totalorder %s21, %s24
    %p30 = scmp.eq.s32.totalorder %s11, 0
    %p31 = por %p29, %p30
    %p32 = scmp.ne.s32.totalorder %s21, %s24
    %p33 = scmp.eq.s32.totalorder %s16, 3
    %p34 = por %p32, %p33
    %p35 = scmp.ne.s32.totalorder %s24, %s25
    %p36 = scmp.eq.s32.totalorder %s16, 0
    %p37 = por %p35, %p36
    %p38 = scmp.ne.s32.totalorder %s24, %s25
    %p39 = scmp.eq.s32.totalorder %s17, 3
    %p40 = por %p38, %p39
    %p42 = scmp.ne.s32.totalorder %s25, %s41
    %p43 = scmp.eq.s32.totalorder %s17, 0
    %p44 = por %p42, %p43
    %s46 = sadd.s32 %s45, 1
    %p49 = scmp.eq.s32.totalorder %s11, 3
    %p50 = scmp.ne.s32.totalorder %s45, %s47
    %p51 = scmp.eq.s32.totalorder %s11, 0
    %p52 = por %p50, %p51
    %p53 = scmp.ne.s32.totalorder %s45, %s47
    %p54 = scmp.eq.s32.totalorder %s16, 3
    %p55 = por %p53, %p54
    %p56 = scmp.ne.s32.totalorder %s47, %s48
    %p57 = scmp.eq.s32.totalorder %s16, 0
    %p58 = por %p56, %p57
    %p59 = scmp.ne.s32.totalorder %s47, %s48
    %p60 = scmp.eq.s32.totalorder %s17, 3
    %p61 = por %p59, %p60
    %p63 = scmp.ne.s32.totalorder %s48, %s62
    %p64 = scmp.eq.s32.totalorder %s17, 0
    %p65 = por %p63, %p64
    %s67 = sadd.s32 %s66, 1
    %p70 = scmp.eq.s32.totalorder %s11, 3
    %p71 = scmp.ne.s32.totalorder %s66, %s68
    %p72 = scmp.eq.s32.totalorder %s11, 0
    %p73 = por %p71, %p72
    %p74 = scmp.ne.s32.totalorder %s66, %s68
    %p75 = scmp.eq.s32.totalorder %s16, 3
    %p76 = por %p74, %p75
    %p77 = scmp.ne.s32.totalorder %s68, %s69
    %p78 = scmp.eq.s32.totalorder %s16, 0
    %p79 = por %p77, %p78
    %p80 = scmp.ne.s32.totalorder %s68, %s69
    %p81 = scmp.eq.s32.totalorder %s17, 3
    %p82 = por %p80, %p81
    %p84 = scmp.ne.s32.totalorder %s69, %s83
    %p85 = scmp.eq.s32.totalorder %s17, 0
    %p86 = por %p84, %p85
    %s87 = ssub.s32 %s11, %s18
    %p88 = scmp.eq.s32.totalorder %s87, 0
    %s90 = sadd.s32 %s89, 1
    %s91 = scalar_select %p88, %s89, %s90
    %p94 = pneg %p88
    %p95 = scmp.eq.s32.totalorder %s11, 3
    %p96 = por %p94, %p95
    %p97 = scmp.ne.s32.totalorder %s89, %s92
    %p98 = scmp.eq.s32.totalorder %s11, 0
    %p99 = por %p97, %p98
    %p100 = scmp.ne.s32.totalorder %s89, %s92
    %p101 = scmp.eq.s32.totalorder %s16, 3
    %p102 = por %p100, %p101
    %p103 = scmp.ne.s32.totalorder %s92, %s93
    %p104 = scmp.eq.s32.totalorder %s16, 0
    %p105 = por %p103, %p104
    %p106 = scmp.ne.s32.totalorder %s92, %s93
    %p107 = scmp.eq.s32.totalorder %s17, 3
    %p108 = por %p106, %p107
    %p110 = scmp.ne.s32.totalorder %s93, %s109
    %p111 = scmp.eq.s32.totalorder %s17, 0
    %p112 = por %p110, %p111
    %s113 = ssub.s32 %s11, %s18
    %p114 = scmp.eq.s32.totalorder %s113, 0
    %s116 = sadd.s32 %s115, 1
    %s117 = scalar_select %p114, %s115, %s116
    %p120 = pneg %p114
    %p121 = scmp.eq.s32.totalorder %s11, 3
    %p122 = por %p120, %p121
    %p123 = scmp.ne.s32.totalorder %s115, %s118
    %p124 = scmp.eq.s32.totalorder %s11, 0
    %p125 = por %p123, %p124
    %p126 = scmp.ne.s32.totalorder %s115, %s118
    %p127 = scmp.eq.s32.totalorder %s16, 3
    %p128 = por %p126, %p127
    %p129 = scmp.ne.s32.totalorder %s118, %s119
    %p130 = scmp.eq.s32.totalorder %s16, 0
    %p131 = por %p129, %p130
    %p132 = scmp.ne.s32.totalorder %s118, %s119
    %p133 = scmp.eq.s32.totalorder %s17, 3
    %p134 = por %p132, %p133
    %p136 = scmp.ne.s32.totalorder %s119, %s135
    %p137 = scmp.eq.s32.totalorder %s17, 0
    %p138 = por %p136, %p137
    %p139 = scmp.le.s32.totalorder 1, %s11
    %p140 = scmp.lt.s32.totalorder %s11, 5
    %p141 = pnand %p139, %p140
    %p142 = pneg %p141
    // Predicated region
    $region9: #{style_feature_loss.4} parent=5 // pred_check
      _
    $region10: #{style_feature_loss.4} parent=5 // pred_check_branch
      %144 = sbr.rel (%p141) target = $region12
    $region11: #{style_feature_loss.4} parent=5 // pred_region
      %s145 = ssub.s32 %s11, 1
      // Predicated region
      $region13: #{style_feature_loss.4} parent=11 // pred_check
        %p146 = pneg %p58
      $region14: #{style_feature_loss.4} parent=11 // pred_check_branch
        %148 = sbr.rel (%p146) target = $region16
      $region15: #{style_feature_loss.4} parent=11 // pred_region
        _
      $region16: #{style_feature_loss.4} parent=11 // pred_fallthru
        _
      // Predicated region
      $region17: #{style_feature_loss.4} parent=11 // pred_check
        %p149 = pneg %p79
      $region18: #{style_feature_loss.4} parent=11 // pred_check_branch
        %151 = sbr.rel (%p149) target = $region20
      $region19: #{style_feature_loss.4} parent=11 // pred_region
        _
      $region20: #{style_feature_loss.4} parent=11 // pred_fallthru
        _
    $region12: #{style_feature_loss.4} parent=5 // pred_fallthru
      _
    %p152 = scmp.lt.s32.totalorder %s11, 4
    // Predicated region
    $region21: #{style_feature_loss.4} parent=5 // pred_check
      %p153 = pneg %p152
    $region22: #{style_feature_loss.4} parent=5 // pred_check_branch
      %155 = sbr.rel (%p153) target = $region24
    $region23: #{style_feature_loss.4} parent=5 // pred_region
      // Predicated region
      $region25: #{style_feature_loss.4} parent=23 // pred_check
        %p156 = pneg %p31
      $region26: #{style_feature_loss.4} parent=23 // pred_check_branch
        %158 = sbr.rel (%p156) target = $region28
      $region27: #{style_feature_loss.4} parent=23 // pred_region
        %p159 = scmp.lt.s32.totalorder %s11, 3
        %s160 = scalar_select %p159, %s11, 3
        %s161 = smul.addr %s160, 54
        %s162 = smul.addr %s161, 4
        %s163 = scalar_lea.vmem %s0, %s162
      $region28: #{style_feature_loss.4} parent=23 // pred_fallthru
        _
    $region24: #{style_feature_loss.4} parent=5 // pred_fallthru
      _
    %p164 = scmp.le.s32.totalorder 1, %s11
    %p165 = scmp.lt.s32.totalorder %s11, 5
    %p166 = pnand %p164, %p165
    %p167 = pneg %p166
    // Predicated region
    $region29: #{style_feature_loss.4} parent=5 // pred_check
      _
    $region30: #{style_feature_loss.4} parent=5 // pred_check_branch
      %169 = sbr.rel (%p166) target = $region32
    $region31: #{style_feature_loss.4} parent=5 // pred_region
      %s170 = ssub.s32 %s11, 1
      %p171 = scmp.lt.s32.totalorder %s16, 3
      %s172 = scalar_select %p171, %s16, 3
      %s173 = smul.addr %s172, 54
      %s174 = smul.addr %s173, 4
      %s175 = scalar_lea.vmem %s0, %s174
      %p176 = pneg %p37
      %p177 = pneg %p34
      %p178 = pneg %p58
      %p179 = pneg %p55
      %p180 = pneg %p79
      %p181 = pneg %p76
      %p182 = pneg %p105
      %p183 = pneg %p102
      %p184 = scmp.lt.s32.totalorder %s16, 3
      %s185 = scalar_select %p184, %s16, 3
      %s186 = smul.addr %s185, 32
      %s187 = smul.addr %s186, 4
      %s188 = scalar_lea.vmem %s3, %s187
      %p189 = pneg %p131
      %p190 = pneg %p128
      %p191 = scmp.lt.s32.totalorder %s16, 3
      %s192 = scalar_select %p191, %s16, 3
      %s193 = smul.addr %s192, 2
      %s194 = smul.addr %s193, 8
      %s195 = scalar_lea.vmem %s4, %s194
      %p196 = scmp.lt.s32.totalorder %s16, 3
      %s197 = scalar_select %p196, %s16, 3
      %s198 = smul.addr %s197, 54
      %s199 = smul.addr %s198, 4
      %s200 = scalar_lea.vmem %s0, %s199
      %p201 = scmp.lt.s32.totalorder %s16, 3
      %s202 = scalar_select %p201, %s16, 3
      %s203 = smul.addr %s202, 32
      %s204 = smul.addr %s203, 4
      %s205 = scalar_lea.vmem %s3, %s204
      %p206 = scmp.lt.s32.totalorder %s16, 3
      %s207 = scalar_select %p206, %s16, 3
      %s208 = smul.addr %s207, 2
      %s209 = smul.addr %s208, 8
      %s210 = scalar_lea.vmem %s4, %s209
      %v212 = vld [vmem:[%s200] sm:$0xf]
      %v213 = vld [vmem:[%s200 + $0x4] sm:$0xf]
      %v214 = vld [vmem:[%s200 + $0xc] sm:$0xf]
      %v215 = vld [vmem:[%s200 + $0x10] sm:$0xf]
      %v216 = vld [vmem:[%s200 + $0x18] sm:$0xf]
      %v217 = vld [vmem:[%s200 + $0x1c] sm:$0xf]
      %v218 = vld [vmem:[%s200 + $0x24] sm:$0xf]
      %v219 = vld [vmem:[%s200 + $0x28] sm:$0xf]
      %v220 = vld [vmem:[%s200 + $0x30] sm:$0xf]
      %v221 = vld [vmem:[%s200 + $0x34] sm:$0xf]
      %v222 = vld [vmem:[%s200 + $0x3c] sm:$0xf]
      %v223 = vld [vmem:[%s200 + $0x40] sm:$0xf]
      %v224 = vld [vmem:[%s200 + $0x48] sm:$0xf]
      %v225 = vld [vmem:[%s200 + $0x4c] sm:$0xf]
      %v226 = vld [vmem:[%s200 + $0x54] sm:$0xf]
      %v227 = vld [vmem:[%s200 + $0x58] sm:$0xf]
      %v228 = vld [vmem:[%s200 + $0x60] sm:$0xf]
      %v229 = vld [vmem:[%s200 + $0x64] sm:$0xf]
      %v230 = vld [vmem:[%s200 + $0x6c] sm:$0xf]
      %v231 = vld [vmem:[%s200 + $0x70] sm:$0xf]
      %v232 = vld [vmem:[%s200 + $0x78] sm:$0xf]
      %v233 = vld [vmem:[%s200 + $0x7c] sm:$0xf]
      %v234 = vld [vmem:[%s200 + $0x84] sm:$0xf]
      %v235 = vld [vmem:[%s200 + $0x88] sm:$0xf]
      %v236 = vld [vmem:[%s200 + $0x90] sm:$0xf]
      %v237 = vld [vmem:[%s200 + $0x94] sm:$0xf]
      %v238 = vld [vmem:[%s200 + $0x9c] sm:$0xf]
      %v239 = vld [vmem:[%s200 + $0xa0] sm:$0xf]
      %v240 = vld [vmem:[%s200 + $0xa8] sm:$0xf]
      %v241 = vld [vmem:[%s200 + $0xac] sm:$0xf]
      %v242 = vld [vmem:[%s200 + $0xb4] sm:$0xf]
      %v243 = vld [vmem:[%s200 + $0xb8] sm:$0xf]
      %v244 = vld [vmem:[%s200 + $0xc0] sm:$0xf]
      %v245 = vld [vmem:[%s200 + $0xc4] sm:$0xf]
      %v246 = vld [vmem:[%s200 + $0xcc] sm:$0xf]
      %v247 = vld [vmem:[%s200 + $0xd0] sm:$0xf]
      %v248 = vld [vmem:[%s1] sm:$0xf]
      %s249 = scalar_lea.vmem %s1, 12
      %v250 = vld [vmem:[%s249] sm:$0xf]
      %v283 = vunpack.c.l.b16 %v214
      %v284 = vunpack.c.l.b16 %v215
      %v285 = vunpack.c.l.b16 %v216
      %v286 = vunpack.c.l.b16 %v217
      %v287 = vunpack.c.l.b16 %v218
      %v288 = vunpack.c.l.b16 %v219
      %v289 = vunpack.c.l.b16 %v220
      %v290 = vunpack.c.l.b16 %v221
      %v291 = vunpack.c.l.b16 %v222
      %v292 = vunpack.c.l.b16 %v223
      %v293 = vunpack.c.l.b16 %v224
      %v294 = vunpack.c.l.b16 %v225
      %v295 = vunpack.c.l.b16 %v226
      %v296 = vunpack.c.l.b16 %v227
      %v297 = vunpack.c.l.b16 %v228
      %v298 = vunpack.c.l.b16 %v229
      %v299 = vunpack.c.l.b16 %v230
      %v300 = vunpack.c.l.b16 %v231
      %v301 = vunpack.c.l.b16 %v232
      %v302 = vunpack.c.l.b16 %v233
      %v303 = vunpack.c.l.b16 %v234
      %v304 = vunpack.c.l.b16 %v235
      %v305 = vunpack.c.l.b16 %v236
      %v306 = vunpack.c.l.b16 %v237
      %v307 = vunpack.c.l.b16 %v238
      %v308 = vunpack.c.l.b16 %v239
      %v309 = vunpack.c.l.b16 %v240
      %v310 = vunpack.c.l.b16 %v241
      %v311 = vunpack.c.l.b16 %v242
      %v312 = vunpack.c.l.b16 %v243
      %v313 = vunpack.c.l.b16 %v244
      %v314 = vunpack.c.l.b16 %v245
      %v315 = vpack.c.b16 %v284, %v283
      %v316 = vpack.c.b16 %v286, %v285
      %v317 = vpack.c.b16 %v288, %v287
      %v318 = vpack.c.b16 %v290, %v289
      %v319 = vpack.c.b16 %v292, %v291
      %v320 = vpack.c.b16 %v294, %v293
      %v321 = vpack.c.b16 %v296, %v295
      %v322 = vpack.c.b16 %v298, %v297
      %v323 = vpack.c.b16 %v300, %v299
      %v324 = vpack.c.b16 %v302, %v301
      %v325 = vpack.c.b16 %v304, %v303
      %v326 = vpack.c.b16 %v306, %v305
      %v327 = vpack.c.b16 %v308, %v307
      %v328 = vpack.c.b16 %v310, %v309
      %v329 = vpack.c.b16 %v312, %v311
      %v330 = vpack.c.b16 %v314, %v313
      %vm331 = vcmask 64512
      %v333 = vsel %vm331, %v315, 0
      %v336 = vsel %vm331, %v316, 0
      %v339 = vsel %vm331, %v317, 0
      %v342 = vsel %vm331, %v318, 0
      %v345 = vsel %vm331, %v319, 0
      %v348 = vsel %vm331, %v320, 0
      %v351 = vsel %vm331, %v321, 0
      %v354 = vsel %vm331, %v322, 0
      %v357 = vsel %vm331, %v323, 0
      %v360 = vsel %vm331, %v324, 0
      %v363 = vsel %vm331, %v325, 0
      %v366 = vsel %vm331, %v326, 0
      %v369 = vsel %vm331, %v327, 0
      %v372 = vsel %vm331, %v328, 0
      %v375 = vsel %vm331, %v329, 0
      %v378 = vsel %vm331, %v330, 0
      %vm380 = vcmask 1043456
      %v382 = vsel %vm380, %v250, 0
      %384 = vmatpush.bf16.msra.mxu0 0
      %385 = vmatpush.bf16.msra.mxu0 0
      %386 = vmatpush.bf16.msra.mxu0 0
      %387 = vmatpush.bf16.msra.mxu0 0
      %388 = vmatpush.bf16.msra.mxu0 0
      %389 = vmatpush.bf16.msra.mxu0 0
      %390 = vmatpush.bf16.msra.mxu0 0
      %391 = vmatpush.bf16.msra.mxu0 %v382
      %392 = vmatmul.bf16.gmra.mxu0 %v333
      %v393 = vpop.f32.mrf.mxu0
      %v394 = vadd.f32 0.0, %v393
      %v395 = vpop.f32.mrf.mxu0
      %v396 = vadd.f32 0.0, %v395
      %397 = vmatmul.bf16.gmra.mxu0 %v336
      %v398 = vpop.f32.mrf.mxu0
      %v399 = vadd.f32 0.0, %v398
      %v400 = vpop.f32.mrf.mxu0
      %v401 = vadd.f32 0.0, %v400
      %402 = vmatmul.bf16.gmra.mxu0 %v339
      %v403 = vpop.f32.mrf.mxu0
      %v404 = vadd.f32 0.0, %v403
      %v405 = vpop.f32.mrf.mxu0
      %v406 = vadd.f32 0.0, %v405
      %407 = vmatmul.bf16.gmra.mxu0 %v342
      %v408 = vpop.f32.mrf.mxu0
      %v409 = vadd.f32 0.0, %v408
      %v410 = vpop.f32.mrf.mxu0
      %v411 = vadd.f32 0.0, %v410
      %412 = vmatmul.bf16.gmra.mxu0 %v345
      %v413 = vpop.f32.mrf.mxu0
      %v414 = vadd.f32 0.0, %v413
      %v415 = vpop.f32.mrf.mxu0
      %v416 = vadd.f32 0.0, %v415
      %417 = vmatmul.bf16.gmra.mxu0 %v348
      %v418 = vpop.f32.mrf.mxu0
      %v419 = vadd.f32 0.0, %v418
      %v420 = vpop.f32.mrf.mxu0
      %v421 = vadd.f32 0.0, %v420
      %422 = vmatmul.bf16.gmra.mxu0 %v351
      %v423 = vpop.f32.mrf.mxu0
      %v424 = vadd.f32 0.0, %v423
      %v425 = vpop.f32.mrf.mxu0
      %v426 = vadd.f32 0.0, %v425
      %427 = vmatmul.bf16.gmra.mxu0 %v354
      %v428 = vpop.f32.mrf.mxu0
      %v429 = vadd.f32 0.0, %v428
      %v430 = vpop.f32.mrf.mxu0
      %v431 = vadd.f32 0.0, %v430
      %432 = vmatmul.bf16.gmra.mxu0 %v357
      %v433 = vpop.f32.mrf.mxu0
      %v434 = vadd.f32 0.0, %v433
      %v435 = vpop.f32.mrf.mxu0
      %v436 = vadd.f32 0.0, %v435
      %437 = vmatmul.bf16.gmra.mxu0 %v360
      %v438 = vpop.f32.mrf.mxu0
      %v439 = vadd.f32 0.0, %v438
      %v440 = vpop.f32.mrf.mxu0
      %v441 = vadd.f32 0.0, %v440
      %442 = vmatmul.bf16.gmra.mxu0 %v363
      %v443 = vpop.f32.mrf.mxu0
      %v444 = vadd.f32 0.0, %v443
      %v445 = vpop.f32.mrf.mxu0
      %v446 = vadd.f32 0.0, %v445
      %447 = vmatmul.bf16.gmra.mxu0 %v366
      %v448 = vpop.f32.mrf.mxu0
      %v449 = vadd.f32 0.0, %v448
      %v450 = vpop.f32.mrf.mxu0
      %v451 = vadd.f32 0.0, %v450
      %452 = vmatmul.bf16.gmra.mxu0 %v369
      %v453 = vpop.f32.mrf.mxu0
      %v454 = vadd.f32 0.0, %v453
      %v455 = vpop.f32.mrf.mxu0
      %v456 = vadd.f32 0.0, %v455
      %457 = vmatmul.bf16.gmra.mxu0 %v372
      %v458 = vpop.f32.mrf.mxu0
      %v459 = vadd.f32 0.0, %v458
      %v460 = vpop.f32.mrf.mxu0
      %v461 = vadd.f32 0.0, %v460
      %462 = vmatmul.bf16.gmra.mxu0 %v375
      %v463 = vpop.f32.mrf.mxu0
      %v464 = vadd.f32 0.0, %v463
      %v465 = vpop.f32.mrf.mxu0
      %v466 = vadd.f32 0.0, %v465
      %467 = vmatmul.bf16.gmra.mxu0 %v378
      %v468 = vpop.f32.mrf.mxu0
      %v469 = vadd.f32 0.0, %v468
      %v470 = vpop.f32.mrf.mxu0
      %v471 = vadd.f32 0.0, %v470
      %472 = vdwg.mxu0
      %v475 = vunpack.c.l.b16 %v212
      %v476 = vunpack.c.l.b16 %v213
      %v477 = vpack.c.b16 %v476, %v475
      %v479 = vsel %vm331, %v477, 0
      %v482 = vsel %vm380, %v248, 0
      %484 = vmatpush.bf16.msra.mxu0 0
      %485 = vmatpush.bf16.msra.mxu0 0
      %486 = vmatpush.bf16.msra.mxu0 0
      %487 = vmatpush.bf16.msra.mxu0 0
      %488 = vmatpush.bf16.msra.mxu0 0
      %489 = vmatpush.bf16.msra.mxu0 0
      %490 = vmatpush.bf16.msra.mxu0 0
      %491 = vmatpush.bf16.msra.mxu0 %v482
      %492 = vmatmul.bf16.gmra.mxu0 %v479
      %v493 = vpop.f32.mrf.mxu0
      %v494 = vadd.f32 %v394, %v493
      %v495 = vpop.f32.mrf.mxu0
      %v496 = vadd.f32 %v396, %v495
      %497 = vmatmul.bf16.gmra.mxu0 %v333
      %v498 = vpop.f32.mrf.mxu0
      %v499 = vadd.f32 %v399, %v498
      %v500 = vpop.f32.mrf.mxu0
      %v501 = vadd.f32 %v401, %v500
      %502 = vmatmul.bf16.gmra.mxu0 %v336
      %v503 = vpop.f32.mrf.mxu0
      %v504 = vadd.f32 %v404, %v503
      %v505 = vpop.f32.mrf.mxu0
      %v506 = vadd.f32 %v406, %v505
      %507 = vmatmul.bf16.gmra.mxu0 %v339
      %v508 = vpop.f32.mrf.mxu0
      %v509 = vadd.f32 %v409, %v508
      %v510 = vpop.f32.mrf.mxu0
      %v511 = vadd.f32 %v411, %v510
      %512 = vmatmul.bf16.gmra.mxu0 %v342
      %v513 = vpop.f32.mrf.mxu0
      %v514 = vadd.f32 %v414, %v513
      %v515 = vpop.f32.mrf.mxu0
      %v516 = vadd.f32 %v416, %v515
      %517 = vmatmul.bf16.gmra.mxu0 %v345
      %v518 = vpop.f32.mrf.mxu0
      %v519 = vadd.f32 %v419, %v518
      %v520 = vpop.f32.mrf.mxu0
      %v521 = vadd.f32 %v421, %v520
      %522 = vmatmul.bf16.gmra.mxu0 %v348
      %v523 = vpop.f32.mrf.mxu0
      %v524 = vadd.f32 %v424, %v523
      %v525 = vpop.f32.mrf.mxu0
      %v526 = vadd.f32 %v426, %v525
      %527 = vmatmul.bf16.gmra.mxu0 %v351
      %v528 = vpop.f32.mrf.mxu0
      %v529 = vadd.f32 %v429, %v528
      %v530 = vpop.f32.mrf.mxu0
      %v531 = vadd.f32 %v431, %v530
      %532 = vmatmul.bf16.gmra.mxu0 %v354
      %v533 = vpop.f32.mrf.mxu0
      %v534 = vadd.f32 %v434, %v533
      %v535 = vpop.f32.mrf.mxu0
      %v536 = vadd.f32 %v436, %v535
      %537 = vmatmul.bf16.gmra.mxu0 %v357
      %v538 = vpop.f32.mrf.mxu0
      %v539 = vadd.f32 %v439, %v538
      %v540 = vpop.f32.mrf.mxu0
      %v541 = vadd.f32 %v441, %v540
      %542 = vmatmul.bf16.gmra.mxu0 %v360
      %v543 = vpop.f32.mrf.mxu0
      %v544 = vadd.f32 %v444, %v543
      %v545 = vpop.f32.mrf.mxu0
      %v546 = vadd.f32 %v446, %v545
      %547 = vmatmul.bf16.gmra.mxu0 %v363
      %v548 = vpop.f32.mrf.mxu0
      %v549 = vadd.f32 %v449, %v548
      %v550 = vpop.f32.mrf.mxu0
      %v551 = vadd.f32 %v451, %v550
      %552 = vmatmul.bf16.gmra.mxu0 %v366
      %v553 = vpop.f32.mrf.mxu0
      %v554 = vadd.f32 %v454, %v553
      %v555 = vpop.f32.mrf.mxu0
      %v556 = vadd.f32 %v456, %v555
      %557 = vmatmul.bf16.gmra.mxu0 %v369
      %v558 = vpop.f32.mrf.mxu0
      %v559 = vadd.f32 %v459, %v558
      %v560 = vpop.f32.mrf.mxu0
      %v561 = vadd.f32 %v461, %v560
      %562 = vmatmul.bf16.gmra.mxu0 %v372
      %v563 = vpop.f32.mrf.mxu0
      %v564 = vadd.f32 %v464, %v563
      %v565 = vpop.f32.mrf.mxu0
      %v566 = vadd.f32 %v466, %v565
      %567 = vmatmul.bf16.gmra.mxu0 %v375
      %v568 = vpop.f32.mrf.mxu0
      %v569 = vadd.f32 %v469, %v568
      %v570 = vpop.f32.mrf.mxu0
      %v571 = vadd.f32 %v471, %v570
      %572 = vdwg.mxu0
      %s573 = scalar_lea.vmem %s1, 24
      %v574 = vld [vmem:[%s573] sm:$0xf]
      %v577 = vunpack.c.l.b16 %v246
      %v578 = vunpack.c.l.b16 %v247
      %v579 = vpack.c.b16 %v578, %v577
      %v581 = vsel %vm331, %v579, 0
      %v584 = vsel %vm380, %v574, 0
      %586 = vmatpush.bf16.msra.mxu0 0
      %587 = vmatpush.bf16.msra.mxu0 0
      %588 = vmatpush.bf16.msra.mxu0 0
      %589 = vmatpush.bf16.msra.mxu0 0
      %590 = vmatpush.bf16.msra.mxu0 0
      %591 = vmatpush.bf16.msra.mxu0 0
      %592 = vmatpush.bf16.msra.mxu0 0
      %593 = vmatpush.bf16.msra.mxu0 %v584
      %594 = vmatmul.bf16.gmra.mxu0 %v336
      %v595 = vpop.f32.mrf.mxu0
      %v596 = vadd.f32 0.0, %v595
      %v597 = vpop.f32.mrf.mxu0
      %v598 = vadd.f32 0.0, %v597
      %599 = vmatmul.bf16.gmra.mxu0 %v339
      %v600 = vpop.f32.mrf.mxu0
      %v601 = vadd.f32 0.0, %v600
      %v602 = vpop.f32.mrf.mxu0
      %v603 = vadd.f32 0.0, %v602
      %604 = vmatmul.bf16.gmra.mxu0 %v342
      %v605 = vpop.f32.mrf.mxu0
      %v606 = vadd.f32 0.0, %v605
      %v607 = vpop.f32.mrf.mxu0
      %v608 = vadd.f32 0.0, %v607
      %609 = vmatmul.bf16.gmra.mxu0 %v345
      %v610 = vpop.f32.mrf.mxu0
      %v611 = vadd.f32 0.0, %v610
      %v612 = vpop.f32.mrf.mxu0
      %v613 = vadd.f32 0.0, %v612
      %614 = vmatmul.bf16.gmra.mxu0 %v348
      %v615 = vpop.f32.mrf.mxu0
      %v616 = vadd.f32 0.0, %v615
      %v617 = vpop.f32.mrf.mxu0
      %v618 = vadd.f32 0.0, %v617
      %619 = vmatmul.bf16.gmra.mxu0 %v351
      %v620 = vpop.f32.mrf.mxu0
      %v621 = vadd.f32 0.0, %v620
      %v622 = vpop.f32.mrf.mxu0
      %v623 = vadd.f32 0.0, %v622
      %624 = vmatmul.bf16.gmra.mxu0 %v354
      %v625 = vpop.f32.mrf.mxu0
      %v626 = vadd.f32 0.0, %v625
      %v627 = vpop.f32.mrf.mxu0
      %v628 = vadd.f32 0.0, %v627
      %629 = vmatmul.bf16.gmra.mxu0 %v357
      %v630 = vpop.f32.mrf.mxu0
      %v631 = vadd.f32 0.0, %v630
      %v632 = vpop.f32.mrf.mxu0
      %v633 = vadd.f32 0.0, %v632
      %634 = vmatmul.bf16.gmra.mxu0 %v360
      %v635 = vpop.f32.mrf.mxu0
      %v636 = vadd.f32 0.0, %v635
      %v637 = vpop.f32.mrf.mxu0
      %v638 = vadd.f32 0.0, %v637
      %639 = vmatmul.bf16.gmra.mxu0 %v363
      %v640 = vpop.f32.mrf.mxu0
      %v641 = vadd.f32 0.0, %v640
      %v642 = vpop.f32.mrf.mxu0
      %v643 = vadd.f32 0.0, %v642
      %644 = vmatmul.bf16.gmra.mxu0 %v366
      %v645 = vpop.f32.mrf.mxu0
      %v646 = vadd.f32 0.0, %v645
      %v647 = vpop.f32.mrf.mxu0
      %v648 = vadd.f32 0.0, %v647
      %649 = vmatmul.bf16.gmra.mxu0 %v369
      %v650 = vpop.f32.mrf.mxu0
      %v651 = vadd.f32 0.0, %v650
      %v652 = vpop.f32.mrf.mxu0
      %v653 = vadd.f32 0.0, %v652
      %654 = vmatmul.bf16.gmra.mxu0 %v372
      %v655 = vpop.f32.mrf.mxu0
      %v656 = vadd.f32 0.0, %v655
      %v657 = vpop.f32.mrf.mxu0
      %v658 = vadd.f32 0.0, %v657
      %659 = vmatmul.bf16.gmra.mxu0 %v375
      %v660 = vpop.f32.mrf.mxu0
      %v661 = vadd.f32 0.0, %v660
      %v662 = vpop.f32.mrf.mxu0
      %v663 = vadd.f32 0.0, %v662
      %664 = vmatmul.bf16.gmra.mxu0 %v378
      %v665 = vpop.f32.mrf.mxu0
      %v666 = vadd.f32 0.0, %v665
      %v667 = vpop.f32.mrf.mxu0
      %v668 = vadd.f32 0.0, %v667
      %669 = vmatmul.bf16.gmra.mxu0 %v581
      %v670 = vpop.f32.mrf.mxu0
      %v671 = vadd.f32 0.0, %v670
      %v672 = vpop.f32.mrf.mxu0
      %v673 = vadd.f32 0.0, %v672
      %674 = vdwg.mxu0
      %v675 = vadd.f32 %v494, %v596
      %v676 = vadd.f32 %v496, %v598
      %v677 = vadd.f32 %v499, %v601
      %v678 = vadd.f32 %v501, %v603
      %v679 = vadd.f32 %v504, %v606
      %v680 = vadd.f32 %v506, %v608
      %v681 = vadd.f32 %v509, %v611
      %v682 = vadd.f32 %v511, %v613
      %v683 = vadd.f32 %v514, %v616
      %v684 = vadd.f32 %v516, %v618
      %v685 = vadd.f32 %v519, %v621
      %v686 = vadd.f32 %v521, %v623
      %v687 = vadd.f32 %v524, %v626
      %v688 = vadd.f32 %v526, %v628
      %v689 = vadd.f32 %v529, %v631
      %v690 = vadd.f32 %v531, %v633
      %v691 = vadd.f32 %v534, %v636
      %v692 = vadd.f32 %v536, %v638
      %v693 = vadd.f32 %v539, %v641
      %v694 = vadd.f32 %v541, %v643
      %v695 = vadd.f32 %v544, %v646
      %v696 = vadd.f32 %v546, %v648
      %v697 = vadd.f32 %v549, %v651
      %v698 = vadd.f32 %v551, %v653
      %v699 = vadd.f32 %v554, %v656
      %v700 = vadd.f32 %v556, %v658
      %v701 = vadd.f32 %v559, %v661
      %v702 = vadd.f32 %v561, %v663
      %v703 = vadd.f32 %v564, %v666
      %v704 = vadd.f32 %v566, %v668
      %v705 = vadd.f32 %v569, %v671
      %v706 = vadd.f32 %v571, %v673
      %v707 = vld [vmem:[%s200] sm:$0xf]
      %v708 = vld [vmem:[%s200 + $0x4] sm:$0xf]
      %v709 = vld [vmem:[%s200 + $0x8] sm:$0x1]
      %v710 = vld [vmem:[%s200 + $0xc] sm:$0xf]
      %v711 = vld [vmem:[%s200 + $0x10] sm:$0xf]
      %v712 = vld [vmem:[%s200 + $0x14] sm:$0x1]
      %v713 = vld [vmem:[%s200 + $0x18] sm:$0xf]
      %v714 = vld [vmem:[%s200 + $0x1c] sm:$0xf]
      %v715 = vld [vmem:[%s200 + $0x20] sm:$0x1]
      %v716 = vld [vmem:[%s200 + $0x24] sm:$0xf]
      %v717 = vld [vmem:[%s200 + $0x28] sm:$0xf]
      %v718 = vld [vmem:[%s200 + $0x2c] sm:$0x1]
      %v719 = vld [vmem:[%s200 + $0x30] sm:$0xf]
      %v720 = vld [vmem:[%s200 + $0x34] sm:$0xf]
      %v721 = vld [vmem:[%s200 + $0x38] sm:$0x1]
      %v722 = vld [vmem:[%s200 + $0x3c] sm:$0xf]
      %v723 = vld [vmem:[%s200 + $0x40] sm:$0xf]
      %v724 = vld [vmem:[%s200 + $0x44] sm:$0x1]
      %v725 = vld [vmem:[%s200 + $0x48] sm:$0xf]
      %v726 = vld [vmem:[%s200 + $0x4c] sm:$0xf]
      %v727 = vld [vmem:[%s200 + $0x50] sm:$0x1]
      %v728 = vld [vmem:[%s200 + $0x54] sm:$0xf]
      %v729 = vld [vmem:[%s200 + $0x58] sm:$0xf]
      %v730 = vld [vmem:[%s200 + $0x5c] sm:$0x1]
      %v731 = vld [vmem:[%s200 + $0x60] sm:$0xf]
      %v732 = vld [vmem:[%s200 + $0x64] sm:$0xf]
      %v733 = vld [vmem:[%s200 + $0x68] sm:$0x1]
      %v734 = vld [vmem:[%s200 + $0x6c] sm:$0xf]
      %v735 = vld [vmem:[%s200 + $0x70] sm:$0xf]
      %v736 = vld [vmem:[%s200 + $0x74] sm:$0x1]
      %v737 = vld [vmem:[%s200 + $0x78] sm:$0xf]
      %v738 = vld [vmem:[%s200 + $0x7c] sm:$0xf]
      %v739 = vld [vmem:[%s200 + $0x80] sm:$0x1]
      %v740 = vld [vmem:[%s200 + $0x84] sm:$0xf]
      %v741 = vld [vmem:[%s200 + $0x88] sm:$0xf]
      %v742 = vld [vmem:[%s200 + $0x8c] sm:$0x1]
      %v743 = vld [vmem:[%s200 + $0x90] sm:$0xf]
      %v744 = vld [vmem:[%s200 + $0x94] sm:$0xf]
      %v745 = vld [vmem:[%s200 + $0x98] sm:$0x1]
      %v746 = vld [vmem:[%s200 + $0x9c] sm:$0xf]
      %v747 = vld [vmem:[%s200 + $0xa0] sm:$0xf]
      %v748 = vld [vmem:[%s200 + $0xa4] sm:$0x1]
      %v749 = vld [vmem:[%s200 + $0xa8] sm:$0xf]
      %v750 = vld [vmem:[%s200 + $0xac] sm:$0xf]
      %v751 = vld [vmem:[%s200 + $0xb0] sm:$0x1]
      %v752 = vld [vmem:[%s200 + $0xb4] sm:$0xf]
      %v753 = vld [vmem:[%s200 + $0xb8] sm:$0xf]
      %v754 = vld [vmem:[%s200 + $0xbc] sm:$0x1]
      %v755 = vld [vmem:[%s200 + $0xc0] sm:$0xf]
      %v756 = vld [vmem:[%s200 + $0xc4] sm:$0xf]
      %v757 = vld [vmem:[%s200 + $0xc8] sm:$0x1]
      %v758 = vld [vmem:[%s200 + $0xcc] sm:$0xf]
      %v759 = vld [vmem:[%s200 + $0xd0] sm:$0xf]
      %v760 = vld [vmem:[%s200 + $0xd4] sm:$0x1]
      %vm761 = vsmask.f32 3328
      %vm762 = vsmask.f32 7440
      %vm763 = vmor %vm761, %vm762
      %v765 = vshrl.u32 %v707, 16
      %v767 = vrot.slane %v765, 4
      %v768 = vshll.u32 %v707, 16
      %v770 = vrot.slane %v768, 5
      %v771 = vor.u32 %v767, %v770
      %v772 = vrot.slane %v771, 4
      %v774 = vshll.u32 %v708, 16
      %v776 = vrot.slane %v774, 5
      %v777 = vsel %vm763, %v772, %v776
      %v778 = vshrl.u32 %v708, 16
      %v780 = vrot.slane %v778, 4
      %v781 = vor.u32 %v780, %v776
      %v782 = vrot.slane %v781, 4
      %v784 = vshll.u32 %v709, 16
      %v786 = vrot.slane %v784, 5
      %v787 = vsel %vm763, %v782, %v786
      %v789 = vshrl.u32 %v710, 16
      %v791 = vrot.slane %v789, 4
      %v792 = vshll.u32 %v710, 16
      %v794 = vrot.slane %v792, 5
      %v795 = vor.u32 %v791, %v794
      %v796 = vrot.slane %v795, 4
      %v798 = vshll.u32 %v711, 16
      %v800 = vrot.slane %v798, 5
      %v801 = vsel %vm763, %v796, %v800
      %v802 = vshrl.u32 %v711, 16
      %v804 = vrot.slane %v802, 4
      %v805 = vor.u32 %v804, %v800
      %v806 = vrot.slane %v805, 4
      %v808 = vshll.u32 %v712, 16
      %v810 = vrot.slane %v808, 5
      %v811 = vsel %vm763, %v806, %v810
      %v813 = vshrl.u32 %v713, 16
      %v815 = vrot.slane %v813, 4
      %v816 = vshll.u32 %v713, 16
      %v818 = vrot.slane %v816, 5
      %v819 = vor.u32 %v815, %v818
      %v820 = vrot.slane %v819, 4
      %v822 = vshll.u32 %v714, 16
      %v824 = vrot.slane %v822, 5
      %v825 = vsel %vm763, %v820, %v824
      %v826 = vshrl.u32 %v714, 16
      %v828 = vrot.slane %v826, 4
      %v829 = vor.u32 %v828, %v824
      %v830 = vrot.slane %v829, 4
      %v832 = vshll.u32 %v715, 16
      %v834 = vrot.slane %v832, 5
      %v835 = vsel %vm763, %v830, %v834
      %v837 = vshrl.u32 %v716, 16
      %v839 = vrot.slane %v837, 4
      %v840 = vshll.u32 %v716, 16
      %v842 = vrot.slane %v840, 5
      %v843 = vor.u32 %v839, %v842
      %v844 = vrot.slane %v843, 4
      %v846 = vshll.u32 %v717, 16
      %v848 = vrot.slane %v846, 5
      %v849 = vsel %vm763, %v844, %v848
      %v850 = vshrl.u32 %v717, 16
      %v852 = vrot.slane %v850, 4
      %v853 = vor.u32 %v852, %v848
      %v854 = vrot.slane %v853, 4
      %v856 = vshll.u32 %v718, 16
      %v858 = vrot.slane %v856, 5
      %v859 = vsel %vm763, %v854, %v858
      %v861 = vshrl.u32 %v719, 16
      %v863 = vrot.slane %v861, 4
      %v864 = vshll.u32 %v719, 16
      %v866 = vrot.slane %v864, 5
      %v867 = vor.u32 %v863, %v866
      %v868 = vrot.slane %v867, 4
      %v870 = vshll.u32 %v720, 16
      %v872 = vrot.slane %v870, 5
      %v873 = vsel %vm763, %v868, %v872
      %v874 = vshrl.u32 %v720, 16
      %v876 = vrot.slane %v874, 4
      %v877 = vor.u32 %v876, %v872
      %v878 = vrot.slane %v877, 4
      %v880 = vshll.u32 %v721, 16
      %v882 = vrot.slane %v880, 5
      %v883 = vsel %vm763, %v878, %v882
      %v885 = vshrl.u32 %v722, 16
      %v887 = vrot.slane %v885, 4
      %v888 = vshll.u32 %v722, 16
      %v890 = vrot.slane %v888, 5
      %v891 = vor.u32 %v887, %v890
      %v892 = vrot.slane %v891, 4
      %v894 = vshll.u32 %v723, 16
      %v896 = vrot.slane %v894, 5
      %v897 = vsel %vm763, %v892, %v896
      %v898 = vshrl.u32 %v723, 16
      %v900 = vrot.slane %v898, 4
      %v901 = vor.u32 %v900, %v896
      %v902 = vrot.slane %v901, 4
      %v904 = vshll.u32 %v724, 16
      %v906 = vrot.slane %v904, 5
      %v907 = vsel %vm763, %v902, %v906
      %v909 = vshrl.u32 %v725, 16
      %v911 = vrot.slane %v909, 4
      %v912 = vshll.u32 %v725, 16
      %v914 = vrot.slane %v912, 5
      %v915 = vor.u32 %v911, %v914
      %v916 = vrot.slane %v915, 4
      %v918 = vshll.u32 %v726, 16
      %v920 = vrot.slane %v918, 5
      %v921 = vsel %vm763, %v916, %v920
      %v922 = vshrl.u32 %v726, 16
      %v924 = vrot.slane %v922, 4
      %v925 = vor.u32 %v924, %v920
      %v926 = vrot.slane %v925, 4
      %v928 = vshll.u32 %v727, 16
      %v930 = vrot.slane %v928, 5
      %v931 = vsel %vm763, %v926, %v930
      %v933 = vshrl.u32 %v728, 16
      %v935 = vrot.slane %v933, 4
      %v936 = vshll.u32 %v728, 16
      %v938 = vrot.slane %v936, 5
      %v939 = vor.u32 %v935, %v938
      %v940 = vrot.slane %v939, 4
      %v942 = vshll.u32 %v729, 16
      %v944 = vrot.slane %v942, 5
      %v945 = vsel %vm763, %v940, %v944
      %v946 = vshrl.u32 %v729, 16
      %v948 = vrot.slane %v946, 4
      %v949 = vor.u32 %v948, %v944
      %v950 = vrot.slane %v949, 4
      %v952 = vshll.u32 %v730, 16
      %v954 = vrot.slane %v952, 5
      %v955 = vsel %vm763, %v950, %v954
      %v957 = vshrl.u32 %v731, 16
      %v959 = vrot.slane %v957, 4
      %v960 = vshll.u32 %v731, 16
      %v962 = vrot.slane %v960, 5
      %v963 = vor.u32 %v959, %v962
      %v964 = vrot.slane %v963, 4
      %v966 = vshll.u32 %v732, 16
      %v968 = vrot.slane %v966, 5
      %v969 = vsel %vm763, %v964, %v968
      %v970 = vshrl.u32 %v732, 16
      %v972 = vrot.slane %v970, 4
      %v973 = vor.u32 %v972, %v968
      %v974 = vrot.slane %v973, 4
      %v976 = vshll.u32 %v733, 16
      %v978 = vrot.slane %v976, 5
      %v979 = vsel %vm763, %v974, %v978
      %v981 = vshrl.u32 %v734, 16
      %v983 = vrot.slane %v981, 4
      %v984 = vshll.u32 %v734, 16
      %v986 = vrot.slane %v984, 5
      %v987 = vor.u32 %v983, %v986
      %v988 = vrot.slane %v987, 4
      %v990 = vshll.u32 %v735, 16
      %v992 = vrot.slane %v990, 5
      %v993 = vsel %vm763, %v988, %v992
      %v994 = vshrl.u32 %v735, 16
      %v996 = vrot.slane %v994, 4
      %v997 = vor.u32 %v996, %v992
      %v998 = vrot.slane %v997, 4
      %v1000 = vshll.u32 %v736, 16
      %v1002 = vrot.slane %v1000, 5
      %v1003 = vsel %vm763, %v998, %v1002
      %v1005 = vshrl.u32 %v737, 16
      %v1007 = vrot.slane %v1005, 4
      %v1008 = vshll.u32 %v737, 16
      %v1010 = vrot.slane %v1008, 5
      %v1011 = vor.u32 %v1007, %v1010
      %v1012 = vrot.slane %v1011, 4
      %v1014 = vshll.u32 %v738, 16
      %v1016 = vrot.slane %v1014, 5
      %v1017 = vsel %vm763, %v1012, %v1016
      %v1018 = vshrl.u32 %v738, 16
      %v1020 = vrot.slane %v1018, 4
      %v1021 = vor.u32 %v1020, %v1016
      %v1022 = vrot.slane %v1021, 4
      %v1024 = vshll.u32 %v739, 16
      %v1026 = vrot.slane %v1024, 5
      %v1027 = vsel %vm763, %v1022, %v1026
      %v1029 = vshrl.u32 %v740, 16
      %v1031 = vrot.slane %v1029, 4
      %v1032 = vshll.u32 %v740, 16
      %v1034 = vrot.slane %v1032, 5
      %v1035 = vor.u32 %v1031, %v1034
      %v1036 = vrot.slane %v1035, 4
      %v1038 = vshll.u32 %v741, 16
      %v1040 = vrot.slane %v1038, 5
      %v1041 = vsel %vm763, %v1036, %v1040
      %v1042 = vshrl.u32 %v741, 16
      %v1044 = vrot.slane %v1042, 4
      %v1045 = vor.u32 %v1044, %v1040
      %v1046 = vrot.slane %v1045, 4
      %v1048 = vshll.u32 %v742, 16
      %v1050 = vrot.slane %v1048, 5
      %v1051 = vsel %vm763, %v1046, %v1050
      %v1053 = vshrl.u32 %v743, 16
      %v1055 = vrot.slane %v1053, 4
      %v1056 = vshll.u32 %v743, 16
      %v1058 = vrot.slane %v1056, 5
      %v1059 = vor.u32 %v1055, %v1058
      %v1060 = vrot.slane %v1059, 4
      %v1062 = vshll.u32 %v744, 16
      %v1064 = vrot.slane %v1062, 5
      %v1065 = vsel %vm763, %v1060, %v1064
      %v1066 = vshrl.u32 %v744, 16
      %v1068 = vrot.slane %v1066, 4
      %v1069 = vor.u32 %v1068, %v1064
      %v1070 = vrot.slane %v1069, 4
      %v1072 = vshll.u32 %v745, 16
      %v1074 = vrot.slane %v1072, 5
      %v1075 = vsel %vm763, %v1070, %v1074
      %v1077 = vshrl.u32 %v746, 16
      %v1079 = vrot.slane %v1077, 4
      %v1080 = vshll.u32 %v746, 16
      %v1082 = vrot.slane %v1080, 5
      %v1083 = vor.u32 %v1079, %v1082
      %v1084 = vrot.slane %v1083, 4
      %v1086 = vshll.u32 %v747, 16
      %v1088 = vrot.slane %v1086, 5
      %v1089 = vsel %vm763, %v1084, %v1088
      %v1090 = vshrl.u32 %v747, 16
      %v1092 = vrot.slane %v1090, 4
      %v1093 = vor.u32 %v1092, %v1088
      %v1094 = vrot.slane %v1093, 4
      %v1096 = vshll.u32 %v748, 16
      %v1098 = vrot.slane %v1096, 5
      %v1099 = vsel %vm763, %v1094, %v1098
      %v1101 = vshrl.u32 %v749, 16
      %v1103 = vrot.slane %v1101, 4
      %v1104 = vshll.u32 %v749, 16
      %v1106 = vrot.slane %v1104, 5
      %v1107 = vor.u32 %v1103, %v1106
      %v1108 = vrot.slane %v1107, 4
      %v1110 = vshll.u32 %v750, 16
      %v1112 = vrot.slane %v1110, 5
      %v1113 = vsel %vm763, %v1108, %v1112
      %v1114 = vshrl.u32 %v750, 16
      %v1116 = vrot.slane %v1114, 4
      %v1117 = vor.u32 %v1116, %v1112
      %v1118 = vrot.slane %v1117, 4
      %v1120 = vshll.u32 %v751, 16
      %v1122 = vrot.slane %v1120, 5
      %v1123 = vsel %vm763, %v1118, %v1122
      %v1125 = vshrl.u32 %v752, 16
      %v1127 = vrot.slane %v1125, 4
      %v1128 = vshll.u32 %v752, 16
      %v1130 = vrot.slane %v1128, 5
      %v1131 = vor.u32 %v1127, %v1130
      %v1132 = vrot.slane %v1131, 4
      %v1134 = vshll.u32 %v753, 16
      %v1136 = vrot.slane %v1134, 5
      %v1137 = vsel %vm763, %v1132, %v1136
      %v1138 = vshrl.u32 %v753, 16
      %v1140 = vrot.slane %v1138, 4
      %v1141 = vor.u32 %v1140, %v1136
      %v1142 = vrot.slane %v1141, 4
      %v1144 = vshll.u32 %v754, 16
      %v1146 = vrot.slane %v1144, 5
      %v1147 = vsel %vm763, %v1142, %v1146
      %s1148 = scalar_lea.vmem %s1, 4
      %v1149 = vld [vmem:[%s1148] sm:$0xf]
      %v1150 = vunpack.c.l.b16 %v777
      %v1151 = vunpack.c.l.b16 %v787
      %v1152 = vunpack.c.l.b16 %v801
      %v1153 = vunpack.c.l.b16 %v811
      %v1154 = vunpack.c.l.b16 %v825
      %v1155 = vunpack.c.l.b16 %v835
      %v1156 = vunpack.c.l.b16 %v849
      %v1157 = vunpack.c.l.b16 %v859
      %v1158 = vunpack.c.l.b16 %v873
      %v1159 = vunpack.c.l.b16 %v883
      %v1160 = vunpack.c.l.b16 %v897
      %v1161 = vunpack.c.l.b16 %v907
      %v1162 = vunpack.c.l.b16 %v921
      %v1163 = vunpack.c.l.b16 %v931
      %v1164 = vunpack.c.l.b16 %v945
      %v1165 = vunpack.c.l.b16 %v955
      %v1166 = vunpack.c.l.b16 %v969
      %v1167 = vunpack.c.l.b16 %v979
      %v1168 = vunpack.c.l.b16 %v993
      %v1169 = vunpack.c.l.b16 %v1003
      %v1170 = vunpack.c.l.b16 %v1017
      %v1171 = vunpack.c.l.b16 %v1027
      %v1172 = vunpack.c.l.b16 %v1041
      %v1173 = vunpack.c.l.b16 %v1051
      %v1174 = vunpack.c.l.b16 %v1065
      %v1175 = vunpack.c.l.b16 %v1075
      %v1176 = vunpack.c.l.b16 %v1089
      %v1177 = vunpack.c.l.b16 %v1099
      %v1178 = vunpack.c.l.b16 %v1113
      %v1179 = vunpack.c.l.b16 %v1123
      %v1180 = vunpack.c.l.b16 %v1137
      %v1181 = vunpack.c.l.b16 %v1147
      %v1182 = vpack.c.b16 %v1151, %v1150
      %v1183 = vpack.c.b16 %v1153, %v1152
      %v1184 = vpack.c.b16 %v1155, %v1154
      %v1185 = vpack.c.b16 %v1157, %v1156
      %v1186 = vpack.c.b16 %v1159, %v1158
      %v1187 = vpack.c.b16 %v1161, %v1160
      %v1188 = vpack.c.b16 %v1163, %v1162
      %v1189 = vpack.c.b16 %v1165, %v1164
      %v1190 = vpack.c.b16 %v1167, %v1166
      %v1191 = vpack.c.b16 %v1169, %v1168
      %v1192 = vpack.c.b16 %v1171, %v1170
      %v1193 = vpack.c.b16 %v1173, %v1172
      %v1194 = vpack.c.b16 %v1175, %v1174
      %v1195 = vpack.c.b16 %v1177, %v1176
      %v1196 = vpack.c.b16 %v1179, %v1178
      %v1197 = vpack.c.b16 %v1181, %v1180
      %v1199 = vsel %vm331, %v1182, 0
      %v1202 = vsel %vm331, %v1183, 0
      %v1205 = vsel %vm331, %v1184, 0
      %v1208 = vsel %vm331, %v1185, 0
      %v1211 = vsel %vm331, %v1186, 0
      %v1214 = vsel %vm331, %v1187, 0
      %v1217 = vsel %vm331, %v1188, 0
      %v1220 = vsel %vm331, %v1189, 0
      %v1223 = vsel %vm331, %v1190, 0
      %v1226 = vsel %vm331, %v1191, 0
      %v1229 = vsel %vm331, %v1192, 0
      %v1232 = vsel %vm331, %v1193, 0
      %v1235 = vsel %vm331, %v1194, 0
      %v1238 = vsel %vm331, %v1195, 0
      %v1241 = vsel %vm331, %v1196, 0
      %v1244 = vsel %vm331, %v1197, 0
      %v1247 = vsel %vm380, %v1149, 0
      %1249 = vmatpush.bf16.msra.mxu0 0
      %1250 = vmatpush.bf16.msra.mxu0 0
      %1251 = vmatpush.bf16.msra.mxu0 0
      %1252 = vmatpush.bf16.msra.mxu0 0
      %1253 = vmatpush.bf16.msra.mxu0 0
      %1254 = vmatpush.bf16.msra.mxu0 0
      %1255 = vmatpush.bf16.msra.mxu0 0
      %1256 = vmatpush.bf16.msra.mxu0 %v1247
      %1257 = vmatmul.bf16.gmra.mxu0 %v1199
      %v1258 = vpop.f32.mrf.mxu0
      %v1259 = vadd.f32 0.0, %v1258
      %v1260 = vpop.f32.mrf.mxu0
      %v1261 = vadd.f32 0.0, %v1260
      %1262 = vmatmul.bf16.gmra.mxu0 %v1202
      %v1263 = vpop.f32.mrf.mxu0
      %v1264 = vadd.f32 0.0, %v1263
      %v1265 = vpop.f32.mrf.mxu0
      %v1266 = vadd.f32 0.0, %v1265
      %1267 = vmatmul.bf16.gmra.mxu0 %v1205
      %v1268 = vpop.f32.mrf.mxu0
      %v1269 = vadd.f32 0.0, %v1268
      %v1270 = vpop.f32.mrf.mxu0
      %v1271 = vadd.f32 0.0, %v1270
      %1272 = vmatmul.bf16.gmra.mxu0 %v1208
      %v1273 = vpop.f32.mrf.mxu0
      %v1274 = vadd.f32 0.0, %v1273
      %v1275 = vpop.f32.mrf.mxu0
      %v1276 = vadd.f32 0.0, %v1275
      %1277 = vmatmul.bf16.gmra.mxu0 %v1211
      %v1278 = vpop.f32.mrf.mxu0
      %v1279 = vadd.f32 0.0, %v1278
      %v1280 = vpop.f32.mrf.mxu0
      %v1281 = vadd.f32 0.0, %v1280
      %1282 = vmatmul.bf16.gmra.mxu0 %v1214
      %v1283 = vpop.f32.mrf.mxu0
      %v1284 = vadd.f32 0.0, %v1283
      %v1285 = vpop.f32.mrf.mxu0
      %v1286 = vadd.f32 0.0, %v1285
      %1287 = vmatmul.bf16.gmra.mxu0 %v1217
      %v1288 = vpop.f32.mrf.mxu0
      %v1289 = vadd.f32 0.0, %v1288
      %v1290 = vpop.f32.mrf.mxu0
      %v1291 = vadd.f32 0.0, %v1290
      %1292 = vmatmul.bf16.gmra.mxu0 %v1220
      %v1293 = vpop.f32.mrf.mxu0
      %v1294 = vadd.f32 0.0, %v1293
      %v1295 = vpop.f32.mrf.mxu0
      %v1296 = vadd.f32 0.0, %v1295
      %1297 = vmatmul.bf16.gmra.mxu0 %v1223
      %v1298 = vpop.f32.mrf.mxu0
      %v1299 = vadd.f32 0.0, %v1298
      %v1300 = vpop.f32.mrf.mxu0
      %v1301 = vadd.f32 0.0, %v1300
      %1302 = vmatmul.bf16.gmra.mxu0 %v1226
      %v1303 = vpop.f32.mrf.mxu0
      %v1304 = vadd.f32 0.0, %v1303
      %v1305 = vpop.f32.mrf.mxu0
      %v1306 = vadd.f32 0.0, %v1305
      %1307 = vmatmul.bf16.gmra.mxu0 %v1229
      %v1308 = vpop.f32.mrf.mxu0
      %v1309 = vadd.f32 0.0, %v1308
      %v1310 = vpop.f32.mrf.mxu0
      %v1311 = vadd.f32 0.0, %v1310
      %1312 = vmatmul.bf16.gmra.mxu0 %v1232
      %v1313 = vpop.f32.mrf.mxu0
      %v1314 = vadd.f32 0.0, %v1313
      %v1315 = vpop.f32.mrf.mxu0
      %v1316 = vadd.f32 0.0, %v1315
      %1317 = vmatmul.bf16.gmra.mxu0 %v1235
      %v1318 = vpop.f32.mrf.mxu0
      %v1319 = vadd.f32 0.0, %v1318
      %v1320 = vpop.f32.mrf.mxu0
      %v1321 = vadd.f32 0.0, %v1320
      %1322 = vmatmul.bf16.gmra.mxu0 %v1238
      %v1323 = vpop.f32.mrf.mxu0
      %v1324 = vadd.f32 0.0, %v1323
      %v1325 = vpop.f32.mrf.mxu0
      %v1326 = vadd.f32 0.0, %v1325
      %1327 = vmatmul.bf16.gmra.mxu0 %v1241
      %v1328 = vpop.f32.mrf.mxu0
      %v1329 = vadd.f32 0.0, %v1328
      %v1330 = vpop.f32.mrf.mxu0
      %v1331 = vadd.f32 0.0, %v1330
      %1332 = vmatmul.bf16.gmra.mxu0 %v1244
      %v1333 = vpop.f32.mrf.mxu0
      %v1334 = vadd.f32 0.0, %v1333
      %v1335 = vpop.f32.mrf.mxu0
      %v1336 = vadd.f32 0.0, %v1335
      %1337 = vdwg.mxu0
      %v1338 = vadd.f32 %v675, %v1259
      %v1339 = vadd.f32 %v676, %v1261
      %v1340 = vadd.f32 %v677, %v1264
      %v1341 = vadd.f32 %v678, %v1266
      %v1342 = vadd.f32 %v679, %v1269
      %v1343 = vadd.f32 %v680, %v1271
      %v1344 = vadd.f32 %v681, %v1274
      %v1345 = vadd.f32 %v682, %v1276
      %v1346 = vadd.f32 %v683, %v1279
      %v1347 = vadd.f32 %v684, %v1281
      %v1348 = vadd.f32 %v685, %v1284
      %v1349 = vadd.f32 %v686, %v1286
      %v1350 = vadd.f32 %v687, %v1289
      %v1351 = vadd.f32 %v688, %v1291
      %v1352 = vadd.f32 %v689, %v1294
      %v1353 = vadd.f32 %v690, %v1296
      %v1354 = vadd.f32 %v691, %v1299
      %v1355 = vadd.f32 %v692, %v1301
      %v1356 = vadd.f32 %v693, %v1304
      %v1357 = vadd.f32 %v694, %v1306
      %v1358 = vadd.f32 %v695, %v1309
      %v1359 = vadd.f32 %v696, %v1311
      %v1360 = vadd.f32 %v697, %v1314
      %v1361 = vadd.f32 %v698, %v1316
      %v1362 = vadd.f32 %v699, %v1319
      %v1363 = vadd.f32 %v700, %v1321
      %v1364 = vadd.f32 %v701, %v1324
      %v1365 = vadd.f32 %v702, %v1326
      %v1366 = vadd.f32 %v703, %v1329
      %v1367 = vadd.f32 %v704, %v1331
      %v1368 = vadd.f32 %v705, %v1334
      %v1369 = vadd.f32 %v706, %v1336
      %v1371 = vshrl.u32 %v755, 16
      %v1373 = vrot.slane %v1371, 4
      %v1374 = vshll.u32 %v755, 16
      %v1376 = vrot.slane %v1374, 5
      %v1377 = vor.u32 %v1373, %v1376
      %v1378 = vrot.slane %v1377, 4
      %v1380 = vshll.u32 %v756, 16
      %v1382 = vrot.slane %v1380, 5
      %v1383 = vsel %vm763, %v1378, %v1382
      %v1384 = vshrl.u32 %v756, 16
      %v1386 = vrot.slane %v1384, 4
      %v1387 = vor.u32 %v1386, %v1382
      %v1388 = vrot.slane %v1387, 4
      %v1390 = vshll.u32 %v757, 16
      %v1392 = vrot.slane %v1390, 5
      %v1393 = vsel %vm763, %v1388, %v1392
      %s1394 = scalar_lea.vmem %s1, 16
      %v1395 = vld [vmem:[%s1394] sm:$0xf]
      %v1396 = vunpack.c.l.b16 %v1383
      %v1397 = vunpack.c.l.b16 %v1393
      %v1398 = vpack.c.b16 %v1397, %v1396
      %v1400 = vsel %vm331, %v1398, 0
      %v1403 = vsel %vm380, %v1395, 0
      %1405 = vmatpush.bf16.msra.mxu0 0
      %1406 = vmatpush.bf16.msra.mxu0 0
      %1407 = vmatpush.bf16.msra.mxu0 0
      %1408 = vmatpush.bf16.msra.mxu0 0
      %1409 = vmatpush.bf16.msra.mxu0 0
      %1410 = vmatpush.bf16.msra.mxu0 0
      %1411 = vmatpush.bf16.msra.mxu0 0
      %1412 = vmatpush.bf16.msra.mxu0 %v1403
      %1413 = vmatmul.bf16.gmra.mxu0 %v1202
      %v1414 = vpop.f32.mrf.mxu0
      %v1415 = vadd.f32 0.0, %v1414
      %v1416 = vpop.f32.mrf.mxu0
      %v1417 = vadd.f32 0.0, %v1416
      %1418 = vmatmul.bf16.gmra.mxu0 %v1205
      %v1419 = vpop.f32.mrf.mxu0
      %v1420 = vadd.f32 0.0, %v1419
      %v1421 = vpop.f32.mrf.mxu0
      %v1422 = vadd.f32 0.0, %v1421
      %1423 = vmatmul.bf16.gmra.mxu0 %v1208
      %v1424 = vpop.f32.mrf.mxu0
      %v1425 = vadd.f32 0.0, %v1424
      %v1426 = vpop.f32.mrf.mxu0
      %v1427 = vadd.f32 0.0, %v1426
      %1428 = vmatmul.bf16.gmra.mxu0 %v1211
      %v1429 = vpop.f32.mrf.mxu0
      %v1430 = vadd.f32 0.0, %v1429
      %v1431 = vpop.f32.mrf.mxu0
      %v1432 = vadd.f32 0.0, %v1431
      %1433 = vmatmul.bf16.gmra.mxu0 %v1214
      %v1434 = vpop.f32.mrf.mxu0
      %v1435 = vadd.f32 0.0, %v1434
      %v1436 = vpop.f32.mrf.mxu0
      %v1437 = vadd.f32 0.0, %v1436
      %1438 = vmatmul.bf16.gmra.mxu0 %v1217
      %v1439 = vpop.f32.mrf.mxu0
      %v1440 = vadd.f32 0.0, %v1439
      %v1441 = vpop.f32.mrf.mxu0
      %v1442 = vadd.f32 0.0, %v1441
      %1443 = vmatmul.bf16.gmra.mxu0 %v1220
      %v1444 = vpop.f32.mrf.mxu0
      %v1445 = vadd.f32 0.0, %v1444
      %v1446 = vpop.f32.mrf.mxu0
      %v1447 = vadd.f32 0.0, %v1446
      %1448 = vmatmul.bf16.gmra.mxu0 %v1223
      %v1449 = vpop.f32.mrf.mxu0
      %v1450 = vadd.f32 0.0, %v1449
      %v1451 = vpop.f32.mrf.mxu0
      %v1452 = vadd.f32 0.0, %v1451
      %1453 = vmatmul.bf16.gmra.mxu0 %v1226
      %v1454 = vpop.f32.mrf.mxu0
      %v1455 = vadd.f32 0.0, %v1454
      %v1456 = vpop.f32.mrf.mxu0
      %v1457 = vadd.f32 0.0, %v1456
      %1458 = vmatmul.bf16.gmra.mxu0 %v1229
      %v1459 = vpop.f32.mrf.mxu0
      %v1460 = vadd.f32 0.0, %v1459
      %v1461 = vpop.f32.mrf.mxu0
      %v1462 = vadd.f32 0.0, %v1461
      %1463 = vmatmul.bf16.gmra.mxu0 %v1232
      %v1464 = vpop.f32.mrf.mxu0
      %v1465 = vadd.f32 0.0, %v1464
      %v1466 = vpop.f32.mrf.mxu0
      %v1467 = vadd.f32 0.0, %v1466
      %1468 = vmatmul.bf16.gmra.mxu0 %v1235
      %v1469 = vpop.f32.mrf.mxu0
      %v1470 = vadd.f32 0.0, %v1469
      %v1471 = vpop.f32.mrf.mxu0
      %v1472 = vadd.f32 0.0, %v1471
      %1473 = vmatmul.bf16.gmra.mxu0 %v1238
      %v1474 = vpop.f32.mrf.mxu0
      %v1475 = vadd.f32 0.0, %v1474
      %v1476 = vpop.f32.mrf.mxu0
      %v1477 = vadd.f32 0.0, %v1476
      %1478 = vmatmul.bf16.gmra.mxu0 %v1241
      %v1479 = vpop.f32.mrf.mxu0
      %v1480 = vadd.f32 0.0, %v1479
      %v1481 = vpop.f32.mrf.mxu0
      %v1482 = vadd.f32 0.0, %v1481
      %1483 = vmatmul.bf16.gmra.mxu0 %v1244
      %v1484 = vpop.f32.mrf.mxu0
      %v1485 = vadd.f32 0.0, %v1484
      %v1486 = vpop.f32.mrf.mxu0
      %v1487 = vadd.f32 0.0, %v1486
      %1488 = vmatmul.bf16.gmra.mxu0 %v1400
      %v1489 = vpop.f32.mrf.mxu0
      %v1490 = vadd.f32 0.0, %v1489
      %v1491 = vpop.f32.mrf.mxu0
      %v1492 = vadd.f32 0.0, %v1491
      %1493 = vdwg.mxu0
      %v1494 = vadd.f32 %v1338, %v1415
      %v1495 = vadd.f32 %v1339, %v1417
      %v1496 = vadd.f32 %v1340, %v1420
      %v1497 = vadd.f32 %v1341, %v1422
      %v1498 = vadd.f32 %v1342, %v1425
      %v1499 = vadd.f32 %v1343, %v1427
      %v1500 = vadd.f32 %v1344, %v1430
      %v1501 = vadd.f32 %v1345, %v1432
      %v1502 = vadd.f32 %v1346, %v1435
      %v1503 = vadd.f32 %v1347, %v1437
      %v1504 = vadd.f32 %v1348, %v1440
      %v1505 = vadd.f32 %v1349, %v1442
      %v1506 = vadd.f32 %v1350, %v1445
      %v1507 = vadd.f32 %v1351, %v1447
      %v1508 = vadd.f32 %v1352, %v1450
      %v1509 = vadd.f32 %v1353, %v1452
      %v1510 = vadd.f32 %v1354, %v1455
      %v1511 = vadd.f32 %v1355, %v1457
      %v1512 = vadd.f32 %v1356, %v1460
      %v1513 = vadd.f32 %v1357, %v1462
      %v1514 = vadd.f32 %v1358, %v1465
      %v1515 = vadd.f32 %v1359, %v1467
      %v1516 = vadd.f32 %v1360, %v1470
      %v1517 = vadd.f32 %v1361, %v1472
      %v1518 = vadd.f32 %v1362, %v1475
      %v1519 = vadd.f32 %v1363, %v1477
      %v1520 = vadd.f32 %v1364, %v1480
      %v1521 = vadd.f32 %v1365, %v1482
      %v1522 = vadd.f32 %v1366, %v1485
      %v1523 = vadd.f32 %v1367, %v1487
      %v1524 = vadd.f32 %v1368, %v1490
      %v1525 = vadd.f32 %v1369, %v1492
      %v1527 = vshrl.u32 %v758, 16
      %v1529 = vrot.slane %v1527, 4
      %v1530 = vshll.u32 %v758, 16
      %v1532 = vrot.slane %v1530, 5
      %v1533 = vor.u32 %v1529, %v1532
      %v1534 = vrot.slane %v1533, 4
      %v1536 = vshll.u32 %v759, 16
      %v1538 = vrot.slane %v1536, 5
      %v1539 = vsel %vm763, %v1534, %v1538
      %v1540 = vshrl.u32 %v759, 16
      %v1542 = vrot.slane %v1540, 4
      %v1543 = vor.u32 %v1542, %v1538
      %v1544 = vrot.slane %v1543, 4
      %v1546 = vshll.u32 %v760, 16
      %v1548 = vrot.slane %v1546, 5
      %v1549 = vsel %vm763, %v1544, %v1548
      %s1550 = scalar_lea.vmem %s1, 28
      %v1551 = vld [vmem:[%s1550] sm:$0xf]
      %v1552 = vunpack.c.l.b16 %v1539
      %v1553 = vunpack.c.l.b16 %v1549
      %v1554 = vpack.c.b16 %v1553, %v1552
      %v1556 = vsel %vm331, %v1554, 0
      %v1559 = vsel %vm380, %v1551, 0
      %1561 = vmatpush.bf16.msra.mxu0 0
      %1562 = vmatpush.bf16.msra.mxu0 0
      %1563 = vmatpush.bf16.msra.mxu0 0
      %1564 = vmatpush.bf16.msra.mxu0 0
      %1565 = vmatpush.bf16.msra.mxu0 0
      %1566 = vmatpush.bf16.msra.mxu0 0
      %1567 = vmatpush.bf16.msra.mxu0 0
      %1568 = vmatpush.bf16.msra.mxu0 %v1559
      %1569 = vmatmul.bf16.gmra.mxu0 %v1205
      %v1570 = vpop.f32.mrf.mxu0
      %v1571 = vadd.f32 0.0, %v1570
      %v1572 = vpop.f32.mrf.mxu0
      %v1573 = vadd.f32 0.0, %v1572
      %1574 = vmatmul.bf16.gmra.mxu0 %v1208
      %v1575 = vpop.f32.mrf.mxu0
      %v1576 = vadd.f32 0.0, %v1575
      %v1577 = vpop.f32.mrf.mxu0
      %v1578 = vadd.f32 0.0, %v1577
      %1579 = vmatmul.bf16.gmra.mxu0 %v1211
      %v1580 = vpop.f32.mrf.mxu0
      %v1581 = vadd.f32 0.0, %v1580
      %v1582 = vpop.f32.mrf.mxu0
      %v1583 = vadd.f32 0.0, %v1582
      %1584 = vmatmul.bf16.gmra.mxu0 %v1214
      %v1585 = vpop.f32.mrf.mxu0
      %v1586 = vadd.f32 0.0, %v1585
      %v1587 = vpop.f32.mrf.mxu0
      %v1588 = vadd.f32 0.0, %v1587
      %1589 = vmatmul.bf16.gmra.mxu0 %v1217
      %v1590 = vpop.f32.mrf.mxu0
      %v1591 = vadd.f32 0.0, %v1590
      %v1592 = vpop.f32.mrf.mxu0
      %v1593 = vadd.f32 0.0, %v1592
      %1594 = vmatmul.bf16.gmra.mxu0 %v1220
      %v1595 = vpop.f32.mrf.mxu0
      %v1596 = vadd.f32 0.0, %v1595
      %v1597 = vpop.f32.mrf.mxu0
      %v1598 = vadd.f32 0.0, %v1597
      %1599 = vmatmul.bf16.gmra.mxu0 %v1223
      %v1600 = vpop.f32.mrf.mxu0
      %v1601 = vadd.f32 0.0, %v1600
      %v1602 = vpop.f32.mrf.mxu0
      %v1603 = vadd.f32 0.0, %v1602
      %1604 = vmatmul.bf16.gmra.mxu0 %v1226
      %v1605 = vpop.f32.mrf.mxu0
      %v1606 = vadd.f32 0.0, %v1605
      %v1607 = vpop.f32.mrf.mxu0
      %v1608 = vadd.f32 0.0, %v1607
      %1609 = vmatmul.bf16.gmra.mxu0 %v1229
      %v1610 = vpop.f32.mrf.mxu0
      %v1611 = vadd.f32 0.0, %v1610
      %v1612 = vpop.f32.mrf.mxu0
      %v1613 = vadd.f32 0.0, %v1612
      %1614 = vmatmul.bf16.gmra.mxu0 %v1232
      %v1615 = vpop.f32.mrf.mxu0
      %v1616 = vadd.f32 0.0, %v1615
      %v1617 = vpop.f32.mrf.mxu0
      %v1618 = vadd.f32 0.0, %v1617
      %1619 = vmatmul.bf16.gmra.mxu0 %v1235
      %v1620 = vpop.f32.mrf.mxu0
      %v1621 = vadd.f32 0.0, %v1620
      %v1622 = vpop.f32.mrf.mxu0
      %v1623 = vadd.f32 0.0, %v1622
      %1624 = vmatmul.bf16.gmra.mxu0 %v1238
      %v1625 = vpop.f32.mrf.mxu0
      %v1626 = vadd.f32 0.0, %v1625
      %v1627 = vpop.f32.mrf.mxu0
      %v1628 = vadd.f32 0.0, %v1627
      %1629 = vmatmul.bf16.gmra.mxu0 %v1241
      %v1630 = vpop.f32.mrf.mxu0
      %v1631 = vadd.f32 0.0, %v1630
      %v1632 = vpop.f32.mrf.mxu0
      %v1633 = vadd.f32 0.0, %v1632
      %1634 = vmatmul.bf16.gmra.mxu0 %v1244
      %v1635 = vpop.f32.mrf.mxu0
      %v1636 = vadd.f32 0.0, %v1635
      %v1637 = vpop.f32.mrf.mxu0
      %v1638 = vadd.f32 0.0, %v1637
      %1639 = vmatmul.bf16.gmra.mxu0 %v1400
      %v1640 = vpop.f32.mrf.mxu0
      %v1641 = vadd.f32 0.0, %v1640
      %v1642 = vpop.f32.mrf.mxu0
      %v1643 = vadd.f32 0.0, %v1642
      %1644 = vmatmul.bf16.gmra.mxu0 %v1556
      %v1645 = vpop.f32.mrf.mxu0
      %v1646 = vadd.f32 0.0, %v1645
      %v1647 = vpop.f32.mrf.mxu0
      %v1648 = vadd.f32 0.0, %v1647
      %1649 = vdwg.mxu0
      %v1650 = vadd.f32 %v1494, %v1571
      %v1651 = vadd.f32 %v1495, %v1573
      %v1652 = vadd.f32 %v1496, %v1576
      %v1653 = vadd.f32 %v1497, %v1578
      %v1654 = vadd.f32 %v1498, %v1581
      %v1655 = vadd.f32 %v1499, %v1583
      %v1656 = vadd.f32 %v1500, %v1586
      %v1657 = vadd.f32 %v1501, %v1588
      %v1658 = vadd.f32 %v1502, %v1591
      %v1659 = vadd.f32 %v1503, %v1593
      %v1660 = vadd.f32 %v1504, %v1596
      %v1661 = vadd.f32 %v1505, %v1598
      %v1662 = vadd.f32 %v1506, %v1601
      %v1663 = vadd.f32 %v1507, %v1603
      %v1664 = vadd.f32 %v1508, %v1606
      %v1665 = vadd.f32 %v1509, %v1608
      %v1666 = vadd.f32 %v1510, %v1611
      %v1667 = vadd.f32 %v1511, %v1613
      %v1668 = vadd.f32 %v1512, %v1616
      %v1669 = vadd.f32 %v1513, %v1618
      %v1670 = vadd.f32 %v1514, %v1621
      %v1671 = vadd.f32 %v1515, %v1623
      %v1672 = vadd.f32 %v1516, %v1626
      %v1673 = vadd.f32 %v1517, %v1628
      %v1674 = vadd.f32 %v1518, %v1631
      %v1675 = vadd.f32 %v1519, %v1633
      %v1676 = vadd.f32 %v1520, %v1636
      %v1677 = vadd.f32 %v1521, %v1638
      %v1678 = vadd.f32 %v1522, %v1641
      %v1679 = vadd.f32 %v1523, %v1643
      %v1680 = vadd.f32 %v1524, %v1646
      %v1681 = vadd.f32 %v1525, %v1648
      %v1682 = vld [vmem:[%s200] sm:$0xe]
      %v1683 = vld [vmem:[%s200 + $0xc] sm:$0xe]
      %v1684 = vld [vmem:[%s200 + $0x18] sm:$0xe]
      %v1685 = vld [vmem:[%s200 + $0x24] sm:$0xe]
      %v1686 = vld [vmem:[%s200 + $0x30] sm:$0xe]
      %v1687 = vld [vmem:[%s200 + $0x3c] sm:$0xe]
      %v1688 = vld [vmem:[%s200 + $0x48] sm:$0xe]
      %v1689 = vld [vmem:[%s200 + $0x54] sm:$0xe]
      %v1690 = vld [vmem:[%s200 + $0x60] sm:$0xe]
      %v1691 = vld [vmem:[%s200 + $0x6c] sm:$0xe]
      %v1692 = vld [vmem:[%s200 + $0x78] sm:$0xe]
      %v1693 = vld [vmem:[%s200 + $0x84] sm:$0xe]
      %v1694 = vld [vmem:[%s200 + $0x90] sm:$0xe]
      %v1695 = vld [vmem:[%s200 + $0x9c] sm:$0xe]
      %v1696 = vld [vmem:[%s200 + $0xa8] sm:$0xe]
      %v1697 = vld [vmem:[%s200 + $0xb4] sm:$0xe]
      %v1698 = vld [vmem:[%s200 + $0xc0] sm:$0xe]
      %v1699 = vld [vmem:[%s200 + $0xcc] sm:$0xe]
      %vm1748 = vcmask 1042432
      %vm1749 = vcmask 1046532
      %vm1750 = vmor %vm1748, %vm1749
      %v1751 = vrot.slane %v1682, 5
      %v1752 = vrot.slane %v1751, 4
      %v1753 = vrot.slane %v708, 5
      %v1754 = vsel %vm1750, %v1752, %v1753
      %v1755 = vrot.slane %v1753, 4
      %v1756 = vrot.slane %v709, 5
      %v1757 = vsel %vm1750, %v1755, %v1756
      %v1758 = vrot.slane %v1683, 5
      %v1759 = vrot.slane %v1758, 4
      %v1760 = vrot.slane %v711, 5
      %v1761 = vsel %vm1750, %v1759, %v1760
      %v1762 = vrot.slane %v1760, 4
      %v1763 = vrot.slane %v712, 5
      %v1764 = vsel %vm1750, %v1762, %v1763
      %v1765 = vrot.slane %v1684, 5
      %v1766 = vrot.slane %v1765, 4
      %v1767 = vrot.slane %v714, 5
      %v1768 = vsel %vm1750, %v1766, %v1767
      %v1769 = vrot.slane %v1767, 4
      %v1770 = vrot.slane %v715, 5
      %v1771 = vsel %vm1750, %v1769, %v1770
      %v1772 = vrot.slane %v1685, 5
      %v1773 = vrot.slane %v1772, 4
      %v1774 = vrot.slane %v717, 5
      %v1775 = vsel %vm1750, %v1773, %v1774
      %v1776 = vrot.slane %v1774, 4
      %v1777 = vrot.slane %v718, 5
      %v1778 = vsel %vm1750, %v1776, %v1777
      %v1779 = vrot.slane %v1686, 5
      %v1780 = vrot.slane %v1779, 4
      %v1781 = vrot.slane %v720, 5
      %v1782 = vsel %vm1750, %v1780, %v1781
      %v1783 = vrot.slane %v1781, 4
      %v1784 = vrot.slane %v721, 5
      %v1785 = vsel %vm1750, %v1783, %v1784
      %v1786 = vrot.slane %v1687, 5
      %v1787 = vrot.slane %v1786, 4
      %v1788 = vrot.slane %v723, 5
      %v1789 = vsel %vm1750, %v1787, %v1788
      %v1790 = vrot.slane %v1788, 4
      %v1791 = vrot.slane %v724, 5
      %v1792 = vsel %vm1750, %v1790, %v1791
      %v1793 = vrot.slane %v1688, 5
      %v1794 = vrot.slane %v1793, 4
      %v1795 = vrot.slane %v726, 5
      %v1796 = vsel %vm1750, %v1794, %v1795
      %v1797 = vrot.slane %v1795, 4
      %v1798 = vrot.slane %v727, 5
      %v1799 = vsel %vm1750, %v1797, %v1798
      %v1800 = vrot.slane %v1689, 5
      %v1801 = vrot.slane %v1800, 4
      %v1802 = vrot.slane %v729, 5
      %v1803 = vsel %vm1750, %v1801, %v1802
      %v1804 = vrot.slane %v1802, 4
      %v1805 = vrot.slane %v730, 5
      %v1806 = vsel %vm1750, %v1804, %v1805
      %v1807 = vrot.slane %v1690, 5
      %v1808 = vrot.slane %v1807, 4
      %v1809 = vrot.slane %v732, 5
      %v1810 = vsel %vm1750, %v1808, %v1809
      %v1811 = vrot.slane %v1809, 4
      %v1812 = vrot.slane %v733, 5
      %v1813 = vsel %vm1750, %v1811, %v1812
      %v1814 = vrot.slane %v1691, 5
      %v1815 = vrot.slane %v1814, 4
      %v1816 = vrot.slane %v735, 5
      %v1817 = vsel %vm1750, %v1815, %v1816
      %v1818 = vrot.slane %v1816, 4
      %v1819 = vrot.slane %v736, 5
      %v1820 = vsel %vm1750, %v1818, %v1819
      %v1821 = vrot.slane %v1692, 5
      %v1822 = vrot.slane %v1821, 4
      %v1823 = vrot.slane %v738, 5
      %v1824 = vsel %vm1750, %v1822, %v1823
      %v1825 = vrot.slane %v1823, 4
      %v1826 = vrot.slane %v739, 5
      %v1827 = vsel %vm1750, %v1825, %v1826
      %v1828 = vrot.slane %v1693, 5
      %v1829 = vrot.slane %v1828, 4
      %v1830 = vrot.slane %v741, 5
      %v1831 = vsel %vm1750, %v1829, %v1830
      %v1832 = vrot.slane %v1830, 4
      %v1833 = vrot.slane %v742, 5
      %v1834 = vsel %vm1750, %v1832, %v1833
      %v1835 = vrot.slane %v1694, 5
      %v1836 = vrot.slane %v1835, 4
      %v1837 = vrot.slane %v744, 5
      %v1838 = vsel %vm1750, %v1836, %v1837
      %v1839 = vrot.slane %v1837, 4
      %v1840 = vrot.slane %v745, 5
      %v1841 = vsel %vm1750, %v1839, %v1840
      %v1842 = vrot.slane %v1695, 5
      %v1843 = vrot.slane %v1842, 4
      %v1844 = vrot.slane %v747, 5
      %v1845 = vsel %vm1750, %v1843, %v1844
      %v1846 = vrot.slane %v1844, 4
      %v1847 = vrot.slane %v748, 5
      %v1848 = vsel %vm1750, %v1846, %v1847
      %v1849 = vrot.slane %v1696, 5
      %v1850 = vrot.slane %v1849, 4
      %v1851 = vrot.slane %v750, 5
      %v1852 = vsel %vm1750, %v1850, %v1851
      %v1853 = vrot.slane %v1851, 4
      %v1854 = vrot.slane %v751, 5
      %v1855 = vsel %vm1750, %v1853, %v1854
      %v1856 = vrot.slane %v1697, 5
      %v1857 = vrot.slane %v1856, 4
      %v1858 = vrot.slane %v753, 5
      %v1859 = vsel %vm1750, %v1857, %v1858
      %v1860 = vrot.slane %v1858, 4
      %v1861 = vrot.slane %v754, 5
      %v1862 = vsel %vm1750, %v1860, %v1861
      %s1863 = scalar_lea.vmem %s1, 8
      %v1864 = vld [vmem:[%s1863] sm:$0xf]
      %v1865 = vunpack.c.l.b16 %v1754
      %v1866 = vunpack.c.l.b16 %v1757
      %v1867 = vunpack.c.l.b16 %v1761
      %v1868 = vunpack.c.l.b16 %v1764
      %v1869 = vunpack.c.l.b16 %v1768
      %v1870 = vunpack.c.l.b16 %v1771
      %v1871 = vunpack.c.l.b16 %v1775
      %v1872 = vunpack.c.l.b16 %v1778
      %v1873 = vunpack.c.l.b16 %v1782
      %v1874 = vunpack.c.l.b16 %v1785
      %v1875 = vunpack.c.l.b16 %v1789
      %v1876 = vunpack.c.l.b16 %v1792
      %v1877 = vunpack.c.l.b16 %v1796
      %v1878 = vunpack.c.l.b16 %v1799
      %v1879 = vunpack.c.l.b16 %v1803
      %v1880 = vunpack.c.l.b16 %v1806
      %v1881 = vunpack.c.l.b16 %v1810
      %v1882 = vunpack.c.l.b16 %v1813
      %v1883 = vunpack.c.l.b16 %v1817
      %v1884 = vunpack.c.l.b16 %v1820
      %v1885 = vunpack.c.l.b16 %v1824
      %v1886 = vunpack.c.l.b16 %v1827
      %v1887 = vunpack.c.l.b16 %v1831
      %v1888 = vunpack.c.l.b16 %v1834
      %v1889 = vunpack.c.l.b16 %v1838
      %v1890 = vunpack.c.l.b16 %v1841
      %v1891 = vunpack.c.l.b16 %v1845
      %v1892 = vunpack.c.l.b16 %v1848
      %v1893 = vunpack.c.l.b16 %v1852
      %v1894 = vunpack.c.l.b16 %v1855
      %v1895 = vunpack.c.l.b16 %v1859
      %v1896 = vunpack.c.l.b16 %v1862
      %v1897 = vpack.c.b16 %v1866, %v1865
      %v1898 = vpack.c.b16 %v1868, %v1867
      %v1899 = vpack.c.b16 %v1870, %v1869
      %v1900 = vpack.c.b16 %v1872, %v1871
      %v1901 = vpack.c.b16 %v1874, %v1873
      %v1902 = vpack.c.b16 %v1876, %v1875
      %v1903 = vpack.c.b16 %v1878, %v1877
      %v1904 = vpack.c.b16 %v1880, %v1879
      %v1905 = vpack.c.b16 %v1882, %v1881
      %v1906 = vpack.c.b16 %v1884, %v1883
      %v1907 = vpack.c.b16 %v1886, %v1885
      %v1908 = vpack.c.b16 %v1888, %v1887
      %v1909 = vpack.c.b16 %v1890, %v1889
      %v1910 = vpack.c.b16 %v1892, %v1891
      %v1911 = vpack.c.b16 %v1894, %v1893
      %v1912 = vpack.c.b16 %v1896, %v1895
      %v1914 = vsel %vm331, %v1897, 0
      %v1917 = vsel %vm331, %v1898, 0
      %v1920 = vsel %vm331, %v1899, 0
      %v1923 = vsel %vm331, %v1900, 0
      %v1926 = vsel %vm331, %v1901, 0
      %v1929 = vsel %vm331, %v1902, 0
      %v1932 = vsel %vm331, %v1903, 0
      %v1935 = vsel %vm331, %v1904, 0
      %v1938 = vsel %vm331, %v1905, 0
      %v1941 = vsel %vm331, %v1906, 0
      %v1944 = vsel %vm331, %v1907, 0
      %v1947 = vsel %vm331, %v1908, 0
      %v1950 = vsel %vm331, %v1909, 0
      %v1953 = vsel %vm331, %v1910, 0
      %v1956 = vsel %vm331, %v1911, 0
      %v1959 = vsel %vm331, %v1912, 0
      %v1962 = vsel %vm380, %v1864, 0
      %1964 = vmatpush.bf16.msra.mxu0 0
      %1965 = vmatpush.bf16.msra.mxu0 0
      %1966 = vmatpush.bf16.msra.mxu0 0
      %1967 = vmatpush.bf16.msra.mxu0 0
      %1968 = vmatpush.bf16.msra.mxu0 0
      %1969 = vmatpush.bf16.msra.mxu0 0
      %1970 = vmatpush.bf16.msra.mxu0 0
      %1971 = vmatpush.bf16.msra.mxu0 %v1962
      %1972 = vmatmul.bf16.gmra.mxu0 %v1914
      %v1973 = vpop.f32.mrf.mxu0
      %v1974 = vadd.f32 0.0, %v1973
      %v1975 = vpop.f32.mrf.mxu0
      %v1976 = vadd.f32 0.0, %v1975
      %1977 = vmatmul.bf16.gmra.mxu0 %v1917
      %v1978 = vpop.f32.mrf.mxu0
      %v1979 = vadd.f32 0.0, %v1978
      %v1980 = vpop.f32.mrf.mxu0
      %v1981 = vadd.f32 0.0, %v1980
      %1982 = vmatmul.bf16.gmra.mxu0 %v1920
      %v1983 = vpop.f32.mrf.mxu0
      %v1984 = vadd.f32 0.0, %v1983
      %v1985 = vpop.f32.mrf.mxu0
      %v1986 = vadd.f32 0.0, %v1985
      %1987 = vmatmul.bf16.gmra.mxu0 %v1923
      %v1988 = vpop.f32.mrf.mxu0
      %v1989 = vadd.f32 0.0, %v1988
      %v1990 = vpop.f32.mrf.mxu0
      %v1991 = vadd.f32 0.0, %v1990
      %1992 = vmatmul.bf16.gmra.mxu0 %v1926
      %v1993 = vpop.f32.mrf.mxu0
      %v1994 = vadd.f32 0.0, %v1993
      %v1995 = vpop.f32.mrf.mxu0
      %v1996 = vadd.f32 0.0, %v1995
      %1997 = vmatmul.bf16.gmra.mxu0 %v1929
      %v1998 = vpop.f32.mrf.mxu0
      %v1999 = vadd.f32 0.0, %v1998
      %v2000 = vpop.f32.mrf.mxu0
      %v2001 = vadd.f32 0.0, %v2000
      %2002 = vmatmul.bf16.gmra.mxu0 %v1932
      %v2003 = vpop.f32.mrf.mxu0
      %v2004 = vadd.f32 0.0, %v2003
      %v2005 = vpop.f32.mrf.mxu0
      %v2006 = vadd.f32 0.0, %v2005
      %2007 = vmatmul.bf16.gmra.mxu0 %v1935
      %v2008 = vpop.f32.mrf.mxu0
      %v2009 = vadd.f32 0.0, %v2008
      %v2010 = vpop.f32.mrf.mxu0
      %v2011 = vadd.f32 0.0, %v2010
      %2012 = vmatmul.bf16.gmra.mxu0 %v1938
      %v2013 = vpop.f32.mrf.mxu0
      %v2014 = vadd.f32 0.0, %v2013
      %v2015 = vpop.f32.mrf.mxu0
      %v2016 = vadd.f32 0.0, %v2015
      %2017 = vmatmul.bf16.gmra.mxu0 %v1941
      %v2018 = vpop.f32.mrf.mxu0
      %v2019 = vadd.f32 0.0, %v2018
      %v2020 = vpop.f32.mrf.mxu0
      %v2021 = vadd.f32 0.0, %v2020
      %2022 = vmatmul.bf16.gmra.mxu0 %v1944
      %v2023 = vpop.f32.mrf.mxu0
      %v2024 = vadd.f32 0.0, %v2023
      %v2025 = vpop.f32.mrf.mxu0
      %v2026 = vadd.f32 0.0, %v2025
      %2027 = vmatmul.bf16.gmra.mxu0 %v1947
      %v2028 = vpop.f32.mrf.mxu0
      %v2029 = vadd.f32 0.0, %v2028
      %v2030 = vpop.f32.mrf.mxu0
      %v2031 = vadd.f32 0.0, %v2030
      %2032 = vmatmul.bf16.gmra.mxu0 %v1950
      %v2033 = vpop.f32.mrf.mxu0
      %v2034 = vadd.f32 0.0, %v2033
      %v2035 = vpop.f32.mrf.mxu0
      %v2036 = vadd.f32 0.0, %v2035
      %2037 = vmatmul.bf16.gmra.mxu0 %v1953
      %v2038 = vpop.f32.mrf.mxu0
      %v2039 = vadd.f32 0.0, %v2038
      %v2040 = vpop.f32.mrf.mxu0
      %v2041 = vadd.f32 0.0, %v2040
      %2042 = vmatmul.bf16.gmra.mxu0 %v1956
      %v2043 = vpop.f32.mrf.mxu0
      %v2044 = vadd.f32 0.0, %v2043
      %v2045 = vpop.f32.mrf.mxu0
      %v2046 = vadd.f32 0.0, %v2045
      %2047 = vmatmul.bf16.gmra.mxu0 %v1959
      %v2048 = vpop.f32.mrf.mxu0
      %v2049 = vadd.f32 0.0, %v2048
      %v2050 = vpop.f32.mrf.mxu0
      %v2051 = vadd.f32 0.0, %v2050
      %2052 = vdwg.mxu0
      %v2053 = vadd.f32 %v1650, %v1974
      %v2054 = vadd.f32 %v1651, %v1976
      %v2055 = vadd.f32 %v1652, %v1979
      %v2056 = vadd.f32 %v1653, %v1981
      %v2057 = vadd.f32 %v1654, %v1984
      %v2058 = vadd.f32 %v1655, %v1986
      %v2059 = vadd.f32 %v1656, %v1989
      %v2060 = vadd.f32 %v1657, %v1991
      %v2061 = vadd.f32 %v1658, %v1994
      %v2062 = vadd.f32 %v1659, %v1996
      %v2063 = vadd.f32 %v1660, %v1999
      %v2064 = vadd.f32 %v1661, %v2001
      %v2065 = vadd.f32 %v1662, %v2004
      %v2066 = vadd.f32 %v1663, %v2006
      %v2067 = vadd.f32 %v1664, %v2009
      %v2068 = vadd.f32 %v1665, %v2011
      %v2069 = vadd.f32 %v1666, %v2014
      %v2070 = vadd.f32 %v1667, %v2016
      %v2071 = vadd.f32 %v1668, %v2019
      %v2072 = vadd.f32 %v1669, %v2021
      %v2073 = vadd.f32 %v1670, %v2024
      %v2074 = vadd.f32 %v1671, %v2026
      %v2075 = vadd.f32 %v1672, %v2029
      %v2076 = vadd.f32 %v1673, %v2031
      %v2077 = vadd.f32 %v1674, %v2034
      %v2078 = vadd.f32 %v1675, %v2036
      %v2079 = vadd.f32 %v1676, %v2039
      %v2080 = vadd.f32 %v1677, %v2041
      %v2081 = vadd.f32 %v1678, %v2044
      %v2082 = vadd.f32 %v1679, %v2046
      %v2083 = vadd.f32 %v1680, %v2049
      %v2084 = vadd.f32 %v1681, %v2051
      %v2088 = vrot.slane %v1698, 5
      %v2089 = vrot.slane %v2088, 4
      %v2090 = vrot.slane %v756, 5
      %v2091 = vsel %vm1750, %v2089, %v2090
      %v2092 = vrot.slane %v2090, 4
      %v2093 = vrot.slane %v757, 5
      %v2094 = vsel %vm1750, %v2092, %v2093
      %s2095 = scalar_lea.vmem %s1, 20
      %v2096 = vld [vmem:[%s2095] sm:$0xf]
      %v2097 = vunpack.c.l.b16 %v2091
      %v2098 = vunpack.c.l.b16 %v2094
      %v2099 = vpack.c.b16 %v2098, %v2097
      %v2101 = vsel %vm331, %v2099, 0
      %v2104 = vsel %vm380, %v2096, 0
      %2106 = vmatpush.bf16.msra.mxu0 0
      %2107 = vmatpush.bf16.msra.mxu0 0
      %2108 = vmatpush.bf16.msra.mxu0 0
      %2109 = vmatpush.bf16.msra.mxu0 0
      %2110 = vmatpush.bf16.msra.mxu0 0
      %2111 = vmatpush.bf16.msra.mxu0 0
      %2112 = vmatpush.bf16.msra.mxu0 0
      %2113 = vmatpush.bf16.msra.mxu0 %v2104
      %2114 = vmatmul.bf16.gmra.mxu0 %v1917
      %v2115 = vpop.f32.mrf.mxu0
      %v2116 = vadd.f32 0.0, %v2115
      %v2117 = vpop.f32.mrf.mxu0
      %v2118 = vadd.f32 0.0, %v2117
      %2119 = vmatmul.bf16.gmra.mxu0 %v1920
      %v2120 = vpop.f32.mrf.mxu0
      %v2121 = vadd.f32 0.0, %v2120
      %v2122 = vpop.f32.mrf.mxu0
      %v2123 = vadd.f32 0.0, %v2122
      %2124 = vmatmul.bf16.gmra.mxu0 %v1923
      %v2125 = vpop.f32.mrf.mxu0
      %v2126 = vadd.f32 0.0, %v2125
      %v2127 = vpop.f32.mrf.mxu0
      %v2128 = vadd.f32 0.0, %v2127
      %2129 = vmatmul.bf16.gmra.mxu0 %v1926
      %v2130 = vpop.f32.mrf.mxu0
      %v2131 = vadd.f32 0.0, %v2130
      %v2132 = vpop.f32.mrf.mxu0
      %v2133 = vadd.f32 0.0, %v2132
      %2134 = vmatmul.bf16.gmra.mxu0 %v1929
      %v2135 = vpop.f32.mrf.mxu0
      %v2136 = vadd.f32 0.0, %v2135
      %v2137 = vpop.f32.mrf.mxu0
      %v2138 = vadd.f32 0.0, %v2137
      %2139 = vmatmul.bf16.gmra.mxu0 %v1932
      %v2140 = vpop.f32.mrf.mxu0
      %v2141 = vadd.f32 0.0, %v2140
      %v2142 = vpop.f32.mrf.mxu0
      %v2143 = vadd.f32 0.0, %v2142
      %2144 = vmatmul.bf16.gmra.mxu0 %v1935
      %v2145 = vpop.f32.mrf.mxu0
      %v2146 = vadd.f32 0.0, %v2145
      %v2147 = vpop.f32.mrf.mxu0
      %v2148 = vadd.f32 0.0, %v2147
      %2149 = vmatmul.bf16.gmra.mxu0 %v1938
      %v2150 = vpop.f32.mrf.mxu0
      %v2151 = vadd.f32 0.0, %v2150
      %v2152 = vpop.f32.mrf.mxu0
      %v2153 = vadd.f32 0.0, %v2152
      %2154 = vmatmul.bf16.gmra.mxu0 %v1941
      %v2155 = vpop.f32.mrf.mxu0
      %v2156 = vadd.f32 0.0, %v2155
      %v2157 = vpop.f32.mrf.mxu0
      %v2158 = vadd.f32 0.0, %v2157
      %2159 = vmatmul.bf16.gmra.mxu0 %v1944
      %v2160 = vpop.f32.mrf.mxu0
      %v2161 = vadd.f32 0.0, %v2160
      %v2162 = vpop.f32.mrf.mxu0
      %v2163 = vadd.f32 0.0, %v2162
      %2164 = vmatmul.bf16.gmra.mxu0 %v1947
      %v2165 = vpop.f32.mrf.mxu0
      %v2166 = vadd.f32 0.0, %v2165
      %v2167 = vpop.f32.mrf.mxu0
      %v2168 = vadd.f32 0.0, %v2167
      %2169 = vmatmul.bf16.gmra.mxu0 %v1950
      %v2170 = vpop.f32.mrf.mxu0
      %v2171 = vadd.f32 0.0, %v2170
      %v2172 = vpop.f32.mrf.mxu0
      %v2173 = vadd.f32 0.0, %v2172
      %2174 = vmatmul.bf16.gmra.mxu0 %v1953
      %v2175 = vpop.f32.mrf.mxu0
      %v2176 = vadd.f32 0.0, %v2175
      %v2177 = vpop.f32.mrf.mxu0
      %v2178 = vadd.f32 0.0, %v2177
      %2179 = vmatmul.bf16.gmra.mxu0 %v1956
      %v2180 = vpop.f32.mrf.mxu0
      %v2181 = vadd.f32 0.0, %v2180
      %v2182 = vpop.f32.mrf.mxu0
      %v2183 = vadd.f32 0.0, %v2182
      %2184 = vmatmul.bf16.gmra.mxu0 %v1959
      %v2185 = vpop.f32.mrf.mxu0
      %v2186 = vadd.f32 0.0, %v2185
      %v2187 = vpop.f32.mrf.mxu0
      %v2188 = vadd.f32 0.0, %v2187
      %2189 = vmatmul.bf16.gmra.mxu0 %v2101
      %v2190 = vpop.f32.mrf.mxu0
      %v2191 = vadd.f32 0.0, %v2190
      %v2192 = vpop.f32.mrf.mxu0
      %v2193 = vadd.f32 0.0, %v2192
      %2194 = vdwg.mxu0
      %v2195 = vadd.f32 %v2053, %v2116
      %v2196 = vadd.f32 %v2054, %v2118
      %v2197 = vadd.f32 %v2055, %v2121
      %v2198 = vadd.f32 %v2056, %v2123
      %v2199 = vadd.f32 %v2057, %v2126
      %v2200 = vadd.f32 %v2058, %v2128
      %v2201 = vadd.f32 %v2059, %v2131
      %v2202 = vadd.f32 %v2060, %v2133
      %v2203 = vadd.f32 %v2061, %v2136
      %v2204 = vadd.f32 %v2062, %v2138
      %v2205 = vadd.f32 %v2063, %v2141
      %v2206 = vadd.f32 %v2064, %v2143
      %v2207 = vadd.f32 %v2065, %v2146
      %v2208 = vadd.f32 %v2066, %v2148
      %v2209 = vadd.f32 %v2067, %v2151
      %v2210 = vadd.f32 %v2068, %v2153
      %v2211 = vadd.f32 %v2069, %v2156
      %v2212 = vadd.f32 %v2070, %v2158
      %v2213 = vadd.f32 %v2071, %v2161
      %v2214 = vadd.f32 %v2072, %v2163
      %v2215 = vadd.f32 %v2073, %v2166
      %v2216 = vadd.f32 %v2074, %v2168
      %v2217 = vadd.f32 %v2075, %v2171
      %v2218 = vadd.f32 %v2076, %v2173
      %v2219 = vadd.f32 %v2077, %v2176
      %v2220 = vadd.f32 %v2078, %v2178
      %v2221 = vadd.f32 %v2079, %v2181
      %v2222 = vadd.f32 %v2080, %v2183
      %v2223 = vadd.f32 %v2081, %v2186
      %v2224 = vadd.f32 %v2082, %v2188
      %v2225 = vadd.f32 %v2083, %v2191
      %v2226 = vadd.f32 %v2084, %v2193
      %v2230 = vrot.slane %v1699, 5
      %v2231 = vrot.slane %v2230, 4
      %v2232 = vrot.slane %v759, 5
      %v2233 = vsel %vm1750, %v2231, %v2232
      %v2234 = vrot.slane %v2232, 4
      %v2235 = vrot.slane %v760, 5
      %v2236 = vsel %vm1750, %v2234, %v2235
      %s2237 = scalar_lea.vmem %s1, 32
      %v2238 = vld [vmem:[%s2237] sm:$0xf]
      %v2239 = vunpack.c.l.b16 %v2233
      %v2240 = vunpack.c.l.b16 %v2236
      %v2241 = vpack.c.b16 %v2240, %v2239
      %v2243 = vsel %vm331, %v2241, 0
      %v2246 = vsel %vm380, %v2238, 0
      %2248 = vmatpush.bf16.msra.mxu0 0
      %2249 = vmatpush.bf16.msra.mxu0 0
      %2250 = vmatpush.bf16.msra.mxu0 0
      %2251 = vmatpush.bf16.msra.mxu0 0
      %2252 = vmatpush.bf16.msra.mxu0 0
      %2253 = vmatpush.bf16.msra.mxu0 0
      %2254 = vmatpush.bf16.msra.mxu0 0
      %2255 = vmatpush.bf16.msra.mxu0 %v2246
      %2256 = vmatmul.bf16.gmra.mxu0 %v1920
      %v2257 = vpop.f32.mrf.mxu0
      %v2258 = vadd.f32 0.0, %v2257
      %v2259 = vpop.f32.mrf.mxu0
      %v2260 = vadd.f32 0.0, %v2259
      %2261 = vmatmul.bf16.gmra.mxu0 %v1923
      %v2262 = vpop.f32.mrf.mxu0
      %v2263 = vadd.f32 0.0, %v2262
      %v2264 = vpop.f32.mrf.mxu0
      %v2265 = vadd.f32 0.0, %v2264
      %2266 = vmatmul.bf16.gmra.mxu0 %v1926
      %v2267 = vpop.f32.mrf.mxu0
      %v2268 = vadd.f32 0.0, %v2267
      %v2269 = vpop.f32.mrf.mxu0
      %v2270 = vadd.f32 0.0, %v2269
      %2271 = vmatmul.bf16.gmra.mxu0 %v1929
      %v2272 = vpop.f32.mrf.mxu0
      %v2273 = vadd.f32 0.0, %v2272
      %v2274 = vpop.f32.mrf.mxu0
      %v2275 = vadd.f32 0.0, %v2274
      %2276 = vmatmul.bf16.gmra.mxu0 %v1932
      %v2277 = vpop.f32.mrf.mxu0
      %v2278 = vadd.f32 0.0, %v2277
      %v2279 = vpop.f32.mrf.mxu0
      %v2280 = vadd.f32 0.0, %v2279
      %2281 = vmatmul.bf16.gmra.mxu0 %v1935
      %v2282 = vpop.f32.mrf.mxu0
      %v2283 = vadd.f32 0.0, %v2282
      %v2284 = vpop.f32.mrf.mxu0
      %v2285 = vadd.f32 0.0, %v2284
      %2286 = vmatmul.bf16.gmra.mxu0 %v1938
      %v2287 = vpop.f32.mrf.mxu0
      %v2288 = vadd.f32 0.0, %v2287
      %v2289 = vpop.f32.mrf.mxu0
      %v2290 = vadd.f32 0.0, %v2289
      %2291 = vmatmul.bf16.gmra.mxu0 %v1941
      %v2292 = vpop.f32.mrf.mxu0
      %v2293 = vadd.f32 0.0, %v2292
      %v2294 = vpop.f32.mrf.mxu0
      %v2295 = vadd.f32 0.0, %v2294
      %2296 = vmatmul.bf16.gmra.mxu0 %v1944
      %v2297 = vpop.f32.mrf.mxu0
      %v2298 = vadd.f32 0.0, %v2297
      %v2299 = vpop.f32.mrf.mxu0
      %v2300 = vadd.f32 0.0, %v2299
      %2301 = vmatmul.bf16.gmra.mxu0 %v1947
      %v2302 = vpop.f32.mrf.mxu0
      %v2303 = vadd.f32 0.0, %v2302
      %v2304 = vpop.f32.mrf.mxu0
      %v2305 = vadd.f32 0.0, %v2304
      %2306 = vmatmul.bf16.gmra.mxu0 %v1950
      %v2307 = vpop.f32.mrf.mxu0
      %v2308 = vadd.f32 0.0, %v2307
      %v2309 = vpop.f32.mrf.mxu0
      %v2310 = vadd.f32 0.0, %v2309
      %2311 = vmatmul.bf16.gmra.mxu0 %v1953
      %v2312 = vpop.f32.mrf.mxu0
      %v2313 = vadd.f32 0.0, %v2312
      %v2314 = vpop.f32.mrf.mxu0
      %v2315 = vadd.f32 0.0, %v2314
      %2316 = vmatmul.bf16.gmra.mxu0 %v1956
      %v2317 = vpop.f32.mrf.mxu0
      %v2318 = vadd.f32 0.0, %v2317
      %v2319 = vpop.f32.mrf.mxu0
      %v2320 = vadd.f32 0.0, %v2319
      %2321 = vmatmul.bf16.gmra.mxu0 %v1959
      %v2322 = vpop.f32.mrf.mxu0
      %v2323 = vadd.f32 0.0, %v2322
      %v2324 = vpop.f32.mrf.mxu0
      %v2325 = vadd.f32 0.0, %v2324
      %2326 = vmatmul.bf16.gmra.mxu0 %v2101
      %v2327 = vpop.f32.mrf.mxu0
      %v2328 = vadd.f32 0.0, %v2327
      %v2329 = vpop.f32.mrf.mxu0
      %v2330 = vadd.f32 0.0, %v2329
      %2331 = vmatmul.bf16.gmra.mxu0 %v2243
      %v2332 = vpop.f32.mrf.mxu0
      %v2333 = vadd.f32 0.0, %v2332
      %v2334 = vpop.f32.mrf.mxu0
      %v2335 = vadd.f32 0.0, %v2334
      %2336 = vdwg.mxu0
      %v2337 = vadd.f32 %v2195, %v2258
      %v2338 = vadd.f32 %v2196, %v2260
      %v2339 = vadd.f32 %v2197, %v2263
      %v2340 = vadd.f32 %v2198, %v2265
      %v2341 = vadd.f32 %v2199, %v2268
      %v2342 = vadd.f32 %v2200, %v2270
      %v2343 = vadd.f32 %v2201, %v2273
      %v2344 = vadd.f32 %v2202, %v2275
      %v2345 = vadd.f32 %v2203, %v2278
      %v2346 = vadd.f32 %v2204, %v2280
      %v2347 = vadd.f32 %v2205, %v2283
      %v2348 = vadd.f32 %v2206, %v2285
      %v2349 = vadd.f32 %v2207, %v2288
      %v2350 = vadd.f32 %v2208, %v2290
      %v2351 = vadd.f32 %v2209, %v2293
      %v2352 = vadd.f32 %v2210, %v2295
      %v2353 = vadd.f32 %v2211, %v2298
      %v2354 = vadd.f32 %v2212, %v2300
      %v2355 = vadd.f32 %v2213, %v2303
      %v2356 = vadd.f32 %v2214, %v2305
      %v2357 = vadd.f32 %v2215, %v2308
      %v2358 = vadd.f32 %v2216, %v2310
      %v2359 = vadd.f32 %v2217, %v2313
      %v2360 = vadd.f32 %v2218, %v2315
      %v2361 = vadd.f32 %v2219, %v2318
      %v2362 = vadd.f32 %v2220, %v2320
      %v2363 = vadd.f32 %v2221, %v2323
      %v2364 = vadd.f32 %v2222, %v2325
      %v2365 = vadd.f32 %v2223, %v2328
      %v2366 = vadd.f32 %v2224, %v2330
      %v2367 = vadd.f32 %v2225, %v2333
      %v2368 = vadd.f32 %v2226, %v2335
      %v2369 = vld [vmem:[%s2] sm:$0x1]
      %v2371 = vperm.slane %v2369, 0
      %v2373 = vadd.f32 %v2337, %v2371
      %v2374 = vadd.f32 %v2338, %v2371
      %v2375 = vadd.f32 %v2339, %v2371
      %v2376 = vadd.f32 %v2340, %v2371
      %v2377 = vadd.f32 %v2341, %v2371
      %v2378 = vadd.f32 %v2342, %v2371
      %v2379 = vadd.f32 %v2343, %v2371
      %v2380 = vadd.f32 %v2344, %v2371
      %v2381 = vadd.f32 %v2345, %v2371
      %v2382 = vadd.f32 %v2346, %v2371
      %v2383 = vadd.f32 %v2347, %v2371
      %v2384 = vadd.f32 %v2348, %v2371
      %v2385 = vadd.f32 %v2349, %v2371
      %v2386 = vadd.f32 %v2350, %v2371
      %v2387 = vadd.f32 %v2351, %v2371
      %v2388 = vadd.f32 %v2352, %v2371
      %v2389 = vadd.f32 %v2353, %v2371
      %v2390 = vadd.f32 %v2354, %v2371
      %v2391 = vadd.f32 %v2355, %v2371
      %v2392 = vadd.f32 %v2356, %v2371
      %v2393 = vadd.f32 %v2357, %v2371
      %v2394 = vadd.f32 %v2358, %v2371
      %v2395 = vadd.f32 %v2359, %v2371
      %v2396 = vadd.f32 %v2360, %v2371
      %v2397 = vadd.f32 %v2361, %v2371
      %v2398 = vadd.f32 %v2362, %v2371
      %v2399 = vadd.f32 %v2363, %v2371
      %v2400 = vadd.f32 %v2364, %v2371
      %v2401 = vadd.f32 %v2365, %v2371
      %v2402 = vadd.f32 %v2366, %v2371
      %v2403 = vadd.f32 %v2367, %v2371
      %v2404 = vadd.f32 %v2368, %v2371
      %v2405 = vmax.f32 %v2373, 0.0
      %v2406 = vmax.f32 %v2374, 0.0
      %v2407 = vmax.f32 %v2375, 0.0
      %v2408 = vmax.f32 %v2376, 0.0
      %v2409 = vmax.f32 %v2377, 0.0
      %v2410 = vmax.f32 %v2378, 0.0
      %v2411 = vmax.f32 %v2379, 0.0
      %v2412 = vmax.f32 %v2380, 0.0
      %v2413 = vmax.f32 %v2381, 0.0
      %v2414 = vmax.f32 %v2382, 0.0
      %v2415 = vmax.f32 %v2383, 0.0
      %v2416 = vmax.f32 %v2384, 0.0
      %v2417 = vmax.f32 %v2385, 0.0
      %v2418 = vmax.f32 %v2386, 0.0
      %v2419 = vmax.f32 %v2387, 0.0
      %v2420 = vmax.f32 %v2388, 0.0
      %v2421 = vmax.f32 %v2389, 0.0
      %v2422 = vmax.f32 %v2390, 0.0
      %v2423 = vmax.f32 %v2391, 0.0
      %v2424 = vmax.f32 %v2392, 0.0
      %v2425 = vmax.f32 %v2393, 0.0
      %v2426 = vmax.f32 %v2394, 0.0
      %v2427 = vmax.f32 %v2395, 0.0
      %v2428 = vmax.f32 %v2396, 0.0
      %v2429 = vmax.f32 %v2397, 0.0
      %v2430 = vmax.f32 %v2398, 0.0
      %v2431 = vmax.f32 %v2399, 0.0
      %v2432 = vmax.f32 %v2400, 0.0
      %v2433 = vmax.f32 %v2401, 0.0
      %v2434 = vmax.f32 %v2402, 0.0
      %v2435 = vmax.f32 %v2403, 0.0
      %v2436 = vmax.f32 %v2404, 0.0
      %v2437 = vpack.c.bf16 %v2405, %v2405
      %v2438 = vpack.c.bf16 %v2406, %v2406
      %v2439 = vpack.c.bf16 %v2407, %v2407
      %v2440 = vpack.c.bf16 %v2408, %v2408
      %v2441 = vpack.c.bf16 %v2409, %v2409
      %v2442 = vpack.c.bf16 %v2410, %v2410
      %v2443 = vpack.c.bf16 %v2411, %v2411
      %v2444 = vpack.c.bf16 %v2412, %v2412
      %v2445 = vpack.c.bf16 %v2413, %v2413
      %v2446 = vpack.c.bf16 %v2414, %v2414
      %v2447 = vpack.c.bf16 %v2415, %v2415
      %v2448 = vpack.c.bf16 %v2416, %v2416
      %v2449 = vpack.c.bf16 %v2417, %v2417
      %v2450 = vpack.c.bf16 %v2418, %v2418
      %v2451 = vpack.c.bf16 %v2419, %v2419
      %v2452 = vpack.c.bf16 %v2420, %v2420
      %v2453 = vpack.c.bf16 %v2421, %v2421
      %v2454 = vpack.c.bf16 %v2422, %v2422
      %v2455 = vpack.c.bf16 %v2423, %v2423
      %v2456 = vpack.c.bf16 %v2424, %v2424
      %v2457 = vpack.c.bf16 %v2425, %v2425
      %v2458 = vpack.c.bf16 %v2426, %v2426
      %v2459 = vpack.c.bf16 %v2427, %v2427
      %v2460 = vpack.c.bf16 %v2428, %v2428
      %v2461 = vpack.c.bf16 %v2429, %v2429
      %v2462 = vpack.c.bf16 %v2430, %v2430
      %v2463 = vpack.c.bf16 %v2431, %v2431
      %v2464 = vpack.c.bf16 %v2432, %v2432
      %v2465 = vpack.c.bf16 %v2433, %v2433
      %v2466 = vpack.c.bf16 %v2434, %v2434
      %v2467 = vpack.c.bf16 %v2435, %v2435
      %v2468 = vpack.c.bf16 %v2436, %v2436
      %vm2469 = vcmask 125952
      %2470 = vst.msk [vmem:[%s205] sm:$0xf] %vm2469, %v2437
      %2471 = vst.msk [vmem:[%s205 + $0x4] sm:$0xf] %vm2469, %v2438
      %2472 = vst.msk [vmem:[%s205 + $0x8] sm:$0xf] %vm2469, %v2439
      %2473 = vst.msk [vmem:[%s205 + $0xc] sm:$0xf] %vm2469, %v2440
      %2474 = vst.msk [vmem:[%s205 + $0x10] sm:$0xf] %vm2469, %v2441
      %2475 = vst.msk [vmem:[%s205 + $0x14] sm:$0xf] %vm2469, %v2442
      %2476 = vst.msk [vmem:[%s205 + $0x18] sm:$0xf] %vm2469, %v2443
      %2477 = vst.msk [vmem:[%s205 + $0x1c] sm:$0xf] %vm2469, %v2444
      %2478 = vst.msk [vmem:[%s205 + $0x20] sm:$0xf] %vm2469, %v2445
      %2479 = vst.msk [vmem:[%s205 + $0x24] sm:$0xf] %vm2469, %v2446
      %2480 = vst.msk [vmem:[%s205 + $0x28] sm:$0xf] %vm2469, %v2447
      %2481 = vst.msk [vmem:[%s205 + $0x2c] sm:$0xf] %vm2469, %v2448
      %2482 = vst.msk [vmem:[%s205 + $0x30] sm:$0xf] %vm2469, %v2449
      %2483 = vst.msk [vmem:[%s205 + $0x34] sm:$0xf] %vm2469, %v2450
      %2484 = vst.msk [vmem:[%s205 + $0x38] sm:$0xf] %vm2469, %v2451
      %2485 = vst.msk [vmem:[%s205 + $0x3c] sm:$0xf] %vm2469, %v2452
      %2486 = vst.msk [vmem:[%s205 + $0x40] sm:$0xf] %vm2469, %v2453
      %2487 = vst.msk [vmem:[%s205 + $0x44] sm:$0xf] %vm2469, %v2454
      %2488 = vst.msk [vmem:[%s205 + $0x48] sm:$0xf] %vm2469, %v2455
      %2489 = vst.msk [vmem:[%s205 + $0x4c] sm:$0xf] %vm2469, %v2456
      %2490 = vst.msk [vmem:[%s205 + $0x50] sm:$0xf] %vm2469, %v2457
      %2491 = vst.msk [vmem:[%s205 + $0x54] sm:$0xf] %vm2469, %v2458
      %2492 = vst.msk [vmem:[%s205 + $0x58] sm:$0xf] %vm2469, %v2459
      %2493 = vst.msk [vmem:[%s205 + $0x5c] sm:$0xf] %vm2469, %v2460
      %2494 = vst.msk [vmem:[%s205 + $0x60] sm:$0xf] %vm2469, %v2461
      %2495 = vst.msk [vmem:[%s205 + $0x64] sm:$0xf] %vm2469, %v2462
      %2496 = vst.msk [vmem:[%s205 + $0x68] sm:$0xf] %vm2469, %v2463
      %2497 = vst.msk [vmem:[%s205 + $0x6c] sm:$0xf] %vm2469, %v2464
      %2498 = vst.msk [vmem:[%s205 + $0x70] sm:$0xf] %vm2469, %v2465
      %2499 = vst.msk [vmem:[%s205 + $0x74] sm:$0xf] %vm2469, %v2466
      %2500 = vst.msk [vmem:[%s205 + $0x78] sm:$0xf] %vm2469, %v2467
      %2501 = vst.msk [vmem:[%s205 + $0x7c] sm:$0xf] %vm2469, %v2468
      %2502 = vxpose.xlu0.b32.start [1/16] %v2405, 128
      %2503 = vxpose.xlu0.b32.cont [2/16] %v2406, 128
      %2504 = vxpose.xlu0.b32.cont [3/16] %v2407, 128
      %2505 = vxpose.xlu0.b32.cont [4/16] %v2408, 128
      %2506 = vxpose.xlu0.b32.cont [5/16] %v2409, 128
      %2507 = vxpose.xlu0.b32.cont [6/16] %v2410, 128
      %2508 = vxpose.xlu0.b32.cont [7/16] %v2411, 128
      %2509 = vxpose.xlu0.b32.cont [8/16] %v2412, 128
      %2510 = vxpose.xlu0.b32.cont [9/16] %v2413, 128
      %2511 = vxpose.xlu0.b32.cont [10/16] %v2414, 128
      %2512 = vxpose.xlu0.b32.cont [11/16] %v2415, 128
      %2513 = vxpose.xlu0.b32.cont [12/16] %v2416, 128
      %2514 = vxpose.xlu0.b32.cont [13/16] %v2417, 128
      %2515 = vxpose.xlu0.b32.cont [14/16] %v2418, 128
      %2516 = vxpose.xlu0.b32.cont [15/16] %v2419, 128
      %2517 = vxpose.xlu0.b32.end [16/16] %v2420, 128
      %v2518 = vpop.trf.xlu0
      %v2519 = vpop.trf.xlu0
      %v2520 = vpop.trf.xlu0
      %v2521 = vpop.trf.xlu0
      %v2522 = vpop.trf.xlu0
      %v2523 = vpop.trf.xlu0
      %v2524 = vpop.trf.xlu0
      %v2525 = vpop.trf.xlu0
      %v2526 = vpop.trf.xlu0
      %v2527 = vpop.trf.xlu0
      %v2528 = vpop.trf.xlu0
      %v2529 = vpop.trf.xlu0
      %v2530 = vpop.trf.xlu0
      %v2531 = vpop.trf.xlu0
      %v2532 = vpop.trf.xlu0
      %v2533 = vpop.trf.xlu0
      %2534 = vxpose.xlu0.b32.start [1/16] %v2421, 128
      %2535 = vxpose.xlu0.b32.cont [2/16] %v2422, 128
      %2536 = vxpose.xlu0.b32.cont [3/16] %v2423, 128
      %2537 = vxpose.xlu0.b32.cont [4/16] %v2424, 128
      %2538 = vxpose.xlu0.b32.cont [5/16] %v2425, 128
      %2539 = vxpose.xlu0.b32.cont [6/16] %v2426, 128
      %2540 = vxpose.xlu0.b32.cont [7/16] %v2427, 128
      %2541 = vxpose.xlu0.b32.cont [8/16] %v2428, 128
      %2542 = vxpose.xlu0.b32.cont [9/16] %v2429, 128
      %2543 = vxpose.xlu0.b32.cont [10/16] %v2430, 128
      %2544 = vxpose.xlu0.b32.cont [11/16] %v2431, 128
      %2545 = vxpose.xlu0.b32.cont [12/16] %v2432, 128
      %2546 = vxpose.xlu0.b32.cont [13/16] %v2433, 128
      %2547 = vxpose.xlu0.b32.cont [14/16] %v2434, 128
      %2548 = vxpose.xlu0.b32.cont [15/16] %v2435, 128
      %2549 = vxpose.xlu0.b32.end [16/16] %v2436, 128
      %v2550 = vpop.trf.xlu0
      %v2551 = vpop.trf.xlu0
      %v2552 = vpop.trf.xlu0
      %v2553 = vpop.trf.xlu0
      %v2554 = vpop.trf.xlu0
      %v2555 = vpop.trf.xlu0
      %v2556 = vpop.trf.xlu0
      %v2557 = vpop.trf.xlu0
      %v2558 = vpop.trf.xlu0
      %v2559 = vpop.trf.xlu0
      %v2560 = vpop.trf.xlu0
      %v2561 = vpop.trf.xlu0
      %v2562 = vpop.trf.xlu0
      %v2563 = vpop.trf.xlu0
      %v2564 = vpop.trf.xlu0
      %v2565 = vpop.trf.xlu0
      %2566 = vmatpush.msra.mxu0 %v2420
      %2567 = vmatpush.msra.mxu0 %v2419
      %2568 = vmatpush.msra.mxu0 %v2418
      %2569 = vmatpush.msra.mxu0 %v2417
      %2570 = vmatpush.msra.mxu0 %v2416
      %2571 = vmatpush.msra.mxu0 %v2415
      %2572 = vmatpush.msra.mxu0 %v2414
      %2573 = vmatpush.msra.mxu0 %v2413
      %2574 = vmatpush.msra.mxu0 %v2412
      %2575 = vmatpush.msra.mxu0 %v2411
      %2576 = vmatpush.msra.mxu0 %v2410
      %2577 = vmatpush.msra.mxu0 %v2409
      %2578 = vmatpush.msra.mxu0 %v2408
      %2579 = vmatpush.msra.mxu0 %v2407
      %2580 = vmatpush.msra.mxu0 %v2406
      %2581 = vmatpush.msra.mxu0 %v2405
      %2582 = vmatmul.f32.gmra.mxu0 %v2518
      %v2583 = vpop.f32.mrf.mxu0
      %v2584 = vadd.f32 0.0, %v2583
      %2585 = vmatmul.f32.gmra.mxu0 %v2519
      %v2586 = vpop.f32.mrf.mxu0
      %v2587 = vadd.f32 0.0, %v2586
      %2588 = vdwg.mxu0
      %2589 = vmatpush.msra.mxu0 %v2436
      %2590 = vmatpush.msra.mxu0 %v2435
      %2591 = vmatpush.msra.mxu0 %v2434
      %2592 = vmatpush.msra.mxu0 %v2433
      %2593 = vmatpush.msra.mxu0 %v2432
      %2594 = vmatpush.msra.mxu0 %v2431
      %2595 = vmatpush.msra.mxu0 %v2430
      %2596 = vmatpush.msra.mxu0 %v2429
      %2597 = vmatpush.msra.mxu0 %v2428
      %2598 = vmatpush.msra.mxu0 %v2427
      %2599 = vmatpush.msra.mxu0 %v2426
      %2600 = vmatpush.msra.mxu0 %v2425
      %2601 = vmatpush.msra.mxu0 %v2424
      %2602 = vmatpush.msra.mxu0 %v2423
      %2603 = vmatpush.msra.mxu0 %v2422
      %2604 = vmatpush.msra.mxu0 %v2421
      %2605 = vmatmul.f32.gmra.mxu0 %v2550
      %v2606 = vpop.f32.mrf.mxu0
      %v2607 = vadd.f32 %v2584, %v2606
      %2608 = vmatmul.f32.gmra.mxu0 %v2551
      %v2609 = vpop.f32.mrf.mxu0
      %v2610 = vadd.f32 %v2587, %v2609
      %2611 = vdwg.mxu0
      %vm2612 = vcmask 130048
      %2613 = vst.msk [vmem:[%s210] sm:$0xff] %vm2612, %v2607
      %2614 = vst.msk [vmem:[%s210 + $0x8] sm:$0xff] %vm2612, %v2610
      %p2615 = scmp.lt.s32.totalorder %s16, 3
      %s2616 = scalar_select %p2615, %s16, 3
      %s2617 = smul.addr %s2616, 32
      %s2618 = smul.addr %s2617, 4
      %s2619 = scalar_lea.vmem %s3, %s2618
      %p2620 = scmp.lt.s32.totalorder %s16, 3
      %s2621 = scalar_select %p2620, %s16, 3
      %s2622 = smul.addr %s2621, 2
      %s2623 = smul.addr %s2622, 8
      %s2624 = scalar_lea.vmem %s4, %s2623
      // Predicated region
      $region33: #{style_feature_loss.4} parent=31 // pred_check
        %p2625 = pneg %p102
      $region34: #{style_feature_loss.4} parent=31 // pred_check_branch
        %2627 = sbr.rel (%p2625) target = $region36
      $region35: #{style_feature_loss.4} parent=31 // pred_region
        _
      $region36: #{style_feature_loss.4} parent=31 // pred_fallthru
        _
      // Predicated region
      $region37: #{style_feature_loss.4} parent=31 // pred_check
        %p2628 = pneg %p128
      $region38: #{style_feature_loss.4} parent=31 // pred_check_branch
        %2630 = sbr.rel (%p2628) target = $region40
      $region39: #{style_feature_loss.4} parent=31 // pred_region
        _
      $region40: #{style_feature_loss.4} parent=31 // pred_fallthru
        _
    $region32: #{style_feature_loss.4} parent=5 // pred_fallthru
      _
    %p2631 = scmp.le.s32.totalorder 2, %s11
    // Predicated region
    $region41: #{style_feature_loss.4} parent=5 // pred_check
      %p2632 = pneg %p2631
    $region42: #{style_feature_loss.4} parent=5 // pred_check_branch
      %2634 = sbr.rel (%p2632) target = $region44
    $region43: #{style_feature_loss.4} parent=5 // pred_region
      %s2635 = ssub.s32 %s11, 2
      // Predicated region
      $region45: #{style_feature_loss.4} parent=43 // pred_check
        %p2636 = pneg %p108
      $region46: #{style_feature_loss.4} parent=43 // pred_check_branch
        %2638 = sbr.rel (%p2636) target = $region48
      $region47: #{style_feature_loss.4} parent=43 // pred_region
        %p2639 = scmp.lt.s32.totalorder %s17, 3
        %s2640 = scalar_select %p2639, %s17, 3
        %s2641 = smul.addr %s2640, 32
        %s2642 = smul.addr %s2641, 4
        %s2643 = scalar_lea.vmem %s3, %s2642
      $region48: #{style_feature_loss.4} parent=43 // pred_fallthru
        _
      // Predicated region
      $region49: #{style_feature_loss.4} parent=43 // pred_check
        %p2644 = pneg %p134
      $region50: #{style_feature_loss.4} parent=43 // pred_check_branch
        %2646 = sbr.rel (%p2644) target = $region52
      $region51: #{style_feature_loss.4} parent=43 // pred_region
        %p2647 = scmp.lt.s32.totalorder %s17, 3
        %s2648 = scalar_select %p2647, %s17, 3
        %s2649 = smul.addr %s2648, 2
        %s2650 = smul.addr %s2649, 8
        %s2651 = scalar_lea.vmem %s4, %s2650
      $region52: #{style_feature_loss.4} parent=43 // pred_fallthru
        _
    $region44: #{style_feature_loss.4} parent=5 // pred_fallthru
      _
  $region6: #{style_feature_loss.4} parent=0 // loop_footer
    %s15 = sadd.s32 1, %s11
  $region7: #{style_feature_loss.4} parent=0 // loop_footer_branch
    %10 = sbr.rel target = $region3
  $region8: #{style_feature_loss.4} parent=0 // loop_exit
    _

// kernel: style_feature_loss.3
$region0: #{style_feature_loss.3}
  #allocation0 [shape = 'u32[]', space=smem, size = 0x4, offset = 0x4, fixed_abs, tag = 'smem constant byte address 0x4 - core index']
  #allocation1 [shape = 'u32[72,128]{1,0:T(1,128)}', space=vmem, size = 0x9000, scoped, tag = 'internal scratch']
  %s0 = inlined_call_operand.vmem [shape: bf16[4,34,34,8], index: 0, kind: input, shape index: {}]
  %s1 = inlined_call_operand.vmem [shape: bf16[9,8,8], index: 1, kind: input, shape index: {}]
  %s2 = inlined_call_operand.vmem [shape: f32[1,8], index: 2, kind: input, shape index: {}]
  %s3 = inlined_call_operand.vmem [shape: bf16[4,32,32,8], index: 3, kind: output, shape index: {0}]
  %s4 = inlined_call_operand.vmem [shape: f32[4,8,8], index: 4, kind: output, shape index: {1}]
  %5 = xla_tuple %s3, %s4
  %s6 = sld [smem:[#allocation0]]
  $region53: #{style_feature_loss.3} parent=0
    _
  %s8 = ssub.s32 1, %s6
  %s9 = scalar_select 0, %s8, %s6
  loop: start=0, step=1, limit=6
  $region2: #{style_feature_loss.3} parent=0 // loop_pre_header
    _
  $region3: #{style_feature_loss.3} parent=0 // loop_header
    %s11 = sphi 0, %s15
    %p12 = scmp.ge.s32.totalorder %s11, 6
    %s21 = sphi 0, %s23
    %s24 = sphi 0, %s21
    %s25 = sphi 0, %s24
    %s41 = sphi 0, %s25
    %s45 = sphi 0, %s45
    %s47 = sphi 0, %s45
    %s48 = sphi 0, %s47
    %s62 = sphi 0, %s48
    %s66 = sphi 0, %s66
    %s68 = sphi 0, %s66
    %s69 = sphi 0, %s68
    %s83 = sphi 0, %s69
    %s89 = sphi 0, %s91
    %s92 = sphi 0, %s89
    %s93 = sphi 0, %s92
    %s109 = sphi 0, %s93
    %s115 = sphi 0, %s117
    %s118 = sphi 0, %s115
    %s119 = sphi 0, %s118
    %s135 = sphi 0, %s119
  $region4: #{style_feature_loss.3} parent=0 // loop_header_branch
    %14 = sbr.rel (%p12) target = $region8
  $region5: #{style_feature_loss.3} parent=0 // loop_body
    %s16 = ssub.s32 %s11, 1
    %s17 = ssub.s32 %s11, 2
    %s18 = sadd.s32 %s11, 1
    %s19 = ssub.s32 %s11, %s18
    %p20 = scmp.eq.s32.totalorder %s19, 0
    %s22 = sadd.s32 %s21, 1
    %s23 = scalar_select %p20, %s21, %s22
    %p26 = pneg %p20
    %p27 = scmp.eq.s32.totalorder %s11, 3
    %p28 = por %p26, %p27
    %p29 = scmp.ne.s32.totalorder %s21, %s24
    %p30 = scmp.eq.s32.totalorder %s11, 0
    %p31 = por %p29, %p30
    %p32 = scmp.ne.s32.totalorder %s21, %s24
    %p33 = scmp.eq.s32.totalorder %s16, 3
    %p34 = por %p32, %p33
    %p35 = scmp.ne.s32.totalorder %s24, %s25
    %p36 = scmp.eq.s32.totalorder %s16, 0
    %p37 = por %p35, %p36
    %p38 = scmp.ne.s32.totalorder %s24, %s25
    %p39 = scmp.eq.s32.totalorder %s17, 3
    %p40 = por %p38, %p39
    %p42 = scmp.ne.s32.totalorder %s25, %s41
    %p43 = scmp.eq.s32.totalorder %s17, 0
    %p44 = por %p42, %p43
    %s46 = sadd.s32 %s45, 1
    %p49 = scmp.eq.s32.totalorder %s11, 3
    %p50 = scmp.ne.s32.totalorder %s45, %s47
    %p51 = scmp.eq.s32.totalorder %s11, 0
    %p52 = por %p50, %p51
    %p53 = scmp.ne.s32.totalorder %s45, %s47
    %p54 = scmp.eq.s32.totalorder %s16, 3
    %p55 = por %p53, %p54
    %p56 = scmp.ne.s32.totalorder %s47, %s48
    %p57 = scmp.eq.s32.totalorder %s16, 0
    %p58 = por %p56, %p57
    %p59 = scmp.ne.s32.totalorder %s47, %s48
    %p60 = scmp.eq.s32.totalorder %s17, 3
    %p61 = por %p59, %p60
    %p63 = scmp.ne.s32.totalorder %s48, %s62
    %p64 = scmp.eq.s32.totalorder %s17, 0
    %p65 = por %p63, %p64
    %s67 = sadd.s32 %s66, 1
    %p70 = scmp.eq.s32.totalorder %s11, 3
    %p71 = scmp.ne.s32.totalorder %s66, %s68
    %p72 = scmp.eq.s32.totalorder %s11, 0
    %p73 = por %p71, %p72
    %p74 = scmp.ne.s32.totalorder %s66, %s68
    %p75 = scmp.eq.s32.totalorder %s16, 3
    %p76 = por %p74, %p75
    %p77 = scmp.ne.s32.totalorder %s68, %s69
    %p78 = scmp.eq.s32.totalorder %s16, 0
    %p79 = por %p77, %p78
    %p80 = scmp.ne.s32.totalorder %s68, %s69
    %p81 = scmp.eq.s32.totalorder %s17, 3
    %p82 = por %p80, %p81
    %p84 = scmp.ne.s32.totalorder %s69, %s83
    %p85 = scmp.eq.s32.totalorder %s17, 0
    %p86 = por %p84, %p85
    %s87 = ssub.s32 %s11, %s18
    %p88 = scmp.eq.s32.totalorder %s87, 0
    %s90 = sadd.s32 %s89, 1
    %s91 = scalar_select %p88, %s89, %s90
    %p94 = pneg %p88
    %p95 = scmp.eq.s32.totalorder %s11, 3
    %p96 = por %p94, %p95
    %p97 = scmp.ne.s32.totalorder %s89, %s92
    %p98 = scmp.eq.s32.totalorder %s11, 0
    %p99 = por %p97, %p98
    %p100 = scmp.ne.s32.totalorder %s89, %s92
    %p101 = scmp.eq.s32.totalorder %s16, 3
    %p102 = por %p100, %p101
    %p103 = scmp.ne.s32.totalorder %s92, %s93
    %p104 = scmp.eq.s32.totalorder %s16, 0
    %p105 = por %p103, %p104
    %p106 = scmp.ne.s32.totalorder %s92, %s93
    %p107 = scmp.eq.s32.totalorder %s17, 3
    %p108 = por %p106, %p107
    %p110 = scmp.ne.s32.totalorder %s93, %s109
    %p111 = scmp.eq.s32.totalorder %s17, 0
    %p112 = por %p110, %p111
    %s113 = ssub.s32 %s11, %s18
    %p114 = scmp.eq.s32.totalorder %s113, 0
    %s116 = sadd.s32 %s115, 1
    %s117 = scalar_select %p114, %s115, %s116
    %p120 = pneg %p114
    %p121 = scmp.eq.s32.totalorder %s11, 3
    %p122 = por %p120, %p121
    %p123 = scmp.ne.s32.totalorder %s115, %s118
    %p124 = scmp.eq.s32.totalorder %s11, 0
    %p125 = por %p123, %p124
    %p126 = scmp.ne.s32.totalorder %s115, %s118
    %p127 = scmp.eq.s32.totalorder %s16, 3
    %p128 = por %p126, %p127
    %p129 = scmp.ne.s32.totalorder %s118, %s119
    %p130 = scmp.eq.s32.totalorder %s16, 0
    %p131 = por %p129, %p130
    %p132 = scmp.ne.s32.totalorder %s118, %s119
    %p133 = scmp.eq.s32.totalorder %s17, 3
    %p134 = por %p132, %p133
    %p136 = scmp.ne.s32.totalorder %s119, %s135
    %p137 = scmp.eq.s32.totalorder %s17, 0
    %p138 = por %p136, %p137
    %p139 = scmp.le.s32.totalorder 1, %s11
    %p140 = scmp.lt.s32.totalorder %s11, 5
    %p141 = pnand %p139, %p140
    %p142 = pneg %p141
    // Predicated region
    $region9: #{style_feature_loss.3} parent=5 // pred_check
      _
    $region10: #{style_feature_loss.3} parent=5 // pred_check_branch
      %144 = sbr.rel (%p141) target = $region12
    $region11: #{style_feature_loss.3} parent=5 // pred_region
      %s145 = ssub.s32 %s11, 1
      // Predicated region
      $region13: #{style_feature_loss.3} parent=11 // pred_check
        %p146 = pneg %p58
      $region14: #{style_feature_loss.3} parent=11 // pred_check_branch
        %148 = sbr.rel (%p146) target = $region16
      $region15: #{style_feature_loss.3} parent=11 // pred_region
        _
      $region16: #{style_feature_loss.3} parent=11 // pred_fallthru
        _
      // Predicated region
      $region17: #{style_feature_loss.3} parent=11 // pred_check
        %p149 = pneg %p79
      $region18: #{style_feature_loss.3} parent=11 // pred_check_branch
        %151 = sbr.rel (%p149) target = $region20
      $region19: #{style_feature_loss.3} parent=11 // pred_region
        _
      $region20: #{style_feature_loss.3} parent=11 // pred_fallthru
        _
    $region12: #{style_feature_loss.3} parent=5 // pred_fallthru
      _
    %p152 = scmp.lt.s32.totalorder %s11, 4
    // Predicated region
    $region21: #{style_feature_loss.3} parent=5 // pred_check
      %p153 = pneg %p152
    $region22: #{style_feature_loss.3} parent=5 // pred_check_branch
      %155 = sbr.rel (%p153) target = $region24
    $region23: #{style_feature_loss.3} parent=5 // pred_region
      // Predicated region
      $region25: #{style_feature_loss.3} parent=23 // pred_check
        %p156 = pneg %p31
      $region26: #{style_feature_loss.3} parent=23 // pred_check_branch
        %158 = sbr.rel (%p156) target = $region28
      $region27: #{style_feature_loss.3} parent=23 // pred_region
        %p159 = scmp.lt.s32.totalorder %s11, 3
        %s160 = scalar_select %p159, %s11, 3
        %s161 = smul.addr %s160, 170
        %s162 = smul.addr %s161, 4
        %s163 = scalar_lea.vmem %s0, %s162
      $region28: #{style_feature_loss.3} parent=23 // pred_fallthru
        _
    $region24: #{style_feature_loss.3} parent=5 // pred_fallthru
      _
    %p164 = scmp.le.s32.totalorder 1, %s11
    %p165 = scmp.lt.s32.totalorder %s11, 5
    %p166 = pnand %p164, %p165
    %p167 = pneg %p166
    // Predicated region
    $region29: #{style_feature_loss.3} parent=5 // pred_check
      _
    $region30: #{style_feature_loss.3} parent=5 // pred_check_branch
      %169 = sbr.rel (%p166) target = $region32
    $region31: #{style_feature_loss.3} parent=5 // pred_region
      %s170 = ssub.s32 %s11, 1
      %p171 = scmp.lt.s32.totalorder %s16, 3
      %s172 = scalar_select %p171, %s16, 3
      %s173 = smul.addr %s172, 170
      %s174 = smul.addr %s173, 4
      %s175 = scalar_lea.vmem %s0, %s174
      %p176 = pneg %p37
      %p177 = pneg %p34
      %p178 = pneg %p58
      %p179 = pneg %p55
      %p180 = pneg %p79
      %p181 = pneg %p76
      %p182 = pneg %p105
      %p183 = pneg %p102
      %p184 = scmp.lt.s32.totalorder %s16, 3
      %s185 = scalar_select %p184, %s16, 3
      %s186 = smul.addr %s185, 128
      %s187 = smul.addr %s186, 4
      %s188 = scalar_lea.vmem %s3, %s187
      %p189 = pneg %p131
      %p190 = pneg %p128
      %p191 = scmp.lt.s32.totalorder %s16, 3
      %s192 = scalar_select %p191, %s16, 3
      %s193 = smul.addr %s192, 8
      %s194 = scalar_lea.vmem %s4, %s193
      %p195 = scmp.lt.s32.totalorder %s16, 3
      %s196 = scalar_select %p195, %s16, 3
      %s197 = smul.addr %s196, 170
      %s198 = smul.addr %s197, 4
      %s199 = scalar_lea.vmem %s0, %s198
      %p200 = scmp.lt.s32.totalorder %s16, 3
      %s201 = scalar_select %p200, %s16, 3
      %s202 = smul.addr %s201, 128
      %s203 = smul.addr %s202, 4
      %s204 = scalar_lea.vmem %s3, %s203
      %p205 = scmp.lt.s32.totalorder %s16, 3
      %s206 = scalar_select %p205, %s16, 3
      %s207 = smul.addr %s206, 8
      %s208 = scalar_lea.vmem %s4, %s207
      %v210 = vld [vmem:[%s199] sm:$0xf]
      %v211 = vld [vmem:[%s199 + $0x4] sm:$0xf]
      %v212 = vld [vmem:[%s199 + $0x8] sm:$0xf]
      %v213 = vld [vmem:[%s199 + $0xc] sm:$0xf]
      %v214 = vld [vmem:[%s199 + $0x14] sm:$0xf]
      %v215 = vld [vmem:[%s199 + $0x18] sm:$0xf]
      %v216 = vld [vmem:[%s199 + $0x1c] sm:$0xf]
      %v217 = vld [vmem:[%s199 + $0x20] sm:$0xf]
      %v218 = vld [vmem:[%s199 + $0x28] sm:$0xf]
      %v219 = vld [vmem:[%s199 + $0x2c] sm:$0xf]
      %v220 = vld [vmem:[%s199 + $0x30] sm:$0xf]
      %v221 = vld [vmem:[%s199 + $0x34] sm:$0xf]
      %v222 = vld [vmem:[%s199 + $0x3c] sm:$0xf]
      %v223 = vld [vmem:[%s199 + $0x40] sm:$0xf]
      %v224 = vld [vmem:[%s199 + $0x44] sm:$0xf]
      %v225 = vld [vmem:[%s199 + $0x48] sm:$0xf]
      %v226 = vld [vmem:[%s199 + $0x50] sm:$0xf]
      %v227 = vld [vmem:[%s199 + $0x54] sm:$0xf]
      %v228 = vld [vmem:[%s199 + $0x58] sm:$0xf]
      %v229 = vld [vmem:[%s199 + $0x5c] sm:$0xf]
      %v230 = vld [vmem:[%s199 + $0x64] sm:$0xf]
      %v231 = vld [vmem:[%s199 + $0x68] sm:$0xf]
      %v232 = vld [vmem:[%s199 + $0x6c] sm:$0xf]
      %v233 = vld [vmem:[%s199 + $0x70] sm:$0xf]
      %v234 = vld [vmem:[%s199 + $0x78] sm:$0xf]
      %v235 = vld [vmem:[%s199 + $0x7c] sm:$0xf]
      %v236 = vld [vmem:[%s199 + $0x80] sm:$0xf]
      %v237 = vld [vmem:[%s199 + $0x84] sm:$0xf]
      %v238 = vld [vmem:[%s199 + $0x8c] sm:$0xf]
      %v239 = vld [vmem:[%s199 + $0x90] sm:$0xf]
      %v240 = vld [vmem:[%s199 + $0x94] sm:$0xf]
      %v241 = vld [vmem:[%s199 + $0x98] sm:$0xf]
      %v242 = vld [vmem:[%s199 + $0xa0] sm:$0xf]
      %v243 = vld [vmem:[%s199 + $0xa4] sm:$0xf]
      %v244 = vld [vmem:[%s199 + $0xa8] sm:$0xf]
      %v245 = vld [vmem:[%s199 + $0xac] sm:$0xf]
      %v246 = vld [vmem:[%s199 + $0xb4] sm:$0xf]
      %v247 = vld [vmem:[%s199 + $0xb8] sm:$0xf]
      %v248 = vld [vmem:[%s199 + $0xbc] sm:$0xf]
      %v249 = vld [vmem:[%s199 + $0xc0] sm:$0xf]
      %v250 = vld [vmem:[%s199 + $0xc8] sm:$0xf]
      %v251 = vld [vmem:[%s199 + $0xcc] sm:$0xf]
      %v252 = vld [vmem:[%s199 + $0xd0] sm:$0xf]
      %v253 = vld [vmem:[%s199 + $0xd4] sm:$0xf]
      %v254 = vld [vmem:[%s199 + $0xdc] sm:$0xf]
      %v255 = vld [vmem:[%s199 + $0xe0] sm:$0xf]
      %v256 = vld [vmem:[%s199 + $0xe4] sm:$0xf]
      %v257 = vld [vmem:[%s199 + $0xe8] sm:$0xf]
      %v258 = vld [vmem:[%s199 + $0xf0] sm:$0xf]
      %v259 = vld [vmem:[%s199 + $0xf4] sm:$0xf]
      %v260 = vld [vmem:[%s199 + $0xf8] sm:$0xf]
      %v261 = vld [vmem:[%s199 + $0xfc] sm:$0xf]
      %v262 = vld [vmem:[%s199 + $0x104] sm:$0xf]
      %v263 = vld [vmem:[%s199 + $0x108] sm:$0xf]
      %v264 = vld [vmem:[%s199 + $0x10c] sm:$0xf]
      %v265 = vld [vmem:[%s199 + $0x110] sm:$0xf]
      %v266 = vld [vmem:[%s199 + $0x118] sm:$0xf]
      %v267 = vld [vmem:[%s199 + $0x11c] sm:$0xf]
      %v268 = vld [vmem:[%s199 + $0x120] sm:$0xf]
      %v269 = vld [vmem:[%s199 + $0x124] sm:$0xf]
      %v270 = vld [vmem:[%s199 + $0x12c] sm:$0xf]
      %v271 = vld [vmem:[%s199 + $0x130] sm:$0xf]
      %v272 = vld [vmem:[%s199 + $0x134] sm:$0xf]
      %v273 = vld [vmem:[%s199 + $0x138] sm:$0xf]
      %v274 = vld [vmem:[%s199 + $0x140] sm:$0xf]
      %v275 = vld [vmem:[%s199 + $0x144] sm:$0xf]
      %v276 = vld [vmem:[%s199 + $0x148] sm:$0xf]
      %v277 = vld [vmem:[%s199 + $0x14c] sm:$0xf]
      %v278 = vld [vmem:[%s199 + $0x154] sm:$0xf]
      %v279 = vld [vmem:[%s199 + $0x158] sm:$0xf]
      %v280 = vld [vmem:[%s199 + $0x15c] sm:$0xf]
      %v281 = vld [vmem:[%s199 + $0x160] sm:$0xf]
      %v282 = vld [vmem:[%s199 + $0x168] sm:$0xf]
      %v283 = vld [vmem:[%s199 + $0x16c] sm:$0xf]
      %v284 = vld [vmem:[%s199 + $0x170] sm:$0xf]
      %v285 = vld [vmem:[%s199 + $0x174] sm:$0xf]
      %v286 = vld [vmem:[%s199 + $0x17c] sm:$0xf]
      %v287 = vld [vmem:[%s199 + $0x180] sm:$0xf]
      %v288 = vld [vmem:[%s199 + $0x184] sm:$0xf]
      %v289 = vld [vmem:[%s199 + $0x188] sm:$0xf]
      %v290 = vld [vmem:[%s199 + $0x190] sm:$0xf]
      %v291 = vld [vmem:[%s199 + $0x194] sm:$0xf]
      %v292 = vld [vmem:[%s199 + $0x198] sm:$0xf]
      %v293 = vld [vmem:[%s199 + $0x19c] sm:$0xf]
      %v294 = vld [vmem:[%s199 + $0x1a4] sm:$0xf]
      %v295 = vld [vmem:[%s199 + $0x1a8] sm:$0xf]
      %v296 = vld [vmem:[%s199 + $0x1ac] sm:$0xf]
      %v297 = vld [vmem:[%s199 + $0x1b0] sm:$0xf]
      %v298 = vld [vmem:[%s199 + $0x1b8] sm:$0xf]
      %v299 = vld [vmem:[%s199 + $0x1bc] sm:$0xf]
      %v300 = vld [vmem:[%s199 + $0x1c0] sm:$0xf]
      %v301 = vld [vmem:[%s199 + $0x1c4] sm:$0xf]
      %v302 = vld [vmem:[%s199 + $0x1cc] sm:$0xf]
      %v303 = vld [vmem:[%s199 + $0x1d0] sm:$0xf]
      %v304 = vld [vmem:[%s199 + $0x1d4] sm:$0xf]
      %v305 = vld [vmem:[%s199 + $0x1d8] sm:$0xf]
      %v306 = vld [vmem:[%s199 + $0x1e0] sm:$0xf]
      %v307 = vld [vmem:[%s199 + $0x1e4] sm:$0xf]
      %v308 = vld [vmem:[%s199 + $0x1e8] sm:$0xf]
      %v309 = vld [vmem:[%s199 + $0x1ec] sm:$0xf]
      %v310 = vld [vmem:[%s199 + $0x1f4] sm:$0xf]
      %v311 = vld [vmem:[%s199 + $0x1f8] sm:$0xf]
      %v312 = vld [vmem:[%s199 + $0x1fc] sm:$0xf]
      %v313 = vld [vmem:[%s199 + $0x200] sm:$0xf]
      %v314 = vld [vmem:[%s199 + $0x208] sm:$0xf]
      %v315 = vld [vmem:[%s199 + $0x20c] sm:$0xf]
      %v316 = vld [vmem:[%s199 + $0x210] sm:$0xf]
      %v317 = vld [vmem:[%s199 + $0x214] sm:$0xf]
      %v318 = vld [vmem:[%s199 + $0x21c] sm:$0xf]
      %v319 = vld [vmem:[%s199 + $0x220] sm:$0xf]
      %v320 = vld [vmem:[%s199 + $0x224] sm:$0xf]
      %v321 = vld [vmem:[%s199 + $0x228] sm:$0xf]
      %v322 = vld [vmem:[%s199 + $0x230] sm:$0xf]
      %v323 = vld [vmem:[%s199 + $0x234] sm:$0xf]
      %v324 = vld [vmem:[%s199 + $0x238] sm:$0xf]
      %v325 = vld [vmem:[%s199 + $0x23c] sm:$0xf]
      %v326 = vld [vmem:[%s199 + $0x244] sm:$0xf]
      %v327 = vld [vmem:[%s199 + $0x248] sm:$0xf]
      %v328 = vld [vmem:[%s199 + $0x24c] sm:$0xf]
      %v329 = vld [vmem:[%s199 + $0x250] sm:$0xf]
      %v330 = vld [vmem:[%s199 + $0x258] sm:$0xf]
      %v331 = vld [vmem:[%s199 + $0x25c] sm:$0xf]
      %v332 = vld [vmem:[%s199 + $0x260] sm:$0xf]
      %v333 = vld [vmem:[%s199 + $0x264] sm:$0xf]
      %v334 = vld [vmem:[%s199 + $0x26c] sm:$0xf]
      %v335 = vld [vmem:[%s199 + $0x270] sm:$0xf]
      %v336 = vld [vmem:[%s199 + $0x274] sm:$0xf]
      %v337 = vld [vmem:[%s199 + $0x278] sm:$0xf]
      %v338 = vld [vmem:[%s199 + $0x280] sm:$0xf]
      %v339 = vld [vmem:[%s199 + $0x284] sm:$0xf]
      %v340 = vld [vmem:[%s199 + $0x288] sm:$0xf]
      %v341 = vld [vmem:[%s199 + $0x28c] sm:$0xf]
      %v342 = vld [vmem:[%s199 + $0x294] sm:$0xf]
      %v343 = vld [vmem:[%s199 + $0x298] sm:$0xf]
      %v344 = vld [vmem:[%s199 + $0x29c] sm:$0xf]
      %v345 = vld [vmem:[%s199 + $0x2a0] sm:$0xf]
      %v346 = vld [vmem:[%s1] sm:$0xf]
      %s347 = scalar_lea.vmem %s1, 12
      %v348 = vld [vmem:[%s347] sm:$0xf]
      %v477 = vunpack.c.l.b16 %v214
      %v478 = vunpack.c.l.b16 %v215
      %v479 = vunpack.c.l.b16 %v216
      %v480 = vunpack.c.l.b16 %v217
      %v481 = vunpack.c.l.b16 %v218
      %v482 = vunpack.c.l.b16 %v219
      %v483 = vunpack.c.l.b16 %v220
      %v484 = vunpack.c.l.b16 %v221
      %v485 = vunpack.c.l.b16 %v222
      %v486 = vunpack.c.l.b16 %v223
      %v487 = vunpack.c.l.b16 %v224
      %v488 = vunpack.c.l.b16 %v225
      %v489 = vunpack.c.l.b16 %v226
      %v490 = vunpack.c.l.b16 %v227
      %v491 = vunpack.c.l.b16 %v228
      %v492 = vunpack.c.l.b16 %v229
      %v493 = vunpack.c.l.b16 %v230
      %v494 = vunpack.c.l.b16 %v231
      %v495 = vunpack.c.l.b16 %v232
      %v496 = vunpack.c.l.b16 %v233
      %v497 = vunpack.c.l.b16 %v234
      %v498 = vunpack.c.l.b16 %v235
      %v499 = vunpack.c.l.b16 %v236
      %v500 = vunpack.c.l.b16 %v237
      %v501 = vunpack.c.l.b16 %v238
      %v502 = vunpack.c.l.b16 %v239
      %v503 = vunpack.c.l.b16 %v240
      %v504 = vunpack.c.l.b16 %v241
      %v505 = vunpack.c.l.b16 %v242
      %v506 = vunpack.c.l.b16 %v243
      %v507 = vunpack.c.l.b16 %v244
      %v508 = vunpack.c.l.b16 %v245
      %v509 = vunpack.c.l.b16 %v246
      %v510 = vunpack.c.l.b16 %v247
      %v511 = vunpack.c.l.b16 %v248
      %v512 = vunpack.c.l.b16 %v249
      %v513 = vunpack.c.l.b16 %v250
      %v514 = vunpack.c.l.b16 %v251
      %v515 = vunpack.c.l.b16 %v252
      %v516 = vunpack.c.l.b16 %v253
      %v517 = vunpack.c.l.b16 %v254
      %v518 = vunpack.c.l.b16 %v255
      %v519 = vunpack.c.l.b16 %v256
      %v520 = vunpack.c.l.b16 %v257
      %v521 = vunpack.c.l.b16 %v258
      %v522 = vunpack.c.l.b16 %v259
      %v523 = vunpack.c.l.b16 %v260
      %v524 = vunpack.c.l.b16 %v261
      %v525 = vunpack.c.l.b16 %v262
      %v526 = vunpack.c.l.b16 %v263
      %v527 = vunpack.c.l.b16 %v264
      %v528 = vunpack.c.l.b16 %v265
      %v529 = vunpack.c.l.b16 %v266
      %v530 = vunpack.c.l.b16 %v267
      %v531 = vunpack.c.l.b16 %v268
      %v532 = vunpack.c.l.b16 %v269
      %v533 = vunpack.c.l.b16 %v270
      %v534 = vunpack.c.l.b16 %v271
      %v535 = vunpack.c.l.b16 %v272
      %v536 = vunpack.c.l.b16 %v273
      %v537 = vunpack.c.l.b16 %v274
      %v538 = vunpack.c.l.b16 %v275
      %v539 = vunpack.c.l.b16 %v276
      %v540 = vunpack.c.l.b16 %v277
      %v541 = vunpack.c.l.b16 %v278
      %v542 = vunpack.c.l.b16 %v279
      %v543 = vunpack.c.l.b16 %v280
      %v544 = vunpack.c.l.b16 %v281
      %v545 = vunpack.c.l.b16 %v282
      %v546 = vunpack.c.l.b16 %v283
      %v547 = vunpack.c.l.b16 %v284
      %v548 = vunpack.c.l.b16 %v285
      %v549 = vunpack.c.l.b16 %v286
      %v550 = vunpack.c.l.b16 %v287
      %v551 = vunpack.c.l.b16 %v288
      %v552 = vunpack.c.l.b16 %v289
      %v553 = vunpack.c.l.b16 %v290
      %v554 = vunpack.c.l.b16 %v291
      %v555 = vunpack.c.l.b16 %v292
      %v556 = vunpack.c.l.b16 %v293
      %v557 = vunpack.c.l.b16 %v294
      %v558 = vunpack.c.l.b16 %v295
      %v559 = vunpack.c.l.b16 %v296
      %v560 = vunpack.c.l.b16 %v297
      %v561 = vunpack.c.l.b16 %v298
      %v562 = vunpack.c.l.b16 %v299
      %v563 = vunpack.c.l.b16 %v300
      %v564 = vunpack.c.l.b16 %v301
      %v565 = vunpack.c.l.b16 %v302
      %v566 = vunpack.c.l.b16 %v303
      %v567 = vunpack.c.l.b16 %v304
      %v568 = vunpack.c.l.b16 %v305
      %v569 = vunpack.c.l.b16 %v306
      %v570 = vunpack.c.l.b16 %v307
      %v571 = vunpack.c.l.b16 %v308
      %v572 = vunpack.c.l.b16 %v309
      %v573 = vunpack.c.l.b16 %v310
      %v574 = vunpack.c.l.b16 %v311
      %v575 = vunpack.c.l.b16 %v312
      %v576 = vunpack.c.l.b16 %v313
      %v577 = vunpack.c.l.b16 %v314
      %v578 = vunpack.c.l.b16 %v315
      %v579 = vunpack.c.l.b16 %v316
      %v580 = vunpack.c.l.b16 %v317
      %v581 = vunpack.c.l.b16 %v318
      %v582 = vunpack.c.l.b16 %v319
      %v583 = vunpack.c.l.b16 %v320
      %v584 = vunpack.c.l.b16 %v321
      %v585 = vunpack.c.l.b16 %v322
      %v586 = vunpack.c.l.b16 %v323
      %v587 = vunpack.c.l.b16 %v324
      %v588 = vunpack.c.l.b16 %v325
      %v589 = vunpack.c.l.b16 %v326
      %v590 = vunpack.c.l.b16 %v327
      %v591 = vunpack.c.l.b16 %v328
      %v592 = vunpack.c.l.b16 %v329
      %v593 = vunpack.c.l.b16 %v330
      %v594 = vunpack.c.l.b16 %v331
      %v595 = vunpack.c.l.b16 %v332
      %v596 = vunpack.c.l.b16 %v333
      %v597 = vunpack.c.l.b16 %v334
      %v598 = vunpack.c.l.b16 %v335
      %v599 = vunpack.c.l.b16 %v336
      %v600 = vunpack.c.l.b16 %v337
      %v601 = vunpack.c.l.b16 %v338
      %v602 = vunpack.c.l.b16 %v339
      %v603 = vunpack.c.l.b16 %v340
      %v604 = vunpack.c.l.b16 %v341
      %v605 = vpack.c.b16 %v478, %v477
      %v606 = vpack.c.b16 %v480, %v479
      %v607 = vpack.c.b16 %v482, %v481
      %v608 = vpack.c.b16 %v484, %v483
      %v609 = vpack.c.b16 %v486, %v485
      %v610 = vpack.c.b16 %v488, %v487
      %v611 = vpack.c.b16 %v490, %v489
      %v612 = vpack.c.b16 %v492, %v491
      %v613 = vpack.c.b16 %v494, %v493
      %v614 = vpack.c.b16 %v496, %v495
      %v615 = vpack.c.b16 %v498, %v497
      %v616 = vpack.c.b16 %v500, %v499
      %v617 = vpack.c.b16 %v502, %v501
      %v618 = vpack.c.b16 %v504, %v503
      %v619 = vpack.c.b16 %v506, %v505
      %v620 = vpack.c.b16 %v508, %v507
      %v621 = vpack.c.b16 %v510, %v509
      %v622 = vpack.c.b16 %v512, %v511
      %v623 = vpack.c.b16 %v514, %v513
      %v624 = vpack.c.b16 %v516, %v515
      %v625 = vpack.c.b16 %v518, %v517
      %v626 = vpack.c.b16 %v520, %v519
      %v627 = vpack.c.b16 %v522, %v521
      %v628 = vpack.c.b16 %v524, %v523
      %v629 = vpack.c.b16 %v526, %v525
      %v630 = vpack.c.b16 %v528, %v527
      %v631 = vpack.c.b16 %v530, %v529
      %v632 = vpack.c.b16 %v532, %v531
      %v633 = vpack.c.b16 %v534, %v533
      %v634 = vpack.c.b16 %v536, %v535
      %v635 = vpack.c.b16 %v538, %v537
      %v636 = vpack.c.b16 %v540, %v539
      %v637 = vpack.c.b16 %v542, %v541
      %v638 = vpack.c.b16 %v544, %v543
      %v639 = vpack.c.b16 %v546, %v545
      %v640 = vpack.c.b16 %v548, %v547
      %v641 = vpack.c.b16 %v550, %v549
      %v642 = vpack.c.b16 %v552, %v551
      %v643 = vpack.c.b16 %v554, %v553
      %v644 = vpack.c.b16 %v556, %v555
      %v645 = vpack.c.b16 %v558, %v557
      %v646 = vpack.c.b16 %v560, %v559
      %v647 = vpack.c.b16 %v562, %v561
      %v648 = vpack.c.b16 %v564, %v563
      %v649 = vpack.c.b16 %v566, %v565
      %v650 = vpack.c.b16 %v568, %v567
      %v651 = vpack.c.b16 %v570, %v569
      %v652 = vpack.c.b16 %v572, %v571
      %v653 = vpack.c.b16 %v574, %v573
      %v654 = vpack.c.b16 %v576, %v575
      %v655 = vpack.c.b16 %v578, %v577
      %v656 = vpack.c.b16 %v580, %v579
      %v657 = vpack.c.b16 %v582, %v581
      %v658 = vpack.c.b16 %v584, %v583
      %v659 = vpack.c.b16 %v586, %v585
      %v660 = vpack.c.b16 %v588, %v587
      %v661 = vpack.c.b16 %v590, %v589
      %v662 = vpack.c.b16 %v592, %v591
      %v663 = vpack.c.b16 %v594, %v593
      %v664 = vpack.c.b16 %v596, %v595
      %v665 = vpack.c.b16 %v598, %v597
      %v666 = vpack.c.b16 %v600, %v599
      %v667 = vpack.c.b16 %v602, %v601
      %v668 = vpack.c.b16 %v604, %v603
      %vm669 = vcmask 64512
      %v671 = vsel %vm669, %v605, 0
      %v674 = vsel %vm669, %v606, 0
      %v677 = vsel %vm669, %v607, 0
      %v680 = vsel %vm669, %v608, 0
      %v683 = vsel %vm669, %v609, 0
      %v686 = vsel %vm669, %v610, 0
      %v689 = vsel %vm669, %v611, 0
      %v692 = vsel %vm669, %v612, 0
      %v695 = vsel %vm669, %v613, 0
      %v698 = vsel %vm669, %v614, 0
      %v701 = vsel %vm669, %v615, 0
      %v704 = vsel %vm669, %v616, 0
      %v707 = vsel %vm669, %v617, 0
      %v710 = vsel %vm669, %v618, 0
      %v713 = vsel %vm669, %v619, 0
      %v716 = vsel %vm669, %v620, 0
      %v719 = vsel %vm669, %v621, 0
      %v722 = vsel %vm669, %v622, 0
      %v725 = vsel %vm669, %v623, 0
      %v728 = vsel %vm669, %v624, 0
      %v731 = vsel %vm669, %v625, 0
      %v734 = vsel %vm669, %v626, 0
      %v737 = vsel %vm669, %v627, 0
      %v740 = vsel %vm669, %v628, 0
      %v743 = vsel %vm669, %v629, 0
      %v746 = vsel %vm669, %v630, 0
      %v749 = vsel %vm669, %v631, 0
      %v752 = vsel %vm669, %v632, 0
      %v755 = vsel %vm669, %v633, 0
      %v758 = vsel %vm669, %v634, 0
      %v761 = vsel %vm669, %v635, 0
      %v764 = vsel %vm669, %v636, 0
      %v767 = vsel %vm669, %v637, 0
      %v770 = vsel %vm669, %v638, 0
      %v773 = vsel %vm669, %v639, 0
      %v776 = vsel %vm669, %v640, 0
      %v779 = vsel %vm669, %v641, 0
      %v782 = vsel %vm669, %v642, 0
      %v785 = vsel %vm669, %v643, 0
      %v788 = vsel %vm669, %v644, 0
      %v791 = vsel %vm669, %v645, 0
      %v794 = vsel %vm669, %v646, 0
      %v797 = vsel %vm669, %v647, 0
      %v800 = vsel %vm669, %v648, 0
      %v803 = vsel %vm669, %v649, 0
      %v806 = vsel %vm669, %v650, 0
      %v809 = vsel %vm669, %v651, 0
      %v812 = vsel %vm669, %v652, 0
      %v815 = vsel %vm669, %v653, 0
      %v818 = vsel %vm669, %v654, 0
      %v821 = vsel %vm669, %v655, 0
      %v824 = vsel %vm669, %v656, 0
      %v827 = vsel %vm669, %v657, 0
      %v830 = vsel %vm669, %v658, 0
      %v833 = vsel %vm669, %v659, 0
      %v836 = vsel %vm669, %v660, 0
      %v839 = vsel %vm669, %v661, 0
      %v842 = vsel %vm669, %v662, 0
      %v845 = vsel %vm669, %v663, 0
      %v848 = vsel %vm669, %v664, 0
      %v851 = vsel %vm669, %v665, 0
      %v854 = vsel %vm669, %v666, 0
      %v857 = vsel %vm669, %v667, 0
      %v860 = vsel %vm669, %v668, 0
      %vm862 = vcmask 1043456
      %v864 = vsel %vm862, %v348, 0
      %866 = vmatpush.bf16.msra.mxu0 0
      %867 = vmatpush.bf16.msra.mxu0 0
      %868 = vmatpush.bf16.msra.mxu0 0
      %869 = vmatpush.bf16.msra.mxu0 0
      %870 = vmatpush.bf16.msra.mxu0 0
      %871 = vmatpush.bf16.msra.mxu0 0
      %872 = vmatpush.bf16.msra.mxu0 0
      %873 = vmatpush.bf16.msra.mxu0 %v864
      %874 = vmatmul.bf16.gmra.mxu0 %v671
      %v875 = vpop.f32.mrf.mxu0
      %v876 = vadd.f32 0.0, %v875
      %v877 = vpop.f32.mrf.mxu0
      %v878 = vadd.f32 0.0, %v877
      %879 = vmatmul.bf16.gmra.mxu0 %v674
      %v880 = vpop.f32.mrf.mxu0
      %v881 = vadd.f32 0.0, %v880
      %v882 = vpop.f32.mrf.mxu0
      %v883 = vadd.f32 0.0, %v882
      %884 = vmatmul.bf16.gmra.mxu0 %v677
      %v885 = vpop.f32.mrf.mxu0
      %v886 = vadd.f32 0.0, %v885
      %v887 = vpop.f32.mrf.mxu0
      %v888 = vadd.f32 0.0, %v887
      %889 = vmatmul.bf16.gmra.mxu0 %v680
      %v890 = vpop.f32.mrf.mxu0
      %v891 = vadd.f32 0.0, %v890
      %v892 = vpop.f32.mrf.mxu0
      %v893 = vadd.f32 0.0, %v892
      %894 = vmatmul.bf16.gmra.mxu0 %v683
      %v895 = vpop.f32.mrf.mxu0
      %v896 = vadd.f32 0.0, %v895
      %v897 = vpop.f32.mrf.mxu0
      %v898 = vadd.f32 0.0, %v897
      %899 = vmatmul.bf16.gmra.mxu0 %v686
      %v900 = vpop.f32.mrf.mxu0
      %v901 = vadd.f32 0.0, %v900
      %v902 = vpop.f32.mrf.mxu0
      %v903 = vadd.f32 0.0, %v902
      %904 = vmatmul.bf16.gmra.mxu0 %v689
      %v905 = vpop.f32.mrf.mxu0
      %v906 = vadd.f32 0.0, %v905
      %v907 = vpop.f32.mrf.mxu0
      %v908 = vadd.f32 0.0, %v907
      %909 = vmatmul.bf16.gmra.mxu0 %v692
      %v910 = vpop.f32.mrf.mxu0
      %v911 = vadd.f32 0.0, %v910
      %v912 = vpop.f32.mrf.mxu0
      %v913 = vadd.f32 0.0, %v912
      %914 = vmatmul.bf16.gmra.mxu0 %v695
      %v915 = vpop.f32.mrf.mxu0
      %v916 = vadd.f32 0.0, %v915
      %v917 = vpop.f32.mrf.mxu0
      %v918 = vadd.f32 0.0, %v917
      %919 = vmatmul.bf16.gmra.mxu0 %v698
      %v920 = vpop.f32.mrf.mxu0
      %v921 = vadd.f32 0.0, %v920
      %v922 = vpop.f32.mrf.mxu0
      %v923 = vadd.f32 0.0, %v922
      %924 = vmatmul.bf16.gmra.mxu0 %v701
      %v925 = vpop.f32.mrf.mxu0
      %v926 = vadd.f32 0.0, %v925
      %v927 = vpop.f32.mrf.mxu0
      %v928 = vadd.f32 0.0, %v927
      %929 = vmatmul.bf16.gmra.mxu0 %v704
      %v930 = vpop.f32.mrf.mxu0
      %v931 = vadd.f32 0.0, %v930
      %v932 = vpop.f32.mrf.mxu0
      %v933 = vadd.f32 0.0, %v932
      %934 = vmatmul.bf16.gmra.mxu0 %v707
      %v935 = vpop.f32.mrf.mxu0
      %v936 = vadd.f32 0.0, %v935
      %v937 = vpop.f32.mrf.mxu0
      %v938 = vadd.f32 0.0, %v937
      %939 = vmatmul.bf16.gmra.mxu0 %v710
      %v940 = vpop.f32.mrf.mxu0
      %v941 = vadd.f32 0.0, %v940
      %v942 = vpop.f32.mrf.mxu0
      %v943 = vadd.f32 0.0, %v942
      %944 = vmatmul.bf16.gmra.mxu0 %v713
      %v945 = vpop.f32.mrf.mxu0
      %v946 = vadd.f32 0.0, %v945
      %v947 = vpop.f32.mrf.mxu0
      %v948 = vadd.f32 0.0, %v947
      %949 = vmatmul.bf16.gmra.mxu0 %v716
      %v950 = vpop.f32.mrf.mxu0
      %v951 = vadd.f32 0.0, %v950
      %v952 = vpop.f32.mrf.mxu0
      %v953 = vadd.f32 0.0, %v952
      %954 = vmatmul.bf16.gmra.mxu0 %v719
      %v955 = vpop.f32.mrf.mxu0
      %v956 = vadd.f32 0.0, %v955
      %v957 = vpop.f32.mrf.mxu0
      %v958 = vadd.f32 0.0, %v957
      %959 = vmatmul.bf16.gmra.mxu0 %v722
      %v960 = vpop.f32.mrf.mxu0
      %v961 = vadd.f32 0.0, %v960
      %v962 = vpop.f32.mrf.mxu0
      %v963 = vadd.f32 0.0, %v962
      %964 = vmatmul.bf16.gmra.mxu0 %v725
      %v965 = vpop.f32.mrf.mxu0
      %v966 = vadd.f32 0.0, %v965
      %v967 = vpop.f32.mrf.mxu0
      %v968 = vadd.f32 0.0, %v967
      %969 = vmatmul.bf16.gmra.mxu0 %v728
      %v970 = vpop.f32.mrf.mxu0
      %v971 = vadd.f32 0.0, %v970
      %v972 = vpop.f32.mrf.mxu0
      %v973 = vadd.f32 0.0, %v972
      %974 = vmatmul.bf16.gmra.mxu0 %v731
      %v975 = vpop.f32.mrf.mxu0
      %v976 = vadd.f32 0.0, %v975
      %v977 = vpop.f32.mrf.mxu0
      %v978 = vadd.f32 0.0, %v977
      %979 = vmatmul.bf16.gmra.mxu0 %v734
      %v980 = vpop.f32.mrf.mxu0
      %v981 = vadd.f32 0.0, %v980
      %v982 = vpop.f32.mrf.mxu0
      %v983 = vadd.f32 0.0, %v982
      %984 = vmatmul.bf16.gmra.mxu0 %v737
      %v985 = vpop.f32.mrf.mxu0
      %v986 = vadd.f32 0.0, %v985
      %v987 = vpop.f32.mrf.mxu0
      %v988 = vadd.f32 0.0, %v987
      %989 = vmatmul.bf16.gmra.mxu0 %v740
      %v990 = vpop.f32.mrf.mxu0
      %v991 = vadd.f32 0.0, %v990
      %v992 = vpop.f32.mrf.mxu0
      %v993 = vadd.f32 0.0, %v992
      %994 = vmatmul.bf16.gmra.mxu0 %v743
      %v995 = vpop.f32.mrf.mxu0
      %v996 = vadd.f32 0.0, %v995
      %v997 = vpop.f32.mrf.mxu0
      %v998 = vadd.f32 0.0, %v997
      %999 = vmatmul.bf16.gmra.mxu0 %v746
      %v1000 = vpop.f32.mrf.mxu0
      %v1001 = vadd.f32 0.0, %v1000
      %v1002 = vpop.f32.mrf.mxu0
      %v1003 = vadd.f32 0.0, %v1002
      %1004 = vmatmul.bf16.gmra.mxu0 %v749
      %v1005 = vpop.f32.mrf.mxu0
      %v1006 = vadd.f32 0.0, %v1005
      %v1007 = vpop.f32.mrf.mxu0
      %v1008 = vadd.f32 0.0, %v1007
      %1009 = vmatmul.bf16.gmra.mxu0 %v752
      %v1010 = vpop.f32.mrf.mxu0
      %v1011 = vadd.f32 0.0, %v1010
      %v1012 = vpop.f32.mrf.mxu0
      %v1013 = vadd.f32 0.0, %v1012
      %1014 = vmatmul.bf16.gmra.mxu0 %v755
      %v1015 = vpop.f32.mrf.mxu0
      %v1016 = vadd.f32 0.0, %v1015
      %v1017 = vpop.f32.mrf.mxu0
      %v1018 = vadd.f32 0.0, %v1017
      %1019 = vmatmul.bf16.gmra.mxu0 %v758
      %v1020 = vpop.f32.mrf.mxu0
      %v1021 = vadd.f32 0.0, %v1020
      %v1022 = vpop.f32.mrf.mxu0
      %v1023 = vadd.f32 0.0, %v1022
      %1024 = vmatmul.bf16.gmra.mxu0 %v761
      %v1025 = vpop.f32.mrf.mxu0
      %v1026 = vadd.f32 0.0, %v1025
      %v1027 = vpop.f32.mrf.mxu0
      %v1028 = vadd.f32 0.0, %v1027
      %1029 = vmatmul.bf16.gmra.mxu0 %v764
      %v1030 = vpop.f32.mrf.mxu0
      %v1031 = vadd.f32 0.0, %v1030
      %v1032 = vpop.f32.mrf.mxu0
      %v1033 = vadd.f32 0.0, %v1032
      %1034 = vmatmul.bf16.gmra.mxu0 %v767
      %v1035 = vpop.f32.mrf.mxu0
      %v1036 = vadd.f32 0.0, %v1035
      %v1037 = vpop.f32.mrf.mxu0
      %v1038 = vadd.f32 0.0, %v1037
      %1039 = vmatmul.bf16.gmra.mxu0 %v770
      %v1040 = vpop.f32.mrf.mxu0
      %v1041 = vadd.f32 0.0, %v1040
      %v1042 = vpop.f32.mrf.mxu0
      %v1043 = vadd.f32 0.0, %v1042
      %1044 = vmatmul.bf16.gmra.mxu0 %v773
      %v1045 = vpop.f32.mrf.mxu0
      %v1046 = vadd.f32 0.0, %v1045
      %v1047 = vpop.f32.mrf.mxu0
      %v1048 = vadd.f32 0.0, %v1047
      %1049 = vmatmul.bf16.gmra.mxu0 %v776
      %v1050 = vpop.f32.mrf.mxu0
      %v1051 = vadd.f32 0.0, %v1050
      %v1052 = vpop.f32.mrf.mxu0
      %v1053 = vadd.f32 0.0, %v1052
      %1054 = vmatmul.bf16.gmra.mxu0 %v779
      %v1055 = vpop.f32.mrf.mxu0
      %v1056 = vadd.f32 0.0, %v1055
      %v1057 = vpop.f32.mrf.mxu0
      %v1058 = vadd.f32 0.0, %v1057
      %1059 = vmatmul.bf16.gmra.mxu0 %v782
      %v1060 = vpop.f32.mrf.mxu0
      %v1061 = vadd.f32 0.0, %v1060
      %v1062 = vpop.f32.mrf.mxu0
      %v1063 = vadd.f32 0.0, %v1062
      %1064 = vmatmul.bf16.gmra.mxu0 %v785
      %v1065 = vpop.f32.mrf.mxu0
      %v1066 = vadd.f32 0.0, %v1065
      %v1067 = vpop.f32.mrf.mxu0
      %v1068 = vadd.f32 0.0, %v1067
      %1069 = vmatmul.bf16.gmra.mxu0 %v788
      %v1070 = vpop.f32.mrf.mxu0
      %v1071 = vadd.f32 0.0, %v1070
      %v1072 = vpop.f32.mrf.mxu0
      %v1073 = vadd.f32 0.0, %v1072
      %1074 = vmatmul.bf16.gmra.mxu0 %v791
      %v1075 = vpop.f32.mrf.mxu0
      %v1076 = vadd.f32 0.0, %v1075
      %v1077 = vpop.f32.mrf.mxu0
      %v1078 = vadd.f32 0.0, %v1077
      %1079 = vmatmul.bf16.gmra.mxu0 %v794
      %v1080 = vpop.f32.mrf.mxu0
      %v1081 = vadd.f32 0.0, %v1080
      %v1082 = vpop.f32.mrf.mxu0
      %v1083 = vadd.f32 0.0, %v1082
      %1084 = vmatmul.bf16.gmra.mxu0 %v797
      %v1085 = vpop.f32.mrf.mxu0
      %v1086 = vadd.f32 0.0, %v1085
      %v1087 = vpop.f32.mrf.mxu0
      %v1088 = vadd.f32 0.0, %v1087
      %1089 = vmatmul.bf16.gmra.mxu0 %v800
      %v1090 = vpop.f32.mrf.mxu0
      %v1091 = vadd.f32 0.0, %v1090
      %v1092 = vpop.f32.mrf.mxu0
      %v1093 = vadd.f32 0.0, %v1092
      %1094 = vmatmul.bf16.gmra.mxu0 %v803
      %v1095 = vpop.f32.mrf.mxu0
      %v1096 = vadd.f32 0.0, %v1095
      %v1097 = vpop.f32.mrf.mxu0
      %v1098 = vadd.f32 0.0, %v1097
      %1099 = vmatmul.bf16.gmra.mxu0 %v806
      %v1100 = vpop.f32.mrf.mxu0
      %v1101 = vadd.f32 0.0, %v1100
      %v1102 = vpop.f32.mrf.mxu0
      %v1103 = vadd.f32 0.0, %v1102
      %1104 = vmatmul.bf16.gmra.mxu0 %v809
      %v1105 = vpop.f32.mrf.mxu0
      %v1106 = vadd.f32 0.0, %v1105
      %v1107 = vpop.f32.mrf.mxu0
      %v1108 = vadd.f32 0.0, %v1107
      %1109 = vmatmul.bf16.gmra.mxu0 %v812
      %v1110 = vpop.f32.mrf.mxu0
      %v1111 = vadd.f32 0.0, %v1110
      %v1112 = vpop.f32.mrf.mxu0
      %v1113 = vadd.f32 0.0, %v1112
      %1114 = vmatmul.bf16.gmra.mxu0 %v815
      %v1115 = vpop.f32.mrf.mxu0
      %v1116 = vadd.f32 0.0, %v1115
      %v1117 = vpop.f32.mrf.mxu0
      %v1118 = vadd.f32 0.0, %v1117
      %1119 = vmatmul.bf16.gmra.mxu0 %v818
      %v1120 = vpop.f32.mrf.mxu0
      %v1121 = vadd.f32 0.0, %v1120
      %v1122 = vpop.f32.mrf.mxu0
      %v1123 = vadd.f32 0.0, %v1122
      %1124 = vmatmul.bf16.gmra.mxu0 %v821
      %v1125 = vpop.f32.mrf.mxu0
      %v1126 = vadd.f32 0.0, %v1125
      %v1127 = vpop.f32.mrf.mxu0
      %v1128 = vadd.f32 0.0, %v1127
      %1129 = vmatmul.bf16.gmra.mxu0 %v824
      %v1130 = vpop.f32.mrf.mxu0
      %v1131 = vadd.f32 0.0, %v1130
      %v1132 = vpop.f32.mrf.mxu0
      %v1133 = vadd.f32 0.0, %v1132
      %1134 = vmatmul.bf16.gmra.mxu0 %v827
      %v1135 = vpop.f32.mrf.mxu0
      %v1136 = vadd.f32 0.0, %v1135
      %v1137 = vpop.f32.mrf.mxu0
      %v1138 = vadd.f32 0.0, %v1137
      %1139 = vmatmul.bf16.gmra.mxu0 %v830
      %v1140 = vpop.f32.mrf.mxu0
      %v1141 = vadd.f32 0.0, %v1140
      %v1142 = vpop.f32.mrf.mxu0
      %v1143 = vadd.f32 0.0, %v1142
      %1144 = vmatmul.bf16.gmra.mxu0 %v833
      %v1145 = vpop.f32.mrf.mxu0
      %v1146 = vadd.f32 0.0, %v1145
      %v1147 = vpop.f32.mrf.mxu0
      %v1148 = vadd.f32 0.0, %v1147
      %1149 = vmatmul.bf16.gmra.mxu0 %v836
      %v1150 = vpop.f32.mrf.mxu0
      %v1151 = vadd.f32 0.0, %v1150
      %v1152 = vpop.f32.mrf.mxu0
      %v1153 = vadd.f32 0.0, %v1152
      %1154 = vmatmul.bf16.gmra.mxu0 %v839
      %v1155 = vpop.f32.mrf.mxu0
      %v1156 = vadd.f32 0.0, %v1155
      %v1157 = vpop.f32.mrf.mxu0
      %v1158 = vadd.f32 0.0, %v1157
      %1159 = vmatmul.bf16.gmra.mxu0 %v842
      %v1160 = vpop.f32.mrf.mxu0
      %v1161 = vadd.f32 0.0, %v1160
      %v1162 = vpop.f32.mrf.mxu0
      %v1163 = vadd.f32 0.0, %v1162
      %1164 = vmatmul.bf16.gmra.mxu0 %v845
      %v1165 = vpop.f32.mrf.mxu0
      %v1166 = vadd.f32 0.0, %v1165
      %v1167 = vpop.f32.mrf.mxu0
      %v1168 = vadd.f32 0.0, %v1167
      %1169 = vmatmul.bf16.gmra.mxu0 %v848
      %v1170 = vpop.f32.mrf.mxu0
      %v1171 = vadd.f32 0.0, %v1170
      %v1172 = vpop.f32.mrf.mxu0
      %v1173 = vadd.f32 0.0, %v1172
      %1174 = vmatmul.bf16.gmra.mxu0 %v851
      %v1175 = vpop.f32.mrf.mxu0
      %v1176 = vadd.f32 0.0, %v1175
      %v1177 = vpop.f32.mrf.mxu0
      %v1178 = vadd.f32 0.0, %v1177
      %1179 = vmatmul.bf16.gmra.mxu0 %v854
      %v1180 = vpop.f32.mrf.mxu0
      %v1181 = vadd.f32 0.0, %v1180
      %v1182 = vpop.f32.mrf.mxu0
      %v1183 = vadd.f32 0.0, %v1182
      %1184 = vmatmul.bf16.gmra.mxu0 %v857
      %v1185 = vpop.f32.mrf.mxu0
      %v1186 = vadd.f32 0.0, %v1185
      %v1187 = vpop.f32.mrf.mxu0
      %v1188 = vadd.f32 0.0, %v1187
      %1189 = vmatmul.bf16.gmra.mxu0 %v860
      %v1190 = vpop.f32.mrf.mxu0
      %v1191 = vadd.f32 0.0, %v1190
      %v1192 = vpop.f32.mrf.mxu0
      %v1193 = vadd.f32 0.0, %v1192
      %1194 = vdwg.mxu0
      %v1199 = vunpack.c.l.b16 %v210
      %v1200 = vunpack.c.l.b16 %v211
      %v1201 = vunpack.c.l.b16 %v212
      %v1202 = vunpack.c.l.b16 %v213
      %v1203 = vpack.c.b16 %v1200, %v1199
      %v1204 = vpack.c.b16 %v1202, %v1201
      %v1206 = vsel %vm669, %v1203, 0
      %v1209 = vsel %vm669, %v1204, 0
      %v1212 = vsel %vm862, %v346, 0
      %1214 = vmatpush.bf16.msra.mxu0 0
      %1215 = vmatpush.bf16.msra.mxu0 0
      %1216 = vmatpush.bf16.msra.mxu0 0
      %1217 = vmatpush.bf16.msra.mxu0 0
      %1218 = vmatpush.bf16.msra.mxu0 0
      %1219 = vmatpush.bf16.msra.mxu0 0
      %1220 = vmatpush.bf16.msra.mxu0 0
      %1221 = vmatpush.bf16.msra.mxu0 %v1212
      %1222 = vmatmul.bf16.gmra.mxu0 %v1206
      %v1223 = vpop.f32.mrf.mxu0
      %v1224 = vadd.f32 %v876, %v1223
      %v1225 = vpop.f32.mrf.mxu0
      %v1226 = vadd.f32 %v878, %v1225
      %1227 = vmatmul.bf16.gmra.mxu0 %v1209
      %v1228 = vpop.f32.mrf.mxu0
      %v1229 = vadd.f32 %v881, %v1228
      %v1230 = vpop.f32.mrf.mxu0
      %v1231 = vadd.f32 %v883, %v1230
      %1232 = vmatmul.bf16.gmra.mxu0 %v671
      %v1233 = vpop.f32.mrf.mxu0
      %v1234 = vadd.f32 %v886, %v1233
      %v1235 = vpop.f32.mrf.mxu0
      %v1236 = vadd.f32 %v888, %v1235
      %1237 = vmatmul.bf16.gmra.mxu0 %v674
      %v1238 = vpop.f32.mrf.mxu0
      %v1239 = vadd.f32 %v891, %v1238
      %v1240 = vpop.f32.mrf.mxu0
      %v1241 = vadd.f32 %v893, %v1240
      %1242 = vmatmul.bf16.gmra.mxu0 %v677
      %v1243 = vpop.f32.mrf.mxu0
      %v1244 = vadd.f32 %v896, %v1243
      %v1245 = vpop.f32.mrf.mxu0
      %v1246 = vadd.f32 %v898, %v1245
      %1247 = vmatmul.bf16.gmra.mxu0 %v680
      %v1248 = vpop.f32.mrf.mxu0
      %v1249 = vadd.f32 %v901, %v1248
      %v1250 = vpop.f32.mrf.mxu0
      %v1251 = vadd.f32 %v903, %v1250
      %1252 = vmatmul.bf16.gmra.mxu0 %v683
      %v1253 = vpop.f32.mrf.mxu0
      %v1254 = vadd.f32 %v906, %v1253
      %v1255 = vpop.f32.mrf.mxu0
      %v1256 = vadd.f32 %v908, %v1255
      %1257 = vmatmul.bf16.gmra.mxu0 %v686
      %v1258 = vpop.f32.mrf.mxu0
      %v1259 = vadd.f32 %v911, %v1258
      %v1260 = vpop.f32.mrf.mxu0
      %v1261 = vadd.f32 %v913, %v1260
      %1262 = vmatmul.bf16.gmra.mxu0 %v689
      %v1263 = vpop.f32.mrf.mxu0
      %v1264 = vadd.f32 %v916, %v1263
      %v1265 = vpop.f32.mrf.mxu0
      %v1266 = vadd.f32 %v918, %v1265
      %1267 = vmatmul.bf16.gmra.mxu0 %v692
      %v1268 = vpop.f32.mrf.mxu0
      %v1269 = vadd.f32 %v921, %v1268
      %v1270 = vpop.f32.mrf.mxu0
      %v1271 = vadd.f32 %v923, %v1270
      %1272 = vmatmul.bf16.gmra.mxu0 %v695
      %v1273 = vpop.f32.mrf.mxu0
      %v1274 = vadd.f32 %v926, %v1273
      %v1275 = vpop.f32.mrf.mxu0
      %v1276 = vadd.f32 %v928, %v1275
      %1277 = vmatmul.bf16.gmra.mxu0 %v698
      %v1278 = vpop.f32.mrf.mxu0
      %v1279 = vadd.f32 %v931, %v1278
      %v1280 = vpop.f32.mrf.mxu0
      %v1281 = vadd.f32 %v933, %v1280
      %1282 = vmatmul.bf16.gmra.mxu0 %v701
      %v1283 = vpop.f32.mrf.mxu0
      %v1284 = vadd.f32 %v936, %v1283
      %v1285 = vpop.f32.mrf.mxu0
      %v1286 = vadd.f32 %v938, %v1285
      %1287 = vmatmul.bf16.gmra.mxu0 %v704
      %v1288 = vpop.f32.mrf.mxu0
      %v1289 = vadd.f32 %v941, %v1288
      %v1290 = vpop.f32.mrf.mxu0
      %v1291 = vadd.f32 %v943, %v1290
      %1292 = vmatmul.bf16.gmra.mxu0 %v707
      %v1293 = vpop.f32.mrf.mxu0
      %v1294 = vadd.f32 %v946, %v1293
      %v1295 = vpop.f32.mrf.mxu0
      %v1296 = vadd.f32 %v948, %v1295
      %1297 = vmatmul.bf16.gmra.mxu0 %v710
      %v1298 = vpop.f32.mrf.mxu0
      %v1299 = vadd.f32 %v951, %v1298
      %v1300 = vpop.f32.mrf.mxu0
      %v1301 = vadd.f32 %v953, %v1300
      %1302 = vmatmul.bf16.gmra.mxu0 %v713
      %v1303 = vpop.f32.mrf.mxu0
      %v1304 = vadd.f32 %v956, %v1303
      %v1305 = vpop.f32.mrf.mxu0
      %v1306 = vadd.f32 %v958, %v1305
      %1307 = vmatmul.bf16.gmra.mxu0 %v716
      %v1308 = vpop.f32.mrf.mxu0
      %v1309 = vadd.f32 %v961, %v1308
      %v1310 = vpop.f32.mrf.mxu0
      %v1311 = vadd.f32 %v963, %v1310
      %1312 = vmatmul.bf16.gmra.mxu0 %v719
      %v1313 = vpop.f32.mrf.mxu0
      %v1314 = vadd.f32 %v966, %v1313
      %v1315 = vpop.f32.mrf.mxu0
      %v1316 = vadd.f32 %v968, %v1315
      %1317 = vmatmul.bf16.gmra.mxu0 %v722
      %v1318 = vpop.f32.mrf.mxu0
      %v1319 = vadd.f32 %v971, %v1318
      %v1320 = vpop.f32.mrf.mxu0
      %v1321 = vadd.f32 %v973, %v1320
      %1322 = vmatmul.bf16.gmra.mxu0 %v725
      %v1323 = vpop.f32.mrf.mxu0
      %v1324 = vadd.f32 %v976, %v1323
      %v1325 = vpop.f32.mrf.mxu0
      %v1326 = vadd.f32 %v978, %v1325
      %1327 = vmatmul.bf16.gmra.mxu0 %v728
      %v1328 = vpop.f32.mrf.mxu0
      %v1329 = vadd.f32 %v981, %v1328
      %v1330 = vpop.f32.mrf.mxu0
      %v1331 = vadd.f32 %v983, %v1330
      %1332 = vmatmul.bf16.gmra.mxu0 %v731
      %v1333 = vpop.f32.mrf.mxu0
      %v1334 = vadd.f32 %v986, %v1333
      %v1335 = vpop.f32.mrf.mxu0
      %v1336 = vadd.f32 %v988, %v1335
      %1337 = vmatmul.bf16.gmra.mxu0 %v734
      %v1338 = vpop.f32.mrf.mxu0
      %v1339 = vadd.f32 %v991, %v1338
      %v1340 = vpop.f32.mrf.mxu0
      %v1341 = vadd.f32 %v993, %v1340
      %1342 = vmatmul.bf16.gmra.mxu0 %v737
      %v1343 = vpop.f32.mrf.mxu0
      %v1344 = vadd.f32 %v996, %v1343
      %v1345 = vpop.f32.mrf.mxu0
      %v1346 = vadd.f32 %v998, %v1345
      %1347 = vmatmul.bf16.gmra.mxu0 %v740
      %v1348 = vpop.f32.mrf.mxu0
      %v1349 = vadd.f32 %v1001, %v1348
      %v1350 = vpop.f32.mrf.mxu0
      %v1351 = vadd.f32 %v1003, %v1350
      %1352 = vmatmul.bf16.gmra.mxu0 %v743
      %v1353 = vpop.f32.mrf.mxu0
      %v1354 = vadd.f32 %v1006, %v1353
      %v1355 = vpop.f32.mrf.mxu0
      %v1356 = vadd.f32 %v1008, %v1355
      %1357 = vmatmul.bf16.gmra.mxu0 %v746
      %v1358 = vpop.f32.mrf.mxu0
      %v1359 = vadd.f32 %v1011, %v1358
      %v1360 = vpop.f32.mrf.mxu0
      %v1361 = vadd.f32 %v1013, %v1360
      %1362 = vmatmul.bf16.gmra.mxu0 %v749
      %v1363 = vpop.f32.mrf.mxu0
      %v1364 = vadd.f32 %v1016, %v1363
      %v1365 = vpop.f32.mrf.mxu0
      %v1366 = vadd.f32 %v1018, %v1365
      %1367 = vmatmul.bf16.gmra.mxu0 %v752
      %v1368 = vpop.f32.mrf.mxu0
      %v1369 = vadd.f32 %v1021, %v1368
      %v1370 = vpop.f32.mrf.mxu0
      %v1371 = vadd.f32 %v1023, %v1370
      %1372 = vmatmul.bf16.gmra.mxu0 %v755
      %v1373 = vpop.f32.mrf.mxu0
      %v1374 = vadd.f32 %v1026, %v1373
      %v1375 = vpop.f32.mrf.mxu0
      %v1376 = vadd.f32 %v1028, %v1375
      %1377 = vmatmul.bf16.gmra.mxu0 %v758
      %v1378 = vpop.f32.mrf.mxu0
      %v1379 = vadd.f32 %v1031, %v1378
      %v1380 = vpop.f32.mrf.mxu0
      %v1381 = vadd.f32 %v1033, %v1380
      %1382 = vmatmul.bf16.gmra.mxu0 %v761
      %v1383 = vpop.f32.mrf.mxu0
      %v1384 = vadd.f32 %v1036, %v1383
      %v1385 = vpop.f32.mrf.mxu0
      %v1386 = vadd.f32 %v1038, %v1385
      %1387 = vmatmul.bf16.gmra.mxu0 %v764
      %v1388 = vpop.f32.mrf.mxu0
      %v1389 = vadd.f32 %v1041, %v1388
      %v1390 = vpop.f32.mrf.mxu0
      %v1391 = vadd.f32 %v1043, %v1390
      %1392 = vmatmul.bf16.gmra.mxu0 %v767
      %v1393 = vpop.f32.mrf.mxu0
      %v1394 = vadd.f32 %v1046, %v1393
      %v1395 = vpop.f32.mrf.mxu0
      %v1396 = vadd.f32 %v1048, %v1395
      %1397 = vmatmul.bf16.gmra.mxu0 %v770
      %v1398 = vpop.f32.mrf.mxu0
      %v1399 = vadd.f32 %v1051, %v1398
      %v1400 = vpop.f32.mrf.mxu0
      %v1401 = vadd.f32 %v1053, %v1400
      %1402 = vmatmul.bf16.gmra.mxu0 %v773
      %v1403 = vpop.f32.mrf.mxu0
      %v1404 = vadd.f32 %v1056, %v1403
      %v1405 = vpop.f32.mrf.mxu0
      %v1406 = vadd.f32 %v1058, %v1405
      %1407 = vmatmul.bf16.gmra.mxu0 %v776
      %v1408 = vpop.f32.mrf.mxu0
      %v1409 = vadd.f32 %v1061, %v1408
      %v1410 = vpop.f32.mrf.mxu0
      %v1411 = vadd.f32 %v1063, %v1410
      %1412 = vmatmul.bf16.gmra.mxu0 %v779
      %v1413 = vpop.f32.mrf.mxu0
      %v1414 = vadd.f32 %v1066, %v1413
      %v1415 = vpop.f32.mrf.mxu0
      %v1416 = vadd.f32 %v1068, %v1415
      %1417 = vmatmul.bf16.gmra.mxu0 %v782
      %v1418 = vpop.f32.mrf.mxu0
      %v1419 = vadd.f32 %v1071, %v1418
      %v1420 = vpop.f32.mrf.mxu0
      %v1421 = vadd.f32 %v1073, %v1420
      %1422 = vmatmul.bf16.gmra.mxu0 %v785
      %v1423 = vpop.f32.mrf.mxu0
      %v1424 = vadd.f32 %v1076, %v1423
      %v1425 = vpop.f32.mrf.mxu0
      %v1426 = vadd.f32 %v1078, %v1425
      %1427 = vmatmul.bf16.gmra.mxu0 %v788
      %v1428 = vpop.f32.mrf.mxu0
      %v1429 = vadd.f32 %v1081, %v1428
      %v1430 = vpop.f32.mrf.mxu0
      %v1431 = vadd.f32 %v1083, %v1430
      %1432 = vmatmul.bf16.gmra.mxu0 %v791
      %v1433 = vpop.f32.mrf.mxu0
      %v1434 = vadd.f32 %v1086, %v1433
      %v1435 = vpop.f32.mrf.mxu0
      %v1436 = vadd.f32 %v1088, %v1435
      %1437 = vmatmul.bf16.gmra.mxu0 %v794
      %v1438 = vpop.f32.mrf.mxu0
      %v1439 = vadd.f32 %v1091, %v1438
      %v1440 = vpop.f32.mrf.mxu0
      %v1441 = vadd.f32 %v1093, %v1440
      %1442 = vmatmul.bf16.gmra.mxu0 %v797
      %v1443 = vpop.f32.mrf.mxu0
      %v1444 = vadd.f32 %v1096, %v1443
      %v1445 = vpop.f32.mrf.mxu0
      %v1446 = vadd.f32 %v1098, %v1445
      %1447 = vmatmul.bf16.gmra.mxu0 %v800
      %v1448 = vpop.f32.mrf.mxu0
      %v1449 = vadd.f32 %v1101, %v1448
      %v1450 = vpop.f32.mrf.mxu0
      %v1451 = vadd.f32 %v1103, %v1450
      %1452 = vmatmul.bf16.gmra.mxu0 %v803
      %v1453 = vpop.f32.mrf.mxu0
      %v1454 = vadd.f32 %v1106, %v1453
      %v1455 = vpop.f32.mrf.mxu0
      %v1456 = vadd.f32 %v1108, %v1455
      %1457 = vmatmul.bf16.gmra.mxu0 %v806
      %v1458 = vpop.f32.mrf.mxu0
      %v1459 = vadd.f32 %v1111, %v1458
      %v1460 = vpop.f32.mrf.mxu0
      %v1461 = vadd.f32 %v1113, %v1460
      %1462 = vmatmul.bf16.gmra.mxu0 %v809
      %v1463 = vpop.f32.mrf.mxu0
      %v1464 = vadd.f32 %v1116, %v1463
      %v1465 = vpop.f32.mrf.mxu0
      %v1466 = vadd.f32 %v1118, %v1465
      %1467 = vmatmul.bf16.gmra.mxu0 %v812
      %v1468 = vpop.f32.mrf.mxu0
      %v1469 = vadd.f32 %v1121, %v1468
      %v1470 = vpop.f32.mrf.mxu0
      %v1471 = vadd.f32 %v1123, %v1470
      %1472 = vmatmul.bf16.gmra.mxu0 %v815
      %v1473 = vpop.f32.mrf.mxu0
      %v1474 = vadd.f32 %v1126, %v1473
      %v1475 = vpop.f32.mrf.mxu0
      %v1476 = vadd.f32 %v1128, %v1475
      %1477 = vmatmul.bf16.gmra.mxu0 %v818
      %v1478 = vpop.f32.mrf.mxu0
      %v1479 = vadd.f32 %v1131, %v1478
      %v1480 = vpop.f32.mrf.mxu0
      %v1481 = vadd.f32 %v1133, %v1480
      %1482 = vmatmul.bf16.gmra.mxu0 %v821
      %v1483 = vpop.f32.mrf.mxu0
      %v1484 = vadd.f32 %v1136, %v1483
      %v1485 = vpop.f32.mrf.mxu0
      %v1486 = vadd.f32 %v1138, %v1485
      %1487 = vmatmul.bf16.gmra.mxu0 %v824
      %v1488 = vpop.f32.mrf.mxu0
      %v1489 = vadd.f32 %v1141, %v1488
      %v1490 = vpop.f32.mrf.mxu0
      %v1491 = vadd.f32 %v1143, %v1490
      %1492 = vmatmul.bf16.gmra.mxu0 %v827
      %v1493 = vpop.f32.mrf.mxu0
      %v1494 = vadd.f32 %v1146, %v1493
      %v1495 = vpop.f32.mrf.mxu0
      %v1496 = vadd.f32 %v1148, %v1495
      %1497 = vmatmul.bf16.gmra.mxu0 %v830
      %v1498 = vpop.f32.mrf.mxu0
      %v1499 = vadd.f32 %v1151, %v1498
      %v1500 = vpop.f32.mrf.mxu0
      %v1501 = vadd.f32 %v1153, %v1500
      %1502 = vmatmul.bf16.gmra.mxu0 %v833
      %v1503 = vpop.f32.mrf.mxu0
      %v1504 = vadd.f32 %v1156, %v1503
      %v1505 = vpop.f32.mrf.mxu0
      %v1506 = vadd.f32 %v1158, %v1505
      %1507 = vmatmul.bf16.gmra.mxu0 %v836
      %v1508 = vpop.f32.mrf.mxu0
      %v1509 = vadd.f32 %v1161, %v1508
      %v1510 = vpop.f32.mrf.mxu0
      %v1511 = vadd.f32 %v1163, %v1510
      %1512 = vmatmul.bf16.gmra.mxu0 %v839
      %v1513 = vpop.f32.mrf.mxu0
      %v1514 = vadd.f32 %v1166, %v1513
      %v1515 = vpop.f32.mrf.mxu0
      %v1516 = vadd.f32 %v1168, %v1515
      %1517 = vmatmul.bf16.gmra.mxu0 %v842
      %v1518 = vpop.f32.mrf.mxu0
      %v1519 = vadd.f32 %v1171, %v1518
      %v1520 = vpop.f32.mrf.mxu0
      %v1521 = vadd.f32 %v1173, %v1520
      %1522 = vmatmul.bf16.gmra.mxu0 %v845
      %v1523 = vpop.f32.mrf.mxu0
      %v1524 = vadd.f32 %v1176, %v1523
      %v1525 = vpop.f32.mrf.mxu0
      %v1526 = vadd.f32 %v1178, %v1525
      %1527 = vmatmul.bf16.gmra.mxu0 %v848
      %v1528 = vpop.f32.mrf.mxu0
      %v1529 = vadd.f32 %v1181, %v1528
      %v1530 = vpop.f32.mrf.mxu0
      %v1531 = vadd.f32 %v1183, %v1530
      %1532 = vmatmul.bf16.gmra.mxu0 %v851
      %v1533 = vpop.f32.mrf.mxu0
      %v1534 = vadd.f32 %v1186, %v1533
      %v1535 = vpop.f32.mrf.mxu0
      %v1536 = vadd.f32 %v1188, %v1535
      %1537 = vmatmul.bf16.gmra.mxu0 %v854
      %v1538 = vpop.f32.mrf.mxu0
      %v1539 = vadd.f32 %v1191, %v1538
      %v1540 = vpop.f32.mrf.mxu0
      %v1541 = vadd.f32 %v1193, %v1540
      %1542 = vdwg.mxu0
      %s1543 = scalar_lea.vmem %s1, 24
      %v1544 = vld [vmem:[%s1543] sm:$0xf]
      %v1549 = vunpack.c.l.b16 %v342
      %v1550 = vunpack.c.l.b16 %v343
      %v1551 = vunpack.c.l.b16 %v344
      %v1552 = vunpack.c.l.b16 %v345
      %v1553 = vpack.c.b16 %v1550, %v1549
      %v1554 = vpack.c.b16 %v1552, %v1551
      %v1556 = vsel %vm669, %v1553, 0
      %v1559 = vsel %vm669, %v1554, 0
      %v1562 = vsel %vm862, %v1544, 0
      %1564 = vmatpush.bf16.msra.mxu0 0
      %1565 = vmatpush.bf16.msra.mxu0 0
      %1566 = vmatpush.bf16.msra.mxu0 0
      %1567 = vmatpush.bf16.msra.mxu0 0
      %1568 = vmatpush.bf16.msra.mxu0 0
      %1569 = vmatpush.bf16.msra.mxu0 0
      %1570 = vmatpush.bf16.msra.mxu0 0
      %1571 = vmatpush.bf16.msra.mxu0 %v1562
      %1572 = vmatmul.bf16.gmra.mxu0 %v677
      %v1573 = vpop.f32.mrf.mxu0
      %v1574 = vadd.f32 0.0, %v1573
      %v1575 = vpop.f32.mrf.mxu0
      %v1576 = vadd.f32 0.0, %v1575
      %1577 = vmatmul.bf16.gmra.mxu0 %v680
      %v1578 = vpop.f32.mrf.mxu0
      %v1579 = vadd.f32 0.0, %v1578
      %v1580 = vpop.f32.mrf.mxu0
      %v1581 = vadd.f32 0.0, %v1580
      %1582 = vmatmul.bf16.gmra.mxu0 %v683
      %v1583 = vpop.f32.mrf.mxu0
      %v1584 = vadd.f32 0.0, %v1583
      %v1585 = vpop.f32.mrf.mxu0
      %v1586 = vadd.f32 0.0, %v1585
      %1587 = vmatmul.bf16.gmra.mxu0 %v686
      %v1588 = vpop.f32.mrf.mxu0
      %v1589 = vadd.f32 0.0, %v1588
      %v1590 = vpop.f32.mrf.mxu0
      %v1591 = vadd.f32 0.0, %v1590
      %1592 = vmatmul.bf16.gmra.mxu0 %v689
      %v1593 = vpop.f32.mrf.mxu0
      %v1594 = vadd.f32 0.0, %v1593
      %v1595 = vpop.f32.mrf.mxu0
      %v1596 = vadd.f32 0.0, %v1595
      %1597 = vmatmul.bf16.gmra.mxu0 %v692
      %v1598 = vpop.f32.mrf.mxu0
      %v1599 = vadd.f32 0.0, %v1598
      %v1600 = vpop.f32.mrf.mxu0
      %v1601 = vadd.f32 0.0, %v1600
      %1602 = vmatmul.bf16.gmra.mxu0 %v695
      %v1603 = vpop.f32.mrf.mxu0
      %v1604 = vadd.f32 0.0, %v1603
      %v1605 = vpop.f32.mrf.mxu0
      %v1606 = vadd.f32 0.0, %v1605
      %1607 = vmatmul.bf16.gmra.mxu0 %v698
      %v1608 = vpop.f32.mrf.mxu0
      %v1609 = vadd.f32 0.0, %v1608
      %v1610 = vpop.f32.mrf.mxu0
      %v1611 = vadd.f32 0.0, %v1610
      %1612 = vmatmul.bf16.gmra.mxu0 %v701
      %v1613 = vpop.f32.mrf.mxu0
      %v1614 = vadd.f32 0.0, %v1613
      %v1615 = vpop.f32.mrf.mxu0
      %v1616 = vadd.f32 0.0, %v1615
      %1617 = vmatmul.bf16.gmra.mxu0 %v704
      %v1618 = vpop.f32.mrf.mxu0
      %v1619 = vadd.f32 0.0, %v1618
      %v1620 = vpop.f32.mrf.mxu0
      %v1621 = vadd.f32 0.0, %v1620
      %1622 = vmatmul.bf16.gmra.mxu0 %v707
      %v1623 = vpop.f32.mrf.mxu0
      %v1624 = vadd.f32 0.0, %v1623
      %v1625 = vpop.f32.mrf.mxu0
      %v1626 = vadd.f32 0.0, %v1625
      %1627 = vmatmul.bf16.gmra.mxu0 %v710
      %v1628 = vpop.f32.mrf.mxu0
      %v1629 = vadd.f32 0.0, %v1628
      %v1630 = vpop.f32.mrf.mxu0
      %v1631 = vadd.f32 0.0, %v1630
      %1632 = vmatmul.bf16.gmra.mxu0 %v713
      %v1633 = vpop.f32.mrf.mxu0
      %v1634 = vadd.f32 0.0, %v1633
      %v1635 = vpop.f32.mrf.mxu0
      %v1636 = vadd.f32 0.0, %v1635
      %1637 = vmatmul.bf16.gmra.mxu0 %v716
      %v1638 = vpop.f32.mrf.mxu0
      %v1639 = vadd.f32 0.0, %v1638
      %v1640 = vpop.f32.mrf.mxu0
      %v1641 = vadd.f32 0.0, %v1640
      %1642 = vmatmul.bf16.gmra.mxu0 %v719
      %v1643 = vpop.f32.mrf.mxu0
      %v1644 = vadd.f32 0.0, %v1643
      %v1645 = vpop.f32.mrf.mxu0
      %v1646 = vadd.f32 0.0, %v1645
      %1647 = vmatmul.bf16.gmra.mxu0 %v722
      %v1648 = vpop.f32.mrf.mxu0
      %v1649 = vadd.f32 0.0, %v1648
      %v1650 = vpop.f32.mrf.mxu0
      %v1651 = vadd.f32 0.0, %v1650
      %1652 = vmatmul.bf16.gmra.mxu0 %v725
      %v1653 = vpop.f32.mrf.mxu0
      %v1654 = vadd.f32 0.0, %v1653
      %v1655 = vpop.f32.mrf.mxu0
      %v1656 = vadd.f32 0.0, %v1655
      %1657 = vmatmul.bf16.gmra.mxu0 %v728
      %v1658 = vpop.f32.mrf.mxu0
      %v1659 = vadd.f32 0.0, %v1658
      %v1660 = vpop.f32.mrf.mxu0
      %v1661 = vadd.f32 0.0, %v1660
      %1662 = vmatmul.bf16.gmra.mxu0 %v731
      %v1663 = vpop.f32.mrf.mxu0
      %v1664 = vadd.f32 0.0, %v1663
      %v1665 = vpop.f32.mrf.mxu0
      %v1666 = vadd.f32 0.0, %v1665
      %1667 = vmatmul.bf16.gmra.mxu0 %v734
      %v1668 = vpop.f32.mrf.mxu0
      %v1669 = vadd.f32 0.0, %v1668
      %v1670 = vpop.f32.mrf.mxu0
      %v1671 = vadd.f32 0.0, %v1670
      %1672 = vmatmul.bf16.gmra.mxu0 %v737
      %v1673 = vpop.f32.mrf.mxu0
      %v1674 = vadd.f32 0.0, %v1673
      %v1675 = vpop.f32.mrf.mxu0
      %v1676 = vadd.f32 0.0, %v1675
      %1677 = vmatmul.bf16.gmra.mxu0 %v740
      %v1678 = vpop.f32.mrf.mxu0
      %v1679 = vadd.f32 0.0, %v1678
      %v1680 = vpop.f32.mrf.mxu0
      %v1681 = vadd.f32 0.0, %v1680
      %1682 = vmatmul.bf16.gmra.mxu0 %v743
      %v1683 = vpop.f32.mrf.mxu0
      %v1684 = vadd.f32 0.0, %v1683
      %v1685 = vpop.f32.mrf.mxu0
      %v1686 = vadd.f32 0.0, %v1685
      %1687 = vmatmul.bf16.gmra.mxu0 %v746
      %v1688 = vpop.f32.mrf.mxu0
      %v1689 = vadd.f32 0.0, %v1688
      %v1690 = vpop.f32.mrf.mxu0
      %v1691 = vadd.f32 0.0, %v1690
      %1692 = vmatmul.bf16.gmra.mxu0 %v749
      %v1693 = vpop.f32.mrf.mxu0
      %v1694 = vadd.f32 0.0, %v1693
      %v1695 = vpop.f32.mrf.mxu0
      %v1696 = vadd.f32 0.0, %v1695
      %1697 = vmatmul.bf16.gmra.mxu0 %v752
      %v1698 = vpop.f32.mrf.mxu0
      %v1699 = vadd.f32 0.0, %v1698
      %v1700 = vpop.f32.mrf.mxu0
      %v1701 = vadd.f32 0.0, %v1700
      %1702 = vmatmul.bf16.gmra.mxu0 %v755
      %v1703 = vpop.f32.mrf.mxu0
      %v1704 = vadd.f32 0.0, %v1703
      %v1705 = vpop.f32.mrf.mxu0
      %v1706 = vadd.f32 0.0, %v1705
      %1707 = vmatmul.bf16.gmra.mxu0 %v758
      %v1708 = vpop.f32.mrf.mxu0
      %v1709 = vadd.f32 0.0, %v1708
      %v1710 = vpop.f32.mrf.mxu0
      %v1711 = vadd.f32 0.0, %v1710
      %1712 = vmatmul.bf16.gmra.mxu0 %v761
      %v1713 = vpop.f32.mrf.mxu0
      %v1714 = vadd.f32 0.0, %v1713
      %v1715 = vpop.f32.mrf.mxu0
      %v1716 = vadd.f32 0.0, %v1715
      %1717 = vmatmul.bf16.gmra.mxu0 %v764
      %v1718 = vpop.f32.mrf.mxu0
      %v1719 = vadd.f32 0.0, %v1718
      %v1720 = vpop.f32.mrf.mxu0
      %v1721 = vadd.f32 0.0, %v1720
      %1722 = vmatmul.bf16.gmra.mxu0 %v767
      %v1723 = vpop.f32.mrf.mxu0
      %v1724 = vadd.f32 0.0, %v1723
      %v1725 = vpop.f32.mrf.mxu0
      %v1726 = vadd.f32 0.0, %v1725
      %1727 = vmatmul.bf16.gmra.mxu0 %v770
      %v1728 = vpop.f32.mrf.mxu0
      %v1729 = vadd.f32 0.0, %v1728
      %v1730 = vpop.f32.mrf.mxu0
      %v1731 = vadd.f32 0.0, %v1730
      %1732 = vmatmul.bf16.gmra.mxu0 %v773
      %v1733 = vpop.f32.mrf.mxu0
      %v1734 = vadd.f32 0.0, %v1733
      %v1735 = vpop.f32.mrf.mxu0
      %v1736 = vadd.f32 0.0, %v1735
      %1737 = vmatmul.bf16.gmra.mxu0 %v776
      %v1738 = vpop.f32.mrf.mxu0
      %v1739 = vadd.f32 0.0, %v1738
      %v1740 = vpop.f32.mrf.mxu0
      %v1741 = vadd.f32 0.0, %v1740
      %1742 = vmatmul.bf16.gmra.mxu0 %v779
      %v1743 = vpop.f32.mrf.mxu0
      %v1744 = vadd.f32 0.0, %v1743
      %v1745 = vpop.f32.mrf.mxu0
      %v1746 = vadd.f32 0.0, %v1745
      %1747 = vmatmul.bf16.gmra.mxu0 %v782
      %v1748 = vpop.f32.mrf.mxu0
      %v1749 = vadd.f32 0.0, %v1748
      %v1750 = vpop.f32.mrf.mxu0
      %v1751 = vadd.f32 0.0, %v1750
      %1752 = vmatmul.bf16.gmra.mxu0 %v785
      %v1753 = vpop.f32.mrf.mxu0
      %v1754 = vadd.f32 0.0, %v1753
      %v1755 = vpop.f32.mrf.mxu0
      %v1756 = vadd.f32 0.0, %v1755
      %1757 = vmatmul.bf16.gmra.mxu0 %v788
      %v1758 = vpop.f32.mrf.mxu0
      %v1759 = vadd.f32 0.0, %v1758
      %v1760 = vpop.f32.mrf.mxu0
      %v1761 = vadd.f32 0.0, %v1760
      %1762 = vmatmul.bf16.gmra.mxu0 %v791
      %v1763 = vpop.f32.mrf.mxu0
      %v1764 = vadd.f32 0.0, %v1763
      %v1765 = vpop.f32.mrf.mxu0
      %v1766 = vadd.f32 0.0, %v1765
      %1767 = vmatmul.bf16.gmra.mxu0 %v794
      %v1768 = vpop.f32.mrf.mxu0
      %v1769 = vadd.f32 0.0, %v1768
      %v1770 = vpop.f32.mrf.mxu0
      %v1771 = vadd.f32 0.0, %v1770
      %1772 = vmatmul.bf16.gmra.mxu0 %v797
      %v1773 = vpop.f32.mrf.mxu0
      %v1774 = vadd.f32 0.0, %v1773
      %v1775 = vpop.f32.mrf.mxu0
      %v1776 = vadd.f32 0.0, %v1775
      %1777 = vmatmul.bf16.gmra.mxu0 %v800
      %v1778 = vpop.f32.mrf.mxu0
      %v1779 = vadd.f32 0.0, %v1778
      %v1780 = vpop.f32.mrf.mxu0
      %v1781 = vadd.f32 0.0, %v1780
      %1782 = vmatmul.bf16.gmra.mxu0 %v803
      %v1783 = vpop.f32.mrf.mxu0
      %v1784 = vadd.f32 0.0, %v1783
      %v1785 = vpop.f32.mrf.mxu0
      %v1786 = vadd.f32 0.0, %v1785
      %1787 = vmatmul.bf16.gmra.mxu0 %v806
      %v1788 = vpop.f32.mrf.mxu0
      %v1789 = vadd.f32 0.0, %v1788
      %v1790 = vpop.f32.mrf.mxu0
      %v1791 = vadd.f32 0.0, %v1790
      %1792 = vmatmul.bf16.gmra.mxu0 %v809
      %v1793 = vpop.f32.mrf.mxu0
      %v1794 = vadd.f32 0.0, %v1793
      %v1795 = vpop.f32.mrf.mxu0
      %v1796 = vadd.f32 0.0, %v1795
      %1797 = vmatmul.bf16.gmra.mxu0 %v812
      %v1798 = vpop.f32.mrf.mxu0
      %v1799 = vadd.f32 0.0, %v1798
      %v1800 = vpop.f32.mrf.mxu0
      %v1801 = vadd.f32 0.0, %v1800
      %1802 = vmatmul.bf16.gmra.mxu0 %v815
      %v1803 = vpop.f32.mrf.mxu0
      %v1804 = vadd.f32 0.0, %v1803
      %v1805 = vpop.f32.mrf.mxu0
      %v1806 = vadd.f32 0.0, %v1805
      %1807 = vmatmul.bf16.gmra.mxu0 %v818
      %v1808 = vpop.f32.mrf.mxu0
      %v1809 = vadd.f32 0.0, %v1808
      %v1810 = vpop.f32.mrf.mxu0
      %v1811 = vadd.f32 0.0, %v1810
      %1812 = vmatmul.bf16.gmra.mxu0 %v821
      %v1813 = vpop.f32.mrf.mxu0
      %v1814 = vadd.f32 0.0, %v1813
      %v1815 = vpop.f32.mrf.mxu0
      %v1816 = vadd.f32 0.0, %v1815
      %1817 = vmatmul.bf16.gmra.mxu0 %v824
      %v1818 = vpop.f32.mrf.mxu0
      %v1819 = vadd.f32 0.0, %v1818
      %v1820 = vpop.f32.mrf.mxu0
      %v1821 = vadd.f32 0.0, %v1820
      %1822 = vmatmul.bf16.gmra.mxu0 %v827
      %v1823 = vpop.f32.mrf.mxu0
      %v1824 = vadd.f32 0.0, %v1823
      %v1825 = vpop.f32.mrf.mxu0
      %v1826 = vadd.f32 0.0, %v1825
      %1827 = vmatmul.bf16.gmra.mxu0 %v830
      %v1828 = vpop.f32.mrf.mxu0
      %v1829 = vadd.f32 0.0, %v1828
      %v1830 = vpop.f32.mrf.mxu0
      %v1831 = vadd.f32 0.0, %v1830
      %1832 = vmatmul.bf16.gmra.mxu0 %v833
      %v1833 = vpop.f32.mrf.mxu0
      %v1834 = vadd.f32 0.0, %v1833
      %v1835 = vpop.f32.mrf.mxu0
      %v1836 = vadd.f32 0.0, %v1835
      %1837 = vmatmul.bf16.gmra.mxu0 %v836
      %v1838 = vpop.f32.mrf.mxu0
      %v1839 = vadd.f32 0.0, %v1838
      %v1840 = vpop.f32.mrf.mxu0
      %v1841 = vadd.f32 0.0, %v1840
      %1842 = vmatmul.bf16.gmra.mxu0 %v839
      %v1843 = vpop.f32.mrf.mxu0
      %v1844 = vadd.f32 0.0, %v1843
      %v1845 = vpop.f32.mrf.mxu0
      %v1846 = vadd.f32 0.0, %v1845
      %1847 = vmatmul.bf16.gmra.mxu0 %v842
      %v1848 = vpop.f32.mrf.mxu0
      %v1849 = vadd.f32 0.0, %v1848
      %v1850 = vpop.f32.mrf.mxu0
      %v1851 = vadd.f32 0.0, %v1850
      %1852 = vmatmul.bf16.gmra.mxu0 %v845
      %v1853 = vpop.f32.mrf.mxu0
      %v1854 = vadd.f32 0.0, %v1853
      %v1855 = vpop.f32.mrf.mxu0
      %v1856 = vadd.f32 0.0, %v1855
      %1857 = vmatmul.bf16.gmra.mxu0 %v848
      %v1858 = vpop.f32.mrf.mxu0
      %v1859 = vadd.f32 0.0, %v1858
      %v1860 = vpop.f32.mrf.mxu0
      %v1861 = vadd.f32 0.0, %v1860
      %1862 = vmatmul.bf16.gmra.mxu0 %v851
      %v1863 = vpop.f32.mrf.mxu0
      %v1864 = vadd.f32 0.0, %v1863
      %v1865 = vpop.f32.mrf.mxu0
      %v1866 = vadd.f32 0.0, %v1865
      %1867 = vmatmul.bf16.gmra.mxu0 %v854
      %v1868 = vpop.f32.mrf.mxu0
      %v1869 = vadd.f32 0.0, %v1868
      %v1870 = vpop.f32.mrf.mxu0
      %v1871 = vadd.f32 0.0, %v1870
      %1872 = vmatmul.bf16.gmra.mxu0 %v857
      %v1873 = vpop.f32.mrf.mxu0
      %v1874 = vadd.f32 0.0, %v1873
      %v1875 = vpop.f32.mrf.mxu0
      %v1876 = vadd.f32 0.0, %v1875
      %1877 = vmatmul.bf16.gmra.mxu0 %v860
      %v1878 = vpop.f32.mrf.mxu0
      %v1879 = vadd.f32 0.0, %v1878
      %v1880 = vpop.f32.mrf.mxu0
      %v1881 = vadd.f32 0.0, %v1880
      %1882 = vmatmul.bf16.gmra.mxu0 %v1556
      %v1883 = vpop.f32.mrf.mxu0
      %v1884 = vadd.f32 0.0, %v1883
      %v1885 = vpop.f32.mrf.mxu0
      %v1886 = vadd.f32 0.0, %v1885
      %1887 = vmatmul.bf16.gmra.mxu0 %v1559
      %v1888 = vpop.f32.mrf.mxu0
      %v1889 = vadd.f32 0.0, %v1888
      %v1890 = vpop.f32.mrf.mxu0
      %v1891 = vadd.f32 0.0, %v1890
      %1892 = vdwg.mxu0
      %v1893 = vadd.f32 %v1224, %v1574
      %v1894 = vadd.f32 %v1226, %v1576
      %v1895 = vadd.f32 %v1229, %v1579
      %v1896 = vadd.f32 %v1231, %v1581
      %v1897 = vadd.f32 %v1234, %v1584
      %v1898 = vadd.f32 %v1236, %v1586
      %v1899 = vadd.f32 %v1239, %v1589
      %v1900 = vadd.f32 %v1241, %v1591
      %v1901 = vadd.f32 %v1244, %v1594
      %v1902 = vadd.f32 %v1246, %v1596
      %v1903 = vadd.f32 %v1249, %v1599
      %v1904 = vadd.f32 %v1251, %v1601
      %v1905 = vadd.f32 %v1254, %v1604
      %v1906 = vadd.f32 %v1256, %v1606
      %v1907 = vadd.f32 %v1259, %v1609
      %v1908 = vadd.f32 %v1261, %v1611
      %v1909 = vadd.f32 %v1264, %v1614
      %v1910 = vadd.f32 %v1266, %v1616
      %v1911 = vadd.f32 %v1269, %v1619
      %v1912 = vadd.f32 %v1271, %v1621
      %v1913 = vadd.f32 %v1274, %v1624
      %v1914 = vadd.f32 %v1276, %v1626
      %v1915 = vadd.f32 %v1279, %v1629
      %v1916 = vadd.f32 %v1281, %v1631
      %v1917 = vadd.f32 %v1284, %v1634
      %v1918 = vadd.f32 %v1286, %v1636
      %v1919 = vadd.f32 %v1289, %v1639
      %v1920 = vadd.f32 %v1291, %v1641
      %v1921 = vadd.f32 %v1294, %v1644
      %v1922 = vadd.f32 %v1296, %v1646
      %v1923 = vadd.f32 %v1299, %v1649
      %v1924 = vadd.f32 %v1301, %v1651
      %v1925 = vadd.f32 %v1304, %v1654
      %v1926 = vadd.f32 %v1306, %v1656
      %v1927 = vadd.f32 %v1309, %v1659
      %v1928 = vadd.f32 %v1311, %v1661
      %v1929 = vadd.f32 %v1314, %v1664
      %v1930 = vadd.f32 %v1316, %v1666
      %v1931 = vadd.f32 %v1319, %v1669
      %v1932 = vadd.f32 %v1321, %v1671
      %v1933 = vadd.f32 %v1324, %v1674
      %v1934 = vadd.f32 %v1326, %v1676
      %v1935 = vadd.f32 %v1329, %v1679
      %v1936 = vadd.f32 %v1331, %v1681
      %v1937 = vadd.f32 %v1334, %v1684
      %v1938 = vadd.f32 %v1336, %v1686
      %v1939 = vadd.f32 %v1339, %v1689
      %v1940 = vadd.f32 %v1341, %v1691
      %v1941 = vadd.f32 %v1344, %v1694
      %v1942 = vadd.f32 %v1346, %v1696
      %v1943 = vadd.f32 %v1349, %v1699
      %v1944 = vadd.f32 %v1351, %v1701
      %v1945 = vadd.f32 %v1354, %v1704
      %v1946 = vadd.f32 %v1356, %v1706
      %v1947 = vadd.f32 %v1359, %v1709
      %v1948 = vadd.f32 %v1361, %v1711
      %v1949 = vadd.f32 %v1364, %v1714
      %v1950 = vadd.f32 %v1366, %v1716
      %v1951 = vadd.f32 %v1369, %v1719
      %v1952 = vadd.f32 %v1371, %v1721
      %v1953 = vadd.f32 %v1374, %v1724
      %v1954 = vadd.f32 %v1376, %v1726
      %v1955 = vadd.f32 %v1379, %v1729
      %v1956 = vadd.f32 %v1381, %v1731
      %v1957 = vadd.f32 %v1384, %v1734
      %v1958 = vadd.f32 %v1386, %v1736
      %v1959 = vadd.f32 %v1389, %v1739
      %v1960 = vadd.f32 %v1391, %v1741
      %v1961 = vadd.f32 %v1394, %v1744
      %v1962 = vadd.f32 %v1396, %v1746
      %v1963 = vadd.f32 %v1399, %v1749
      %v1964 = vadd.f32 %v1401, %v1751
      %v1965 = vadd.f32 %v1404, %v1754
      %v1966 = vadd.f32 %v1406, %v1756
      %v1967 = vadd.f32 %v1409, %v1759
      %v1968 = vadd.f32 %v1411, %v1761
      %v1969 = vadd.f32 %v1414, %v1764
      %v1970 = vadd.f32 %v1416, %v1766
      %v1971 = vadd.f32 %v1419, %v1769
      %v1972 = vadd.f32 %v1421, %v1771
      %v1973 = vadd.f32 %v1424, %v1774
      %v1974 = vadd.f32 %v1426, %v1776
      %v1975 = vadd.f32 %v1429, %v1779
      %v1976 = vadd.f32 %v1431, %v1781
      %v1977 = vadd.f32 %v1434, %v1784
      %v1978 = vadd.f32 %v1436, %v1786
      %v1979 = vadd.f32 %v1439, %v1789
      %v1980 = vadd.f32 %v1441, %v1791
      %v1981 = vadd.f32 %v1444, %v1794
      %v1982 = vadd.f32 %v1446, %v1796
      %v1983 = vadd.f32 %v1449, %v1799
      %v1984 = vadd.f32 %v1451, %v1801
      %v1985 = vadd.f32 %v1454, %v1804
      %v1986 = vadd.f32 %v1456, %v1806
      %v1987 = vadd.f32 %v1459, %v1809
      %v1988 = vadd.f32 %v1461, %v1811
      %v1989 = vadd.f32 %v1464, %v1814
      %v1990 = vadd.f32 %v1466, %v1816
      %v1991 = vadd.f32 %v1469, %v1819
      %v1992 = vadd.f32 %v1471, %v1821
      %v1993 = vadd.f32 %v1474, %v1824
      %v1994 = vadd.f32 %v1476, %v1826
      %v1995 = vadd.f32 %v1479, %v1829
      %v1996 = vadd.f32 %v1481, %v1831
      %v1997 = vadd.f32 %v1484, %v1834
      %v1998 = vadd.f32 %v1486, %v1836
      %v1999 = vadd.f32 %v1489, %v1839
      %v2000 = vadd.f32 %v1491, %v1841
      %v2001 = vadd.f32 %v1494, %v1844
      %v2002 = vadd.f32 %v1496, %v1846
      %v2003 = vadd.f32 %v1499, %v1849
      %v2004 = vadd.f32 %v1501, %v1851
      %v2005 = vadd.f32 %v1504, %v1854
      %v2006 = vadd.f32 %v1506, %v1856
      %v2007 = vadd.f32 %v1509, %v1859
      %v2008 = vadd.f32 %v1511, %v1861
      %v2009 = vadd.f32 %v1514, %v1864
      %v2010 = vadd.f32 %v1516, %v1866
      %v2011 = vadd.f32 %v1519, %v1869
      %v2012 = vadd.f32 %v1521, %v1871
      %v2013 = vadd.f32 %v1524, %v1874
      %v2014 = vadd.f32 %v1526, %v1876
      %v2015 = vadd.f32 %v1529, %v1879
      %v2016 = vadd.f32 %v1531, %v1881
      %v2017 = vadd.f32 %v1534, %v1884
      %v2018 = vadd.f32 %v1536, %v1886
      %v2019 = vadd.f32 %v1539, %v1889
      %v2020 = vadd.f32 %v1541, %v1891
      %v2021 = vld [vmem:[%s199] sm:$0xf]
      %v2022 = vld [vmem:[%s199 + $0x4] sm:$0xf]
      %v2023 = vld [vmem:[%s199 + $0x8] sm:$0xf]
      %v2024 = vld [vmem:[%s199 + $0xc] sm:$0xf]
      %v2025 = vld [vmem:[%s199 + $0x10] sm:$0x1]
      %v2026 = vld [vmem:[%s199 + $0x14] sm:$0xf]
      %v2027 = vld [vmem:[%s199 + $0x18] sm:$0xf]
      %v2028 = vld [vmem:[%s199 + $0x1c] sm:$0xf]
      %v2029 = vld [vmem:[%s199 + $0x20] sm:$0xf]
      %v2030 = vld [vmem:[%s199 + $0x24] sm:$0x1]
      %v2031 = vld [vmem:[%s199 + $0x28] sm:$0xf]
      %v2032 = vld [vmem:[%s199 + $0x2c] sm:$0xf]
      %v2033 = vld [vmem:[%s199 + $0x30] sm:$0xf]
      %v2034 = vld [vmem:[%s199 + $0x34] sm:$0xf]
      %v2035 = vld [vmem:[%s199 + $0x38] sm:$0x1]
      %v2036 = vld [vmem:[%s199 + $0x3c] sm:$0xf]
      %v2037 = vld [vmem:[%s199 + $0x40] sm:$0xf]
      %v2038 = vld [vmem:[%s199 + $0x44] sm:$0xf]
      %v2039 = vld [vmem:[%s199 + $0x48] sm:$0xf]
      %v2040 = vld [vmem:[%s199 + $0x4c] sm:$0x1]
      %v2041 = vld [vmem:[%s199 + $0x50] sm:$0xf]
      %v2042 = vld [vmem:[%s199 + $0x54] sm:$0xf]
      %v2043 = vld [vmem:[%s199 + $0x58] sm:$0xf]
      %v2044 = vld [vmem:[%s199 + $0x5c] sm:$0xf]
      %v2045 = vld [vmem:[%s199 + $0x60] sm:$0x1]
      %v2046 = vld [vmem:[%s199 + $0x64] sm:$0xf]
      %v2047 = vld [vmem:[%s199 + $0x68] sm:$0xf]
      %v2048 = vld [vmem:[%s199 + $0x6c] sm:$0xf]
      %v2049 = vld [vmem:[%s199 + $0x70] sm:$0xf]
      %v2050 = vld [vmem:[%s199 + $0x74] sm:$0x1]
      %v2051 = vld [vmem:[%s199 + $0x78] sm:$0xf]
      %v2052 = vld [vmem:[%s199 + $0x7c] sm:$0xf]
      %v2053 = vld [vmem:[%s199 + $0x80] sm:$0xf]
      %v2054 = vld [vmem:[%s199 + $0x84] sm:$0xf]
      %v2055 = vld [vmem:[%s199 + $0x88] sm:$0x1]
      %v2056 = vld [vmem:[%s199 + $0x8c] sm:$0xf]
      %v2057 = vld [vmem:[%s199 + $0x90] sm:$0xf]
      %v2058 = vld [vmem:[%s199 + $0x94] sm:$0xf]
      %v2059 = vld [vmem:[%s199 + $0x98] sm:$0xf]
      %v2060 = vld [vmem:[%s199 + $0x9c] sm:$0x1]
      %v2061 = vld [vmem:[%s199 + $0xa0] sm:$0xf]
      %v2062 = vld [vmem:[%s199 + $0xa4] sm:$0xf]
      %v2063 = vld [vmem:[%s199 + $0xa8] sm:$0xf]
      %v2064 = vld [vmem:[%s199 + $0xac] sm:$0xf]
      %v2065 = vld [vmem:[%s199 + $0xb0] sm:$0x1]
      %v2066 = vld [vmem:[%s199 + $0xb4] sm:$0xf]
      %v2067 = vld [vmem:[%s199 + $0xb8] sm:$0xf]
      %v2068 = vld [vmem:[%s199 + $0xbc] sm:$0xf]
      %v2069 = vld [vmem:[%s199 + $0xc0] sm:$0xf]
      %v2070 = vld [vmem:[%s199 + $0xc4] sm:$0x1]
      %v2071 = vld [vmem:[%s199 + $0xc8] sm:$0xf]
      %v2072 = vld [vmem:[%s199 + $0xcc] sm:$0xf]
      %v2073 = vld [vmem:[%s199 + $0xd0] sm:$0xf]
      %v2074 = vld [vmem:[%s199 + $0xd4] sm:$0xf]
      %v2075 = vld [vmem:[%s199 + $0xd8] sm:$0x1]
      %v2076 = vld [vmem:[%s199 + $0xdc] sm:$0xf]
      %v2077 = vld [vmem:[%s199 + $0xe0] sm:$0xf]
      %v2078 = vld [vmem:[%s199 + $0xe4] sm:$0xf]
      %v2079 = vld [vmem:[%s199 + $0xe8] sm:$0xf]
      %v2080 = vld [vmem:[%s199 + $0xec] sm:$0x1]
      %v2081 = vld [vmem:[%s199 + $0xf0] sm:$0xf]
      %v2082 = vld [vmem:[%s199 + $0xf4] sm:$0xf]
      %v2083 = vld [vmem:[%s199 + $0xf8] sm:$0xf]
      %v2084 = vld [vmem:[%s199 + $0xfc] sm:$0xf]
      %v2085 = vld [vmem:[%s199 + $0x100] sm:$0x1]
      %v2086 = vld [vmem:[%s199 + $0x104] sm:$0xf]
      %v2087 = vld [vmem:[%s199 + $0x108] sm:$0xf]
      %v2088 = vld [vmem:[%s199 + $0x10c] sm:$0xf]
      %v2089 = vld [vmem:[%s199 + $0x110] sm:$0xf]
      %v2090 = vld [vmem:[%s199 + $0x114] sm:$0x1]
      %v2091 = vld [vmem:[%s199 + $0x118] sm:$0xf]
      %v2092 = vld [vmem:[%s199 + $0x11c] sm:$0xf]
      %v2093 = vld [vmem:[%s199 + $0x120] sm:$0xf]
      %v2094 = vld [vmem:[%s199 + $0x124] sm:$0xf]
      %v2095 = vld [vmem:[%s199 + $0x128] sm:$0x1]
      %v2096 = vld [vmem:[%s199 + $0x12c] sm:$0xf]
      %v2097 = vld [vmem:[%s199 + $0x130] sm:$0xf]
      %v2098 = vld [vmem:[%s199 + $0x134] sm:$0xf]
      %v2099 = vld [vmem:[%s199 + $0x138] sm:$0xf]
      %v2100 = vld [vmem:[%s199 + $0x13c] sm:$0x1]
      %v2101 = vld [vmem:[%s199 + $0x140] sm:$0xf]
      %v2102 = vld [vmem:[%s199 + $0x144] sm:$0xf]
      %v2103 = vld [vmem:[%s199 + $0x148] sm:$0xf]
      %v2104 = vld [vmem:[%s199 + $0x14c] sm:$0xf]
      %v2105 = vld [vmem:[%s199 + $0x150] sm:$0x1]
      %v2106 = vld [vmem:[%s199 + $0x154] sm:$0xf]
      %v2107 = vld [vmem:[%s199 + $0x158] sm:$0xf]
      %v2108 = vld [vmem:[%s199 + $0x15c] sm:$0xf]
      %v2109 = vld [vmem:[%s199 + $0x160] sm:$0xf]
      %v2110 = vld [vmem:[%s199 + $0x164] sm:$0x1]
      %v2111 = vld [vmem:[%s199 + $0x168] sm:$0xf]
      %v2112 = vld [vmem:[%s199 + $0x16c] sm:$0xf]
      %v2113 = vld [vmem:[%s199 + $0x170] sm:$0xf]
      %v2114 = vld [vmem:[%s199 + $0x174] sm:$0xf]
      %v2115 = vld [vmem:[%s199 + $0x178] sm:$0x1]
      %v2116 = vld [vmem:[%s199 + $0x17c] sm:$0xf]
      %v2117 = vld [vmem:[%s199 + $0x180] sm:$0xf]
      %v2118 = vld [vmem:[%s199 + $0x184] sm:$0xf]
      %v2119 = vld [vmem:[%s199 + $0x188] sm:$0xf]
      %v2120 = vld [vmem:[%s199 + $0x18c] sm:$0x1]
      %v2121 = vld [vmem:[%s199 + $0x190] sm:$0xf]
      %v2122 = vld [vmem:[%s199 + $0x194] sm:$0xf]
      %v2123 = vld [vmem:[%s199 + $0x198] sm:$0xf]
      %v2124 = vld [vmem:[%s199 + $0x19c] sm:$0xf]
      %v2125 = vld [vmem:[%s199 + $0x1a0] sm:$0x1]
      %v2126 = vld [vmem:[%s199 + $0x1a4] sm:$0xf]
      %v2127 = vld [vmem:[%s199 + $0x1a8] sm:$0xf]
      %v2128 = vld [vmem:[%s199 + $0x1ac] sm:$0xf]
      %v2129 = vld [vmem:[%s199 + $0x1b0] sm:$0xf]
      %v2130 = vld [vmem:[%s199 + $0x1b4] sm:$0x1]
      %v2131 = vld [vmem:[%s199 + $0x1b8] sm:$0xf]
      %v2132 = vld [vmem:[%s199 + $0x1bc] sm:$0xf]
      %v2133 = vld [vmem:[%s199 + $0x1c0] sm:$0xf]
      %v2134 = vld [vmem:[%s199 + $0x1c4] sm:$0xf]
      %v2135 = vld [vmem:[%s199 + $0x1c8] sm:$0x1]
      %v2136 = vld [vmem:[%s199 + $0x1cc] sm:$0xf]
      %v2137 = vld [vmem:[%s199 + $0x1d0] sm:$0xf]
      %v2138 = vld [vmem:[%s199 + $0x1d4] sm:$0xf]
      %v2139 = vld [vmem:[%s199 + $0x1d8] sm:$0xf]
      %v2140 = vld [vmem:[%s199 + $0x1dc] sm:$0x1]
      %v2141 = vld [vmem:[%s199 + $0x1e0] sm:$0xf]
      %v2142 = vld [vmem:[%s199 + $0x1e4] sm:$0xf]
      %v2143 = vld [vmem:[%s199 + $0x1e8] sm:$0xf]
      %v2144 = vld [vmem:[%s199 + $0x1ec] sm:$0xf]
      %v2145 = vld [vmem:[%s199 + $0x1f0] sm:$0x1]
      %v2146 = vld [vmem:[%s199 + $0x1f4] sm:$0xf]
      %v2147 = vld [vmem:[%s199 + $0x1f8] sm:$0xf]
      %v2148 = vld [vmem:[%s199 + $0x1fc] sm:$0xf]
      %v2149 = vld [vmem:[%s199 + $0x200] sm:$0xf]
      %v2150 = vld [vmem:[%s199 + $0x204] sm:$0x1]
      %v2151 = vld [vmem:[%s199 + $0x208] sm:$0xf]
      %v2152 = vld [vmem:[%s199 + $0x20c] sm:$0xf]
      %v2153 = vld [vmem:[%s199 + $0x210] sm:$0xf]
      %v2154 = vld [vmem:[%s199 + $0x214] sm:$0xf]
      %v2155 = vld [vmem:[%s199 + $0x218] sm:$0x1]
      %v2156 = vld [vmem:[%s199 + $0x21c] sm:$0xf]
      %v2157 = vld [vmem:[%s199 + $0x220] sm:$0xf]
      %v2158 = vld [vmem:[%s199 + $0x224] sm:$0xf]
      %v2159 = vld [vmem:[%s199 + $0x228] sm:$0xf]
      %v2160 = vld [vmem:[%s199 + $0x22c] sm:$0x1]
      %v2161 = vld [vmem:[%s199 + $0x230] sm:$0xf]
      %v2162 = vld [vmem:[%s199 + $0x234] sm:$0xf]
      %v2163 = vld [vmem:[%s199 + $0x238] sm:$0xf]
      %v2164 = vld [vmem:[%s199 + $0x23c] sm:$0xf]
      %v2165 = vld [vmem:[%s199 + $0x240] sm:$0x1]
      %v2166 = vld [vmem:[%s199 + $0x244] sm:$0xf]
      %v2167 = vld [vmem:[%s199 + $0x248] sm:$0xf]
      %v2168 = vld [vmem:[%s199 + $0x24c] sm:$0xf]
      %v2169 = vld [vmem:[%s199 + $0x250] sm:$0xf]
      %v2170 = vld [vmem:[%s199 + $0x254] sm:$0x1]
      %v2171 = vld [vmem:[%s199 + $0x258] sm:$0xf]
      %v2172 = vld [vmem:[%s199 + $0x25c] sm:$0xf]
      %v2173 = vld [vmem:[%s199 + $0x260] sm:$0xf]
      %v2174 = vld [vmem:[%s199 + $0x264] sm:$0xf]
      %v2175 = vld [vmem:[%s199 + $0x268] sm:$0x1]
      %v2176 = vld [vmem:[%s199 + $0x26c] sm:$0xf]
      %v2177 = vld [vmem:[%s199 + $0x270] sm:$0xf]
      %v2178 = vld [vmem:[%s199 + $0x274] sm:$0xf]
      %v2179 = vld [vmem:[%s199 + $0x278] sm:$0xf]
      %v2180 = vld [vmem:[%s199 + $0x27c] sm:$0x1]
      %v2181 = vld [vmem:[%s199 + $0x280] sm:$0xf]
      %v2182 = vld [vmem:[%s199 + $0x284] sm:$0xf]
      %v2183 = vld [vmem:[%s199 + $0x288] sm:$0xf]
      %v2184 = vld [vmem:[%s199 + $0x28c] sm:$0xf]
      %v2185 = vld [vmem:[%s199 + $0x290] sm:$0x1]
      %v2186 = vld [vmem:[%s199 + $0x294] sm:$0xf]
      %v2187 = vld [vmem:[%s199 + $0x298] sm:$0xf]
      %v2188 = vld [vmem:[%s199 + $0x29c] sm:$0xf]
      %v2189 = vld [vmem:[%s199 + $0x2a0] sm:$0xf]
      %v2190 = vld [vmem:[%s199 + $0x2a4] sm:$0x1]
      %vm2191 = vsmask.f32 3328
      %vm2192 = vsmask.f32 7440
      %vm2193 = vmor %vm2191, %vm2192
      %v2195 = vshrl.u32 %v2021, 16
      %v2197 = vrot.slane %v2195, 4
      %v2198 = vshll.u32 %v2021, 16
      %v2200 = vrot.slane %v2198, 5
      %v2201 = vor.u32 %v2197, %v2200
      %v2202 = vrot.slane %v2201, 4
      %v2204 = vshll.u32 %v2022, 16
      %v2206 = vrot.slane %v2204, 5
      %v2207 = vsel %vm2193, %v2202, %v2206
      %v2208 = vshrl.u32 %v2022, 16
      %v2210 = vrot.slane %v2208, 4
      %v2211 = vor.u32 %v2210, %v2206
      %v2212 = vrot.slane %v2211, 4
      %v2214 = vshll.u32 %v2023, 16
      %v2216 = vrot.slane %v2214, 5
      %v2217 = vsel %vm2193, %v2212, %v2216
      %v2218 = vshrl.u32 %v2023, 16
      %v2220 = vrot.slane %v2218, 4
      %v2221 = vor.u32 %v2220, %v2216
      %v2222 = vrot.slane %v2221, 4
      %v2224 = vshll.u32 %v2024, 16
      %v2226 = vrot.slane %v2224, 5
      %v2227 = vsel %vm2193, %v2222, %v2226
      %v2228 = vshrl.u32 %v2024, 16
      %v2230 = vrot.slane %v2228, 4
      %v2231 = vor.u32 %v2230, %v2226
      %v2232 = vrot.slane %v2231, 4
      %v2234 = vshll.u32 %v2025, 16
      %v2236 = vrot.slane %v2234, 5
      %v2237 = vsel %vm2193, %v2232, %v2236
      %v2239 = vshrl.u32 %v2026, 16
      %v2241 = vrot.slane %v2239, 4
      %v2242 = vshll.u32 %v2026, 16
      %v2244 = vrot.slane %v2242, 5
      %v2245 = vor.u32 %v2241, %v2244
      %v2246 = vrot.slane %v2245, 4
      %v2248 = vshll.u32 %v2027, 16
      %v2250 = vrot.slane %v2248, 5
      %v2251 = vsel %vm2193, %v2246, %v2250
      %v2252 = vshrl.u32 %v2027, 16
      %v2254 = vrot.slane %v2252, 4
      %v2255 = vor.u32 %v2254, %v2250
      %v2256 = vrot.slane %v2255, 4
      %v2258 = vshll.u32 %v2028, 16
      %v2260 = vrot.slane %v2258, 5
      %v2261 = vsel %vm2193, %v2256, %v2260
      %v2262 = vshrl.u32 %v2028, 16
      %v2264 = vrot.slane %v2262, 4
      %v2265 = vor.u32 %v2264, %v2260
      %v2266 = vrot.slane %v2265, 4
      %v2268 = vshll.u32 %v2029, 16
      %v2270 = vrot.slane %v2268, 5
      %v2271 = vsel %vm2193, %v2266, %v2270
      %v2272 = vshrl.u32 %v2029, 16
      %v2274 = vrot.slane %v2272, 4
      %v2275 = vor.u32 %v2274, %v2270
      %v2276 = vrot.slane %v2275, 4
      %v2278 = vshll.u32 %v2030, 16
      %v2280 = vrot.slane %v2278, 5
      %v2281 = vsel %vm2193, %v2276, %v2280
      %v2283 = vshrl.u32 %v2031, 16
      %v2285 = vrot.slane %v2283, 4
      %v2286 = vshll.u32 %v2031, 16
      %v2288 = vrot.slane %v2286, 5
      %v2289 = vor.u32 %v2285, %v2288
      %v2290 = vrot.slane %v2289, 4
      %v2292 = vshll.u32 %v2032, 16
      %v2294 = vrot.slane %v2292, 5
      %v2295 = vsel %vm2193, %v2290, %v2294
      %v2296 = vshrl.u32 %v2032, 16
      %v2298 = vrot.slane %v2296, 4
      %v2299 = vor.u32 %v2298, %v2294
      %v2300 = vrot.slane %v2299, 4
      %v2302 = vshll.u32 %v2033, 16
      %v2304 = vrot.slane %v2302, 5
      %v2305 = vsel %vm2193, %v2300, %v2304
      %v2306 = vshrl.u32 %v2033, 16
      %v2308 = vrot.slane %v2306, 4
      %v2309 = vor.u32 %v2308, %v2304
      %v2310 = vrot.slane %v2309, 4
      %v2312 = vshll.u32 %v2034, 16
      %v2314 = vrot.slane %v2312, 5
      %v2315 = vsel %vm2193, %v2310, %v2314
      %v2316 = vshrl.u32 %v2034, 16
      %v2318 = vrot.slane %v2316, 4
      %v2319 = vor.u32 %v2318, %v2314
      %v2320 = vrot.slane %v2319, 4
      %v2322 = vshll.u32 %v2035, 16
      %v2324 = vrot.slane %v2322, 5
      %v2325 = vsel %vm2193, %v2320, %v2324
      %v2327 = vshrl.u32 %v2036, 16
      %v2329 = vrot.slane %v2327, 4
      %v2330 = vshll.u32 %v2036, 16
      %v2332 = vrot.slane %v2330, 5
      %v2333 = vor.u32 %v2329, %v2332
      %v2334 = vrot.slane %v2333, 4
      %v2336 = vshll.u32 %v2037, 16
      %v2338 = vrot.slane %v2336, 5
      %v2339 = vsel %vm2193, %v2334, %v2338
      %v2340 = vshrl.u32 %v2037, 16
      %v2342 = vrot.slane %v2340, 4
      %v2343 = vor.u32 %v2342, %v2338
      %v2344 = vrot.slane %v2343, 4
      %v2346 = vshll.u32 %v2038, 16
      %v2348 = vrot.slane %v2346, 5
      %v2349 = vsel %vm2193, %v2344, %v2348
      %v2350 = vshrl.u32 %v2038, 16
      %v2352 = vrot.slane %v2350, 4
      %v2353 = vor.u32 %v2352, %v2348
      %v2354 = vrot.slane %v2353, 4
      %v2356 = vshll.u32 %v2039, 16
      %v2358 = vrot.slane %v2356, 5
      %v2359 = vsel %vm2193, %v2354, %v2358
      %v2360 = vshrl.u32 %v2039, 16
      %v2362 = vrot.slane %v2360, 4
      %v2363 = vor.u32 %v2362, %v2358
      %v2364 = vrot.slane %v2363, 4
      %v2366 = vshll.u32 %v2040, 16
      %v2368 = vrot.slane %v2366, 5
      %v2369 = vsel %vm2193, %v2364, %v2368
      %v2371 = vshrl.u32 %v2041, 16
      %v2373 = vrot.slane %v2371, 4
      %v2374 = vshll.u32 %v2041, 16
      %v2376 = vrot.slane %v2374, 5
      %v2377 = vor.u32 %v2373, %v2376
      %v2378 = vrot.slane %v2377, 4
      %v2380 = vshll.u32 %v2042, 16
      %v2382 = vrot.slane %v2380, 5
      %v2383 = vsel %vm2193, %v2378, %v2382
      %v2384 = vshrl.u32 %v2042, 16
      %v2386 = vrot.slane %v2384, 4
      %v2387 = vor.u32 %v2386, %v2382
      %v2388 = vrot.slane %v2387, 4
      %v2390 = vshll.u32 %v2043, 16
      %v2392 = vrot.slane %v2390, 5
      %v2393 = vsel %vm2193, %v2388, %v2392
      %v2394 = vshrl.u32 %v2043, 16
      %v2396 = vrot.slane %v2394, 4
      %v2397 = vor.u32 %v2396, %v2392
      %v2398 = vrot.slane %v2397, 4
      %v2400 = vshll.u32 %v2044, 16
      %v2402 = vrot.slane %v2400, 5
      %v2403 = vsel %vm2193, %v2398, %v2402
      %v2404 = vshrl.u32 %v2044, 16
      %v2406 = vrot.slane %v2404, 4
      %v2407 = vor.u32 %v2406, %v2402
      %v2408 = vrot.slane %v2407, 4
      %v2410 = vshll.u32 %v2045, 16
      %v2412 = vrot.slane %v2410, 5
      %v2413 = vsel %vm2193, %v2408, %v2412
      %v2415 = vshrl.u32 %v2046, 16
      %v2417 = vrot.slane %v2415, 4
      %v2418 = vshll.u32 %v2046, 16
      %v2420 = vrot.slane %v2418, 5
      %v2421 = vor.u32 %v2417, %v2420
      %v2422 = vrot.slane %v2421, 4
      %v2424 = vshll.u32 %v2047, 16
      %v2426 = vrot.slane %v2424, 5
      %v2427 = vsel %vm2193, %v2422, %v2426
      %v2428 = vshrl.u32 %v2047, 16
      %v2430 = vrot.slane %v2428, 4
      %v2431 = vor.u32 %v2430, %v2426
      %v2432 = vrot.slane %v2431, 4
      %v2434 = vshll.u32 %v2048, 16
      %v2436 = vrot.slane %v2434, 5
      %v2437 = vsel %vm2193, %v2432, %v2436
      %v2438 = vshrl.u32 %v2048, 16
      %v2440 = vrot.slane %v2438, 4
      %v2441 = vor.u32 %v2440, %v2436
      %v2442 = vrot.slane %v2441, 4
      %v2444 = vshll.u32 %v2049, 16
      %v2446 = vrot.slane %v2444, 5
      %v2447 = vsel %vm2193, %v2442, %v2446
      %v2448 = vshrl.u32 %v2049, 16
      %v2450 = vrot.slane %v2448, 4
      %v2451 = vor.u32 %v2450, %v2446
      %v2452 = vrot.slane %v2451, 4
      %v2454 = vshll.u32 %v2050, 16
      %v2456 = vrot.slane %v2454, 5
      %v2457 = vsel %vm2193, %v2452, %v2456
      %v2459 = vshrl.u32 %v2051, 16
      %v2461 = vrot.slane %v2459, 4
      %v2462 = vshll.u32 %v2051, 16
      %v2464 = vrot.slane %v2462, 5
      %v2465 = vor.u32 %v2461, %v2464
      %v2466 = vrot.slane %v2465, 4
      %v2468 = vshll.u32 %v2052, 16
      %v2470 = vrot.slane %v2468, 5
      %v2471 = vsel %vm2193, %v2466, %v2470
      %v2472 = vshrl.u32 %v2052, 16
      %v2474 = vrot.slane %v2472, 4
      %v2475 = vor.u32 %v2474, %v2470
      %v2476 = vrot.slane %v2475, 4
      %v2478 = vshll.u32 %v2053, 16
      %v2480 = vrot.slane %v2478, 5
      %v2481 = vsel %vm2193, %v2476, %v2480
      %v2482 = vshrl.u32 %v2053, 16
      %v2484 = vrot.slane %v2482, 4
      %v2485 = vor.u32 %v2484, %v2480
      %v2486 = vrot.slane %v2485, 4
      %v2488 = vshll.u32 %v2054, 16
      %v2490 = vrot.slane %v2488, 5
      %v2491 = vsel %vm2193, %v2486, %v2490
      %v2492 = vshrl.u32 %v2054, 16
      %v2494 = vrot.slane %v2492, 4
      %v2495 = vor.u32 %v2494, %v2490
      %v2496 = vrot.slane %v2495, 4
      %v2498 = vshll.u32 %v2055, 16
      %v2500 = vrot.slane %v2498, 5
      %v2501 = vsel %vm2193, %v2496, %v2500
      %v2503 = vshrl.u32 %v2056, 16
      %v2505 = vrot.slane %v2503, 4
      %v2506 = vshll.u32 %v2056, 16
      %v2508 = vrot.slane %v2506, 5
      %v2509 = vor.u32 %v2505, %v2508
      %v2510 = vrot.slane %v2509, 4
      %v2512 = vshll.u32 %v2057, 16
      %v2514 = vrot.slane %v2512, 5
      %v2515 = vsel %vm2193, %v2510, %v2514
      %v2516 = vshrl.u32 %v2057, 16
      %v2518 = vrot.slane %v2516, 4
      %v2519 = vor.u32 %v2518, %v2514
      %v2520 = vrot.slane %v2519, 4
      %v2522 = vshll.u32 %v2058, 16
      %v2524 = vrot.slane %v2522, 5
      %v2525 = vsel %vm2193, %v2520, %v2524
      %v2526 = vshrl.u32 %v2058, 16
      %v2528 = vrot.slane %v2526, 4
      %v2529 = vor.u32 %v2528, %v2524
      %v2530 = vrot.slane %v2529, 4
      %v2532 = vshll.u32 %v2059, 16
      %v2534 = vrot.slane %v2532, 5
      %v2535 = vsel %vm2193, %v2530, %v2534
      %v2536 = vshrl.u32 %v2059, 16
      %v2538 = vrot.slane %v2536, 4
      %v2539 = vor.u32 %v2538, %v2534
      %v2540 = vrot.slane %v2539, 4
      %v2542 = vshll.u32 %v2060, 16
      %v2544 = vrot.slane %v2542, 5
      %v2545 = vsel %vm2193, %v2540, %v2544
      %v2547 = vshrl.u32 %v2061, 16
      %v2549 = vrot.slane %v2547, 4
      %v2550 = vshll.u32 %v2061, 16
      %v2552 = vrot.slane %v2550, 5
      %v2553 = vor.u32 %v2549, %v2552
      %v2554 = vrot.slane %v2553, 4
      %v2556 = vshll.u32 %v2062, 16
      %v2558 = vrot.slane %v2556, 5
      %v2559 = vsel %vm2193, %v2554, %v2558
      %v2560 = vshrl.u32 %v2062, 16
      %v2562 = vrot.slane %v2560, 4
      %v2563 = vor.u32 %v2562, %v2558
      %v2564 = vrot.slane %v2563, 4
      %v2566 = vshll.u32 %v2063, 16
      %v2568 = vrot.slane %v2566, 5
      %v2569 = vsel %vm2193, %v2564, %v2568
      %v2570 = vshrl.u32 %v2063, 16
      %v2572 = vrot.slane %v2570, 4
      %v2573 = vor.u32 %v2572, %v2568
      %v2574 = vrot.slane %v2573, 4
      %v2576 = vshll.u32 %v2064, 16
      %v2578 = vrot.slane %v2576, 5
      %v2579 = vsel %vm2193, %v2574, %v2578
      %v2580 = vshrl.u32 %v2064, 16
      %v2582 = vrot.slane %v2580, 4
      %v2583 = vor.u32 %v2582, %v2578
      %v2584 = vrot.slane %v2583, 4
      %v2586 = vshll.u32 %v2065, 16
      %v2588 = vrot.slane %v2586, 5
      %v2589 = vsel %vm2193, %v2584, %v2588
      %v2591 = vshrl.u32 %v2066, 16
      %v2593 = vrot.slane %v2591, 4
      %v2594 = vshll.u32 %v2066, 16
      %v2596 = vrot.slane %v2594, 5
      %v2597 = vor.u32 %v2593, %v2596
      %v2598 = vrot.slane %v2597, 4
      %v2600 = vshll.u32 %v2067, 16
      %v2602 = vrot.slane %v2600, 5
      %v2603 = vsel %vm2193, %v2598, %v2602
      %v2604 = vshrl.u32 %v2067, 16
      %v2606 = vrot.slane %v2604, 4
      %v2607 = vor.u32 %v2606, %v2602
      %v2608 = vrot.slane %v2607, 4
      %v2610 = vshll.u32 %v2068, 16
      %v2612 = vrot.slane %v2610, 5
      %v2613 = vsel %vm2193, %v2608, %v2612
      %v2614 = vshrl.u32 %v2068, 16
      %v2616 = vrot.slane %v2614, 4
      %v2617 = vor.u32 %v2616, %v2612
      %v2618 = vrot.slane %v2617, 4
      %v2620 = vshll.u32 %v2069, 16
      %v2622 = vrot.slane %v2620, 5
      %v2623 = vsel %vm2193, %v2618, %v2622
      %v2624 = vshrl.u32 %v2069, 16
      %v2626 = vrot.slane %v2624, 4
      %v2627 = vor.u32 %v2626, %v2622
      %v2628 = vrot.slane %v2627, 4
      %v2630 = vshll.u32 %v2070, 16
      %v2632 = vrot.slane %v2630, 5
      %v2633 = vsel %vm2193, %v2628, %v2632
      %v2635 = vshrl.u32 %v2071, 16
      %v2637 = vrot.slane %v2635, 4
      %v2638 = vshll.u32 %v2071, 16
      %v2640 = vrot.slane %v2638, 5
      %v2641 = vor.u32 %v2637, %v2640
      %v2642 = vrot.slane %v2641, 4
      %v2644 = vshll.u32 %v2072, 16
      %v2646 = vrot.slane %v2644, 5
      %v2647 = vsel %vm2193, %v2642, %v2646
      %v2648 = vshrl.u32 %v2072, 16
      %v2650 = vrot.slane %v2648, 4
      %v2651 = vor.u32 %v2650, %v2646
      %v2652 = vrot.slane %v2651, 4
      %v2654 = vshll.u32 %v2073, 16
      %v2656 = vrot.slane %v2654, 5
      %v2657 = vsel %vm2193, %v2652, %v2656
      %v2658 = vshrl.u32 %v2073, 16
      %v2660 = vrot.slane %v2658, 4
      %v2661 = vor.u32 %v2660, %v2656
      %v2662 = vrot.slane %v2661, 4
      %v2664 = vshll.u32 %v2074, 16
      %v2666 = vrot.slane %v2664, 5
      %v2667 = vsel %vm2193, %v2662, %v2666
      %v2668 = vshrl.u32 %v2074, 16
      %v2670 = vrot.slane %v2668, 4
      %v2671 = vor.u32 %v2670, %v2666
      %v2672 = vrot.slane %v2671, 4
      %v2674 = vshll.u32 %v2075, 16
      %v2676 = vrot.slane %v2674, 5
      %v2677 = vsel %vm2193, %v2672, %v2676
      %v2679 = vshrl.u32 %v2076, 16
      %v2681 = vrot.slane %v2679, 4
      %v2682 = vshll.u32 %v2076, 16
      %v2684 = vrot.slane %v2682, 5
      %v2685 = vor.u32 %v2681, %v2684
      %v2686 = vrot.slane %v2685, 4
      %v2688 = vshll.u32 %v2077, 16
      %v2690 = vrot.slane %v2688, 5
      %v2691 = vsel %vm2193, %v2686, %v2690
      %v2692 = vshrl.u32 %v2077, 16
      %v2694 = vrot.slane %v2692, 4
      %v2695 = vor.u32 %v2694, %v2690
      %v2696 = vrot.slane %v2695, 4
      %v2698 = vshll.u32 %v2078, 16
      %v2700 = vrot.slane %v2698, 5
      %v2701 = vsel %vm2193, %v2696, %v2700
      %v2702 = vshrl.u32 %v2078, 16
      %v2704 = vrot.slane %v2702, 4
      %v2705 = vor.u32 %v2704, %v2700
      %v2706 = vrot.slane %v2705, 4
      %v2708 = vshll.u32 %v2079, 16
      %v2710 = vrot.slane %v2708, 5
      %v2711 = vsel %vm2193, %v2706, %v2710
      %v2712 = vshrl.u32 %v2079, 16
      %v2714 = vrot.slane %v2712, 4
      %v2715 = vor.u32 %v2714, %v2710
      %v2716 = vrot.slane %v2715, 4
      %v2718 = vshll.u32 %v2080, 16
      %v2720 = vrot.slane %v2718, 5
      %v2721 = vsel %vm2193, %v2716, %v2720
      %v2723 = vshrl.u32 %v2081, 16
      %v2725 = vrot.slane %v2723, 4
      %v2726 = vshll.u32 %v2081, 16
      %v2728 = vrot.slane %v2726, 5
      %v2729 = vor.u32 %v2725, %v2728
      %v2730 = vrot.slane %v2729, 4
      %v2732 = vshll.u32 %v2082, 16
      %v2734 = vrot.slane %v2732, 5
      %v2735 = vsel %vm2193, %v2730, %v2734
      %v2736 = vshrl.u32 %v2082, 16
      %v2738 = vrot.slane %v2736, 4
      %v2739 = vor.u32 %v2738, %v2734
      %v2740 = vrot.slane %v2739, 4
      %v2742 = vshll.u32 %v2083, 16
      %v2744 = vrot.slane %v2742, 5
      %v2745 = vsel %vm2193, %v2740, %v2744
      %v2746 = vshrl.u32 %v2083, 16
      %v2748 = vrot.slane %v2746, 4
      %v2749 = vor.u32 %v2748, %v2744
      %v2750 = vrot.slane %v2749, 4
      %v2752 = vshll.u32 %v2084, 16
      %v2754 = vrot.slane %v2752, 5
      %v2755 = vsel %vm2193, %v2750, %v2754
      %v2756 = vshrl.u32 %v2084, 16
      %v2758 = vrot.slane %v2756, 4
      %v2759 = vor.u32 %v2758, %v2754
      %v2760 = vrot.slane %v2759, 4
      %v2762 = vshll.u32 %v2085, 16
      %v2764 = vrot.slane %v2762, 5
      %v2765 = vsel %vm2193, %v2760, %v2764
      %v2767 = vshrl.u32 %v2086, 16
      %v2769 = vrot.slane %v2767, 4
      %v2770 = vshll.u32 %v2086, 16
      %v2772 = vrot.slane %v2770, 5
      %v2773 = vor.u32 %v2769, %v2772
      %v2774 = vrot.slane %v2773, 4
      %v2776 = vshll.u32 %v2087, 16
      %v2778 = vrot.slane %v2776, 5
      %v2779 = vsel %vm2193, %v2774, %v2778
      %v2780 = vshrl.u32 %v2087, 16
      %v2782 = vrot.slane %v2780, 4
      %v2783 = vor.u32 %v2782, %v2778
      %v2784 = vrot.slane %v2783, 4
      %v2786 = vshll.u32 %v2088, 16
      %v2788 = vrot.slane %v2786, 5
      %v2789 = vsel %vm2193, %v2784, %v2788
      %v2790 = vshrl.u32 %v2088, 16
      %v2792 = vrot.slane %v2790, 4
      %v2793 = vor.u32 %v2792, %v2788
      %v2794 = vrot.slane %v2793, 4
      %v2796 = vshll.u32 %v2089, 16
      %v2798 = vrot.slane %v2796, 5
      %v2799 = vsel %vm2193, %v2794, %v2798
      %v2800 = vshrl.u32 %v2089, 16
      %v2802 = vrot.slane %v2800, 4
      %v2803 = vor.u32 %v2802, %v2798
      %v2804 = vrot.slane %v2803, 4
      %v2806 = vshll.u32 %v2090, 16
      %v2808 = vrot.slane %v2806, 5
      %v2809 = vsel %vm2193, %v2804, %v2808
      %v2811 = vshrl.u32 %v2091, 16
      %v2813 = vrot.slane %v2811, 4
      %v2814 = vshll.u32 %v2091, 16
      %v2816 = vrot.slane %v2814, 5
      %v2817 = vor.u32 %v2813, %v2816
      %v2818 = vrot.slane %v2817, 4
      %v2820 = vshll.u32 %v2092, 16
      %v2822 = vrot.slane %v2820, 5
      %v2823 = vsel %vm2193, %v2818, %v2822
      %v2824 = vshrl.u32 %v2092, 16
      %v2826 = vrot.slane %v2824, 4
      %v2827 = vor.u32 %v2826, %v2822
      %v2828 = vrot.slane %v2827, 4
      %v2830 = vshll.u32 %v2093, 16
      %v2832 = vrot.slane %v2830, 5
      %v2833 = vsel %vm2193, %v2828, %v2832
      %v2834 = vshrl.u32 %v2093, 16
      %v2836 = vrot.slane %v2834, 4
      %v2837 = vor.u32 %v2836, %v2832
      %v2838 = vrot.slane %v2837, 4
      %v2840 = vshll.u32 %v2094, 16
      %v2842 = vrot.slane %v2840, 5
      %v2843 = vsel %vm2193, %v2838, %v2842
      %v2844 = vshrl.u32 %v2094, 16
      %v2846 = vrot.slane %v2844, 4
      %v2847 = vor.u32 %v2846, %v2842
      %v2848 = vrot.slane %v2847, 4
      %v2850 = vshll.u32 %v2095, 16
      %v2852 = vrot.slane %v2850, 5
      %v2853 = vsel %vm2193, %v2848, %v2852
      %v2855 = vshrl.u32 %v2096, 16
      %v2857 = vrot.slane %v2855, 4
      %v2858 = vshll.u32 %v2096, 16
      %v2860 = vrot.slane %v2858, 5
      %v2861 = vor.u32 %v2857, %v2860
      %v2862 = vrot.slane %v2861, 4
      %v2864 = vshll.u32 %v2097, 16
      %v2866 = vrot.slane %v2864, 5
      %v2867 = vsel %vm2193, %v2862, %v2866
      %v2868 = vshrl.u32 %v2097, 16
      %v2870 = vrot.slane %v2868, 4
      %v2871 = vor.u32 %v2870, %v2866
      %v2872 = vrot.slane %v2871, 4
      %v2874 = vshll.u32 %v2098, 16
      %v2876 = vrot.slane %v2874, 5
      %v2877 = vsel %vm2193, %v2872, %v2876
      %v2878 = vshrl.u32 %v2098, 16
      %v2880 = vrot.slane %v2878, 4
      %v2881 = vor.u32 %v2880, %v2876
      %v2882 = vrot.slane %v2881, 4
      %v2884 = vshll.u32 %v2099, 16
      %v2886 = vrot.slane %v2884, 5
      %v2887 = vsel %vm2193, %v2882, %v2886
      %v2888 = vshrl.u32 %v2099, 16
      %v2890 = vrot.slane %v2888, 4
      %v2891 = vor.u32 %v2890, %v2886
      %v2892 = vrot.slane %v2891, 4
      %v2894 = vshll.u32 %v2100, 16
      %v2896 = vrot.slane %v2894, 5
      %v2897 = vsel %vm2193, %v2892, %v2896
      %v2899 = vshrl.u32 %v2101, 16
      %v2901 = vrot.slane %v2899, 4
      %v2902 = vshll.u32 %v2101, 16
      %v2904 = vrot.slane %v2902, 5
      %v2905 = vor.u32 %v2901, %v2904
      %v2906 = vrot.slane %v2905, 4
      %v2908 = vshll.u32 %v2102, 16
      %v2910 = vrot.slane %v2908, 5
      %v2911 = vsel %vm2193, %v2906, %v2910
      %v2912 = vshrl.u32 %v2102, 16
      %v2914 = vrot.slane %v2912, 4
      %v2915 = vor.u32 %v2914, %v2910
      %v2916 = vrot.slane %v2915, 4
      %v2918 = vshll.u32 %v2103, 16
      %v2920 = vrot.slane %v2918, 5
      %v2921 = vsel %vm2193, %v2916, %v2920
      %v2922 = vshrl.u32 %v2103, 16
      %v2924 = vrot.slane %v2922, 4
      %v2925 = vor.u32 %v2924, %v2920
      %v2926 = vrot.slane %v2925, 4
      %v2928 = vshll.u32 %v2104, 16
      %v2930 = vrot.slane %v2928, 5
      %v2931 = vsel %vm2193, %v2926, %v2930
      %v2932 = vshrl.u32 %v2104, 16
      %v2934 = vrot.slane %v2932, 4
      %v2935 = vor.u32 %v2934, %v2930
      %v2936 = vrot.slane %v2935, 4
      %v2938 = vshll.u32 %v2105, 16
      %v2940 = vrot.slane %v2938, 5
      %v2941 = vsel %vm2193, %v2936, %v2940
      %v2943 = vshrl.u32 %v2106, 16
      %v2945 = vrot.slane %v2943, 4
      %v2946 = vshll.u32 %v2106, 16
      %v2948 = vrot.slane %v2946, 5
      %v2949 = vor.u32 %v2945, %v2948
      %v2950 = vrot.slane %v2949, 4
      %v2952 = vshll.u32 %v2107, 16
      %v2954 = vrot.slane %v2952, 5
      %v2955 = vsel %vm2193, %v2950, %v2954
      %v2956 = vshrl.u32 %v2107, 16
      %v2958 = vrot.slane %v2956, 4
      %v2959 = vor.u32 %v2958, %v2954
      %v2960 = vrot.slane %v2959, 4
      %v2962 = vshll.u32 %v2108, 16
      %v2964 = vrot.slane %v2962, 5
      %v2965 = vsel %vm2193, %v2960, %v2964
      %v2966 = vshrl.u32 %v2108, 16
      %v2968 = vrot.slane %v2966, 4
      %v2969 = vor.u32 %v2968, %v2964
      %v2970 = vrot.slane %v2969, 4
      %v2972 = vshll.u32 %v2109, 16
      %v2974 = vrot.slane %v2972, 5
      %v2975 = vsel %vm2193, %v2970, %v2974
      %v2976 = vshrl.u32 %v2109, 16
      %v2978 = vrot.slane %v2976, 4
      %v2979 = vor.u32 %v2978, %v2974
      %v2980 = vrot.slane %v2979, 4
      %v2982 = vshll.u32 %v2110, 16
      %v2984 = vrot.slane %v2982, 5
      %v2985 = vsel %vm2193, %v2980, %v2984
      %v2987 = vshrl.u32 %v2111, 16
      %v2989 = vrot.slane %v2987, 4
      %v2990 = vshll.u32 %v2111, 16
      %v2992 = vrot.slane %v2990, 5
      %v2993 = vor.u32 %v2989, %v2992
      %v2994 = vrot.slane %v2993, 4
      %v2996 = vshll.u32 %v2112, 16
      %v2998 = vrot.slane %v2996, 5
      %v2999 = vsel %vm2193, %v2994, %v2998
      %v3000 = vshrl.u32 %v2112, 16
      %v3002 = vrot.slane %v3000, 4
      %v3003 = vor.u32 %v3002, %v2998
      %v3004 = vrot.slane %v3003, 4
      %v3006 = vshll.u32 %v2113, 16
      %v3008 = vrot.slane %v3006, 5
      %v3009 = vsel %vm2193, %v3004, %v3008
      %v3010 = vshrl.u32 %v2113, 16
      %v3012 = vrot.slane %v3010, 4
      %v3013 = vor.u32 %v3012, %v3008
      %v3014 = vrot.slane %v3013, 4
      %v3016 = vshll.u32 %v2114, 16
      %v3018 = vrot.slane %v3016, 5
      %v3019 = vsel %vm2193, %v3014, %v3018
      %v3020 = vshrl.u32 %v2114, 16
      %v3022 = vrot.slane %v3020, 4
      %v3023 = vor.u32 %v3022, %v3018
      %v3024 = vrot.slane %v3023, 4
      %v3026 = vshll.u32 %v2115, 16
      %v3028 = vrot.slane %v3026, 5
      %v3029 = vsel %vm2193, %v3024, %v3028
      %v3031 = vshrl.u32 %v2116, 16
      %v3033 = vrot.slane %v3031, 4
      %v3034 = vshll.u32 %v2116, 16
      %v3036 = vrot.slane %v3034, 5
      %v3037 = vor.u32 %v3033, %v3036
      %v3038 = vrot.slane %v3037, 4
      %v3040 = vshll.u32 %v2117, 16
      %v3042 = vrot.slane %v3040, 5
      %v3043 = vsel %vm2193, %v3038, %v3042
      %v3044 = vshrl.u32 %v2117, 16
      %v3046 = vrot.slane %v3044, 4
      %v3047 = vor.u32 %v3046, %v3042
      %v3048 = vrot.slane %v3047, 4
      %v3050 = vshll.u32 %v2118, 16
      %v3052 = vrot.slane %v3050, 5
      %v3053 = vsel %vm2193, %v3048, %v3052
      %v3054 = vshrl.u32 %v2118, 16
      %v3056 = vrot.slane %v3054, 4
      %v3057 = vor.u32 %v3056, %v3052
      %v3058 = vrot.slane %v3057, 4
      %v3060 = vshll.u32 %v2119, 16
      %v3062 = vrot.slane %v3060, 5
      %v3063 = vsel %vm2193, %v3058, %v3062
      %v3064 = vshrl.u32 %v2119, 16
      %v3066 = vrot.slane %v3064, 4
      %v3067 = vor.u32 %v3066, %v3062
      %v3068 = vrot.slane %v3067, 4
      %v3070 = vshll.u32 %v2120, 16
      %v3072 = vrot.slane %v3070, 5
      %v3073 = vsel %vm2193, %v3068, %v3072
      %v3075 = vshrl.u32 %v2121, 16
      %v3077 = vrot.slane %v3075, 4
      %v3078 = vshll.u32 %v2121, 16
      %v3080 = vrot.slane %v3078, 5
      %v3081 = vor.u32 %v3077, %v3080
      %v3082 = vrot.slane %v3081, 4
      %v3084 = vshll.u32 %v2122, 16
      %v3086 = vrot.slane %v3084, 5
      %v3087 = vsel %vm2193, %v3082, %v3086
      %v3088 = vshrl.u32 %v2122, 16
      %v3090 = vrot.slane %v3088, 4
      %v3091 = vor.u32 %v3090, %v3086
      %v3092 = vrot.slane %v3091, 4
      %v3094 = vshll.u32 %v2123, 16
      %v3096 = vrot.slane %v3094, 5
      %v3097 = vsel %vm2193, %v3092, %v3096
      %v3098 = vshrl.u32 %v2123, 16
      %v3100 = vrot.slane %v3098, 4
      %v3101 = vor.u32 %v3100, %v3096
      %v3102 = vrot.slane %v3101, 4
      %v3104 = vshll.u32 %v2124, 16
      %v3106 = vrot.slane %v3104, 5
      %v3107 = vsel %vm2193, %v3102, %v3106
      %v3108 = vshrl.u32 %v2124, 16
      %v3110 = vrot.slane %v3108, 4
      %v3111 = vor.u32 %v3110, %v3106
      %v3112 = vrot.slane %v3111, 4
      %v3114 = vshll.u32 %v2125, 16
      %v3116 = vrot.slane %v3114, 5
      %v3117 = vsel %vm2193, %v3112, %v3116
      %v3119 = vshrl.u32 %v2126, 16
      %v3121 = vrot.slane %v3119, 4
      %v3122 = vshll.u32 %v2126, 16
      %v3124 = vrot.slane %v3122, 5
      %v3125 = vor.u32 %v3121, %v3124
      %v3126 = vrot.slane %v3125, 4
      %v3128 = vshll.u32 %v2127, 16
      %v3130 = vrot.slane %v3128, 5
      %v3131 = vsel %vm2193, %v3126, %v3130
      %v3132 = vshrl.u32 %v2127, 16
      %v3134 = vrot.slane %v3132, 4
      %v3135 = vor.u32 %v3134, %v3130
      %v3136 = vrot.slane %v3135, 4
      %v3138 = vshll.u32 %v2128, 16
      %v3140 = vrot.slane %v3138, 5
      %v3141 = vsel %vm2193, %v3136, %v3140
      %v3142 = vshrl.u32 %v2128, 16
      %v3144 = vrot.slane %v3142, 4
      %v3145 = vor.u32 %v3144, %v3140
      %v3146 = vrot.slane %v3145, 4
      %v3148 = vshll.u32 %v2129, 16
      %v3150 = vrot.slane %v3148, 5
      %v3151 = vsel %vm2193, %v3146, %v3150
      %v3152 = vshrl.u32 %v2129, 16
      %v3154 = vrot.slane %v3152, 4
      %v3155 = vor.u32 %v3154, %v3150
      %v3156 = vrot.slane %v3155, 4
      %v3158 = vshll.u32 %v2130, 16
      %v3160 = vrot.slane %v3158, 5
      %v3161 = vsel %vm2193, %v3156, %v3160
      %v3163 = vshrl.u32 %v2131, 16
      %v3165 = vrot.slane %v3163, 4
      %v3166 = vshll.u32 %v2131, 16
      %v3168 = vrot.slane %v3166, 5
      %v3169 = vor.u32 %v3165, %v3168
      %v3170 = vrot.slane %v3169, 4
      %v3172 = vshll.u32 %v2132, 16
      %v3174 = vrot.slane %v3172, 5
      %v3175 = vsel %vm2193, %v3170, %v3174
      %v3176 = vshrl.u32 %v2132, 16
      %v3178 = vrot.slane %v3176, 4
      %v3179 = vor.u32 %v3178, %v3174
      %v3180 = vrot.slane %v3179, 4
      %v3182 = vshll.u32 %v2133, 16
      %v3184 = vrot.slane %v3182, 5
      %v3185 = vsel %vm2193, %v3180, %v3184
      %v3186 = vshrl.u32 %v2133, 16
      %v3188 = vrot.slane %v3186, 4
      %v3189 = vor.u32 %v3188, %v3184
      %v3190 = vrot.slane %v3189, 4
      %v3192 = vshll.u32 %v2134, 16
      %v3194 = vrot.slane %v3192, 5
      %v3195 = vsel %vm2193, %v3190, %v3194
      %v3196 = vshrl.u32 %v2134, 16
      %v3198 = vrot.slane %v3196, 4
      %v3199 = vor.u32 %v3198, %v3194
      %v3200 = vrot.slane %v3199, 4
      %v3202 = vshll.u32 %v2135, 16
      %v3204 = vrot.slane %v3202, 5
      %v3205 = vsel %vm2193, %v3200, %v3204
      %v3207 = vshrl.u32 %v2136, 16
      %v3209 = vrot.slane %v3207, 4
      %v3210 = vshll.u32 %v2136, 16
      %v3212 = vrot.slane %v3210, 5
      %v3213 = vor.u32 %v3209, %v3212
      %v3214 = vrot.slane %v3213, 4
      %v3216 = vshll.u32 %v2137, 16
      %v3218 = vrot.slane %v3216, 5
      %v3219 = vsel %vm2193, %v3214, %v3218
      %v3220 = vshrl.u32 %v2137, 16
      %v3222 = vrot.slane %v3220, 4
      %v3223 = vor.u32 %v3222, %v3218
      %v3224 = vrot.slane %v3223, 4
      %v3226 = vshll.u32 %v2138, 16
      %v3228 = vrot.slane %v3226, 5
      %v3229 = vsel %vm2193, %v3224, %v3228
      %v3230 = vshrl.u32 %v2138, 16
      %v3232 = vrot.slane %v3230, 4
      %v3233 = vor.u32 %v3232, %v3228
      %v3234 = vrot.slane %v3233, 4
      %v3236 = vshll.u32 %v2139, 16
      %v3238 = vrot.slane %v3236, 5
      %v3239 = vsel %vm2193, %v3234, %v3238
      %v3240 = vshrl.u32 %v2139, 16
      %v3242 = vrot.slane %v3240, 4
      %v3243 = vor.u32 %v3242, %v3238
      %v3244 = vrot.slane %v3243, 4
      %v3246 = vshll.u32 %v2140, 16
      %v3248 = vrot.slane %v3246, 5
      %v3249 = vsel %vm2193, %v3244, %v3248
      %v3251 = vshrl.u32 %v2141, 16
      %v3253 = vrot.slane %v3251, 4
      %v3254 = vshll.u32 %v2141, 16
      %v3256 = vrot.slane %v3254, 5
      %v3257 = vor.u32 %v3253, %v3256
      %v3258 = vrot.slane %v3257, 4
      %v3260 = vshll.u32 %v2142, 16
      %v3262 = vrot.slane %v3260, 5
      %v3263 = vsel %vm2193, %v3258, %v3262
      %v3264 = vshrl.u32 %v2142, 16
      %v3266 = vrot.slane %v3264, 4
      %v3267 = vor.u32 %v3266, %v3262
      %v3268 = vrot.slane %v3267, 4
      %v3270 = vshll.u32 %v2143, 16
      %v3272 = vrot.slane %v3270, 5
      %v3273 = vsel %vm2193, %v3268, %v3272
      %v3274 = vshrl.u32 %v2143, 16
      %v3276 = vrot.slane %v3274, 4
      %v3277 = vor.u32 %v3276, %v3272
      %v3278 = vrot.slane %v3277, 4
      %v3280 = vshll.u32 %v2144, 16
      %v3282 = vrot.slane %v3280, 5
      %v3283 = vsel %vm2193, %v3278, %v3282
      %v3284 = vshrl.u32 %v2144, 16
      %v3286 = vrot.slane %v3284, 4
      %v3287 = vor.u32 %v3286, %v3282
      %v3288 = vrot.slane %v3287, 4
      %v3290 = vshll.u32 %v2145, 16
      %v3292 = vrot.slane %v3290, 5
      %v3293 = vsel %vm2193, %v3288, %v3292
      %v3295 = vshrl.u32 %v2146, 16
      %v3297 = vrot.slane %v3295, 4
      %v3298 = vshll.u32 %v2146, 16
      %v3300 = vrot.slane %v3298, 5
      %v3301 = vor.u32 %v3297, %v3300
      %v3302 = vrot.slane %v3301, 4
      %v3304 = vshll.u32 %v2147, 16
      %v3306 = vrot.slane %v3304, 5
      %v3307 = vsel %vm2193, %v3302, %v3306
      %v3308 = vshrl.u32 %v2147, 16
      %v3310 = vrot.slane %v3308, 4
      %v3311 = vor.u32 %v3310, %v3306
      %v3312 = vrot.slane %v3311, 4
      %v3314 = vshll.u32 %v2148, 16
      %v3316 = vrot.slane %v3314, 5
      %v3317 = vsel %vm2193, %v3312, %v3316
      %v3318 = vshrl.u32 %v2148, 16
      %v3320 = vrot.slane %v3318, 4
      %v3321 = vor.u32 %v3320, %v3316
      %v3322 = vrot.slane %v3321, 4
      %v3324 = vshll.u32 %v2149, 16
      %v3326 = vrot.slane %v3324, 5
      %v3327 = vsel %vm2193, %v3322, %v3326
      %v3328 = vshrl.u32 %v2149, 16
      %v3330 = vrot.slane %v3328, 4
      %v3331 = vor.u32 %v3330, %v3326
      %v3332 = vrot.slane %v3331, 4
      %v3334 = vshll.u32 %v2150, 16
      %v3336 = vrot.slane %v3334, 5
      %v3337 = vsel %vm2193, %v3332, %v3336
      %v3339 = vshrl.u32 %v2151, 16
      %v3341 = vrot.slane %v3339, 4
      %v3342 = vshll.u32 %v2151, 16
      %v3344 = vrot.slane %v3342, 5
      %v3345 = vor.u32 %v3341, %v3344
      %v3346 = vrot.slane %v3345, 4
      %v3348 = vshll.u32 %v2152, 16
      %v3350 = vrot.slane %v3348, 5
      %v3351 = vsel %vm2193, %v3346, %v3350
      %v3352 = vshrl.u32 %v2152, 16
      %v3354 = vrot.slane %v3352, 4
      %v3355 = vor.u32 %v3354, %v3350
      %v3356 = vrot.slane %v3355, 4
      %v3358 = vshll.u32 %v2153, 16
      %v3360 = vrot.slane %v3358, 5
      %v3361 = vsel %vm2193, %v3356, %v3360
      %v3362 = vshrl.u32 %v2153, 16
      %v3364 = vrot.slane %v3362, 4
      %v3365 = vor.u32 %v3364, %v3360
      %v3366 = vrot.slane %v3365, 4
      %v3368 = vshll.u32 %v2154, 16
      %v3370 = vrot.slane %v3368, 5
      %v3371 = vsel %vm2193, %v3366, %v3370
      %v3372 = vshrl.u32 %v2154, 16
      %v3374 = vrot.slane %v3372, 4
      %v3375 = vor.u32 %v3374, %v3370
      %v3376 = vrot.slane %v3375, 4
      %v3378 = vshll.u32 %v2155, 16
      %v3380 = vrot.slane %v3378, 5
      %v3381 = vsel %vm2193, %v3376, %v3380
      %v3383 = vshrl.u32 %v2156, 16
      %v3385 = vrot.slane %v3383, 4
      %v3386 = vshll.u32 %v2156, 16
      %v3388 = vrot.slane %v3386, 5
      %v3389 = vor.u32 %v3385, %v3388
      %v3390 = vrot.slane %v3389, 4
      %v3392 = vshll.u32 %v2157, 16
      %v3394 = vrot.slane %v3392, 5
      %v3395 = vsel %vm2193, %v3390, %v3394
      %v3396 = vshrl.u32 %v2157, 16
      %v3398 = vrot.slane %v3396, 4
      %v3399 = vor.u32 %v3398, %v3394
      %v3400 = vrot.slane %v3399, 4
      %v3402 = vshll.u32 %v2158, 16
      %v3404 = vrot.slane %v3402, 5
      %v3405 = vsel %vm2193, %v3400, %v3404
      %v3406 = vshrl.u32 %v2158, 16
      %v3408 = vrot.slane %v3406, 4
      %v3409 = vor.u32 %v3408, %v3404
      %v3410 = vrot.slane %v3409, 4
      %v3412 = vshll.u32 %v2159, 16
      %v3414 = vrot.slane %v3412, 5
      %v3415 = vsel %vm2193, %v3410, %v3414
      %v3416 = vshrl.u32 %v2159, 16
      %v3418 = vrot.slane %v3416, 4
      %v3419 = vor.u32 %v3418, %v3414
      %v3420 = vrot.slane %v3419, 4
      %v3422 = vshll.u32 %v2160, 16
      %v3424 = vrot.slane %v3422, 5
      %v3425 = vsel %vm2193, %v3420, %v3424
      %v3427 = vshrl.u32 %v2161, 16
      %v3429 = vrot.slane %v3427, 4
      %v3430 = vshll.u32 %v2161, 16
      %v3432 = vrot.slane %v3430, 5
      %v3433 = vor.u32 %v3429, %v3432
      %v3434 = vrot.slane %v3433, 4
      %v3436 = vshll.u32 %v2162, 16
      %v3438 = vrot.slane %v3436, 5
      %v3439 = vsel %vm2193, %v3434, %v3438
      %v3440 = vshrl.u32 %v2162, 16
      %v3442 = vrot.slane %v3440, 4
      %v3443 = vor.u32 %v3442, %v3438
      %v3444 = vrot.slane %v3443, 4
      %v3446 = vshll.u32 %v2163, 16
      %v3448 = vrot.slane %v3446, 5
      %v3449 = vsel %vm2193, %v3444, %v3448
      %v3450 = vshrl.u32 %v2163, 16
      %v3452 = vrot.slane %v3450, 4
      %v3453 = vor.u32 %v3452, %v3448
      %v3454 = vrot.slane %v3453, 4
      %v3456 = vshll.u32 %v2164, 16
      %v3458 = vrot.slane %v3456, 5
      %v3459 = vsel %vm2193, %v3454, %v3458
      %v3460 = vshrl.u32 %v2164, 16
      %v3462 = vrot.slane %v3460, 4
      %v3463 = vor.u32 %v3462, %v3458
      %v3464 = vrot.slane %v3463, 4
      %v3466 = vshll.u32 %v2165, 16
      %v3468 = vrot.slane %v3466, 5
      %v3469 = vsel %vm2193, %v3464, %v3468
      %v3471 = vshrl.u32 %v2166, 16
      %v3473 = vrot.slane %v3471, 4
      %v3474 = vshll.u32 %v2166, 16
      %v3476 = vrot.slane %v3474, 5
      %v3477 = vor.u32 %v3473, %v3476
      %v3478 = vrot.slane %v3477, 4
      %v3480 = vshll.u32 %v2167, 16
      %v3482 = vrot.slane %v3480, 5
      %v3483 = vsel %vm2193, %v3478, %v3482
      %v3484 = vshrl.u32 %v2167, 16
      %v3486 = vrot.slane %v3484, 4
      %v3487 = vor.u32 %v3486, %v3482
      %v3488 = vrot.slane %v3487, 4
      %v3490 = vshll.u32 %v2168, 16
      %v3492 = vrot.slane %v3490, 5
      %v3493 = vsel %vm2193, %v3488, %v3492
      %v3494 = vshrl.u32 %v2168, 16
      %v3496 = vrot.slane %v3494, 4
      %v3497 = vor.u32 %v3496, %v3492
      %v3498 = vrot.slane %v3497, 4
      %v3500 = vshll.u32 %v2169, 16
      %v3502 = vrot.slane %v3500, 5
      %v3503 = vsel %vm2193, %v3498, %v3502
      %v3504 = vshrl.u32 %v2169, 16
      %v3506 = vrot.slane %v3504, 4
      %v3507 = vor.u32 %v3506, %v3502
      %v3508 = vrot.slane %v3507, 4
      %v3510 = vshll.u32 %v2170, 16
      %v3512 = vrot.slane %v3510, 5
      %v3513 = vsel %vm2193, %v3508, %v3512
      %v3515 = vshrl.u32 %v2171, 16
      %v3517 = vrot.slane %v3515, 4
      %v3518 = vshll.u32 %v2171, 16
      %v3520 = vrot.slane %v3518, 5
      %v3521 = vor.u32 %v3517, %v3520
      %v3522 = vrot.slane %v3521, 4
      %v3524 = vshll.u32 %v2172, 16
      %v3526 = vrot.slane %v3524, 5
      %v3527 = vsel %vm2193, %v3522, %v3526
      %v3528 = vshrl.u32 %v2172, 16
      %v3530 = vrot.slane %v3528, 4
      %v3531 = vor.u32 %v3530, %v3526
      %v3532 = vrot.slane %v3531, 4
      %v3534 = vshll.u32 %v2173, 16
      %v3536 = vrot.slane %v3534, 5
      %v3537 = vsel %vm2193, %v3532, %v3536
      %v3538 = vshrl.u32 %v2173, 16
      %v3540 = vrot.slane %v3538, 4
      %v3541 = vor.u32 %v3540, %v3536
      %v3542 = vrot.slane %v3541, 4
      %v3544 = vshll.u32 %v2174, 16
      %v3546 = vrot.slane %v3544, 5
      %v3547 = vsel %vm2193, %v3542, %v3546
      %v3548 = vshrl.u32 %v2174, 16
      %v3550 = vrot.slane %v3548, 4
      %v3551 = vor.u32 %v3550, %v3546
      %v3552 = vrot.slane %v3551, 4
      %v3554 = vshll.u32 %v2175, 16
      %v3556 = vrot.slane %v3554, 5
      %v3557 = vsel %vm2193, %v3552, %v3556
      %v3559 = vshrl.u32 %v2176, 16
      %v3561 = vrot.slane %v3559, 4
      %v3562 = vshll.u32 %v2176, 16
      %v3564 = vrot.slane %v3562, 5
      %v3565 = vor.u32 %v3561, %v3564
      %v3566 = vrot.slane %v3565, 4
      %v3568 = vshll.u32 %v2177, 16
      %v3570 = vrot.slane %v3568, 5
      %v3571 = vsel %vm2193, %v3566, %v3570
      %v3572 = vshrl.u32 %v2177, 16
      %v3574 = vrot.slane %v3572, 4
      %v3575 = vor.u32 %v3574, %v3570
      %v3576 = vrot.slane %v3575, 4
      %v3578 = vshll.u32 %v2178, 16
      %v3580 = vrot.slane %v3578, 5
      %v3581 = vsel %vm2193, %v3576, %v3580
      %v3582 = vshrl.u32 %v2178, 16
      %v3584 = vrot.slane %v3582, 4
      %v3585 = vor.u32 %v3584, %v3580
      %v3586 = vrot.slane %v3585, 4
      %v3588 = vshll.u32 %v2179, 16
      %v3590 = vrot.slane %v3588, 5
      %v3591 = vsel %vm2193, %v3586, %v3590
      %v3592 = vshrl.u32 %v2179, 16
      %v3594 = vrot.slane %v3592, 4
      %v3595 = vor.u32 %v3594, %v3590
      %v3596 = vrot.slane %v3595, 4
      %v3598 = vshll.u32 %v2180, 16
      %v3600 = vrot.slane %v3598, 5
      %v3601 = vsel %vm2193, %v3596, %v3600
      %s3602 = scalar_lea.vmem %s1, 4
      %v3603 = vld [vmem:[%s3602] sm:$0xf]
      %v3604 = vunpack.c.l.b16 %v2207
      %v3605 = vunpack.c.l.b16 %v2217
      %v3606 = vunpack.c.l.b16 %v2227
      %v3607 = vunpack.c.l.b16 %v2237
      %v3608 = vunpack.c.l.b16 %v2251
      %v3609 = vunpack.c.l.b16 %v2261
      %v3610 = vunpack.c.l.b16 %v2271
      %v3611 = vunpack.c.l.b16 %v2281
      %v3612 = vunpack.c.l.b16 %v2295
      %v3613 = vunpack.c.l.b16 %v2305
      %v3614 = vunpack.c.l.b16 %v2315
      %v3615 = vunpack.c.l.b16 %v2325
      %v3616 = vunpack.c.l.b16 %v2339
      %v3617 = vunpack.c.l.b16 %v2349
      %v3618 = vunpack.c.l.b16 %v2359
      %v3619 = vunpack.c.l.b16 %v2369
      %v3620 = vunpack.c.l.b16 %v2383
      %v3621 = vunpack.c.l.b16 %v2393
      %v3622 = vunpack.c.l.b16 %v2403
      %v3623 = vunpack.c.l.b16 %v2413
      %v3624 = vunpack.c.l.b16 %v2427
      %v3625 = vunpack.c.l.b16 %v2437
      %v3626 = vunpack.c.l.b16 %v2447
      %v3627 = vunpack.c.l.b16 %v2457
      %v3628 = vunpack.c.l.b16 %v2471
      %v3629 = vunpack.c.l.b16 %v2481
      %v3630 = vunpack.c.l.b16 %v2491
      %v3631 = vunpack.c.l.b16 %v2501
      %v3632 = vunpack.c.l.b16 %v2515
      %v3633 = vunpack.c.l.b16 %v2525
      %v3634 = vunpack.c.l.b16 %v2535
      %v3635 = vunpack.c.l.b16 %v2545
      %v3636 = vunpack.c.l.b16 %v2559
      %v3637 = vunpack.c.l.b16 %v2569
      %v3638 = vunpack.c.l.b16 %v2579
      %v3639 = vunpack.c.l.b16 %v2589
      %v3640 = vunpack.c.l.b16 %v2603
      %v3641 = vunpack.c.l.b16 %v2613
      %v3642 = vunpack.c.l.b16 %v2623
      %v3643 = vunpack.c.l.b16 %v2633
      %v3644 = vunpack.c.l.b16 %v2647
      %v3645 = vunpack.c.l.b16 %v2657
      %v3646 = vunpack.c.l.b16 %v2667
      %v3647 = vunpack.c.l.b16 %v2677
      %v3648 = vunpack.c.l.b16 %v2691
      %v3649 = vunpack.c.l.b16 %v2701
      %v3650 = vunpack.c.l.b16 %v2711
      %v3651 = vunpack.c.l.b16 %v2721
      %v3652 = vunpack.c.l.b16 %v2735
      %v3653 = vunpack.c.l.b16 %v2745
      %v3654 = vunpack.c.l.b16 %v2755
      %v3655 = vunpack.c.l.b16 %v2765
      %v3656 = vunpack.c.l.b16 %v2779
      %v3657 = vunpack.c.l.b16 %v2789
      %v3658 = vunpack.c.l.b16 %v2799
      %v3659 = vunpack.c.l.b16 %v2809
      %v3660 = vunpack.c.l.b16 %v2823
      %v3661 = vunpack.c.l.b16 %v2833
      %v3662 = vunpack.c.l.b16 %v2843
      %v3663 = vunpack.c.l.b16 %v2853
      %v3664 = vunpack.c.l.b16 %v2867
      %v3665 = vunpack.c.l.b16 %v2877
      %v3666 = vunpack.c.l.b16 %v2887
      %v3667 = vunpack.c.l.b16 %v2897
      %v3668 = vunpack.c.l.b16 %v2911
      %v3669 = vunpack.c.l.b16 %v2921
      %v3670 = vunpack.c.l.b16 %v2931
      %v3671 = vunpack.c.l.b16 %v2941
      %v3672 = vunpack.c.l.b16 %v2955
      %v3673 = vunpack.c.l.b16 %v2965
      %v3674 = vunpack.c.l.b16 %v2975
      %v3675 = vunpack.c.l.b16 %v2985
      %v3676 = vunpack.c.l.b16 %v2999
      %v3677 = vunpack.c.l.b16 %v3009
      %v3678 = vunpack.c.l.b16 %v3019
      %v3679 = vunpack.c.l.b16 %v3029
      %v3680 = vunpack.c.l.b16 %v3043
      %v3681 = vunpack.c.l.b16 %v3053
      %v3682 = vunpack.c.l.b16 %v3063
      %v3683 = vunpack.c.l.b16 %v3073
      %v3684 = vunpack.c.l.b16 %v3087
      %v3685 = vunpack.c.l.b16 %v3097
      %v3686 = vunpack.c.l.b16 %v3107
      %v3687 = vunpack.c.l.b16 %v3117
      %v3688 = vunpack.c.l.b16 %v3131
      %v3689 = vunpack.c.l.b16 %v3141
      %v3690 = vunpack.c.l.b16 %v3151
      %v3691 = vunpack.c.l.b16 %v3161
      %v3692 = vunpack.c.l.b16 %v3175
      %v3693 = vunpack.c.l.b16 %v3185
      %v3694 = vunpack.c.l.b16 %v3195
      %v3695 = vunpack.c.l.b16 %v3205
      %v3696 = vunpack.c.l.b16 %v3219
      %v3697 = vunpack.c.l.b16 %v3229
      %v3698 = vunpack.c.l.b16 %v3239
      %v3699 = vunpack.c.l.b16 %v3249
      %v3700 = vunpack.c.l.b16 %v3263
      %v3701 = vunpack.c.l.b16 %v3273
      %v3702 = vunpack.c.l.b16 %v3283
      %v3703 = vunpack.c.l.b16 %v3293
      %v3704 = vunpack.c.l.b16 %v3307
      %v3705 = vunpack.c.l.b16 %v3317
      %v3706 = vunpack.c.l.b16 %v3327
      %v3707 = vunpack.c.l.b16 %v3337
      %v3708 = vunpack.c.l.b16 %v3351
      %v3709 = vunpack.c.l.b16 %v3361
      %v3710 = vunpack.c.l.b16 %v3371
      %v3711 = vunpack.c.l.b16 %v3381
      %v3712 = vunpack.c.l.b16 %v3395
      %v3713 = vunpack.c.l.b16 %v3405
      %v3714 = vunpack.c.l.b16 %v3415
      %v3715 = vunpack.c.l.b16 %v3425
      %v3716 = vunpack.c.l.b16 %v3439
      %v3717 = vunpack.c.l.b16 %v3449
      %v3718 = vunpack.c.l.b16 %v3459
      %v3719 = vunpack.c.l.b16 %v3469
      %v3720 = vunpack.c.l.b16 %v3483
      %v3721 = vunpack.c.l.b16 %v3493
      %v3722 = vunpack.c.l.b16 %v3503
      %v3723 = vunpack.c.l.b16 %v3513
      %v3724 = vunpack.c.l.b16 %v3527
      %v3725 = vunpack.c.l.b16 %v3537
      %v3726 = vunpack.c.l.b16 %v3547
      %v3727 = vunpack.c.l.b16 %v3557
      %v3728 = vunpack.c.l.b16 %v3571
      %v3729 = vunpack.c.l.b16 %v3581
      %v3730 = vunpack.c.l.b16 %v3591
      %v3731 = vunpack.c.l.b16 %v3601
      %v3732 = vpack.c.b16 %v3605, %v3604
      %v3733 = vpack.c.b16 %v3607, %v3606
      %v3734 = vpack.c.b16 %v3609, %v3608
      %v3735 = vpack.c.b16 %v3611, %v3610
      %v3736 = vpack.c.b16 %v3613, %v3612
      %v3737 = vpack.c.b16 %v3615, %v3614
      %v3738 = vpack.c.b16 %v3617, %v3616
      %v3739 = vpack.c.b16 %v3619, %v3618
      %v3740 = vpack.c.b16 %v3621, %v3620
      %v3741 = vpack.c.b16 %v3623, %v3622
      %v3742 = vpack.c.b16 %v3625, %v3624
      %v3743 = vpack.c.b16 %v3627, %v3626
      %v3744 = vpack.c.b16 %v3629, %v3628
      %v3745 = vpack.c.b16 %v3631, %v3630
      %v3746 = vpack.c.b16 %v3633, %v3632
      %v3747 = vpack.c.b16 %v3635, %v3634
      %v3748 = vpack.c.b16 %v3637, %v3636
      %v3749 = vpack.c.b16 %v3639, %v3638
      %v3750 = vpack.c.b16 %v3641, %v3640
      %v3751 = vpack.c.b16 %v3643, %v3642
      %v3752 = vpack.c.b16 %v3645, %v3644
      %v3753 = vpack.c.b16 %v3647, %v3646
      %v3754 = vpack.c.b16 %v3649, %v3648
      %v3755 = vpack.c.b16 %v3651, %v3650
      %v3756 = vpack.c.b16 %v3653, %v3652
      %v3757 = vpack.c.b16 %v3655, %v3654
      %v3758 = vpack.c.b16 %v3657, %v3656
      %v3759 = vpack.c.b16 %v3659, %v3658
      %v3760 = vpack.c.b16 %v3661, %v3660
      %v3761 = vpack.c.b16 %v3663, %v3662
      %v3762 = vpack.c.b16 %v3665, %v3664
      %v3763 = vpack.c.b16 %v3667, %v3666
      %v3764 = vpack.c.b16 %v3669, %v3668
      %v3765 = vpack.c.b16 %v3671, %v3670
      %v3766 = vpack.c.b16 %v3673, %v3672
      %v3767 = vpack.c.b16 %v3675, %v3674
      %v3768 = vpack.c.b16 %v3677, %v3676
      %v3769 = vpack.c.b16 %v3679, %v3678
      %v3770 = vpack.c.b16 %v3681, %v3680
      %v3771 = vpack.c.b16 %v3683, %v3682
      %v3772 = vpack.c.b16 %v3685, %v3684
      %v3773 = vpack.c.b16 %v3687, %v3686
      %v3774 = vpack.c.b16 %v3689, %v3688
      %v3775 = vpack.c.b16 %v3691, %v3690
      %v3776 = vpack.c.b16 %v3693, %v3692
      %v3777 = vpack.c.b16 %v3695, %v3694
      %v3778 = vpack.c.b16 %v3697, %v3696
      %v3779 = vpack.c.b16 %v3699, %v3698
      %v3780 = vpack.c.b16 %v3701, %v3700
      %v3781 = vpack.c.b16 %v3703, %v3702
      %v3782 = vpack.c.b16 %v3705, %v3704
      %v3783 = vpack.c.b16 %v3707, %v3706
      %v3784 = vpack.c.b16 %v3709, %v3708
      %v3785 = vpack.c.b16 %v3711, %v3710
      %v3786 = vpack.c.b16 %v3713, %v3712
      %v3787 = vpack.c.b16 %v3715, %v3714
      %v3788 = vpack.c.b16 %v3717, %v3716
      %v3789 = vpack.c.b16 %v3719, %v3718
      %v3790 = vpack.c.b16 %v3721, %v3720
      %v3791 = vpack.c.b16 %v3723, %v3722
      %v3792 = vpack.c.b16 %v3725, %v3724
      %v3793 = vpack.c.b16 %v3727, %v3726
      %v3794 = vpack.c.b16 %v3729, %v3728
      %v3795 = vpack.c.b16 %v3731, %v3730
      %v3797 = vsel %vm669, %v3732, 0
      %v3800 = vsel %vm669, %v3733, 0
      %v3803 = vsel %vm669, %v3734, 0
      %v3806 = vsel %vm669, %v3735, 0
      %v3809 = vsel %vm669, %v3736, 0
      %v3812 = vsel %vm669, %v3737, 0
      %v3815 = vsel %vm669, %v3738, 0
      %v3818 = vsel %vm669, %v3739, 0
      %v3821 = vsel %vm669, %v3740, 0
      %v3824 = vsel %vm669, %v3741, 0
      %v3827 = vsel %vm669, %v3742, 0
      %v3830 = vsel %vm669, %v3743, 0
      %v3833 = vsel %vm669, %v3744, 0
      %v3836 = vsel %vm669, %v3745, 0
      %v3839 = vsel %vm669, %v3746, 0
      %v3842 = vsel %vm669, %v3747, 0
      %v3845 = vsel %vm669, %v3748, 0
      %v3848 = vsel %vm669, %v3749, 0
      %v3851 = vsel %vm669, %v3750, 0
      %v3854 = vsel %vm669, %v3751, 0
      %v3857 = vsel %vm669, %v3752, 0
      %v3860 = vsel %vm669, %v3753, 0
      %v3863 = vsel %vm669, %v3754, 0
      %v3866 = vsel %vm669, %v3755, 0
      %v3869 = vsel %vm669, %v3756, 0
      %v3872 = vsel %vm669, %v3757, 0
      %v3875 = vsel %vm669, %v3758, 0
      %v3878 = vsel %vm669, %v3759, 0
      %v3881 = vsel %vm669, %v3760, 0
      %v3884 = vsel %vm669, %v3761, 0
      %v3887 = vsel %vm669, %v3762, 0
      %v3890 = vsel %vm669, %v3763, 0
      %v3893 = vsel %vm669, %v3764, 0
      %v3896 = vsel %vm669, %v3765, 0
      %v3899 = vsel %vm669, %v3766, 0
      %v3902 = vsel %vm669, %v3767, 0
      %v3905 = vsel %vm669, %v3768, 0
      %v3908 = vsel %vm669, %v3769, 0
      %v3911 = vsel %vm669, %v3770, 0
      %v3914 = vsel %vm669, %v3771, 0
      %v3917 = vsel %vm669, %v3772, 0
      %v3920 = vsel %vm669, %v3773, 0
      %v3923 = vsel %vm669, %v3774, 0
      %v3926 = vsel %vm669, %v3775, 0
      %v3929 = vsel %vm669, %v3776, 0
      %v3932 = vsel %vm669, %v3777, 0
      %v3935 = vsel %vm669, %v3778, 0
      %v3938 = vsel %vm669, %v3779, 0
      %v3941 = vsel %vm669, %v3780, 0
      %v3944 = vsel %vm669, %v3781, 0
      %v3947 = vsel %vm669, %v3782, 0
      %v3950 = vsel %vm669, %v3783, 0
      %v3953 = vsel %vm669, %v3784, 0
      %v3956 = vsel %vm669, %v3785, 0
      %v3959 = vsel %vm669, %v3786, 0
      %v3962 = vsel %vm669, %v3787, 0
      %v3965 = vsel %vm669, %v3788, 0
      %v3968 = vsel %vm669, %v3789, 0
      %v3971 = vsel %vm669, %v3790, 0
      %v3974 = vsel %vm669, %v3791, 0
      %v3977 = vsel %vm669, %v3792, 0
      %v3980 = vsel %vm669, %v3793, 0
      %v3983 = vsel %vm669, %v3794, 0
      %v3986 = vsel %vm669, %v3795, 0
      %v3989 = vsel %vm862, %v3603, 0
      %3991 = vmatpush.bf16.msra.mxu0 0
      %3992 = vmatpush.bf16.msra.mxu0 0
      %3993 = vmatpush.bf16.msra.mxu0 0
      %3994 = vmatpush.bf16.msra.mxu0 0
      %3995 = vmatpush.bf16.msra.mxu0 0
      %3996 = vmatpush.bf16.msra.mxu0 0
      %3997 = vmatpush.bf16.msra.mxu0 0
      %3998 = vmatpush.bf16.msra.mxu0 %v3989
      %3999 = vmatmul.bf16.gmra.mxu0 %v3797
      %v4000 = vpop.f32.mrf.mxu0
      %v4001 = vadd.f32 0.0, %v4000
      %v4002 = vpop.f32.mrf.mxu0
      %v4003 = vadd.f32 0.0, %v4002
      %4004 = vmatmul.bf16.gmra.mxu0 %v3800
      %v4005 = vpop.f32.mrf.mxu0
      %v4006 = vadd.f32 0.0, %v4005
      %v4007 = vpop.f32.mrf.mxu0
      %v4008 = vadd.f32 0.0, %v4007
      %4009 = vmatmul.bf16.gmra.mxu0 %v3803
      %v4010 = vpop.f32.mrf.mxu0
      %v4011 = vadd.f32 0.0, %v4010
      %v4012 = vpop.f32.mrf.mxu0
      %v4013 = vadd.f32 0.0, %v4012
      %4014 = vmatmul.bf16.gmra.mxu0 %v3806
      %v4015 = vpop.f32.mrf.mxu0
      %v4016 = vadd.f32 0.0, %v4015
      %v4017 = vpop.f32.mrf.mxu0
      %v4018 = vadd.f32 0.0, %v4017
      %4019 = vmatmul.bf16.gmra.mxu0 %v3809
      %v4020 = vpop.f32.mrf.mxu0
      %v4021 = vadd.f32 0.0, %v4020
      %v4022 = vpop.f32.mrf.mxu0
      %v4023 = vadd.f32 0.0, %v4022
      %4024 = vmatmul.bf16.gmra.mxu0 %v3812
      %v4025 = vpop.f32.mrf.mxu0
      %v4026 = vadd.f32 0.0, %v4025
      %v4027 = vpop.f32.mrf.mxu0
      %v4028 = vadd.f32 0.0, %v4027
      %4029 = vmatmul.bf16.gmra.mxu0 %v3815
      %v4030 = vpop.f32.mrf.mxu0
      %v4031 = vadd.f32 0.0, %v4030
      %v4032 = vpop.f32.mrf.mxu0
      %v4033 = vadd.f32 0.0, %v4032
      %4034 = vmatmul.bf16.gmra.mxu0 %v3818
      %v4035 = vpop.f32.mrf.mxu0
      %v4036 = vadd.f32 0.0, %v4035
      %v4037 = vpop.f32.mrf.mxu0
      %v4038 = vadd.f32 0.0, %v4037
      %4039 = vmatmul.bf16.gmra.mxu0 %v3821
      %v4040 = vpop.f32.mrf.mxu0
      %v4041 = vadd.f32 0.0, %v4040
      %v4042 = vpop.f32.mrf.mxu0
      %v4043 = vadd.f32 0.0, %v4042
      %4044 = vmatmul.bf16.gmra.mxu0 %v3824
      %v4045 = vpop.f32.mrf.mxu0
      %v4046 = vadd.f32 0.0, %v4045
      %v4047 = vpop.f32.mrf.mxu0
      %v4048 = vadd.f32 0.0, %v4047
      %4049 = vmatmul.bf16.gmra.mxu0 %v3827
      %v4050 = vpop.f32.mrf.mxu0
      %v4051 = vadd.f32 0.0, %v4050
      %v4052 = vpop.f32.mrf.mxu0
      %v4053 = vadd.f32 0.0, %v4052
      %4054 = vmatmul.bf16.gmra.mxu0 %v3830
      %v4055 = vpop.f32.mrf.mxu0
      %v4056 = vadd.f32 0.0, %v4055
      %v4057 = vpop.f32.mrf.mxu0
      %v4058 = vadd.f32 0.0, %v4057
      %4059 = vmatmul.bf16.gmra.mxu0 %v3833
      %v4060 = vpop.f32.mrf.mxu0
      %v4061 = vadd.f32 0.0, %v4060
      %v4062 = vpop.f32.mrf.mxu0
      %v4063 = vadd.f32 0.0, %v4062
      %4064 = vmatmul.bf16.gmra.mxu0 %v3836
      %v4065 = vpop.f32.mrf.mxu0
      %v4066 = vadd.f32 0.0, %v4065
      %v4067 = vpop.f32.mrf.mxu0
      %v4068 = vadd.f32 0.0, %v4067
      %4069 = vmatmul.bf16.gmra.mxu0 %v3839
      %v4070 = vpop.f32.mrf.mxu0
      %v4071 = vadd.f32 0.0, %v4070
      %v4072 = vpop.f32.mrf.mxu0
      %v4073 = vadd.f32 0.0, %v4072
      %4074 = vmatmul.bf16.gmra.mxu0 %v3842
      %v4075 = vpop.f32.mrf.mxu0
      %v4076 = vadd.f32 0.0, %v4075
      %v4077 = vpop.f32.mrf.mxu0
      %v4078 = vadd.f32 0.0, %v4077
      %4079 = vmatmul.bf16.gmra.mxu0 %v3845
      %v4080 = vpop.f32.mrf.mxu0
      %v4081 = vadd.f32 0.0, %v4080
      %v4082 = vpop.f32.mrf.mxu0
      %v4083 = vadd.f32 0.0, %v4082
      %4084 = vmatmul.bf16.gmra.mxu0 %v3848
      %v4085 = vpop.f32.mrf.mxu0
      %v4086 = vadd.f32 0.0, %v4085
      %v4087 = vpop.f32.mrf.mxu0
      %v4088 = vadd.f32 0.0, %v4087
      %4089 = vmatmul.bf16.gmra.mxu0 %v3851
      %v4090 = vpop.f32.mrf.mxu0
      %v4091 = vadd.f32 0.0, %v4090
      %v4092 = vpop.f32.mrf.mxu0
      %v4093 = vadd.f32 0.0, %v4092
      %4094 = vmatmul.bf16.gmra.mxu0 %v3854
      %v4095 = vpop.f32.mrf.mxu0
      %v4096 = vadd.f32 0.0, %v4095
      %v4097 = vpop.f32.mrf.mxu0
      %v4098 = vadd.f32 0.0, %v4097
      %4099 = vmatmul.bf16.gmra.mxu0 %v3857
      %v4100 = vpop.f32.mrf.mxu0
      %v4101 = vadd.f32 0.0, %v4100
      %v4102 = vpop.f32.mrf.mxu0
      %v4103 = vadd.f32 0.0, %v4102
      %4104 = vmatmul.bf16.gmra.mxu0 %v3860
      %v4105 = vpop.f32.mrf.mxu0
      %v4106 = vadd.f32 0.0, %v4105
      %v4107 = vpop.f32.mrf.mxu0
      %v4108 = vadd.f32 0.0, %v4107
      %4109 = vmatmul.bf16.gmra.mxu0 %v3863
      %v4110 = vpop.f32.mrf.mxu0
      %v4111 = vadd.f32 0.0, %v4110
      %v4112 = vpop.f32.mrf.mxu0
      %v4113 = vadd.f32 0.0, %v4112
      %4114 = vmatmul.bf16.gmra.mxu0 %v3866
      %v4115 = vpop.f32.mrf.mxu0
      %v4116 = vadd.f32 0.0, %v4115
      %v4117 = vpop.f32.mrf.mxu0
      %v4118 = vadd.f32 0.0, %v4117
      %4119 = vmatmul.bf16.gmra.mxu0 %v3869
      %v4120 = vpop.f32.mrf.mxu0
      %v4121 = vadd.f32 0.0, %v4120
      %v4122 = vpop.f32.mrf.mxu0
      %v4123 = vadd.f32 0.0, %v4122
      %4124 = vmatmul.bf16.gmra.mxu0 %v3872
      %v4125 = vpop.f32.mrf.mxu0
      %v4126 = vadd.f32 0.0, %v4125
      %v4127 = vpop.f32.mrf.mxu0
      %v4128 = vadd.f32 0.0, %v4127
      %4129 = vmatmul.bf16.gmra.mxu0 %v3875
      %v4130 = vpop.f32.mrf.mxu0
      %v4131 = vadd.f32 0.0, %v4130
      %v4132 = vpop.f32.mrf.mxu0
      %v4133 = vadd.f32 0.0, %v4132
      %4134 = vmatmul.bf16.gmra.mxu0 %v3878
      %v4135 = vpop.f32.mrf.mxu0
      %v4136 = vadd.f32 0.0, %v4135
      %v4137 = vpop.f32.mrf.mxu0
      %v4138 = vadd.f32 0.0, %v4137
      %4139 = vmatmul.bf16.gmra.mxu0 %v3881
      %v4140 = vpop.f32.mrf.mxu0
      %v4141 = vadd.f32 0.0, %v4140
      %v4142 = vpop.f32.mrf.mxu0
      %v4143 = vadd.f32 0.0, %v4142
      %4144 = vmatmul.bf16.gmra.mxu0 %v3884
      %v4145 = vpop.f32.mrf.mxu0
      %v4146 = vadd.f32 0.0, %v4145
      %v4147 = vpop.f32.mrf.mxu0
      %v4148 = vadd.f32 0.0, %v4147
      %4149 = vmatmul.bf16.gmra.mxu0 %v3887
      %v4150 = vpop.f32.mrf.mxu0
      %v4151 = vadd.f32 0.0, %v4150
      %v4152 = vpop.f32.mrf.mxu0
      %v4153 = vadd.f32 0.0, %v4152
      %4154 = vmatmul.bf16.gmra.mxu0 %v3890
      %v4155 = vpop.f32.mrf.mxu0
      %v4156 = vadd.f32 0.0, %v4155
      %v4157 = vpop.f32.mrf.mxu0
      %v4158 = vadd.f32 0.0, %v4157
      %4159 = vmatmul.bf16.gmra.mxu0 %v3893
      %v4160 = vpop.f32.mrf.mxu0
      %v4161 = vadd.f32 0.0, %v4160
      %v4162 = vpop.f32.mrf.mxu0
      %v4163 = vadd.f32 0.0, %v4162
      %4164 = vmatmul.bf16.gmra.mxu0 %v3896
      %v4165 = vpop.f32.mrf.mxu0
      %v4166 = vadd.f32 0.0, %v4165
      %v4167 = vpop.f32.mrf.mxu0
      %v4168 = vadd.f32 0.0, %v4167
      %4169 = vmatmul.bf16.gmra.mxu0 %v3899
      %v4170 = vpop.f32.mrf.mxu0
      %v4171 = vadd.f32 0.0, %v4170
      %v4172 = vpop.f32.mrf.mxu0
      %v4173 = vadd.f32 0.0, %v4172
      %4174 = vmatmul.bf16.gmra.mxu0 %v3902
      %v4175 = vpop.f32.mrf.mxu0
      %v4176 = vadd.f32 0.0, %v4175
      %v4177 = vpop.f32.mrf.mxu0
      %v4178 = vadd.f32 0.0, %v4177
      %4179 = vmatmul.bf16.gmra.mxu0 %v3905
      %v4180 = vpop.f32.mrf.mxu0
      %v4181 = vadd.f32 0.0, %v4180
      %v4182 = vpop.f32.mrf.mxu0
      %v4183 = vadd.f32 0.0, %v4182
      %4184 = vmatmul.bf16.gmra.mxu0 %v3908
      %v4185 = vpop.f32.mrf.mxu0
      %v4186 = vadd.f32 0.0, %v4185
      %v4187 = vpop.f32.mrf.mxu0
      %v4188 = vadd.f32 0.0, %v4187
      %4189 = vmatmul.bf16.gmra.mxu0 %v3911
      %v4190 = vpop.f32.mrf.mxu0
      %v4191 = vadd.f32 0.0, %v4190
      %v4192 = vpop.f32.mrf.mxu0
      %v4193 = vadd.f32 0.0, %v4192
      %4194 = vmatmul.bf16.gmra.mxu0 %v3914
      %v4195 = vpop.f32.mrf.mxu0
      %v4196 = vadd.f32 0.0, %v4195
      %v4197 = vpop.f32.mrf.mxu0
      %v4198 = vadd.f32 0.0, %v4197
      %4199 = vmatmul.bf16.gmra.mxu0 %v3917
      %v4200 = vpop.f32.mrf.mxu0
      %v4201 = vadd.f32 0.0, %v4200
      %v4202 = vpop.f32.mrf.mxu0
      %v4203 = vadd.f32 0.0, %v4202
      %4204 = vmatmul.bf16.gmra.mxu0 %v3920
      %v4205 = vpop.f32.mrf.mxu0
      %v4206 = vadd.f32 0.0, %v4205
      %v4207 = vpop.f32.mrf.mxu0
      %v4208 = vadd.f32 0.0, %v4207
      %4209 = vmatmul.bf16.gmra.mxu0 %v3923
      %v4210 = vpop.f32.mrf.mxu0
      %v4211 = vadd.f32 0.0, %v4210
      %v4212 = vpop.f32.mrf.mxu0
      %v4213 = vadd.f32 0.0, %v4212
      %4214 = vmatmul.bf16.gmra.mxu0 %v3926
      %v4215 = vpop.f32.mrf.mxu0
      %v4216 = vadd.f32 0.0, %v4215
      %v4217 = vpop.f32.mrf.mxu0
      %v4218 = vadd.f32 0.0, %v4217
      %4219 = vmatmul.bf16.gmra.mxu0 %v3929
      %v4220 = vpop.f32.mrf.mxu0
      %v4221 = vadd.f32 0.0, %v4220
      %v4222 = vpop.f32.mrf.mxu0
      %v4223 = vadd.f32 0.0, %v4222
      %4224 = vmatmul.bf16.gmra.mxu0 %v3932
      %v4225 = vpop.f32.mrf.mxu0
      %v4226 = vadd.f32 0.0, %v4225
      %v4227 = vpop.f32.mrf.mxu0
      %v4228 = vadd.f32 0.0, %v4227
      %4229 = vmatmul.bf16.gmra.mxu0 %v3935
      %v4230 = vpop.f32.mrf.mxu0
      %v4231 = vadd.f32 0.0, %v4230
      %v4232 = vpop.f32.mrf.mxu0
      %v4233 = vadd.f32 0.0, %v4232
      %4234 = vmatmul.bf16.gmra.mxu0 %v3938
      %v4235 = vpop.f32.mrf.mxu0
      %v4236 = vadd.f32 0.0, %v4235
      %v4237 = vpop.f32.mrf.mxu0
      %v4238 = vadd.f32 0.0, %v4237
      %4239 = vmatmul.bf16.gmra.mxu0 %v3941
      %v4240 = vpop.f32.mrf.mxu0
      %v4241 = vadd.f32 0.0, %v4240
      %v4242 = vpop.f32.mrf.mxu0
      %v4243 = vadd.f32 0.0, %v4242
      %4244 = vmatmul.bf16.gmra.mxu0 %v3944
      %v4245 = vpop.f32.mrf.mxu0
      %v4246 = vadd.f32 0.0, %v4245
      %v4247 = vpop.f32.mrf.mxu0
      %v4248 = vadd.f32 0.0, %v4247
      %4249 = vmatmul.bf16.gmra.mxu0 %v3947
      %v4250 = vpop.f32.mrf.mxu0
      %v4251 = vadd.f32 0.0, %v4250
      %v4252 = vpop.f32.mrf.mxu0
      %v4253 = vadd.f32 0.0, %v4252
      %4254 = vmatmul.bf16.gmra.mxu0 %v3950
      %v4255 = vpop.f32.mrf.mxu0
      %v4256 = vadd.f32 0.0, %v4255
      %v4257 = vpop.f32.mrf.mxu0
      %v4258 = vadd.f32 0.0, %v4257
      %4259 = vmatmul.bf16.gmra.mxu0 %v3953
      %v4260 = vpop.f32.mrf.mxu0
      %v4261 = vadd.f32 0.0, %v4260
      %v4262 = vpop.f32.mrf.mxu0
      %v4263 = vadd.f32 0.0, %v4262
      %4264 = vmatmul.bf16.gmra.mxu0 %v3956
      %v4265 = vpop.f32.mrf.mxu0
      %v4266 = vadd.f32 0.0, %v4265
      %v4267 = vpop.f32.mrf.mxu0
      %v4268 = vadd.f32 0.0, %v4267
      %4269 = vmatmul.bf16.gmra.mxu0 %v3959
      %v4270 = vpop.f32.mrf.mxu0
      %v4271 = vadd.f32 0.0, %v4270
      %v4272 = vpop.f32.mrf.mxu0
      %v4273 = vadd.f32 0.0, %v4272
      %4274 = vmatmul.bf16.gmra.mxu0 %v3962
      %v4275 = vpop.f32.mrf.mxu0
      %v4276 = vadd.f32 0.0, %v4275
      %v4277 = vpop.f32.mrf.mxu0
      %v4278 = vadd.f32 0.0, %v4277
      %4279 = vmatmul.bf16.gmra.mxu0 %v3965
      %v4280 = vpop.f32.mrf.mxu0
      %v4281 = vadd.f32 0.0, %v4280
      %v4282 = vpop.f32.mrf.mxu0
      %v4283 = vadd.f32 0.0, %v4282
      %4284 = vmatmul.bf16.gmra.mxu0 %v3968
      %v4285 = vpop.f32.mrf.mxu0
      %v4286 = vadd.f32 0.0, %v4285
      %v4287 = vpop.f32.mrf.mxu0
      %v4288 = vadd.f32 0.0, %v4287
      %4289 = vmatmul.bf16.gmra.mxu0 %v3971
      %v4290 = vpop.f32.mrf.mxu0
      %v4291 = vadd.f32 0.0, %v4290
      %v4292 = vpop.f32.mrf.mxu0
      %v4293 = vadd.f32 0.0, %v4292
      %4294 = vmatmul.bf16.gmra.mxu0 %v3974
      %v4295 = vpop.f32.mrf.mxu0
      %v4296 = vadd.f32 0.0, %v4295
      %v4297 = vpop.f32.mrf.mxu0
      %v4298 = vadd.f32 0.0, %v4297
      %4299 = vmatmul.bf16.gmra.mxu0 %v3977
      %v4300 = vpop.f32.mrf.mxu0
      %v4301 = vadd.f32 0.0, %v4300
      %v4302 = vpop.f32.mrf.mxu0
      %v4303 = vadd.f32 0.0, %v4302
      %4304 = vmatmul.bf16.gmra.mxu0 %v3980
      %v4305 = vpop.f32.mrf.mxu0
      %v4306 = vadd.f32 0.0, %v4305
      %v4307 = vpop.f32.mrf.mxu0
      %v4308 = vadd.f32 0.0, %v4307
      %4309 = vmatmul.bf16.gmra.mxu0 %v3983
      %v4310 = vpop.f32.mrf.mxu0
      %v4311 = vadd.f32 0.0, %v4310
      %v4312 = vpop.f32.mrf.mxu0
      %v4313 = vadd.f32 0.0, %v4312
      %4314 = vmatmul.bf16.gmra.mxu0 %v3986
      %v4315 = vpop.f32.mrf.mxu0
      %v4316 = vadd.f32 0.0, %v4315
      %v4317 = vpop.f32.mrf.mxu0
      %v4318 = vadd.f32 0.0, %v4317
      %4319 = vdwg.mxu0
      %v4320 = vadd.f32 %v1893, %v4001
      %v4321 = vadd.f32 %v1894, %v4003
      %v4322 = vadd.f32 %v1895, %v4006
      %v4323 = vadd.f32 %v1896, %v4008
      %v4324 = vadd.f32 %v1897, %v4011
      %v4325 = vadd.f32 %v1898, %v4013
      %v4326 = vadd.f32 %v1899, %v4016
      %v4327 = vadd.f32 %v1900, %v4018
      %v4328 = vadd.f32 %v1901, %v4021
      %v4329 = vadd.f32 %v1902, %v4023
      %v4330 = vadd.f32 %v1903, %v4026
      %v4331 = vadd.f32 %v1904, %v4028
      %v4332 = vadd.f32 %v1905, %v4031
      %v4333 = vadd.f32 %v1906, %v4033
      %v4334 = vadd.f32 %v1907, %v4036
      %v4335 = vadd.f32 %v1908, %v4038
      %v4336 = vadd.f32 %v1909, %v4041
      %v4337 = vadd.f32 %v1910, %v4043
      %v4338 = vadd.f32 %v1911, %v4046
      %v4339 = vadd.f32 %v1912, %v4048
      %v4340 = vadd.f32 %v1913, %v4051
      %v4341 = vadd.f32 %v1914, %v4053
      %v4342 = vadd.f32 %v1915, %v4056
      %v4343 = vadd.f32 %v1916, %v4058
      %v4344 = vadd.f32 %v1917, %v4061
      %v4345 = vadd.f32 %v1918, %v4063
      %v4346 = vadd.f32 %v1919, %v4066
      %v4347 = vadd.f32 %v1920, %v4068
      %v4348 = vadd.f32 %v1921, %v4071
      %v4349 = vadd.f32 %v1922, %v4073
      %v4350 = vadd.f32 %v1923, %v4076
      %v4351 = vadd.f32 %v1924, %v4078
      %v4352 = vadd.f32 %v1925, %v4081
      %v4353 = vadd.f32 %v1926, %v4083
      %v4354 = vadd.f32 %v1927, %v4086
      %v4355 = vadd.f32 %v1928, %v4088
      %v4356 = vadd.f32 %v1929, %v4091
      %v4357 = vadd.f32 %v1930, %v4093
      %v4358 = vadd.f32 %v1931, %v4096
      %v4359 = vadd.f32 %v1932, %v4098
      %v4360 = vadd.f32 %v1933, %v4101
      %v4361 = vadd.f32 %v1934, %v4103
      %v4362 = vadd.f32 %v1935, %v4106
      %v4363 = vadd.f32 %v1936, %v4108
      %v4364 = vadd.f32 %v1937, %v4111
      %v4365 = vadd.f32 %v1938, %v4113
      %v4366 = vadd.f32 %v1939, %v4116
      %v4367 = vadd.f32 %v1940, %v4118
      %v4368 = vadd.f32 %v1941, %v4121
      %v4369 = vadd.f32 %v1942, %v4123
      %v4370 = vadd.f32 %v1943, %v4126
      %v4371 = vadd.f32 %v1944, %v4128
      %v4372 = vadd.f32 %v1945, %v4131
      %v4373 = vadd.f32 %v1946, %v4133
      %v4374 = vadd.f32 %v1947, %v4136
      %v4375 = vadd.f32 %v1948, %v4138
      %v4376 = vadd.f32 %v1949, %v4141
      %v4377 = vadd.f32 %v1950, %v4143
      %v4378 = vadd.f32 %v1951, %v4146
      %v4379 = vadd.f32 %v1952, %v4148
      %v4380 = vadd.f32 %v1953, %v4151
      %v4381 = vadd.f32 %v1954, %v4153
      %v4382 = vadd.f32 %v1955, %v4156
      %v4383 = vadd.f32 %v1956, %v4158
      %v4384 = vadd.f32 %v1957, %v4161
      %v4385 = vadd.f32 %v1958, %v4163
      %v4386 = vadd.f32 %v1959, %v4166
      %v4387 = vadd.f32 %v1960, %v4168
      %v4388 = vadd.f32 %v1961, %v4171
      %v4389 = vadd.f32 %v1962, %v4173
      %v4390 = vadd.f32 %v1963, %v4176
      %v4391 = vadd.f32 %v1964, %v4178
      %v4392 = vadd.f32 %v1965, %v4181
      %v4393 = vadd.f32 %v1966, %v4183
      %v4394 = vadd.f32 %v1967, %v4186
      %v4395 = vadd.f32 %v1968, %v4188
      %v4396 = vadd.f32 %v1969, %v4191
      %v4397 = vadd.f32 %v1970, %v4193
      %v4398 = vadd.f32 %v1971, %v4196
      %v4399 = vadd.f32 %v1972, %v4198
      %v4400 = vadd.f32 %v1973, %v4201
      %v4401 = vadd.f32 %v1974, %v4203
      %v4402 = vadd.f32 %v1975, %v4206
      %v4403 = vadd.f32 %v1976, %v4208
      %v4404 = vadd.f32 %v1977, %v4211
      %v4405 = vadd.f32 %v1978, %v4213
      %v4406 = vadd.f32 %v1979, %v4216
      %v4407 = vadd.f32 %v1980, %v4218
      %v4408 = vadd.f32 %v1981, %v4221
      %v4409 = vadd.f32 %v1982, %v4223
      %v4410 = vadd.f32 %v1983, %v4226
      %v4411 = vadd.f32 %v1984, %v4228
      %v4412 = vadd.f32 %v1985, %v4231
      %v4413 = vadd.f32 %v1986, %v4233
      %v4414 = vadd.f32 %v1987, %v4236
      %v4415 = vadd.f32 %v1988, %v4238
      %v4416 = vadd.f32 %v1989, %v4241
      %v4417 = vadd.f32 %v1990, %v4243
      %v4418 = vadd.f32 %v1991, %v4246
      %v4419 = vadd.f32 %v1992, %v4248
      %v4420 = vadd.f32 %v1993, %v4251
      %v4421 = vadd.f32 %v1994, %v4253
      %v4422 = vadd.f32 %v1995, %v4256
      %v4423 = vadd.f32 %v1996, %v4258
      %v4424 = vadd.f32 %v1997, %v4261
      %v4425 = vadd.f32 %v1998, %v4263
      %v4426 = vadd.f32 %v1999, %v4266
      %v4427 = vadd.f32 %v2000, %v4268
      %v4428 = vadd.f32 %v2001, %v4271
      %v4429 = vadd.f32 %v2002, %v4273
      %v4430 = vadd.f32 %v2003, %v4276
      %v4431 = vadd.f32 %v2004, %v4278
      %v4432 = vadd.f32 %v2005, %v4281
      %v4433 = vadd.f32 %v2006, %v4283
      %v4434 = vadd.f32 %v2007, %v4286
      %v4435 = vadd.f32 %v2008, %v4288
      %v4436 = vadd.f32 %v2009, %v4291
      %v4437 = vadd.f32 %v2010, %v4293
      %v4438 = vadd.f32 %v2011, %v4296
      %v4439 = vadd.f32 %v2012, %v4298
      %v4440 = vadd.f32 %v2013, %v4301
      %v4441 = vadd.f32 %v2014, %v4303
      %v4442 = vadd.f32 %v2015, %v4306
      %v4443 = vadd.f32 %v2016, %v4308
      %v4444 = vadd.f32 %v2017, %v4311
      %v4445 = vadd.f32 %v2018, %v4313
      %v4446 = vadd.f32 %v2019, %v4316
      %v4447 = vadd.f32 %v2020, %v4318
      %v4449 = vshrl.u32 %v2181, 16
      %v4451 = vrot.slane %v4449, 4
      %v4452 = vshll.u32 %v2181, 16
      %v4454 = vrot.slane %v4452, 5
      %v4455 = vor.u32 %v4451, %v4454
      %v4456 = vrot.slane %v4455, 4
      %v4458 = vshll.u32 %v2182, 16
      %v4460 = vrot.slane %v4458, 5
      %v4461 = vsel %vm2193, %v4456, %v4460
      %v4462 = vshrl.u32 %v2182, 16
      %v4464 = vrot.slane %v4462, 4
      %v4465 = vor.u32 %v4464, %v4460
      %v4466 = vrot.slane %v4465, 4
      %v4468 = vshll.u32 %v2183, 16
      %v4470 = vrot.slane %v4468, 5
      %v4471 = vsel %vm2193, %v4466, %v4470
      %v4472 = vshrl.u32 %v2183, 16
      %v4474 = vrot.slane %v4472, 4
      %v4475 = vor.u32 %v4474, %v4470
      %v4476 = vrot.slane %v4475, 4
      %v4478 = vshll.u32 %v2184, 16
      %v4480 = vrot.slane %v4478, 5
      %v4481 = vsel %vm2193, %v4476, %v4480
      %v4482 = vshrl.u32 %v2184, 16
      %v4484 = vrot.slane %v4482, 4
      %v4485 = vor.u32 %v4484, %v4480
      %v4486 = vrot.slane %v4485, 4
      %v4488 = vshll.u32 %v2185, 16
      %v4490 = vrot.slane %v4488, 5
      %v4491 = vsel %vm2193, %v4486, %v4490
      %s4492 = scalar_lea.vmem %s1, 16
      %v4493 = vld [vmem:[%s4492] sm:$0xf]
      %v4494 = vunpack.c.l.b16 %v4461
      %v4495 = vunpack.c.l.b16 %v4471
      %v4496 = vunpack.c.l.b16 %v4481
      %v4497 = vunpack.c.l.b16 %v4491
      %v4498 = vpack.c.b16 %v4495, %v4494
      %v4499 = vpack.c.b16 %v4497, %v4496
      %v4501 = vsel %vm669, %v4498, 0
      %v4504 = vsel %vm669, %v4499, 0
      %v4507 = vsel %vm862, %v4493, 0
      %4509 = vmatpush.bf16.msra.mxu0 0
      %4510 = vmatpush.bf16.msra.mxu0 0
      %4511 = vmatpush.bf16.msra.mxu0 0
      %4512 = vmatpush.bf16.msra.mxu0 0
      %4513 = vmatpush.bf16.msra.mxu0 0
      %4514 = vmatpush.bf16.msra.mxu0 0
      %4515 = vmatpush.bf16.msra.mxu0 0
      %4516 = vmatpush.bf16.msra.mxu0 %v4507
      %4517 = vmatmul.bf16.gmra.mxu0 %v3803
      %v4518 = vpop.f32.mrf.mxu0
      %v4519 = vadd.f32 0.0, %v4518
      %v4520 = vpop.f32.mrf.mxu0
      %v4521 = vadd.f32 0.0, %v4520
      %4522 = vmatmul.bf16.gmra.mxu0 %v3806
      %v4523 = vpop.f32.mrf.mxu0
      %v4524 = vadd.f32 0.0, %v4523
      %v4525 = vpop.f32.mrf.mxu0
      %v4526 = vadd.f32 0.0, %v4525
      %4527 = vmatmul.bf16.gmra.mxu0 %v3809
      %v4528 = vpop.f32.mrf.mxu0
      %v4529 = vadd.f32 0.0, %v4528
      %v4530 = vpop.f32.mrf.mxu0
      %v4531 = vadd.f32 0.0, %v4530
      %4532 = vmatmul.bf16.gmra.mxu0 %v3812
      %v4533 = vpop.f32.mrf.mxu0
      %v4534 = vadd.f32 0.0, %v4533
      %v4535 = vpop.f32.mrf.mxu0
      %v4536 = vadd.f32 0.0, %v4535
      %4537 = vmatmul.bf16.gmra.mxu0 %v3815
      %v4538 = vpop.f32.mrf.mxu0
      %v4539 = vadd.f32 0.0, %v4538
      %v4540 = vpop.f32.mrf.mxu0
      %v4541 = vadd.f32 0.0, %v4540
      %4542 = vmatmul.bf16.gmra.mxu0 %v3818
      %v4543 = vpop.f32.mrf.mxu0
      %v4544 = vadd.f32 0.0, %v4543
      %v4545 = vpop.f32.mrf.mxu0
      %v4546 = vadd.f32 0.0, %v4545
      %4547 = vmatmul.bf16.gmra.mxu0 %v3821
      %v4548 = vpop.f32.mrf.mxu0
      %v4549 = vadd.f32 0.0, %v4548
      %v4550 = vpop.f32.mrf.mxu0
      %v4551 = vadd.f32 0.0, %v4550
      %4552 = vmatmul.bf16.gmra.mxu0 %v3824
      %v4553 = vpop.f32.mrf.mxu0
      %v4554 = vadd.f32 0.0, %v4553
      %v4555 = vpop.f32.mrf.mxu0
      %v4556 = vadd.f32 0.0, %v4555
      %4557 = vmatmul.bf16.gmra.mxu0 %v3827
      %v4558 = vpop.f32.mrf.mxu0
      %v4559 = vadd.f32 0.0, %v4558
      %v4560 = vpop.f32.mrf.mxu0
      %v4561 = vadd.f32 0.0, %v4560
      %4562 = vmatmul.bf16.gmra.mxu0 %v3830
      %v4563 = vpop.f32.mrf.mxu0
      %v4564 = vadd.f32 0.0, %v4563
      %v4565 = vpop.f32.mrf.mxu0
      %v4566 = vadd.f32 0.0, %v4565
      %4567 = vmatmul.bf16.gmra.mxu0 %v3833
      %v4568 = vpop.f32.mrf.mxu0
      %v4569 = vadd.f32 0.0, %v4568
      %v4570 = vpop.f32.mrf.mxu0
      %v4571 = vadd.f32 0.0, %v4570
      %4572 = vmatmul.bf16.gmra.mxu0 %v3836
      %v4573 = vpop.f32.mrf.mxu0
      %v4574 = vadd.f32 0.0, %v4573
      %v4575 = vpop.f32.mrf.mxu0
      %v4576 = vadd.f32 0.0, %v4575
      %4577 = vmatmul.bf16.gmra.mxu0 %v3839
      %v4578 = vpop.f32.mrf.mxu0
      %v4579 = vadd.f32 0.0, %v4578
      %v4580 = vpop.f32.mrf.mxu0
      %v4581 = vadd.f32 0.0, %v4580
      %4582 = vmatmul.bf16.gmra.mxu0 %v3842
      %v4583 = vpop.f32.mrf.mxu0
      %v4584 = vadd.f32 0.0, %v4583
      %v4585 = vpop.f32.mrf.mxu0
      %v4586 = vadd.f32 0.0, %v4585
      %4587 = vmatmul.bf16.gmra.mxu0 %v3845
      %v4588 = vpop.f32.mrf.mxu0
      %v4589 = vadd.f32 0.0, %v4588
      %v4590 = vpop.f32.mrf.mxu0
      %v4591 = vadd.f32 0.0, %v4590
      %4592 = vmatmul.bf16.gmra.mxu0 %v3848
      %v4593 = vpop.f32.mrf.mxu0
      %v4594 = vadd.f32 0.0, %v4593
      %v4595 = vpop.f32.mrf.mxu0
      %v4596 = vadd.f32 0.0, %v4595
      %4597 = vmatmul.bf16.gmra.mxu0 %v3851
      %v4598 = vpop.f32.mrf.mxu0
      %v4599 = vadd.f32 0.0, %v4598
      %v4600 = vpop.f32.mrf.mxu0
      %v4601 = vadd.f32 0.0, %v4600
      %4602 = vmatmul.bf16.gmra.mxu0 %v3854
      %v4603 = vpop.f32.mrf.mxu0
      %v4604 = vadd.f32 0.0, %v4603
      %v4605 = vpop.f32.mrf.mxu0
      %v4606 = vadd.f32 0.0, %v4605
      %4607 = vmatmul.bf16.gmra.mxu0 %v3857
      %v4608 = vpop.f32.mrf.mxu0
      %v4609 = vadd.f32 0.0, %v4608
      %v4610 = vpop.f32.mrf.mxu0
      %v4611 = vadd.f32 0.0, %v4610
      %4612 = vmatmul.bf16.gmra.mxu0 %v3860
      %v4613 = vpop.f32.mrf.mxu0
      %v4614 = vadd.f32 0.0, %v4613
      %v4615 = vpop.f32.mrf.mxu0
      %v4616 = vadd.f32 0.0, %v4615
      %4617 = vmatmul.bf16.gmra.mxu0 %v3863
      %v4618 = vpop.f32.mrf.mxu0
      %v4619 = vadd.f32 0.0, %v4618
      %v4620 = vpop.f32.mrf.mxu0
      %v4621 = vadd.f32 0.0, %v4620
      %4622 = vmatmul.bf16.gmra.mxu0 %v3866
      %v4623 = vpop.f32.mrf.mxu0
      %v4624 = vadd.f32 0.0, %v4623
      %v4625 = vpop.f32.mrf.mxu0
      %v4626 = vadd.f32 0.0, %v4625
      %4627 = vmatmul.bf16.gmra.mxu0 %v3869
      %v4628 = vpop.f32.mrf.mxu0
      %v4629 = vadd.f32 0.0, %v4628
      %v4630 = vpop.f32.mrf.mxu0
      %v4631 = vadd.f32 0.0, %v4630
      %4632 = vmatmul.bf16.gmra.mxu0 %v3872
      %v4633 = vpop.f32.mrf.mxu0
      %v4634 = vadd.f32 0.0, %v4633
      %v4635 = vpop.f32.mrf.mxu0
      %v4636 = vadd.f32 0.0, %v4635
      %4637 = vmatmul.bf16.gmra.mxu0 %v3875
      %v4638 = vpop.f32.mrf.mxu0
      %v4639 = vadd.f32 0.0, %v4638
      %v4640 = vpop.f32.mrf.mxu0
      %v4641 = vadd.f32 0.0, %v4640
      %4642 = vmatmul.bf16.gmra.mxu0 %v3878
      %v4643 = vpop.f32.mrf.mxu0
      %v4644 = vadd.f32 0.0, %v4643
      %v4645 = vpop.f32.mrf.mxu0
      %v4646 = vadd.f32 0.0, %v4645
      %4647 = vmatmul.bf16.gmra.mxu0 %v3881
      %v4648 = vpop.f32.mrf.mxu0
      %v4649 = vadd.f32 0.0, %v4648
      %v4650 = vpop.f32.mrf.mxu0
      %v4651 = vadd.f32 0.0, %v4650
      %4652 = vmatmul.bf16.gmra.mxu0 %v3884
      %v4653 = vpop.f32.mrf.mxu0
      %v4654 = vadd.f32 0.0, %v4653
      %v4655 = vpop.f32.mrf.mxu0
      %v4656 = vadd.f32 0.0, %v4655
      %4657 = vmatmul.bf16.gmra.mxu0 %v3887
      %v4658 = vpop.f32.mrf.mxu0
      %v4659 = vadd.f32 0.0, %v4658
      %v4660 = vpop.f32.mrf.mxu0
      %v4661 = vadd.f32 0.0, %v4660
      %4662 = vmatmul.bf16.gmra.mxu0 %v3890
      %v4663 = vpop.f32.mrf.mxu0
      %v4664 = vadd.f32 0.0, %v4663
      %v4665 = vpop.f32.mrf.mxu0
      %v4666 = vadd.f32 0.0, %v4665
      %4667 = vmatmul.bf16.gmra.mxu0 %v3893
      %v4668 = vpop.f32.mrf.mxu0
      %v4669 = vadd.f32 0.0, %v4668
      %v4670 = vpop.f32.mrf.mxu0
      %v4671 = vadd.f32 0.0, %v4670
      %4672 = vmatmul.bf16.gmra.mxu0 %v3896
      %v4673 = vpop.f32.mrf.mxu0
      %v4674 = vadd.f32 0.0, %v4673
      %v4675 = vpop.f32.mrf.mxu0
      %v4676 = vadd.f32 0.0, %v4675
      %4677 = vmatmul.bf16.gmra.mxu0 %v3899
      %v4678 = vpop.f32.mrf.mxu0
      %v4679 = vadd.f32 0.0, %v4678
      %v4680 = vpop.f32.mrf.mxu0
      %v4681 = vadd.f32 0.0, %v4680
      %4682 = vmatmul.bf16.gmra.mxu0 %v3902
      %v4683 = vpop.f32.mrf.mxu0
      %v4684 = vadd.f32 0.0, %v4683
      %v4685 = vpop.f32.mrf.mxu0
      %v4686 = vadd.f32 0.0, %v4685
      %4687 = vmatmul.bf16.gmra.mxu0 %v3905
      %v4688 = vpop.f32.mrf.mxu0
      %v4689 = vadd.f32 0.0, %v4688
      %v4690 = vpop.f32.mrf.mxu0
      %v4691 = vadd.f32 0.0, %v4690
      %4692 = vmatmul.bf16.gmra.mxu0 %v3908
      %v4693 = vpop.f32.mrf.mxu0
      %v4694 = vadd.f32 0.0, %v4693
      %v4695 = vpop.f32.mrf.mxu0
      %v4696 = vadd.f32 0.0, %v4695
      %4697 = vmatmul.bf16.gmra.mxu0 %v3911
      %v4698 = vpop.f32.mrf.mxu0
      %v4699 = vadd.f32 0.0, %v4698
      %v4700 = vpop.f32.mrf.mxu0
      %v4701 = vadd.f32 0.0, %v4700
      %4702 = vmatmul.bf16.gmra.mxu0 %v3914
      %v4703 = vpop.f32.mrf.mxu0
      %v4704 = vadd.f32 0.0, %v4703
      %v4705 = vpop.f32.mrf.mxu0
      %v4706 = vadd.f32 0.0, %v4705
      %4707 = vmatmul.bf16.gmra.mxu0 %v3917
      %v4708 = vpop.f32.mrf.mxu0
      %v4709 = vadd.f32 0.0, %v4708
      %v4710 = vpop.f32.mrf.mxu0
      %v4711 = vadd.f32 0.0, %v4710
      %4712 = vmatmul.bf16.gmra.mxu0 %v3920
      %v4713 = vpop.f32.mrf.mxu0
      %v4714 = vadd.f32 0.0, %v4713
      %v4715 = vpop.f32.mrf.mxu0
      %v4716 = vadd.f32 0.0, %v4715
      %4717 = vmatmul.bf16.gmra.mxu0 %v3923
      %v4718 = vpop.f32.mrf.mxu0
      %v4719 = vadd.f32 0.0, %v4718
      %v4720 = vpop.f32.mrf.mxu0
      %v4721 = vadd.f32 0.0, %v4720
      %4722 = vmatmul.bf16.gmra.mxu0 %v3926
      %v4723 = vpop.f32.mrf.mxu0
      %v4724 = vadd.f32 0.0, %v4723
      %v4725 = vpop.f32.mrf.mxu0
      %v4726 = vadd.f32 0.0, %v4725
      %4727 = vmatmul.bf16.gmra.mxu0 %v3929
      %v4728 = vpop.f32.mrf.mxu0
      %v4729 = vadd.f32 0.0, %v4728
      %v4730 = vpop.f32.mrf.mxu0
      %v4731 = vadd.f32 0.0, %v4730
      %4732 = vmatmul.bf16.gmra.mxu0 %v3932
      %v4733 = vpop.f32.mrf.mxu0
      %v4734 = vadd.f32 0.0, %v4733
      %v4735 = vpop.f32.mrf.mxu0
      %v4736 = vadd.f32 0.0, %v4735
      %4737 = vmatmul.bf16.gmra.mxu0 %v3935
      %v4738 = vpop.f32.mrf.mxu0
      %v4739 = vadd.f32 0.0, %v4738
      %v4740 = vpop.f32.mrf.mxu0
      %v4741 = vadd.f32 0.0, %v4740
      %4742 = vmatmul.bf16.gmra.mxu0 %v3938
      %v4743 = vpop.f32.mrf.mxu0
      %v4744 = vadd.f32 0.0, %v4743
      %v4745 = vpop.f32.mrf.mxu0
      %v4746 = vadd.f32 0.0, %v4745
      %4747 = vmatmul.bf16.gmra.mxu0 %v3941
      %v4748 = vpop.f32.mrf.mxu0
      %v4749 = vadd.f32 0.0, %v4748
      %v4750 = vpop.f32.mrf.mxu0
      %v4751 = vadd.f32 0.0, %v4750
      %4752 = vmatmul.bf16.gmra.mxu0 %v3944
      %v4753 = vpop.f32.mrf.mxu0
      %v4754 = vadd.f32 0.0, %v4753
      %v4755 = vpop.f32.mrf.mxu0
      %v4756 = vadd.f32 0.0, %v4755
      %4757 = vmatmul.bf16.gmra.mxu0 %v3947
      %v4758 = vpop.f32.mrf.mxu0
      %v4759 = vadd.f32 0.0, %v4758
      %v4760 = vpop.f32.mrf.mxu0
      %v4761 = vadd.f32 0.0, %v4760
      %4762 = vmatmul.bf16.gmra.mxu0 %v3950
      %v4763 = vpop.f32.mrf.mxu0
      %v4764 = vadd.f32 0.0, %v4763
      %v4765 = vpop.f32.mrf.mxu0
      %v4766 = vadd.f32 0.0, %v4765
      %4767 = vmatmul.bf16.gmra.mxu0 %v3953
      %v4768 = vpop.f32.mrf.mxu0
      %v4769 = vadd.f32 0.0, %v4768
      %v4770 = vpop.f32.mrf.mxu0
      %v4771 = vadd.f32 0.0, %v4770
      %4772 = vmatmul.bf16.gmra.mxu0 %v3956
      %v4773 = vpop.f32.mrf.mxu0
      %v4774 = vadd.f32 0.0, %v4773
      %v4775 = vpop.f32.mrf.mxu0
      %v4776 = vadd.f32 0.0, %v4775
      %4777 = vmatmul.bf16.gmra.mxu0 %v3959
      %v4778 = vpop.f32.mrf.mxu0
      %v4779 = vadd.f32 0.0, %v4778
      %v4780 = vpop.f32.mrf.mxu0
      %v4781 = vadd.f32 0.0, %v4780
      %4782 = vmatmul.bf16.gmra.mxu0 %v3962
      %v4783 = vpop.f32.mrf.mxu0
      %v4784 = vadd.f32 0.0, %v4783
      %v4785 = vpop.f32.mrf.mxu0
      %v4786 = vadd.f32 0.0, %v4785
      %4787 = vmatmul.bf16.gmra.mxu0 %v3965
      %v4788 = vpop.f32.mrf.mxu0
      %v4789 = vadd.f32 0.0, %v4788
      %v4790 = vpop.f32.mrf.mxu0
      %v4791 = vadd.f32 0.0, %v4790
      %4792 = vmatmul.bf16.gmra.mxu0 %v3968
      %v4793 = vpop.f32.mrf.mxu0
      %v4794 = vadd.f32 0.0, %v4793
      %v4795 = vpop.f32.mrf.mxu0
      %v4796 = vadd.f32 0.0, %v4795
      %4797 = vmatmul.bf16.gmra.mxu0 %v3971
      %v4798 = vpop.f32.mrf.mxu0
      %v4799 = vadd.f32 0.0, %v4798
      %v4800 = vpop.f32.mrf.mxu0
      %v4801 = vadd.f32 0.0, %v4800
      %4802 = vmatmul.bf16.gmra.mxu0 %v3974
      %v4803 = vpop.f32.mrf.mxu0
      %v4804 = vadd.f32 0.0, %v4803
      %v4805 = vpop.f32.mrf.mxu0
      %v4806 = vadd.f32 0.0, %v4805
      %4807 = vmatmul.bf16.gmra.mxu0 %v3977
      %v4808 = vpop.f32.mrf.mxu0
      %v4809 = vadd.f32 0.0, %v4808
      %v4810 = vpop.f32.mrf.mxu0
      %v4811 = vadd.f32 0.0, %v4810
      %4812 = vmatmul.bf16.gmra.mxu0 %v3980
      %v4813 = vpop.f32.mrf.mxu0
      %v4814 = vadd.f32 0.0, %v4813
      %v4815 = vpop.f32.mrf.mxu0
      %v4816 = vadd.f32 0.0, %v4815
      %4817 = vmatmul.bf16.gmra.mxu0 %v3983
      %v4818 = vpop.f32.mrf.mxu0
      %v4819 = vadd.f32 0.0, %v4818
      %v4820 = vpop.f32.mrf.mxu0
      %v4821 = vadd.f32 0.0, %v4820
      %4822 = vmatmul.bf16.gmra.mxu0 %v3986
      %v4823 = vpop.f32.mrf.mxu0
      %v4824 = vadd.f32 0.0, %v4823
      %v4825 = vpop.f32.mrf.mxu0
      %v4826 = vadd.f32 0.0, %v4825
      %4827 = vmatmul.bf16.gmra.mxu0 %v4501
      %v4828 = vpop.f32.mrf.mxu0
      %v4829 = vadd.f32 0.0, %v4828
      %v4830 = vpop.f32.mrf.mxu0
      %v4831 = vadd.f32 0.0, %v4830
      %4832 = vmatmul.bf16.gmra.mxu0 %v4504
      %v4833 = vpop.f32.mrf.mxu0
      %v4834 = vadd.f32 0.0, %v4833
      %v4835 = vpop.f32.mrf.mxu0
      %v4836 = vadd.f32 0.0, %v4835
      %4837 = vdwg.mxu0
      %v4838 = vadd.f32 %v4320, %v4519
      %v4839 = vadd.f32 %v4321, %v4521
      %v4840 = vadd.f32 %v4322, %v4524
      %v4841 = vadd.f32 %v4323, %v4526
      %v4842 = vadd.f32 %v4324, %v4529
      %v4843 = vadd.f32 %v4325, %v4531
      %v4844 = vadd.f32 %v4326, %v4534
      %v4845 = vadd.f32 %v4327, %v4536
      %v4846 = vadd.f32 %v4328, %v4539
      %v4847 = vadd.f32 %v4329, %v4541
      %v4848 = vadd.f32 %v4330, %v4544
      %v4849 = vadd.f32 %v4331, %v4546
      %v4850 = vadd.f32 %v4332, %v4549
      %v4851 = vadd.f32 %v4333, %v4551
      %v4852 = vadd.f32 %v4334, %v4554
      %v4853 = vadd.f32 %v4335, %v4556
      %v4854 = vadd.f32 %v4336, %v4559
      %v4855 = vadd.f32 %v4337, %v4561
      %v4856 = vadd.f32 %v4338, %v4564
      %v4857 = vadd.f32 %v4339, %v4566
      %v4858 = vadd.f32 %v4340, %v4569
      %v4859 = vadd.f32 %v4341, %v4571
      %v4860 = vadd.f32 %v4342, %v4574
      %v4861 = vadd.f32 %v4343, %v4576
      %v4862 = vadd.f32 %v4344, %v4579
      %v4863 = vadd.f32 %v4345, %v4581
      %v4864 = vadd.f32 %v4346, %v4584
      %v4865 = vadd.f32 %v4347, %v4586
      %v4866 = vadd.f32 %v4348, %v4589
      %v4867 = vadd.f32 %v4349, %v4591
      %v4868 = vadd.f32 %v4350, %v4594
      %v4869 = vadd.f32 %v4351, %v4596
      %v4870 = vadd.f32 %v4352, %v4599
      %v4871 = vadd.f32 %v4353, %v4601
      %v4872 = vadd.f32 %v4354, %v4604
      %v4873 = vadd.f32 %v4355, %v4606
      %v4874 = vadd.f32 %v4356, %v4609
      %v4875 = vadd.f32 %v4357, %v4611
      %v4876 = vadd.f32 %v4358, %v4614
      %v4877 = vadd.f32 %v4359, %v4616
      %v4878 = vadd.f32 %v4360, %v4619
      %v4879 = vadd.f32 %v4361, %v4621
      %v4880 = vadd.f32 %v4362, %v4624
      %v4881 = vadd.f32 %v4363, %v4626
      %v4882 = vadd.f32 %v4364, %v4629
      %v4883 = vadd.f32 %v4365, %v4631
      %v4884 = vadd.f32 %v4366, %v4634
      %v4885 = vadd.f32 %v4367, %v4636
      %v4886 = vadd.f32 %v4368, %v4639
      %v4887 = vadd.f32 %v4369, %v4641
      %v4888 = vadd.f32 %v4370, %v4644
      %v4889 = vadd.f32 %v4371, %v4646
      %v4890 = vadd.f32 %v4372, %v4649
      %v4891 = vadd.f32 %v4373, %v4651
      %v4892 = vadd.f32 %v4374, %v4654
      %v4893 = vadd.f32 %v4375, %v4656
      %v4894 = vadd.f32 %v4376, %v4659
      %v4895 = vadd.f32 %v4377, %v4661
      %v4896 = vadd.f32 %v4378, %v4664
      %v4897 = vadd.f32 %v4379, %v4666
      %v4898 = vadd.f32 %v4380, %v4669
      %v4899 = vadd.f32 %v4381, %v4671
      %v4900 = vadd.f32 %v4382, %v4674
      %v4901 = vadd.f32 %v4383, %v4676
      %v4902 = vadd.f32 %v4384, %v4679
      %v4903 = vadd.f32 %v4385, %v4681
      %v4904 = vadd.f32 %v4386, %v4684
      %v4905 = vadd.f32 %v4387, %v4686
      %v4906 = vadd.f32 %v4388, %v4689
      %v4907 = vadd.f32 %v4389, %v4691
      %v4908 = vadd.f32 %v4390, %v4694
      %v4909 = vadd.f32 %v4391, %v4696
      %v4910 = vadd.f32 %v4392, %v4699
      %v4911 = vadd.f32 %v4393, %v4701
      %v4912 = vadd.f32 %v4394, %v4704
      %v4913 = vadd.f32 %v4395, %v4706
      %v4914 = vadd.f32 %v4396, %v4709
      %v4915 = vadd.f32 %v4397, %v4711
      %v4916 = vadd.f32 %v4398, %v4714
      %v4917 = vadd.f32 %v4399, %v4716
      %v4918 = vadd.f32 %v4400, %v4719
      %v4919 = vadd.f32 %v4401, %v4721
      %v4920 = vadd.f32 %v4402, %v4724
      %v4921 = vadd.f32 %v4403, %v4726
      %v4922 = vadd.f32 %v4404, %v4729
      %v4923 = vadd.f32 %v4405, %v4731
      %v4924 = vadd.f32 %v4406, %v4734
      %v4925 = vadd.f32 %v4407, %v4736
      %v4926 = vadd.f32 %v4408, %v4739
      %v4927 = vadd.f32 %v4409, %v4741
      %v4928 = vadd.f32 %v4410, %v4744
      %v4929 = vadd.f32 %v4411, %v4746
      %v4930 = vadd.f32 %v4412, %v4749
      %v4931 = vadd.f32 %v4413, %v4751
      %v4932 = vadd.f32 %v4414, %v4754
      %v4933 = vadd.f32 %v4415, %v4756
      %v4934 = vadd.f32 %v4416, %v4759
      %v4935 = vadd.f32 %v4417, %v4761
      %v4936 = vadd.f32 %v4418, %v4764
      %v4937 = vadd.f32 %v4419, %v4766
      %v4938 = vadd.f32 %v4420, %v4769
      %v4939 = vadd.f32 %v4421, %v4771
      %v4940 = vadd.f32 %v4422, %v4774
      %v4941 = vadd.f32 %v4423, %v4776
      %v4942 = vadd.f32 %v4424, %v4779
      %v4943 = vadd.f32 %v4425, %v4781
      %v4944 = vadd.f32 %v4426, %v4784
      %v4945 = vadd.f32 %v4427, %v4786
      %v4946 = vadd.f32 %v4428, %v4789
      %v4947 = vadd.f32 %v4429, %v4791
      %v4948 = vadd.f32 %v4430, %v4794
      %v4949 = vadd.f32 %v4431, %v4796
      %v4950 = vadd.f32 %v4432, %v4799
      %v4951 = vadd.f32 %v4433, %v4801
      %v4952 = vadd.f32 %v4434, %v4804
      %v4953 = vadd.f32 %v4435, %v4806
      %v4954 = vadd.f32 %v4436, %v4809
      %v4955 = vadd.f32 %v4437, %v4811
      %v4956 = vadd.f32 %v4438, %v4814
      %v4957 = vadd.f32 %v4439, %v4816
      %v4958 = vadd.f32 %v4440, %v4819
      %v4959 = vadd.f32 %v4441, %v4821
      %v4960 = vadd.f32 %v4442, %v4824
      %v4961 = vadd.f32 %v4443, %v4826
      %v4962 = vadd.f32 %v4444, %v4829
      %v4963 = vadd.f32 %v4445, %v4831
      %v4964 = vadd.f32 %v4446, %v4834
      %v4965 = vadd.f32 %v4447, %v4836
      %v4967 = vshrl.u32 %v2186, 16
      %v4969 = vrot.slane %v4967, 4
      %v4970 = vshll.u32 %v2186, 16
      %v4972 = vrot.slane %v4970, 5
      %v4973 = vor.u32 %v4969, %v4972
      %v4974 = vrot.slane %v4973, 4
      %v4976 = vshll.u32 %v2187, 16
      %v4978 = vrot.slane %v4976, 5
      %v4979 = vsel %vm2193, %v4974, %v4978
      %v4980 = vshrl.u32 %v2187, 16
      %v4982 = vrot.slane %v4980, 4
      %v4983 = vor.u32 %v4982, %v4978
      %v4984 = vrot.slane %v4983, 4
      %v4986 = vshll.u32 %v2188, 16
      %v4988 = vrot.slane %v4986, 5
      %v4989 = vsel %vm2193, %v4984, %v4988
      %v4990 = vshrl.u32 %v2188, 16
      %v4992 = vrot.slane %v4990, 4
      %v4993 = vor.u32 %v4992, %v4988
      %v4994 = vrot.slane %v4993, 4
      %v4996 = vshll.u32 %v2189, 16
      %v4998 = vrot.slane %v4996, 5
      %v4999 = vsel %vm2193, %v4994, %v4998
      %v5000 = vshrl.u32 %v2189, 16
      %v5002 = vrot.slane %v5000, 4
      %v5003 = vor.u32 %v5002, %v4998
      %v5004 = vrot.slane %v5003, 4
      %v5006 = vshll.u32 %v2190, 16
      %v5008 = vrot.slane %v5006, 5
      %v5009 = vsel %vm2193, %v5004, %v5008
      %s5010 = scalar_lea.vmem %s1, 28
      %v5011 = vld [vmem:[%s5010] sm:$0xf]
      %v5012 = vunpack.c.l.b16 %v4979
      %v5013 = vunpack.c.l.b16 %v4989
      %v5014 = vunpack.c.l.b16 %v4999
      %v5015 = vunpack.c.l.b16 %v5009
      %v5016 = vpack.c.b16 %v5013, %v5012
      %v5017 = vpack.c.b16 %v5015, %v5014
      %v5019 = vsel %vm669, %v5016, 0
      %v5022 = vsel %vm669, %v5017, 0
      %v5025 = vsel %vm862, %v5011, 0
      %5027 = vmatpush.bf16.msra.mxu0 0
      %5028 = vmatpush.bf16.msra.mxu0 0
      %5029 = vmatpush.bf16.msra.mxu0 0
      %5030 = vmatpush.bf16.msra.mxu0 0
      %5031 = vmatpush.bf16.msra.mxu0 0
      %5032 = vmatpush.bf16.msra.mxu0 0
      %5033 = vmatpush.bf16.msra.mxu0 0
      %5034 = vmatpush.bf16.msra.mxu0 %v5025
      %5035 = vmatmul.bf16.gmra.mxu0 %v3809
      %v5036 = vpop.f32.mrf.mxu0
      %v5037 = vadd.f32 0.0, %v5036
      %v5038 = vpop.f32.mrf.mxu0
      %v5039 = vadd.f32 0.0, %v5038
      %5040 = vmatmul.bf16.gmra.mxu0 %v3812
      %v5041 = vpop.f32.mrf.mxu0
      %v5042 = vadd.f32 0.0, %v5041
      %v5043 = vpop.f32.mrf.mxu0
      %v5044 = vadd.f32 0.0, %v5043
      %5045 = vmatmul.bf16.gmra.mxu0 %v3815
      %v5046 = vpop.f32.mrf.mxu0
      %v5047 = vadd.f32 0.0, %v5046
      %v5048 = vpop.f32.mrf.mxu0
      %v5049 = vadd.f32 0.0, %v5048
      %5050 = vmatmul.bf16.gmra.mxu0 %v3818
      %v5051 = vpop.f32.mrf.mxu0
      %v5052 = vadd.f32 0.0, %v5051
      %v5053 = vpop.f32.mrf.mxu0
      %v5054 = vadd.f32 0.0, %v5053
      %5055 = vmatmul.bf16.gmra.mxu0 %v3821
      %v5056 = vpop.f32.mrf.mxu0
      %v5057 = vadd.f32 0.0, %v5056
      %v5058 = vpop.f32.mrf.mxu0
      %v5059 = vadd.f32 0.0, %v5058
      %5060 = vmatmul.bf16.gmra.mxu0 %v3824
      %v5061 = vpop.f32.mrf.mxu0
      %v5062 = vadd.f32 0.0, %v5061
      %v5063 = vpop.f32.mrf.mxu0
      %v5064 = vadd.f32 0.0, %v5063
      %5065 = vmatmul.bf16.gmra.mxu0 %v3827
      %v5066 = vpop.f32.mrf.mxu0
      %v5067 = vadd.f32 0.0, %v5066
      %v5068 = vpop.f32.mrf.mxu0
      %v5069 = vadd.f32 0.0, %v5068
      %5070 = vmatmul.bf16.gmra.mxu0 %v3830
      %v5071 = vpop.f32.mrf.mxu0
      %v5072 = vadd.f32 0.0, %v5071
      %v5073 = vpop.f32.mrf.mxu0
      %v5074 = vadd.f32 0.0, %v5073
      %5075 = vmatmul.bf16.gmra.mxu0 %v3833
      %v5076 = vpop.f32.mrf.mxu0
      %v5077 = vadd.f32 0.0, %v5076
      %v5078 = vpop.f32.mrf.mxu0
      %v5079 = vadd.f32 0.0, %v5078
      %5080 = vmatmul.bf16.gmra.mxu0 %v3836
      %v5081 = vpop.f32.mrf.mxu0
      %v5082 = vadd.f32 0.0, %v5081
      %v5083 = vpop.f32.mrf.mxu0
      %v5084 = vadd.f32 0.0, %v5083
      %5085 = vmatmul.bf16.gmra.mxu0 %v3839
      %v5086 = vpop.f32.mrf.mxu0
      %v5087 = vadd.f32 0.0, %v5086
      %v5088 = vpop.f32.mrf.mxu0
      %v5089 = vadd.f32 0.0, %v5088
      %5090 = vmatmul.bf16.gmra.mxu0 %v3842
      %v5091 = vpop.f32.mrf.mxu0
      %v5092 = vadd.f32 0.0, %v5091
      %v5093 = vpop.f32.mrf.mxu0
      %v5094 = vadd.f32 0.0, %v5093
      %5095 = vmatmul.bf16.gmra.mxu0 %v3845
      %v5096 = vpop.f32.mrf.mxu0
      %v5097 = vadd.f32 0.0, %v5096
      %v5098 = vpop.f32.mrf.mxu0
      %v5099 = vadd.f32 0.0, %v5098
      %5100 = vmatmul.bf16.gmra.mxu0 %v3848
      %v5101 = vpop.f32.mrf.mxu0
      %v5102 = vadd.f32 0.0, %v5101
      %v5103 = vpop.f32.mrf.mxu0
      %v5104 = vadd.f32 0.0, %v5103
      %5105 = vmatmul.bf16.gmra.mxu0 %v3851
      %v5106 = vpop.f32.mrf.mxu0
      %v5107 = vadd.f32 0.0, %v5106
      %v5108 = vpop.f32.mrf.mxu0
      %v5109 = vadd.f32 0.0, %v5108
      %5110 = vmatmul.bf16.gmra.mxu0 %v3854
      %v5111 = vpop.f32.mrf.mxu0
      %v5112 = vadd.f32 0.0, %v5111
      %v5113 = vpop.f32.mrf.mxu0
      %v5114 = vadd.f32 0.0, %v5113
      %5115 = vmatmul.bf16.gmra.mxu0 %v3857
      %v5116 = vpop.f32.mrf.mxu0
      %v5117 = vadd.f32 0.0, %v5116
      %v5118 = vpop.f32.mrf.mxu0
      %v5119 = vadd.f32 0.0, %v5118
      %5120 = vmatmul.bf16.gmra.mxu0 %v3860
      %v5121 = vpop.f32.mrf.mxu0
      %v5122 = vadd.f32 0.0, %v5121
      %v5123 = vpop.f32.mrf.mxu0
      %v5124 = vadd.f32 0.0, %v5123
      %5125 = vmatmul.bf16.gmra.mxu0 %v3863
      %v5126 = vpop.f32.mrf.mxu0
      %v5127 = vadd.f32 0.0, %v5126
      %v5128 = vpop.f32.mrf.mxu0
      %v5129 = vadd.f32 0.0, %v5128
      %5130 = vmatmul.bf16.gmra.mxu0 %v3866
      %v5131 = vpop.f32.mrf.mxu0
      %v5132 = vadd.f32 0.0, %v5131
      %v5133 = vpop.f32.mrf.mxu0
      %v5134 = vadd.f32 0.0, %v5133
      %5135 = vmatmul.bf16.gmra.mxu0 %v3869
      %v5136 = vpop.f32.mrf.mxu0
      %v5137 = vadd.f32 0.0, %v5136
      %v5138 = vpop.f32.mrf.mxu0
      %v5139 = vadd.f32 0.0, %v5138
      %5140 = vmatmul.bf16.gmra.mxu0 %v3872
      %v5141 = vpop.f32.mrf.mxu0
      %v5142 = vadd.f32 0.0, %v5141
      %v5143 = vpop.f32.mrf.mxu0
      %v5144 = vadd.f32 0.0, %v5143
      %5145 = vmatmul.bf16.gmra.mxu0 %v3875
      %v5146 = vpop.f32.mrf.mxu0
      %v5147 = vadd.f32 0.0, %v5146
      %v5148 = vpop.f32.mrf.mxu0
      %v5149 = vadd.f32 0.0, %v5148
      %5150 = vmatmul.bf16.gmra.mxu0 %v3878
      %v5151 = vpop.f32.mrf.mxu0
      %v5152 = vadd.f32 0.0, %v5151
      %v5153 = vpop.f32.mrf.mxu0
      %v5154 = vadd.f32 0.0, %v5153
      %5155 = vmatmul.bf16.gmra.mxu0 %v3881
      %v5156 = vpop.f32.mrf.mxu0
      %v5157 = vadd.f32 0.0, %v5156
      %v5158 = vpop.f32.mrf.mxu0
      %v5159 = vadd.f32 0.0, %v5158
      %5160 = vmatmul.bf16.gmra.mxu0 %v3884
      %v5161 = vpop.f32.mrf.mxu0
      %v5162 = vadd.f32 0.0, %v5161
      %v5163 = vpop.f32.mrf.mxu0
      %v5164 = vadd.f32 0.0, %v5163
      %5165 = vmatmul.bf16.gmra.mxu0 %v3887
      %v5166 = vpop.f32.mrf.mxu0
      %v5167 = vadd.f32 0.0, %v5166
      %v5168 = vpop.f32.mrf.mxu0
      %v5169 = vadd.f32 0.0, %v5168
      %5170 = vmatmul.bf16.gmra.mxu0 %v3890
      %v5171 = vpop.f32.mrf.mxu0
      %v5172 = vadd.f32 0.0, %v5171
      %v5173 = vpop.f32.mrf.mxu0
      %v5174 = vadd.f32 0.0, %v5173
      %5175 = vmatmul.bf16.gmra.mxu0 %v3893
      %v5176 = vpop.f32.mrf.mxu0
      %v5177 = vadd.f32 0.0, %v5176
      %v5178 = vpop.f32.mrf.mxu0
      %v5179 = vadd.f32 0.0, %v5178
      %5180 = vmatmul.bf16.gmra.mxu0 %v3896
      %v5181 = vpop.f32.mrf.mxu0
      %v5182 = vadd.f32 0.0, %v5181
      %v5183 = vpop.f32.mrf.mxu0
      %v5184 = vadd.f32 0.0, %v5183
      %5185 = vmatmul.bf16.gmra.mxu0 %v3899
      %v5186 = vpop.f32.mrf.mxu0
      %v5187 = vadd.f32 0.0, %v5186
      %v5188 = vpop.f32.mrf.mxu0
      %v5189 = vadd.f32 0.0, %v5188
      %5190 = vmatmul.bf16.gmra.mxu0 %v3902
      %v5191 = vpop.f32.mrf.mxu0
      %v5192 = vadd.f32 0.0, %v5191
      %v5193 = vpop.f32.mrf.mxu0
      %v5194 = vadd.f32 0.0, %v5193
      %5195 = vmatmul.bf16.gmra.mxu0 %v3905
      %v5196 = vpop.f32.mrf.mxu0
      %v5197 = vadd.f32 0.0, %v5196
      %v5198 = vpop.f32.mrf.mxu0
      %v5199 = vadd.f32 0.0, %v5198
      %5200 = vmatmul.bf16.gmra.mxu0 %v3908
      %v5201 = vpop.f32.mrf.mxu0
      %v5202 = vadd.f32 0.0, %v5201
      %v5203 = vpop.f32.mrf.mxu0
      %v5204 = vadd.f32 0.0, %v5203
      %5205 = vmatmul.bf16.gmra.mxu0 %v3911
      %v5206 = vpop.f32.mrf.mxu0
      %v5207 = vadd.f32 0.0, %v5206
      %v5208 = vpop.f32.mrf.mxu0
      %v5209 = vadd.f32 0.0, %v5208
      %5210 = vmatmul.bf16.gmra.mxu0 %v3914
      %v5211 = vpop.f32.mrf.mxu0
      %v5212 = vadd.f32 0.0, %v5211
      %v5213 = vpop.f32.mrf.mxu0
      %v5214 = vadd.f32 0.0, %v5213
      %5215 = vmatmul.bf16.gmra.mxu0 %v3917
      %v5216 = vpop.f32.mrf.mxu0
      %v5217 = vadd.f32 0.0, %v5216
      %v5218 = vpop.f32.mrf.mxu0
      %v5219 = vadd.f32 0.0, %v5218
      %5220 = vmatmul.bf16.gmra.mxu0 %v3920
      %v5221 = vpop.f32.mrf.mxu0
      %v5222 = vadd.f32 0.0, %v5221
      %v5223 = vpop.f32.mrf.mxu0
      %v5224 = vadd.f32 0.0, %v5223
      %5225 = vmatmul.bf16.gmra.mxu0 %v3923
      %v5226 = vpop.f32.mrf.mxu0
      %v5227 = vadd.f32 0.0, %v5226
      %v5228 = vpop.f32.mrf.mxu0
      %v5229 = vadd.f32 0.0, %v5228
      %5230 = vmatmul.bf16.gmra.mxu0 %v3926
      %v5231 = vpop.f32.mrf.mxu0
      %v5232 = vadd.f32 0.0, %v5231
      %v5233 = vpop.f32.mrf.mxu0
      %v5234 = vadd.f32 0.0, %v5233
      %5235 = vmatmul.bf16.gmra.mxu0 %v3929
      %v5236 = vpop.f32.mrf.mxu0
      %v5237 = vadd.f32 0.0, %v5236
      %v5238 = vpop.f32.mrf.mxu0
      %v5239 = vadd.f32 0.0, %v5238
      %5240 = vmatmul.bf16.gmra.mxu0 %v3932
      %v5241 = vpop.f32.mrf.mxu0
      %v5242 = vadd.f32 0.0, %v5241
      %v5243 = vpop.f32.mrf.mxu0
      %v5244 = vadd.f32 0.0, %v5243
      %5245 = vmatmul.bf16.gmra.mxu0 %v3935
      %v5246 = vpop.f32.mrf.mxu0
      %v5247 = vadd.f32 0.0, %v5246
      %v5248 = vpop.f32.mrf.mxu0
      %v5249 = vadd.f32 0.0, %v5248
      %5250 = vmatmul.bf16.gmra.mxu0 %v3938
      %v5251 = vpop.f32.mrf.mxu0
      %v5252 = vadd.f32 0.0, %v5251
      %v5253 = vpop.f32.mrf.mxu0
      %v5254 = vadd.f32 0.0, %v5253
      %5255 = vmatmul.bf16.gmra.mxu0 %v3941
      %v5256 = vpop.f32.mrf.mxu0
      %v5257 = vadd.f32 0.0, %v5256
      %v5258 = vpop.f32.mrf.mxu0
      %v5259 = vadd.f32 0.0, %v5258
      %5260 = vmatmul.bf16.gmra.mxu0 %v3944
      %v5261 = vpop.f32.mrf.mxu0
      %v5262 = vadd.f32 0.0, %v5261
      %v5263 = vpop.f32.mrf.mxu0
      %v5264 = vadd.f32 0.0, %v5263
      %5265 = vmatmul.bf16.gmra.mxu0 %v3947
      %v5266 = vpop.f32.mrf.mxu0
      %v5267 = vadd.f32 0.0, %v5266
      %v5268 = vpop.f32.mrf.mxu0
      %v5269 = vadd.f32 0.0, %v5268
      %5270 = vmatmul.bf16.gmra.mxu0 %v3950
      %v5271 = vpop.f32.mrf.mxu0
      %v5272 = vadd.f32 0.0, %v5271
      %v5273 = vpop.f32.mrf.mxu0
      %v5274 = vadd.f32 0.0, %v5273
      %5275 = vmatmul.bf16.gmra.mxu0 %v3953
      %v5276 = vpop.f32.mrf.mxu0
      %v5277 = vadd.f32 0.0, %v5276
      %v5278 = vpop.f32.mrf.mxu0
      %v5279 = vadd.f32 0.0, %v5278
      %5280 = vmatmul.bf16.gmra.mxu0 %v3956
      %v5281 = vpop.f32.mrf.mxu0
      %v5282 = vadd.f32 0.0, %v5281
      %v5283 = vpop.f32.mrf.mxu0
      %v5284 = vadd.f32 0.0, %v5283
      %5285 = vmatmul.bf16.gmra.mxu0 %v3959
      %v5286 = vpop.f32.mrf.mxu0
      %v5287 = vadd.f32 0.0, %v5286
      %v5288 = vpop.f32.mrf.mxu0
      %v5289 = vadd.f32 0.0, %v5288
      %5290 = vmatmul.bf16.gmra.mxu0 %v3962
      %v5291 = vpop.f32.mrf.mxu0
      %v5292 = vadd.f32 0.0, %v5291
      %v5293 = vpop.f32.mrf.mxu0
      %v5294 = vadd.f32 0.0, %v5293
      %5295 = vmatmul.bf16.gmra.mxu0 %v3965
      %v5296 = vpop.f32.mrf.mxu0
      %v5297 = vadd.f32 0.0, %v5296
      %v5298 = vpop.f32.mrf.mxu0
      %v5299 = vadd.f32 0.0, %v5298
      %5300 = vmatmul.bf16.gmra.mxu0 %v3968
      %v5301 = vpop.f32.mrf.mxu0
      %v5302 = vadd.f32 0.0, %v5301
      %v5303 = vpop.f32.mrf.mxu0
      %v5304 = vadd.f32 0.0, %v5303
      %5305 = vmatmul.bf16.gmra.mxu0 %v3971
      %v5306 = vpop.f32.mrf.mxu0
      %v5307 = vadd.f32 0.0, %v5306
      %v5308 = vpop.f32.mrf.mxu0
      %v5309 = vadd.f32 0.0, %v5308
      %5310 = vmatmul.bf16.gmra.mxu0 %v3974
      %v5311 = vpop.f32.mrf.mxu0
      %v5312 = vadd.f32 0.0, %v5311
      %v5313 = vpop.f32.mrf.mxu0
      %v5314 = vadd.f32 0.0, %v5313
      %5315 = vmatmul.bf16.gmra.mxu0 %v3977
      %v5316 = vpop.f32.mrf.mxu0
      %v5317 = vadd.f32 0.0, %v5316
      %v5318 = vpop.f32.mrf.mxu0
      %v5319 = vadd.f32 0.0, %v5318
      %5320 = vmatmul.bf16.gmra.mxu0 %v3980
      %v5321 = vpop.f32.mrf.mxu0
      %v5322 = vadd.f32 0.0, %v5321
      %v5323 = vpop.f32.mrf.mxu0
      %v5324 = vadd.f32 0.0, %v5323
      %5325 = vmatmul.bf16.gmra.mxu0 %v3983
      %v5326 = vpop.f32.mrf.mxu0
      %v5327 = vadd.f32 0.0, %v5326
      %v5328 = vpop.f32.mrf.mxu0
      %v5329 = vadd.f32 0.0, %v5328
      %5330 = vmatmul.bf16.gmra.mxu0 %v3986
      %v5331 = vpop.f32.mrf.mxu0
      %v5332 = vadd.f32 0.0, %v5331
      %v5333 = vpop.f32.mrf.mxu0
      %v5334 = vadd.f32 0.0, %v5333
      %5335 = vmatmul.bf16.gmra.mxu0 %v4501
      %v5336 = vpop.f32.mrf.mxu0
      %v5337 = vadd.f32 0.0, %v5336
      %v5338 = vpop.f32.mrf.mxu0
      %v5339 = vadd.f32 0.0, %v5338
      %5340 = vmatmul.bf16.gmra.mxu0 %v4504
      %v5341 = vpop.f32.mrf.mxu0
      %v5342 = vadd.f32 0.0, %v5341
      %v5343 = vpop.f32.mrf.mxu0
      %v5344 = vadd.f32 0.0, %v5343
      %5345 = vmatmul.bf16.gmra.mxu0 %v5019
      %v5346 = vpop.f32.mrf.mxu0
      %v5347 = vadd.f32 0.0, %v5346
      %v5348 = vpop.f32.mrf.mxu0
      %v5349 = vadd.f32 0.0, %v5348
      %5350 = vmatmul.bf16.gmra.mxu0 %v5022
      %v5351 = vpop.f32.mrf.mxu0
      %v5352 = vadd.f32 0.0, %v5351
      %v5353 = vpop.f32.mrf.mxu0
      %v5354 = vadd.f32 0.0, %v5353
      %5355 = vdwg.mxu0
      %v5356 = vadd.f32 %v4838, %v5037
      %v5357 = vadd.f32 %v4839, %v5039
      %v5358 = vadd.f32 %v4840, %v5042
      %v5359 = vadd.f32 %v4841, %v5044
      %v5360 = vadd.f32 %v4842, %v5047
      %v5361 = vadd.f32 %v4843, %v5049
      %v5362 = vadd.f32 %v4844, %v5052
      %v5363 = vadd.f32 %v4845, %v5054
      %v5364 = vadd.f32 %v4846, %v5057
      %v5365 = vadd.f32 %v4847, %v5059
      %v5366 = vadd.f32 %v4848, %v5062
      %v5367 = vadd.f32 %v4849, %v5064
      %v5368 = vadd.f32 %v4850, %v5067
      %v5369 = vadd.f32 %v4851, %v5069
      %v5370 = vadd.f32 %v4852, %v5072
      %v5371 = vadd.f32 %v4853, %v5074
      %v5372 = vadd.f32 %v4854, %v5077
      %v5373 = vadd.f32 %v4855, %v5079
      %v5374 = vadd.f32 %v4856, %v5082
      %v5375 = vadd.f32 %v4857, %v5084
      %v5376 = vadd.f32 %v4858, %v5087
      %v5377 = vadd.f32 %v4859, %v5089
      %v5378 = vadd.f32 %v4860, %v5092
      %v5379 = vadd.f32 %v4861, %v5094
      %v5380 = vadd.f32 %v4862, %v5097
      %v5381 = vadd.f32 %v4863, %v5099
      %v5382 = vadd.f32 %v4864, %v5102
      %v5383 = vadd.f32 %v4865, %v5104
      %v5384 = vadd.f32 %v4866, %v5107
      %v5385 = vadd.f32 %v4867, %v5109
      %v5386 = vadd.f32 %v4868, %v5112
      %v5387 = vadd.f32 %v4869, %v5114
      %v5388 = vadd.f32 %v4870, %v5117
      %v5389 = vadd.f32 %v4871, %v5119
      %v5390 = vadd.f32 %v4872, %v5122
      %v5391 = vadd.f32 %v4873, %v5124
      %v5392 = vadd.f32 %v4874, %v5127
      %v5393 = vadd.f32 %v4875, %v5129
      %v5394 = vadd.f32 %v4876, %v5132
      %v5395 = vadd.f32 %v4877, %v5134
      %v5396 = vadd.f32 %v4878, %v5137
      %v5397 = vadd.f32 %v4879, %v5139
      %v5398 = vadd.f32 %v4880, %v5142
      %v5399 = vadd.f32 %v4881, %v5144
      %v5400 = vadd.f32 %v4882, %v5147
      %v5401 = vadd.f32 %v4883, %v5149
      %v5402 = vadd.f32 %v4884, %v5152
      %v5403 = vadd.f32 %v4885, %v5154
      %v5404 = vadd.f32 %v4886, %v5157
      %v5405 = vadd.f32 %v4887, %v5159
      %v5406 = vadd.f32 %v4888, %v5162
      %v5407 = vadd.f32 %v4889, %v5164
      %v5408 = vadd.f32 %v4890, %v5167
      %v5409 = vadd.f32 %v4891, %v5169
      %v5410 = vadd.f32 %v4892, %v5172
      %v5411 = vadd.f32 %v4893, %v5174
      %v5412 = vadd.f32 %v4894, %v5177
      %v5413 = vadd.f32 %v4895, %v5179
      %v5414 = vadd.f32 %v4896, %v5182
      %v5415 = vadd.f32 %v4897, %v5184
      %v5416 = vadd.f32 %v4898, %v5187
      %v5417 = vadd.f32 %v4899, %v5189
      %v5418 = vadd.f32 %v4900, %v5192
      %v5419 = vadd.f32 %v4901, %v5194
      %v5420 = vadd.f32 %v4902, %v5197
      %v5421 = vadd.f32 %v4903, %v5199
      %v5422 = vadd.f32 %v4904, %v5202
      %v5423 = vadd.f32 %v4905, %v5204
      %v5424 = vadd.f32 %v4906, %v5207
      %v5425 = vadd.f32 %v4907, %v5209
      %v5426 = vadd.f32 %v4908, %v5212
      %v5427 = vadd.f32 %v4909, %v5214
      %v5428 = vadd.f32 %v4910, %v5217
      %v5429 = vadd.f32 %v4911, %v5219
      %v5430 = vadd.f32 %v4912, %v5222
      %v5431 = vadd.f32 %v4913, %v5224
      %v5432 = vadd.f32 %v4914, %v5227
      %v5433 = vadd.f32 %v4915, %v5229
      %v5434 = vadd.f32 %v4916, %v5232
      %v5435 = vadd.f32 %v4917, %v5234
      %v5436 = vadd.f32 %v4918, %v5237
      %v5437 = vadd.f32 %v4919, %v5239
      %v5438 = vadd.f32 %v4920, %v5242
      %v5439 = vadd.f32 %v4921, %v5244
      %v5440 = vadd.f32 %v4922, %v5247
      %v5441 = vadd.f32 %v4923, %v5249
      %v5442 = vadd.f32 %v4924, %v5252
      %v5443 = vadd.f32 %v4925, %v5254
      %v5444 = vadd.f32 %v4926, %v5257
      %v5445 = vadd.f32 %v4927, %v5259
      %v5446 = vadd.f32 %v4928, %v5262
      %v5447 = vadd.f32 %v4929, %v5264
      %v5448 = vadd.f32 %v4930, %v5267
      %v5449 = vadd.f32 %v4931, %v5269
      %v5450 = vadd.f32 %v4932, %v5272
      %v5451 = vadd.f32 %v4933, %v5274
      %v5452 = vadd.f32 %v4934, %v5277
      %v5453 = vadd.f32 %v4935, %v5279
      %v5454 = vadd.f32 %v4936, %v5282
      %v5455 = vadd.f32 %v4937, %v5284
      %v5456 = vadd.f32 %v4938, %v5287
      %v5457 = vadd.f32 %v4939, %v5289
      %v5458 = vadd.f32 %v4940, %v5292
      %v5459 = vadd.f32 %v4941, %v5294
      %v5460 = vadd.f32 %v4942, %v5297
      %v5461 = vadd.f32 %v4943, %v5299
      %v5462 = vadd.f32 %v4944, %v5302
      %v5463 = vadd.f32 %v4945, %v5304
      %v5464 = vadd.f32 %v4946, %v5307
      %v5465 = vadd.f32 %v4947, %v5309
      %v5466 = vadd.f32 %v4948, %v5312
      %v5467 = vadd.f32 %v4949, %v5314
      %v5468 = vadd.f32 %v4950, %v5317
      %v5469 = vadd.f32 %v4951, %v5319
      %v5470 = vadd.f32 %v4952, %v5322
      %v5471 = vadd.f32 %v4953, %v5324
      %v5472 = vadd.f32 %v4954, %v5327
      %v5473 = vadd.f32 %v4955, %v5329
      %v5474 = vadd.f32 %v4956, %v5332
      %v5475 = vadd.f32 %v4957, %v5334
      %v5476 = vadd.f32 %v4958, %v5337
      %v5477 = vadd.f32 %v4959, %v5339
      %v5478 = vadd.f32 %v4960, %v5342
      %v5479 = vadd.f32 %v4961, %v5344
      %v5480 = vadd.f32 %v4962, %v5347
      %v5481 = vadd.f32 %v4963, %v5349
      %v5482 = vadd.f32 %v4964, %v5352
      %v5483 = vadd.f32 %v4965, %v5354
      %v5484 = vld [vmem:[%s199] sm:$0xe]
      %v5485 = vld [vmem:[%s199 + $0x14] sm:$0xe]
      %v5486 = vld [vmem:[%s199 + $0x28] sm:$0xe]
      %v5487 = vld [vmem:[%s199 + $0x3c] sm:$0xe]
      %v5488 = vld [vmem:[%s199 + $0x50] sm:$0xe]
      %v5489 = vld [vmem:[%s199 + $0x64] sm:$0xe]
      %v5490 = vld [vmem:[%s199 + $0x78] sm:$0xe]
      %v5491 = vld [vmem:[%s199 + $0x8c] sm:$0xe]
      %v5492 = vld [vmem:[%s199 + $0xa0] sm:$0xe]
      %v5493 = vld [vmem:[%s199 + $0xb4] sm:$0xe]
      %v5494 = vld [vmem:[%s199 + $0xc8] sm:$0xe]
      %v5495 = vld [vmem:[%s199 + $0xdc] sm:$0xe]
      %v5496 = vld [vmem:[%s199 + $0xf0] sm:$0xe]
      %v5497 = vld [vmem:[%s199 + $0x104] sm:$0xe]
      %v5498 = vld [vmem:[%s199 + $0x118] sm:$0xe]
      %v5499 = vld [vmem:[%s199 + $0x12c] sm:$0xe]
      %v5500 = vld [vmem:[%s199 + $0x140] sm:$0xe]
      %v5501 = vld [vmem:[%s199 + $0x154] sm:$0xe]
      %v5502 = vld [vmem:[%s199 + $0x168] sm:$0xe]
      %v5503 = vld [vmem:[%s199 + $0x17c] sm:$0xe]
      %v5504 = vld [vmem:[%s199 + $0x190] sm:$0xe]
      %v5505 = vld [vmem:[%s199 + $0x1a4] sm:$0xe]
      %v5506 = vld [vmem:[%s199 + $0x1b8] sm:$0xe]
      %v5507 = vld [vmem:[%s199 + $0x1cc] sm:$0xe]
      %v5508 = vld [vmem:[%s199 + $0x1e0] sm:$0xe]
      %v5509 = vld [vmem:[%s199 + $0x1f4] sm:$0xe]
      %v5510 = vld [vmem:[%s199 + $0x208] sm:$0xe]
      %v5511 = vld [vmem:[%s199 + $0x21c] sm:$0xe]
      %v5512 = vld [vmem:[%s199 + $0x230] sm:$0xe]
      %v5513 = vld [vmem:[%s199 + $0x244] sm:$0xe]
      %v5514 = vld [vmem:[%s199 + $0x258] sm:$0xe]
      %v5515 = vld [vmem:[%s199 + $0x26c] sm:$0xe]
      %v5516 = vld [vmem:[%s199 + $0x280] sm:$0xe]
      %v5517 = vld [vmem:[%s199 + $0x294] sm:$0xe]
      %vm5678 = vcmask 1042432
      %vm5679 = vcmask 1046532
      %vm5680 = vmor %vm5678, %vm5679
      %v5681 = vrot.slane %v5484, 5
      %v5682 = vrot.slane %v5681, 4
      %v5683 = vrot.slane %v2022, 5
      %v5684 = vsel %vm5680, %v5682, %v5683
      %v5685 = vrot.slane %v5683, 4
      %v5686 = vrot.slane %v2023, 5
      %v5687 = vsel %vm5680, %v5685, %v5686
      %v5688 = vrot.slane %v5686, 4
      %v5689 = vrot.slane %v2024, 5
      %v5690 = vsel %vm5680, %v5688, %v5689
      %v5691 = vrot.slane %v5689, 4
      %v5692 = vrot.slane %v2025, 5
      %v5693 = vsel %vm5680, %v5691, %v5692
      %v5694 = vrot.slane %v5485, 5
      %v5695 = vrot.slane %v5694, 4
      %v5696 = vrot.slane %v2027, 5
      %v5697 = vsel %vm5680, %v5695, %v5696
      %v5698 = vrot.slane %v5696, 4
      %v5699 = vrot.slane %v2028, 5
      %v5700 = vsel %vm5680, %v5698, %v5699
      %v5701 = vrot.slane %v5699, 4
      %v5702 = vrot.slane %v2029, 5
      %v5703 = vsel %vm5680, %v5701, %v5702
      %v5704 = vrot.slane %v5702, 4
      %v5705 = vrot.slane %v2030, 5
      %v5706 = vsel %vm5680, %v5704, %v5705
      %v5707 = vrot.slane %v5486, 5
      %v5708 = vrot.slane %v5707, 4
      %v5709 = vrot.slane %v2032, 5
      %v5710 = vsel %vm5680, %v5708, %v5709
      %v5711 = vrot.slane %v5709, 4
      %v5712 = vrot.slane %v2033, 5
      %v5713 = vsel %vm5680, %v5711, %v5712
      %v5714 = vrot.slane %v5712, 4
      %v5715 = vrot.slane %v2034, 5
      %v5716 = vsel %vm5680, %v5714, %v5715
      %v5717 = vrot.slane %v5715, 4
      %v5718 = vrot.slane %v2035, 5
      %v5719 = vsel %vm5680, %v5717, %v5718
      %v5720 = vrot.slane %v5487, 5
      %v5721 = vrot.slane %v5720, 4
      %v5722 = vrot.slane %v2037, 5
      %v5723 = vsel %vm5680, %v5721, %v5722
      %v5724 = vrot.slane %v5722, 4
      %v5725 = vrot.slane %v2038, 5
      %v5726 = vsel %vm5680, %v5724, %v5725
      %v5727 = vrot.slane %v5725, 4
      %v5728 = vrot.slane %v2039, 5
      %v5729 = vsel %vm5680, %v5727, %v5728
      %v5730 = vrot.slane %v5728, 4
      %v5731 = vrot.slane %v2040, 5
      %v5732 = vsel %vm5680, %v5730, %v5731
      %v5733 = vrot.slane %v5488, 5
      %v5734 = vrot.slane %v5733, 4
      %v5735 = vrot.slane %v2042, 5
      %v5736 = vsel %vm5680, %v5734, %v5735
      %v5737 = vrot.slane %v5735, 4
      %v5738 = vrot.slane %v2043, 5
      %v5739 = vsel %vm5680, %v5737, %v5738
      %v5740 = vrot.slane %v5738, 4
      %v5741 = vrot.slane %v2044, 5
      %v5742 = vsel %vm5680, %v5740, %v5741
      %v5743 = vrot.slane %v5741, 4
      %v5744 = vrot.slane %v2045, 5
      %v5745 = vsel %vm5680, %v5743, %v5744
      %v5746 = vrot.slane %v5489, 5
      %v5747 = vrot.slane %v5746, 4
      %v5748 = vrot.slane %v2047, 5
      %v5749 = vsel %vm5680, %v5747, %v5748
      %v5750 = vrot.slane %v5748, 4
      %v5751 = vrot.slane %v2048, 5
      %v5752 = vsel %vm5680, %v5750, %v5751
      %v5753 = vrot.slane %v5751, 4
      %v5754 = vrot.slane %v2049, 5
      %v5755 = vsel %vm5680, %v5753, %v5754
      %v5756 = vrot.slane %v5754, 4
      %v5757 = vrot.slane %v2050, 5
      %v5758 = vsel %vm5680, %v5756, %v5757
      %v5759 = vrot.slane %v5490, 5
      %v5760 = vrot.slane %v5759, 4
      %v5761 = vrot.slane %v2052, 5
      %v5762 = vsel %vm5680, %v5760, %v5761
      %v5763 = vrot.slane %v5761, 4
      %v5764 = vrot.slane %v2053, 5
      %v5765 = vsel %vm5680, %v5763, %v5764
      %v5766 = vrot.slane %v5764, 4
      %v5767 = vrot.slane %v2054, 5
      %v5768 = vsel %vm5680, %v5766, %v5767
      %v5769 = vrot.slane %v5767, 4
      %v5770 = vrot.slane %v2055, 5
      %v5771 = vsel %vm5680, %v5769, %v5770
      %v5772 = vrot.slane %v5491, 5
      %v5773 = vrot.slane %v5772, 4
      %v5774 = vrot.slane %v2057, 5
      %v5775 = vsel %vm5680, %v5773, %v5774
      %v5776 = vrot.slane %v5774, 4
      %v5777 = vrot.slane %v2058, 5
      %v5778 = vsel %vm5680, %v5776, %v5777
      %v5779 = vrot.slane %v5777, 4
      %v5780 = vrot.slane %v2059, 5
      %v5781 = vsel %vm5680, %v5779, %v5780
      %v5782 = vrot.slane %v5780, 4
      %v5783 = vrot.slane %v2060, 5
      %v5784 = vsel %vm5680, %v5782, %v5783
      %v5785 = vrot.slane %v5492, 5
      %v5786 = vrot.slane %v5785, 4
      %v5787 = vrot.slane %v2062, 5
      %v5788 = vsel %vm5680, %v5786, %v5787
      %v5789 = vrot.slane %v5787, 4
      %v5790 = vrot.slane %v2063, 5
      %v5791 = vsel %vm5680, %v5789, %v5790
      %v5792 = vrot.slane %v5790, 4
      %v5793 = vrot.slane %v2064, 5
      %v5794 = vsel %vm5680, %v5792, %v5793
      %v5795 = vrot.slane %v5793, 4
      %v5796 = vrot.slane %v2065, 5
      %v5797 = vsel %vm5680, %v5795, %v5796
      %v5798 = vrot.slane %v5493, 5
      %v5799 = vrot.slane %v5798, 4
      %v5800 = vrot.slane %v2067, 5
      %v5801 = vsel %vm5680, %v5799, %v5800
      %v5802 = vrot.slane %v5800, 4
      %v5803 = vrot.slane %v2068, 5
      %v5804 = vsel %vm5680, %v5802, %v5803
      %v5805 = vrot.slane %v5803, 4
      %v5806 = vrot.slane %v2069, 5
      %v5807 = vsel %vm5680, %v5805, %v5806
      %v5808 = vrot.slane %v5806, 4
      %v5809 = vrot.slane %v2070, 5
      %v5810 = vsel %vm5680, %v5808, %v5809
      %v5811 = vrot.slane %v5494, 5
      %v5812 = vrot.slane %v5811, 4
      %v5813 = vrot.slane %v2072, 5
      %v5814 = vsel %vm5680, %v5812, %v5813
      %v5815 = vrot.slane %v5813, 4
      %v5816 = vrot.slane %v2073, 5
      %v5817 = vsel %vm5680, %v5815, %v5816
      %v5818 = vrot.slane %v5816, 4
      %v5819 = vrot.slane %v2074, 5
      %v5820 = vsel %vm5680, %v5818, %v5819
      %v5821 = vrot.slane %v5819, 4
      %v5822 = vrot.slane %v2075, 5
      %v5823 = vsel %vm5680, %v5821, %v5822
      %v5824 = vrot.slane %v5495, 5
      %v5825 = vrot.slane %v5824, 4
      %v5826 = vrot.slane %v2077, 5
      %v5827 = vsel %vm5680, %v5825, %v5826
      %v5828 = vrot.slane %v5826, 4
      %v5829 = vrot.slane %v2078, 5
      %v5830 = vsel %vm5680, %v5828, %v5829
      %v5831 = vrot.slane %v5829, 4
      %v5832 = vrot.slane %v2079, 5
      %v5833 = vsel %vm5680, %v5831, %v5832
      %v5834 = vrot.slane %v5832, 4
      %v5835 = vrot.slane %v2080, 5
      %v5836 = vsel %vm5680, %v5834, %v5835
      %v5837 = vrot.slane %v5496, 5
      %v5838 = vrot.slane %v5837, 4
      %v5839 = vrot.slane %v2082, 5
      %v5840 = vsel %vm5680, %v5838, %v5839
      %v5841 = vrot.slane %v5839, 4
      %v5842 = vrot.slane %v2083, 5
      %v5843 = vsel %vm5680, %v5841, %v5842
      %v5844 = vrot.slane %v5842, 4
      %v5845 = vrot.slane %v2084, 5
      %v5846 = vsel %vm5680, %v5844, %v5845
      %v5847 = vrot.slane %v5845, 4
      %v5848 = vrot.slane %v2085, 5
      %v5849 = vsel %vm5680, %v5847, %v5848
      %v5850 = vrot.slane %v5497, 5
      %v5851 = vrot.slane %v5850, 4
      %v5852 = vrot.slane %v2087, 5
      %v5853 = vsel %vm5680, %v5851, %v5852
      %v5854 = vrot.slane %v5852, 4
      %v5855 = vrot.slane %v2088, 5
      %v5856 = vsel %vm5680, %v5854, %v5855
      %v5857 = vrot.slane %v5855, 4
      %v5858 = vrot.slane %v2089, 5
      %v5859 = vsel %vm5680, %v5857, %v5858
      %v5860 = vrot.slane %v5858, 4
      %v5861 = vrot.slane %v2090, 5
      %v5862 = vsel %vm5680, %v5860, %v5861
      %v5863 = vrot.slane %v5498, 5
      %v5864 = vrot.slane %v5863, 4
      %v5865 = vrot.slane %v2092, 5
      %v5866 = vsel %vm5680, %v5864, %v5865
      %v5867 = vrot.slane %v5865, 4
      %v5868 = vrot.slane %v2093, 5
      %v5869 = vsel %vm5680, %v5867, %v5868
      %v5870 = vrot.slane %v5868, 4
      %v5871 = vrot.slane %v2094, 5
      %v5872 = vsel %vm5680, %v5870, %v5871
      %v5873 = vrot.slane %v5871, 4
      %v5874 = vrot.slane %v2095, 5
      %v5875 = vsel %vm5680, %v5873, %v5874
      %v5876 = vrot.slane %v5499, 5
      %v5877 = vrot.slane %v5876, 4
      %v5878 = vrot.slane %v2097, 5
      %v5879 = vsel %vm5680, %v5877, %v5878
      %v5880 = vrot.slane %v5878, 4
      %v5881 = vrot.slane %v2098, 5
      %v5882 = vsel %vm5680, %v5880, %v5881
      %v5883 = vrot.slane %v5881, 4
      %v5884 = vrot.slane %v2099, 5
      %v5885 = vsel %vm5680, %v5883, %v5884
      %v5886 = vrot.slane %v5884, 4
      %v5887 = vrot.slane %v2100, 5
      %v5888 = vsel %vm5680, %v5886, %v5887
      %v5889 = vrot.slane %v5500, 5
      %v5890 = vrot.slane %v5889, 4
      %v5891 = vrot.slane %v2102, 5
      %v5892 = vsel %vm5680, %v5890, %v5891
      %v5893 = vrot.slane %v5891, 4
      %v5894 = vrot.slane %v2103, 5
      %v5895 = vsel %vm5680, %v5893, %v5894
      %v5896 = vrot.slane %v5894, 4
      %v5897 = vrot.slane %v2104, 5
      %v5898 = vsel %vm5680, %v5896, %v5897
      %v5899 = vrot.slane %v5897, 4
      %v5900 = vrot.slane %v2105, 5
      %v5901 = vsel %vm5680, %v5899, %v5900
      %v5902 = vrot.slane %v5501, 5
      %v5903 = vrot.slane %v5902, 4
      %v5904 = vrot.slane %v2107, 5
      %v5905 = vsel %vm5680, %v5903, %v5904
      %v5906 = vrot.slane %v5904, 4
      %v5907 = vrot.slane %v2108, 5
      %v5908 = vsel %vm5680, %v5906, %v5907
      %v5909 = vrot.slane %v5907, 4
      %v5910 = vrot.slane %v2109, 5
      %v5911 = vsel %vm5680, %v5909, %v5910
      %v5912 = vrot.slane %v5910, 4
      %v5913 = vrot.slane %v2110, 5
      %v5914 = vsel %vm5680, %v5912, %v5913
      %v5915 = vrot.slane %v5502, 5
      %v5916 = vrot.slane %v5915, 4
      %v5917 = vrot.slane %v2112, 5
      %v5918 = vsel %vm5680, %v5916, %v5917
      %v5919 = vrot.slane %v5917, 4
      %v5920 = vrot.slane %v2113, 5
      %v5921 = vsel %vm5680, %v5919, %v5920
      %v5922 = vrot.slane %v5920, 4
      %v5923 = vrot.slane %v2114, 5
      %v5924 = vsel %vm5680, %v5922, %v5923
      %v5925 = vrot.slane %v5923, 4
      %v5926 = vrot.slane %v2115, 5
      %v5927 = vsel %vm5680, %v5925, %v5926
      %v5928 = vrot.slane %v5503, 5
      %v5929 = vrot.slane %v5928, 4
      %v5930 = vrot.slane %v2117, 5
      %v5931 = vsel %vm5680, %v5929, %v5930
      %v5932 = vrot.slane %v5930, 4
      %v5933 = vrot.slane %v2118, 5
      %v5934 = vsel %vm5680, %v5932, %v5933
      %v5935 = vrot.slane %v5933, 4
      %v5936 = vrot.slane %v2119, 5
      %v5937 = vsel %vm5680, %v5935, %v5936
      %v5938 = vrot.slane %v5936, 4
      %v5939 = vrot.slane %v2120, 5
      %v5940 = vsel %vm5680, %v5938, %v5939
      %v5941 = vrot.slane %v5504, 5
      %v5942 = vrot.slane %v5941, 4
      %v5943 = vrot.slane %v2122, 5
      %v5944 = vsel %vm5680, %v5942, %v5943
      %v5945 = vrot.slane %v5943, 4
      %v5946 = vrot.slane %v2123, 5
      %v5947 = vsel %vm5680, %v5945, %v5946
      %v5948 = vrot.slane %v5946, 4
      %v5949 = vrot.slane %v2124, 5
      %v5950 = vsel %vm5680, %v5948, %v5949
      %v5951 = vrot.slane %v5949, 4
      %v5952 = vrot.slane %v2125, 5
      %v5953 = vsel %vm5680, %v5951, %v5952
      %v5954 = vrot.slane %v5505, 5
      %v5955 = vrot.slane %v5954, 4
      %v5956 = vrot.slane %v2127, 5
      %v5957 = vsel %vm5680, %v5955, %v5956
      %v5958 = vrot.slane %v5956, 4
      %v5959 = vrot.slane %v2128, 5
      %v5960 = vsel %vm5680, %v5958, %v5959
      %v5961 = vrot.slane %v5959, 4
      %v5962 = vrot.slane %v2129, 5
      %v5963 = vsel %vm5680, %v5961, %v5962
      %v5964 = vrot.slane %v5962, 4
      %v5965 = vrot.slane %v2130, 5
      %v5966 = vsel %vm5680, %v5964, %v5965
      %v5967 = vrot.slane %v5506, 5
      %v5968 = vrot.slane %v5967, 4
      %v5969 = vrot.slane %v2132, 5
      %v5970 = vsel %vm5680, %v5968, %v5969
      %v5971 = vrot.slane %v5969, 4
      %v5972 = vrot.slane %v2133, 5
      %v5973 = vsel %vm5680, %v5971, %v5972
      %v5974 = vrot.slane %v5972, 4
      %v5975 = vrot.slane %v2134, 5
      %v5976 = vsel %vm5680, %v5974, %v5975
      %v5977 = vrot.slane %v5975, 4
      %v5978 = vrot.slane %v2135, 5
      %v5979 = vsel %vm5680, %v5977, %v5978
      %v5980 = vrot.slane %v5507, 5
      %v5981 = vrot.slane %v5980, 4
      %v5982 = vrot.slane %v2137, 5
      %v5983 = vsel %vm5680, %v5981, %v5982
      %v5984 = vrot.slane %v5982, 4
      %v5985 = vrot.slane %v2138, 5
      %v5986 = vsel %vm5680, %v5984, %v5985
      %v5987 = vrot.slane %v5985, 4
      %v5988 = vrot.slane %v2139, 5
      %v5989 = vsel %vm5680, %v5987, %v5988
      %v5990 = vrot.slane %v5988, 4
      %v5991 = vrot.slane %v2140, 5
      %v5992 = vsel %vm5680, %v5990, %v5991
      %v5993 = vrot.slane %v5508, 5
      %v5994 = vrot.slane %v5993, 4
      %v5995 = vrot.slane %v2142, 5
      %v5996 = vsel %vm5680, %v5994, %v5995
      %v5997 = vrot.slane %v5995, 4
      %v5998 = vrot.slane %v2143, 5
      %v5999 = vsel %vm5680, %v5997, %v5998
      %v6000 = vrot.slane %v5998, 4
      %v6001 = vrot.slane %v2144, 5
      %v6002 = vsel %vm5680, %v6000, %v6001
      %v6003 = vrot.slane %v6001, 4
      %v6004 = vrot.slane %v2145, 5
      %v6005 = vsel %vm5680, %v6003, %v6004
      %v6006 = vrot.slane %v5509, 5
      %v6007 = vrot.slane %v6006, 4
      %v6008 = vrot.slane %v2147, 5
      %v6009 = vsel %vm5680, %v6007, %v6008
      %v6010 = vrot.slane %v6008, 4
      %v6011 = vrot.slane %v2148, 5
      %v6012 = vsel %vm5680, %v6010, %v6011
      %v6013 = vrot.slane %v6011, 4
      %v6014 = vrot.slane %v2149, 5
      %v6015 = vsel %vm5680, %v6013, %v6014
      %v6016 = vrot.slane %v6014, 4
      %v6017 = vrot.slane %v2150, 5
      %v6018 = vsel %vm5680, %v6016, %v6017
      %v6019 = vrot.slane %v5510, 5
      %v6020 = vrot.slane %v6019, 4
      %v6021 = vrot.slane %v2152, 5
      %v6022 = vsel %vm5680, %v6020, %v6021
      %v6023 = vrot.slane %v6021, 4
      %v6024 = vrot.slane %v2153, 5
      %v6025 = vsel %vm5680, %v6023, %v6024
      %v6026 = vrot.slane %v6024, 4
      %v6027 = vrot.slane %v2154, 5
      %v6028 = vsel %vm5680, %v6026, %v6027
      %v6029 = vrot.slane %v6027, 4
      %v6030 = vrot.slane %v2155, 5
      %v6031 = vsel %vm5680, %v6029, %v6030
      %v6032 = vrot.slane %v5511, 5
      %v6033 = vrot.slane %v6032, 4
      %v6034 = vrot.slane %v2157, 5
      %v6035 = vsel %vm5680, %v6033, %v6034
      %v6036 = vrot.slane %v6034, 4
      %v6037 = vrot.slane %v2158, 5
      %v6038 = vsel %vm5680, %v6036, %v6037
      %v6039 = vrot.slane %v6037, 4
      %v6040 = vrot.slane %v2159, 5
      %v6041 = vsel %vm5680, %v6039, %v6040
      %v6042 = vrot.slane %v6040, 4
      %v6043 = vrot.slane %v2160, 5
      %v6044 = vsel %vm5680, %v6042, %v6043
      %v6045 = vrot.slane %v5512, 5
      %v6046 = vrot.slane %v6045, 4
      %v6047 = vrot.slane %v2162, 5
      %v6048 = vsel %vm5680, %v6046, %v6047
      %v6049 = vrot.slane %v6047, 4
      %v6050 = vrot.slane %v2163, 5
      %v6051 = vsel %vm5680, %v6049, %v6050
      %v6052 = vrot.slane %v6050, 4
      %v6053 = vrot.slane %v2164, 5
      %v6054 = vsel %vm5680, %v6052, %v6053
      %v6055 = vrot.slane %v6053, 4
      %v6056 = vrot.slane %v2165, 5
      %v6057 = vsel %vm5680, %v6055, %v6056
      %v6058 = vrot.slane %v5513, 5
      %v6059 = vrot.slane %v6058, 4
      %v6060 = vrot.slane %v2167, 5
      %v6061 = vsel %vm5680, %v6059, %v6060
      %v6062 = vrot.slane %v6060, 4
      %v6063 = vrot.slane %v2168, 5
      %v6064 = vsel %vm5680, %v6062, %v6063
      %v6065 = vrot.slane %v6063, 4
      %v6066 = vrot.slane %v2169, 5
      %v6067 = vsel %vm5680, %v6065, %v6066
      %v6068 = vrot.slane %v6066, 4
      %v6069 = vrot.slane %v2170, 5
      %v6070 = vsel %vm5680, %v6068, %v6069
      %v6071 = vrot.slane %v5514, 5
      %v6072 = vrot.slane %v6071, 4
      %v6073 = vrot.slane %v2172, 5
      %v6074 = vsel %vm5680, %v6072, %v6073
      %v6075 = vrot.slane %v6073, 4
      %v6076 = vrot.slane %v2173, 5
      %v6077 = vsel %vm5680, %v6075, %v6076
      %v6078 = vrot.slane %v6076, 4
      %v6079 = vrot.slane %v2174, 5
      %v6080 = vsel %vm5680, %v6078, %v6079
      %v6081 = vrot.slane %v6079, 4
      %v6082 = vrot.slane %v2175, 5
      %v6083 = vsel %vm5680, %v6081, %v6082
      %v6084 = vrot.slane %v5515, 5
      %v6085 = vrot.slane %v6084, 4
      %v6086 = vrot.slane %v2177, 5
      %v6087 = vsel %vm5680, %v6085, %v6086
      %v6088 = vrot.slane %v6086, 4
      %v6089 = vrot.slane %v2178, 5
      %v6090 = vsel %vm5680, %v6088, %v6089
      %v6091 = vrot.slane %v6089, 4
      %v6092 = vrot.slane %v2179, 5
      %v6093 = vsel %vm5680, %v6091, %v6092
      %v6094 = vrot.slane %v6092, 4
      %v6095 = vrot.slane %v2180, 5
      %v6096 = vsel %vm5680, %v6094, %v6095
      %s6097 = scalar_lea.vmem %s1, 8
      %v6098 = vld [vmem:[%s6097] sm:$0xf]
      %v6099 = vunpack.c.l.b16 %v5684
      %v6100 = vunpack.c.l.b16 %v5687
      %v6101 = vunpack.c.l.b16 %v5690
      %v6102 = vunpack.c.l.b16 %v5693
      %v6103 = vunpack.c.l.b16 %v5697
      %v6104 = vunpack.c.l.b16 %v5700
      %v6105 = vunpack.c.l.b16 %v5703
      %v6106 = vunpack.c.l.b16 %v5706
      %v6107 = vunpack.c.l.b16 %v5710
      %v6108 = vunpack.c.l.b16 %v5713
      %v6109 = vunpack.c.l.b16 %v5716
      %v6110 = vunpack.c.l.b16 %v5719
      %v6111 = vunpack.c.l.b16 %v5723
      %v6112 = vunpack.c.l.b16 %v5726
      %v6113 = vunpack.c.l.b16 %v5729
      %v6114 = vunpack.c.l.b16 %v5732
      %v6115 = vunpack.c.l.b16 %v5736
      %v6116 = vunpack.c.l.b16 %v5739
      %v6117 = vunpack.c.l.b16 %v5742
      %v6118 = vunpack.c.l.b16 %v5745
      %v6119 = vunpack.c.l.b16 %v5749
      %v6120 = vunpack.c.l.b16 %v5752
      %v6121 = vunpack.c.l.b16 %v5755
      %v6122 = vunpack.c.l.b16 %v5758
      %v6123 = vunpack.c.l.b16 %v5762
      %v6124 = vunpack.c.l.b16 %v5765
      %v6125 = vunpack.c.l.b16 %v5768
      %v6126 = vunpack.c.l.b16 %v5771
      %v6127 = vunpack.c.l.b16 %v5775
      %v6128 = vunpack.c.l.b16 %v5778
      %v6129 = vunpack.c.l.b16 %v5781
      %v6130 = vunpack.c.l.b16 %v5784
      %v6131 = vunpack.c.l.b16 %v5788
      %v6132 = vunpack.c.l.b16 %v5791
      %v6133 = vunpack.c.l.b16 %v5794
      %v6134 = vunpack.c.l.b16 %v5797
      %v6135 = vunpack.c.l.b16 %v5801
      %v6136 = vunpack.c.l.b16 %v5804
      %v6137 = vunpack.c.l.b16 %v5807
      %v6138 = vunpack.c.l.b16 %v5810
      %v6139 = vunpack.c.l.b16 %v5814
      %v6140 = vunpack.c.l.b16 %v5817
      %v6141 = vunpack.c.l.b16 %v5820
      %v6142 = vunpack.c.l.b16 %v5823
      %v6143 = vunpack.c.l.b16 %v5827
      %v6144 = vunpack.c.l.b16 %v5830
      %v6145 = vunpack.c.l.b16 %v5833
      %v6146 = vunpack.c.l.b16 %v5836
      %v6147 = vunpack.c.l.b16 %v5840
      %v6148 = vunpack.c.l.b16 %v5843
      %v6149 = vunpack.c.l.b16 %v5846
      %v6150 = vunpack.c.l.b16 %v5849
      %v6151 = vunpack.c.l.b16 %v5853
      %v6152 = vunpack.c.l.b16 %v5856
      %v6153 = vunpack.c.l.b16 %v5859
      %v6154 = vunpack.c.l.b16 %v5862
      %v6155 = vunpack.c.l.b16 %v5866
      %v6156 = vunpack.c.l.b16 %v5869
      %v6157 = vunpack.c.l.b16 %v5872
      %v6158 = vunpack.c.l.b16 %v5875
      %v6159 = vunpack.c.l.b16 %v5879
      %v6160 = vunpack.c.l.b16 %v5882
      %v6161 = vunpack.c.l.b16 %v5885
      %v6162 = vunpack.c.l.b16 %v5888
      %v6163 = vunpack.c.l.b16 %v5892
      %v6164 = vunpack.c.l.b16 %v5895
      %v6165 = vunpack.c.l.b16 %v5898
      %v6166 = vunpack.c.l.b16 %v5901
      %v6167 = vunpack.c.l.b16 %v5905
      %v6168 = vunpack.c.l.b16 %v5908
      %v6169 = vunpack.c.l.b16 %v5911
      %v6170 = vunpack.c.l.b16 %v5914
      %v6171 = vunpack.c.l.b16 %v5918
      %v6172 = vunpack.c.l.b16 %v5921
      %v6173 = vunpack.c.l.b16 %v5924
      %v6174 = vunpack.c.l.b16 %v5927
      %v6175 = vunpack.c.l.b16 %v5931
      %v6176 = vunpack.c.l.b16 %v5934
      %v6177 = vunpack.c.l.b16 %v5937
      %v6178 = vunpack.c.l.b16 %v5940
      %v6179 = vunpack.c.l.b16 %v5944
      %v6180 = vunpack.c.l.b16 %v5947
      %v6181 = vunpack.c.l.b16 %v5950
      %v6182 = vunpack.c.l.b16 %v5953
      %v6183 = vunpack.c.l.b16 %v5957
      %v6184 = vunpack.c.l.b16 %v5960
      %v6185 = vunpack.c.l.b16 %v5963
      %v6186 = vunpack.c.l.b16 %v5966
      %v6187 = vunpack.c.l.b16 %v5970
      %v6188 = vunpack.c.l.b16 %v5973
      %v6189 = vunpack.c.l.b16 %v5976
      %v6190 = vunpack.c.l.b16 %v5979
      %v6191 = vunpack.c.l.b16 %v5983
      %v6192 = vunpack.c.l.b16 %v5986
      %v6193 = vunpack.c.l.b16 %v5989
      %v6194 = vunpack.c.l.b16 %v5992
      %v6195 = vunpack.c.l.b16 %v5996
      %v6196 = vunpack.c.l.b16 %v5999
      %v6197 = vunpack.c.l.b16 %v6002
      %v6198 = vunpack.c.l.b16 %v6005
      %v6199 = vunpack.c.l.b16 %v6009
      %v6200 = vunpack.c.l.b16 %v6012
      %v6201 = vunpack.c.l.b16 %v6015
      %v6202 = vunpack.c.l.b16 %v6018
      %v6203 = vunpack.c.l.b16 %v6022
      %v6204 = vunpack.c.l.b16 %v6025
      %v6205 = vunpack.c.l.b16 %v6028
      %v6206 = vunpack.c.l.b16 %v6031
      %v6207 = vunpack.c.l.b16 %v6035
      %v6208 = vunpack.c.l.b16 %v6038
      %v6209 = vunpack.c.l.b16 %v6041
      %v6210 = vunpack.c.l.b16 %v6044
      %v6211 = vunpack.c.l.b16 %v6048
      %v6212 = vunpack.c.l.b16 %v6051
      %v6213 = vunpack.c.l.b16 %v6054
      %v6214 = vunpack.c.l.b16 %v6057
      %v6215 = vunpack.c.l.b16 %v6061
      %v6216 = vunpack.c.l.b16 %v6064
      %v6217 = vunpack.c.l.b16 %v6067
      %v6218 = vunpack.c.l.b16 %v6070
      %v6219 = vunpack.c.l.b16 %v6074
      %v6220 = vunpack.c.l.b16 %v6077
      %v6221 = vunpack.c.l.b16 %v6080
      %v6222 = vunpack.c.l.b16 %v6083
      %v6223 = vunpack.c.l.b16 %v6087
      %v6224 = vunpack.c.l.b16 %v6090
      %v6225 = vunpack.c.l.b16 %v6093
      %v6226 = vunpack.c.l.b16 %v6096
      %v6227 = vpack.c.b16 %v6100, %v6099
      %v6228 = vpack.c.b16 %v6102, %v6101
      %v6229 = vpack.c.b16 %v6104, %v6103
      %v6230 = vpack.c.b16 %v6106, %v6105
      %v6231 = vpack.c.b16 %v6108, %v6107
      %v6232 = vpack.c.b16 %v6110, %v6109
      %v6233 = vpack.c.b16 %v6112, %v6111
      %v6234 = vpack.c.b16 %v6114, %v6113
      %v6235 = vpack.c.b16 %v6116, %v6115
      %v6236 = vpack.c.b16 %v6118, %v6117
      %v6237 = vpack.c.b16 %v6120, %v6119
      %v6238 = vpack.c.b16 %v6122, %v6121
      %v6239 = vpack.c.b16 %v6124, %v6123
      %v6240 = vpack.c.b16 %v6126, %v6125
      %v6241 = vpack.c.b16 %v6128, %v6127
      %v6242 = vpack.c.b16 %v6130, %v6129
      %v6243 = vpack.c.b16 %v6132, %v6131
      %v6244 = vpack.c.b16 %v6134, %v6133
      %v6245 = vpack.c.b16 %v6136, %v6135
      %v6246 = vpack.c.b16 %v6138, %v6137
      %v6247 = vpack.c.b16 %v6140, %v6139
      %v6248 = vpack.c.b16 %v6142, %v6141
      %v6249 = vpack.c.b16 %v6144, %v6143
      %v6250 = vpack.c.b16 %v6146, %v6145
      %v6251 = vpack.c.b16 %v6148, %v6147
      %v6252 = vpack.c.b16 %v6150, %v6149
      %v6253 = vpack.c.b16 %v6152, %v6151
      %v6254 = vpack.c.b16 %v6154, %v6153
      %v6255 = vpack.c.b16 %v6156, %v6155
      %v6256 = vpack.c.b16 %v6158, %v6157
      %v6257 = vpack.c.b16 %v6160, %v6159
      %v6258 = vpack.c.b16 %v6162, %v6161
      %v6259 = vpack.c.b16 %v6164, %v6163
      %v6260 = vpack.c.b16 %v6166, %v6165
      %v6261 = vpack.c.b16 %v6168, %v6167
      %v6262 = vpack.c.b16 %v6170, %v6169
      %v6263 = vpack.c.b16 %v6172, %v6171
      %v6264 = vpack.c.b16 %v6174, %v6173
      %v6265 = vpack.c.b16 %v6176, %v6175
      %v6266 = vpack.c.b16 %v6178, %v6177
      %v6267 = vpack.c.b16 %v6180, %v6179
      %v6268 = vpack.c.b16 %v6182, %v6181
      %v6269 = vpack.c.b16 %v6184, %v6183
      %v6270 = vpack.c.b16 %v6186, %v6185
      %v6271 = vpack.c.b16 %v6188, %v6187
      %v6272 = vpack.c.b16 %v6190, %v6189
      %v6273 = vpack.c.b16 %v6192, %v6191
      %v6274 = vpack.c.b16 %v6194, %v6193
      %v6275 = vpack.c.b16 %v6196, %v6195
      %v6276 = vpack.c.b16 %v6198, %v6197
      %v6277 = vpack.c.b16 %v6200, %v6199
      %v6278 = vpack.c.b16 %v6202, %v6201
      %v6279 = vpack.c.b16 %v6204, %v6203
      %v6280 = vpack.c.b16 %v6206, %v6205
      %v6281 = vpack.c.b16 %v6208, %v6207
      %v6282 = vpack.c.b16 %v6210, %v6209
      %v6283 = vpack.c.b16 %v6212, %v6211
      %v6284 = vpack.c.b16 %v6214, %v6213
      %v6285 = vpack.c.b16 %v6216, %v6215
      %v6286 = vpack.c.b16 %v6218, %v6217
      %v6287 = vpack.c.b16 %v6220, %v6219
      %v6288 = vpack.c.b16 %v6222, %v6221
      %v6289 = vpack.c.b16 %v6224, %v6223
      %v6290 = vpack.c.b16 %v6226, %v6225
      %v6292 = vsel %vm669, %v6227, 0
      %v6295 = vsel %vm669, %v6228, 0
      %v6298 = vsel %vm669, %v6229, 0
      %v6301 = vsel %vm669, %v6230, 0
      %v6304 = vsel %vm669, %v6231, 0
      %v6307 = vsel %vm669, %v6232, 0
      %v6310 = vsel %vm669, %v6233, 0
      %v6313 = vsel %vm669, %v6234, 0
      %v6316 = vsel %vm669, %v6235, 0
      %v6319 = vsel %vm669, %v6236, 0
      %v6322 = vsel %vm669, %v6237, 0
      %v6325 = vsel %vm669, %v6238, 0
      %v6328 = vsel %vm669, %v6239, 0
      %v6331 = vsel %vm669, %v6240, 0
      %v6334 = vsel %vm669, %v6241, 0
      %v6337 = vsel %vm669, %v6242, 0
      %v6340 = vsel %vm669, %v6243, 0
      %v6343 = vsel %vm669, %v6244, 0
      %v6346 = vsel %vm669, %v6245, 0
      %v6349 = vsel %vm669, %v6246, 0
      %v6352 = vsel %vm669, %v6247, 0
      %v6355 = vsel %vm669, %v6248, 0
      %v6358 = vsel %vm669, %v6249, 0
      %v6361 = vsel %vm669, %v6250, 0
      %v6364 = vsel %vm669, %v6251, 0
      %v6367 = vsel %vm669, %v6252, 0
      %v6370 = vsel %vm669, %v6253, 0
      %v6373 = vsel %vm669, %v6254, 0
      %v6376 = vsel %vm669, %v6255, 0
      %v6379 = vsel %vm669, %v6256, 0
      %v6382 = vsel %vm669, %v6257, 0
      %v6385 = vsel %vm669, %v6258, 0
      %v6388 = vsel %vm669, %v6259, 0
      %v6391 = vsel %vm669, %v6260, 0
      %v6394 = vsel %vm669, %v6261, 0
      %v6397 = vsel %vm669, %v6262, 0
      %v6400 = vsel %vm669, %v6263, 0
      %v6403 = vsel %vm669, %v6264, 0
      %v6406 = vsel %vm669, %v6265, 0
      %v6409 = vsel %vm669, %v6266, 0
      %v6412 = vsel %vm669, %v6267, 0
      %v6415 = vsel %vm669, %v6268, 0
      %v6418 = vsel %vm669, %v6269, 0
      %v6421 = vsel %vm669, %v6270, 0
      %v6424 = vsel %vm669, %v6271, 0
      %v6427 = vsel %vm669, %v6272, 0
      %v6430 = vsel %vm669, %v6273, 0
      %v6433 = vsel %vm669, %v6274, 0
      %v6436 = vsel %vm669, %v6275, 0
      %v6439 = vsel %vm669, %v6276, 0
      %v6442 = vsel %vm669, %v6277, 0
      %v6445 = vsel %vm669, %v6278, 0
      %v6448 = vsel %vm669, %v6279, 0
      %v6451 = vsel %vm669, %v6280, 0
      %v6454 = vsel %vm669, %v6281, 0
      %v6457 = vsel %vm669, %v6282, 0
      %v6460 = vsel %vm669, %v6283, 0
      %v6463 = vsel %vm669, %v6284, 0
      %v6466 = vsel %vm669, %v6285, 0
      %v6469 = vsel %vm669, %v6286, 0
      %v6472 = vsel %vm669, %v6287, 0
      %v6475 = vsel %vm669, %v6288, 0
      %v6478 = vsel %vm669, %v6289, 0
      %v6481 = vsel %vm669, %v6290, 0
      %v6484 = vsel %vm862, %v6098, 0
      %6486 = vmatpush.bf16.msra.mxu0 0
      %6487 = vmatpush.bf16.msra.mxu0 0
      %6488 = vmatpush.bf16.msra.mxu0 0
      %6489 = vmatpush.bf16.msra.mxu0 0
      %6490 = vmatpush.bf16.msra.mxu0 0
      %6491 = vmatpush.bf16.msra.mxu0 0
      %6492 = vmatpush.bf16.msra.mxu0 0
      %6493 = vmatpush.bf16.msra.mxu0 %v6484
      %6494 = vmatmul.bf16.gmra.mxu0 %v6292
      %v6495 = vpop.f32.mrf.mxu0
      %v6496 = vadd.f32 0.0, %v6495
      %v6497 = vpop.f32.mrf.mxu0
      %v6498 = vadd.f32 0.0, %v6497
      %6499 = vmatmul.bf16.gmra.mxu0 %v6295
      %v6500 = vpop.f32.mrf.mxu0
      %v6501 = vadd.f32 0.0, %v6500
      %v6502 = vpop.f32.mrf.mxu0
      %v6503 = vadd.f32 0.0, %v6502
      %6504 = vmatmul.bf16.gmra.mxu0 %v6298
      %v6505 = vpop.f32.mrf.mxu0
      %v6506 = vadd.f32 0.0, %v6505
      %v6507 = vpop.f32.mrf.mxu0
      %v6508 = vadd.f32 0.0, %v6507
      %6509 = vmatmul.bf16.gmra.mxu0 %v6301
      %v6510 = vpop.f32.mrf.mxu0
      %v6511 = vadd.f32 0.0, %v6510
      %v6512 = vpop.f32.mrf.mxu0
      %v6513 = vadd.f32 0.0, %v6512
      %6514 = vmatmul.bf16.gmra.mxu0 %v6304
      %v6515 = vpop.f32.mrf.mxu0
      %v6516 = vadd.f32 0.0, %v6515
      %v6517 = vpop.f32.mrf.mxu0
      %v6518 = vadd.f32 0.0, %v6517
      %6519 = vmatmul.bf16.gmra.mxu0 %v6307
      %v6520 = vpop.f32.mrf.mxu0
      %v6521 = vadd.f32 0.0, %v6520
      %v6522 = vpop.f32.mrf.mxu0
      %v6523 = vadd.f32 0.0, %v6522
      %6524 = vmatmul.bf16.gmra.mxu0 %v6310
      %v6525 = vpop.f32.mrf.mxu0
      %v6526 = vadd.f32 0.0, %v6525
      %v6527 = vpop.f32.mrf.mxu0
      %v6528 = vadd.f32 0.0, %v6527
      %6529 = vmatmul.bf16.gmra.mxu0 %v6313
      %v6530 = vpop.f32.mrf.mxu0
      %v6531 = vadd.f32 0.0, %v6530
      %v6532 = vpop.f32.mrf.mxu0
      %v6533 = vadd.f32 0.0, %v6532
      %6534 = vmatmul.bf16.gmra.mxu0 %v6316
      %v6535 = vpop.f32.mrf.mxu0
      %v6536 = vadd.f32 0.0, %v6535
      %v6537 = vpop.f32.mrf.mxu0
      %v6538 = vadd.f32 0.0, %v6537
      %6539 = vmatmul.bf16.gmra.mxu0 %v6319
      %v6540 = vpop.f32.mrf.mxu0
      %v6541 = vadd.f32 0.0, %v6540
      %v6542 = vpop.f32.mrf.mxu0
      %v6543 = vadd.f32 0.0, %v6542
      %6544 = vmatmul.bf16.gmra.mxu0 %v6322
      %v6545 = vpop.f32.mrf.mxu0
      %v6546 = vadd.f32 0.0, %v6545
      %v6547 = vpop.f32.mrf.mxu0
      %v6548 = vadd.f32 0.0, %v6547
      %6549 = vmatmul.bf16.gmra.mxu0 %v6325
      %v6550 = vpop.f32.mrf.mxu0
      %v6551 = vadd.f32 0.0, %v6550
      %v6552 = vpop.f32.mrf.mxu0
      %v6553 = vadd.f32 0.0, %v6552
      %6554 = vmatmul.bf16.gmra.mxu0 %v6328
      %v6555 = vpop.f32.mrf.mxu0
      %v6556 = vadd.f32 0.0, %v6555
      %v6557 = vpop.f32.mrf.mxu0
      %v6558 = vadd.f32 0.0, %v6557
      %6559 = vmatmul.bf16.gmra.mxu0 %v6331
      %v6560 = vpop.f32.mrf.mxu0
      %v6561 = vadd.f32 0.0, %v6560
      %v6562 = vpop.f32.mrf.mxu0
      %v6563 = vadd.f32 0.0, %v6562
      %6564 = vmatmul.bf16.gmra.mxu0 %v6334
      %v6565 = vpop.f32.mrf.mxu0
      %v6566 = vadd.f32 0.0, %v6565
      %v6567 = vpop.f32.mrf.mxu0
      %v6568 = vadd.f32 0.0, %v6567
      %6569 = vmatmul.bf16.gmra.mxu0 %v6337
      %v6570 = vpop.f32.mrf.mxu0
      %v6571 = vadd.f32 0.0, %v6570
      %v6572 = vpop.f32.mrf.mxu0
      %v6573 = vadd.f32 0.0, %v6572
      %6574 = vmatmul.bf16.gmra.mxu0 %v6340
      %v6575 = vpop.f32.mrf.mxu0
      %v6576 = vadd.f32 0.0, %v6575
      %v6577 = vpop.f32.mrf.mxu0
      %v6578 = vadd.f32 0.0, %v6577
      %6579 = vmatmul.bf16.gmra.mxu0 %v6343
      %v6580 = vpop.f32.mrf.mxu0
      %v6581 = vadd.f32 0.0, %v6580
      %v6582 = vpop.f32.mrf.mxu0
      %v6583 = vadd.f32 0.0, %v6582
      %6584 = vmatmul.bf16.gmra.mxu0 %v6346
      %v6585 = vpop.f32.mrf.mxu0
      %v6586 = vadd.f32 0.0, %v6585
      %v6587 = vpop.f32.mrf.mxu0
      %v6588 = vadd.f32 0.0, %v6587
      %6589 = vmatmul.bf16.gmra.mxu0 %v6349
      %v6590 = vpop.f32.mrf.mxu0
      %v6591 = vadd.f32 0.0, %v6590
      %v6592 = vpop.f32.mrf.mxu0
      %v6593 = vadd.f32 0.0, %v6592
      %6594 = vmatmul.bf16.gmra.mxu0 %v6352
      %v6595 = vpop.f32.mrf.mxu0
      %v6596 = vadd.f32 0.0, %v6595
      %v6597 = vpop.f32.mrf.mxu0
      %v6598 = vadd.f32 0.0, %v6597
      %6599 = vmatmul.bf16.gmra.mxu0 %v6355
      %v6600 = vpop.f32.mrf.mxu0
      %v6601 = vadd.f32 0.0, %v6600
      %v6602 = vpop.f32.mrf.mxu0
      %v6603 = vadd.f32 0.0, %v6602
      %6604 = vmatmul.bf16.gmra.mxu0 %v6358
      %v6605 = vpop.f32.mrf.mxu0
      %v6606 = vadd.f32 0.0, %v6605
      %v6607 = vpop.f32.mrf.mxu0
      %v6608 = vadd.f32 0.0, %v6607
      %6609 = vmatmul.bf16.gmra.mxu0 %v6361
      %v6610 = vpop.f32.mrf.mxu0
      %v6611 = vadd.f32 0.0, %v6610
      %v6612 = vpop.f32.mrf.mxu0
      %v6613 = vadd.f32 0.0, %v6612
      %6614 = vmatmul.bf16.gmra.mxu0 %v6364
      %v6615 = vpop.f32.mrf.mxu0
      %v6616 = vadd.f32 0.0, %v6615
      %v6617 = vpop.f32.mrf.mxu0
      %v6618 = vadd.f32 0.0, %v6617
      %6619 = vmatmul.bf16.gmra.mxu0 %v6367
      %v6620 = vpop.f32.mrf.mxu0
      %v6621 = vadd.f32 0.0, %v6620
      %v6622 = vpop.f32.mrf.mxu0
      %v6623 = vadd.f32 0.0, %v6622
      %6624 = vmatmul.bf16.gmra.mxu0 %v6370
      %v6625 = vpop.f32.mrf.mxu0
      %v6626 = vadd.f32 0.0, %v6625
      %v6627 = vpop.f32.mrf.mxu0
      %v6628 = vadd.f32 0.0, %v6627
      %6629 = vmatmul.bf16.gmra.mxu0 %v6373
      %v6630 = vpop.f32.mrf.mxu0
      %v6631 = vadd.f32 0.0, %v6630
      %v6632 = vpop.f32.mrf.mxu0
      %v6633 = vadd.f32 0.0, %v6632
      %6634 = vmatmul.bf16.gmra.mxu0 %v6376
      %v6635 = vpop.f32.mrf.mxu0
      %v6636 = vadd.f32 0.0, %v6635
      %v6637 = vpop.f32.mrf.mxu0
      %v6638 = vadd.f32 0.0, %v6637
      %6639 = vmatmul.bf16.gmra.mxu0 %v6379
      %v6640 = vpop.f32.mrf.mxu0
      %v6641 = vadd.f32 0.0, %v6640
      %v6642 = vpop.f32.mrf.mxu0
      %v6643 = vadd.f32 0.0, %v6642
      %6644 = vmatmul.bf16.gmra.mxu0 %v6382
      %v6645 = vpop.f32.mrf.mxu0
      %v6646 = vadd.f32 0.0, %v6645
      %v6647 = vpop.f32.mrf.mxu0
      %v6648 = vadd.f32 0.0, %v6647
      %6649 = vmatmul.bf16.gmra.mxu0 %v6385
      %v6650 = vpop.f32.mrf.mxu0
      %v6651 = vadd.f32 0.0, %v6650
      %v6652 = vpop.f32.mrf.mxu0
      %v6653 = vadd.f32 0.0, %v6652
      %6654 = vmatmul.bf16.gmra.mxu0 %v6388
      %v6655 = vpop.f32.mrf.mxu0
      %v6656 = vadd.f32 0.0, %v6655
      %v6657 = vpop.f32.mrf.mxu0
      %v6658 = vadd.f32 0.0, %v6657
      %6659 = vmatmul.bf16.gmra.mxu0 %v6391
      %v6660 = vpop.f32.mrf.mxu0
      %v6661 = vadd.f32 0.0, %v6660
      %v6662 = vpop.f32.mrf.mxu0
      %v6663 = vadd.f32 0.0, %v6662
      %6664 = vmatmul.bf16.gmra.mxu0 %v6394
      %v6665 = vpop.f32.mrf.mxu0
      %v6666 = vadd.f32 0.0, %v6665
      %v6667 = vpop.f32.mrf.mxu0
      %v6668 = vadd.f32 0.0, %v6667
      %6669 = vmatmul.bf16.gmra.mxu0 %v6397
      %v6670 = vpop.f32.mrf.mxu0
      %v6671 = vadd.f32 0.0, %v6670
      %v6672 = vpop.f32.mrf.mxu0
      %v6673 = vadd.f32 0.0, %v6672
      %6674 = vmatmul.bf16.gmra.mxu0 %v6400
      %v6675 = vpop.f32.mrf.mxu0
      %v6676 = vadd.f32 0.0, %v6675
      %v6677 = vpop.f32.mrf.mxu0
      %v6678 = vadd.f32 0.0, %v6677
      %6679 = vmatmul.bf16.gmra.mxu0 %v6403
      %v6680 = vpop.f32.mrf.mxu0
      %v6681 = vadd.f32 0.0, %v6680
      %v6682 = vpop.f32.mrf.mxu0
      %v6683 = vadd.f32 0.0, %v6682
      %6684 = vmatmul.bf16.gmra.mxu0 %v6406
      %v6685 = vpop.f32.mrf.mxu0
      %v6686 = vadd.f32 0.0, %v6685
      %v6687 = vpop.f32.mrf.mxu0
      %v6688 = vadd.f32 0.0, %v6687
      %6689 = vmatmul.bf16.gmra.mxu0 %v6409
      %v6690 = vpop.f32.mrf.mxu0
      %v6691 = vadd.f32 0.0, %v6690
      %v6692 = vpop.f32.mrf.mxu0
      %v6693 = vadd.f32 0.0, %v6692
      %6694 = vmatmul.bf16.gmra.mxu0 %v6412
      %v6695 = vpop.f32.mrf.mxu0
      %v6696 = vadd.f32 0.0, %v6695
      %v6697 = vpop.f32.mrf.mxu0
      %v6698 = vadd.f32 0.0, %v6697
      %6699 = vmatmul.bf16.gmra.mxu0 %v6415
      %v6700 = vpop.f32.mrf.mxu0
      %v6701 = vadd.f32 0.0, %v6700
      %v6702 = vpop.f32.mrf.mxu0
      %v6703 = vadd.f32 0.0, %v6702
      %6704 = vmatmul.bf16.gmra.mxu0 %v6418
      %v6705 = vpop.f32.mrf.mxu0
      %v6706 = vadd.f32 0.0, %v6705
      %v6707 = vpop.f32.mrf.mxu0
      %v6708 = vadd.f32 0.0, %v6707
      %6709 = vmatmul.bf16.gmra.mxu0 %v6421
      %v6710 = vpop.f32.mrf.mxu0
      %v6711 = vadd.f32 0.0, %v6710
      %v6712 = vpop.f32.mrf.mxu0
      %v6713 = vadd.f32 0.0, %v6712
      %6714 = vmatmul.bf16.gmra.mxu0 %v6424
      %v6715 = vpop.f32.mrf.mxu0
      %v6716 = vadd.f32 0.0, %v6715
      %v6717 = vpop.f32.mrf.mxu0
      %v6718 = vadd.f32 0.0, %v6717
      %6719 = vmatmul.bf16.gmra.mxu0 %v6427
      %v6720 = vpop.f32.mrf.mxu0
      %v6721 = vadd.f32 0.0, %v6720
      %v6722 = vpop.f32.mrf.mxu0
      %v6723 = vadd.f32 0.0, %v6722
      %6724 = vmatmul.bf16.gmra.mxu0 %v6430
      %v6725 = vpop.f32.mrf.mxu0
      %v6726 = vadd.f32 0.0, %v6725
      %v6727 = vpop.f32.mrf.mxu0
      %v6728 = vadd.f32 0.0, %v6727
      %6729 = vmatmul.bf16.gmra.mxu0 %v6433
      %v6730 = vpop.f32.mrf.mxu0
      %v6731 = vadd.f32 0.0, %v6730
      %v6732 = vpop.f32.mrf.mxu0
      %v6733 = vadd.f32 0.0, %v6732
      %6734 = vmatmul.bf16.gmra.mxu0 %v6436
      %v6735 = vpop.f32.mrf.mxu0
      %v6736 = vadd.f32 0.0, %v6735
      %v6737 = vpop.f32.mrf.mxu0
      %v6738 = vadd.f32 0.0, %v6737
      %6739 = vmatmul.bf16.gmra.mxu0 %v6439
      %v6740 = vpop.f32.mrf.mxu0
      %v6741 = vadd.f32 0.0, %v6740
      %v6742 = vpop.f32.mrf.mxu0
      %v6743 = vadd.f32 0.0, %v6742
      %6744 = vmatmul.bf16.gmra.mxu0 %v6442
      %v6745 = vpop.f32.mrf.mxu0
      %v6746 = vadd.f32 0.0, %v6745
      %v6747 = vpop.f32.mrf.mxu0
      %v6748 = vadd.f32 0.0, %v6747
      %6749 = vmatmul.bf16.gmra.mxu0 %v6445
      %v6750 = vpop.f32.mrf.mxu0
      %v6751 = vadd.f32 0.0, %v6750
      %v6752 = vpop.f32.mrf.mxu0
      %v6753 = vadd.f32 0.0, %v6752
      %6754 = vmatmul.bf16.gmra.mxu0 %v6448
      %v6755 = vpop.f32.mrf.mxu0
      %v6756 = vadd.f32 0.0, %v6755
      %v6757 = vpop.f32.mrf.mxu0
      %v6758 = vadd.f32 0.0, %v6757
      %6759 = vmatmul.bf16.gmra.mxu0 %v6451
      %v6760 = vpop.f32.mrf.mxu0
      %v6761 = vadd.f32 0.0, %v6760
      %v6762 = vpop.f32.mrf.mxu0
      %v6763 = vadd.f32 0.0, %v6762
      %6764 = vmatmul.bf16.gmra.mxu0 %v6454
      %v6765 = vpop.f32.mrf.mxu0
      %v6766 = vadd.f32 0.0, %v6765
      %v6767 = vpop.f32.mrf.mxu0
      %v6768 = vadd.f32 0.0, %v6767
      %6769 = vmatmul.bf16.gmra.mxu0 %v6457
      %v6770 = vpop.f32.mrf.mxu0
      %v6771 = vadd.f32 0.0, %v6770
      %v6772 = vpop.f32.mrf.mxu0
      %v6773 = vadd.f32 0.0, %v6772
      %6774 = vmatmul.bf16.gmra.mxu0 %v6460
      %v6775 = vpop.f32.mrf.mxu0
      %v6776 = vadd.f32 0.0, %v6775
      %v6777 = vpop.f32.mrf.mxu0
      %v6778 = vadd.f32 0.0, %v6777
      %6779 = vmatmul.bf16.gmra.mxu0 %v6463
      %v6780 = vpop.f32.mrf.mxu0
      %v6781 = vadd.f32 0.0, %v6780
      %v6782 = vpop.f32.mrf.mxu0
      %v6783 = vadd.f32 0.0, %v6782
      %6784 = vmatmul.bf16.gmra.mxu0 %v6466
      %v6785 = vpop.f32.mrf.mxu0
      %v6786 = vadd.f32 0.0, %v6785
      %v6787 = vpop.f32.mrf.mxu0
      %v6788 = vadd.f32 0.0, %v6787
      %6789 = vmatmul.bf16.gmra.mxu0 %v6469
      %v6790 = vpop.f32.mrf.mxu0
      %v6791 = vadd.f32 0.0, %v6790
      %v6792 = vpop.f32.mrf.mxu0
      %v6793 = vadd.f32 0.0, %v6792
      %6794 = vmatmul.bf16.gmra.mxu0 %v6472
      %v6795 = vpop.f32.mrf.mxu0
      %v6796 = vadd.f32 0.0, %v6795
      %v6797 = vpop.f32.mrf.mxu0
      %v6798 = vadd.f32 0.0, %v6797
      %6799 = vmatmul.bf16.gmra.mxu0 %v6475
      %v6800 = vpop.f32.mrf.mxu0
      %v6801 = vadd.f32 0.0, %v6800
      %v6802 = vpop.f32.mrf.mxu0
      %v6803 = vadd.f32 0.0, %v6802
      %6804 = vmatmul.bf16.gmra.mxu0 %v6478
      %v6805 = vpop.f32.mrf.mxu0
      %v6806 = vadd.f32 0.0, %v6805
      %v6807 = vpop.f32.mrf.mxu0
      %v6808 = vadd.f32 0.0, %v6807
      %6809 = vmatmul.bf16.gmra.mxu0 %v6481
      %v6810 = vpop.f32.mrf.mxu0
      %v6811 = vadd.f32 0.0, %v6810
      %v6812 = vpop.f32.mrf.mxu0
      %v6813 = vadd.f32 0.0, %v6812
      %6814 = vdwg.mxu0
      %v6815 = vadd.f32 %v5356, %v6496
      %v6816 = vadd.f32 %v5357, %v6498
      %v6817 = vadd.f32 %v5358, %v6501
      %v6818 = vadd.f32 %v5359, %v6503
      %v6819 = vadd.f32 %v5360, %v6506
      %v6820 = vadd.f32 %v5361, %v6508
      %v6821 = vadd.f32 %v5362, %v6511
      %v6822 = vadd.f32 %v5363, %v6513
      %v6823 = vadd.f32 %v5364, %v6516
      %v6824 = vadd.f32 %v5365, %v6518
      %v6825 = vadd.f32 %v5366, %v6521
      %v6826 = vadd.f32 %v5367, %v6523
      %v6827 = vadd.f32 %v5368, %v6526
      %v6828 = vadd.f32 %v5369, %v6528
      %v6829 = vadd.f32 %v5370, %v6531
      %v6830 = vadd.f32 %v5371, %v6533
      %v6831 = vadd.f32 %v5372, %v6536
      %v6832 = vadd.f32 %v5373, %v6538
      %v6833 = vadd.f32 %v5374, %v6541
      %v6834 = vadd.f32 %v5375, %v6543
      %v6835 = vadd.f32 %v5376, %v6546
      %v6836 = vadd.f32 %v5377, %v6548
      %v6837 = vadd.f32 %v5378, %v6551
      %v6838 = vadd.f32 %v5379, %v6553
      %v6839 = vadd.f32 %v5380, %v6556
      %v6840 = vadd.f32 %v5381, %v6558
      %v6841 = vadd.f32 %v5382, %v6561
      %v6842 = vadd.f32 %v5383, %v6563
      %v6843 = vadd.f32 %v5384, %v6566
      %v6844 = vadd.f32 %v5385, %v6568
      %v6845 = vadd.f32 %v5386, %v6571
      %v6846 = vadd.f32 %v5387, %v6573
      %v6847 = vadd.f32 %v5388, %v6576
      %v6848 = vadd.f32 %v5389, %v6578
      %v6849 = vadd.f32 %v5390, %v6581
      %v6850 = vadd.f32 %v5391, %v6583
      %v6851 = vadd.f32 %v5392, %v6586
      %v6852 = vadd.f32 %v5393, %v6588
      %v6853 = vadd.f32 %v5394, %v6591
      %v6854 = vadd.f32 %v5395, %v6593
      %v6855 = vadd.f32 %v5396, %v6596
      %v6856 = vadd.f32 %v5397, %v6598
      %v6857 = vadd.f32 %v5398, %v6601
      %v6858 = vadd.f32 %v5399, %v6603
      %v6859 = vadd.f32 %v5400, %v6606
      %v6860 = vadd.f32 %v5401, %v6608
      %v6861 = vadd.f32 %v5402, %v6611
      %v6862 = vadd.f32 %v5403, %v6613
      %v6863 = vadd.f32 %v5404, %v6616
      %v6864 = vadd.f32 %v5405, %v6618
      %v6865 = vadd.f32 %v5406, %v6621
      %v6866 = vadd.f32 %v5407, %v6623
      %v6867 = vadd.f32 %v5408, %v6626
      %v6868 = vadd.f32 %v5409, %v6628
      %v6869 = vadd.f32 %v5410, %v6631
      %v6870 = vadd.f32 %v5411, %v6633
      %v6871 = vadd.f32 %v5412, %v6636
      %v6872 = vadd.f32 %v5413, %v6638
      %v6873 = vadd.f32 %v5414, %v6641
      %v6874 = vadd.f32 %v5415, %v6643
      %v6875 = vadd.f32 %v5416, %v6646
      %v6876 = vadd.f32 %v5417, %v6648
      %v6877 = vadd.f32 %v5418, %v6651
      %v6878 = vadd.f32 %v5419, %v6653
      %v6879 = vadd.f32 %v5420, %v6656
      %v6880 = vadd.f32 %v5421, %v6658
      %v6881 = vadd.f32 %v5422, %v6661
      %v6882 = vadd.f32 %v5423, %v6663
      %v6883 = vadd.f32 %v5424, %v6666
      %v6884 = vadd.f32 %v5425, %v6668
      %v6885 = vadd.f32 %v5426, %v6671
      %v6886 = vadd.f32 %v5427, %v6673
      %v6887 = vadd.f32 %v5428, %v6676
      %v6888 = vadd.f32 %v5429, %v6678
      %v6889 = vadd.f32 %v5430, %v6681
      %v6890 = vadd.f32 %v5431, %v6683
      %v6891 = vadd.f32 %v5432, %v6686
      %v6892 = vadd.f32 %v5433, %v6688
      %v6893 = vadd.f32 %v5434, %v6691
      %v6894 = vadd.f32 %v5435, %v6693
      %v6895 = vadd.f32 %v5436, %v6696
      %v6896 = vadd.f32 %v5437, %v6698
      %v6897 = vadd.f32 %v5438, %v6701
      %v6898 = vadd.f32 %v5439, %v6703
      %v6899 = vadd.f32 %v5440, %v6706
      %v6900 = vadd.f32 %v5441, %v6708
      %v6901 = vadd.f32 %v5442, %v6711
      %v6902 = vadd.f32 %v5443, %v6713
      %v6903 = vadd.f32 %v5444, %v6716
      %v6904 = vadd.f32 %v5445, %v6718
      %v6905 = vadd.f32 %v5446, %v6721
      %v6906 = vadd.f32 %v5447, %v6723
      %v6907 = vadd.f32 %v5448, %v6726
      %v6908 = vadd.f32 %v5449, %v6728
      %v6909 = vadd.f32 %v5450, %v6731
      %v6910 = vadd.f32 %v5451, %v6733
      %v6911 = vadd.f32 %v5452, %v6736
      %v6912 = vadd.f32 %v5453, %v6738
      %v6913 = vadd.f32 %v5454, %v6741
      %v6914 = vadd.f32 %v5455, %v6743
      %v6915 = vadd.f32 %v5456, %v6746
      %v6916 = vadd.f32 %v5457, %v6748
      %v6917 = vadd.f32 %v5458, %v6751
      %v6918 = vadd.f32 %v5459, %v6753
      %v6919 = vadd.f32 %v5460, %v6756
      %v6920 = vadd.f32 %v5461, %v6758
      %v6921 = vadd.f32 %v5462, %v6761
      %v6922 = vadd.f32 %v5463, %v6763
      %v6923 = vadd.f32 %v5464, %v6766
      %v6924 = vadd.f32 %v5465, %v6768
      %v6925 = vadd.f32 %v5466, %v6771
      %v6926 = vadd.f32 %v5467, %v6773
      %v6927 = vadd.f32 %v5468, %v6776
      %v6928 = vadd.f32 %v5469, %v6778
      %v6929 = vadd.f32 %v5470, %v6781
      %v6930 = vadd.f32 %v5471, %v6783
      %v6931 = vadd.f32 %v5472, %v6786
      %v6932 = vadd.f32 %v5473, %v6788
      %v6933 = vadd.f32 %v5474, %v6791
      %v6934 = vadd.f32 %v5475, %v6793
      %v6935 = vadd.f32 %v5476, %v6796
      %v6936 = vadd.f32 %v5477, %v6798
      %v6937 = vadd.f32 %v5478, %v6801
      %v6938 = vadd.f32 %v5479, %v6803
      %v6939 = vadd.f32 %v5480, %v6806
      %v6940 = vadd.f32 %v5481, %v6808
      %v6941 = vadd.f32 %v5482, %v6811
      %v6942 = vadd.f32 %v5483, %v6813
      %v6948 = vrot.slane %v5516, 5
      %v6949 = vrot.slane %v6948, 4
      %v6950 = vrot.slane %v2182, 5
      %v6951 = vsel %vm5680, %v6949, %v6950
      %v6952 = vrot.slane %v6950, 4
      %v6953 = vrot.slane %v2183, 5
      %v6954 = vsel %vm5680, %v6952, %v6953
      %v6955 = vrot.slane %v6953, 4
      %v6956 = vrot.slane %v2184, 5
      %v6957 = vsel %vm5680, %v6955, %v6956
      %v6958 = vrot.slane %v6956, 4
      %v6959 = vrot.slane %v2185, 5
      %v6960 = vsel %vm5680, %v6958, %v6959
      %s6961 = scalar_lea.vmem %s1, 20
      %v6962 = vld [vmem:[%s6961] sm:$0xf]
      %v6963 = vunpack.c.l.b16 %v6951
      %v6964 = vunpack.c.l.b16 %v6954
      %v6965 = vunpack.c.l.b16 %v6957
      %v6966 = vunpack.c.l.b16 %v6960
      %v6967 = vpack.c.b16 %v6964, %v6963
      %v6968 = vpack.c.b16 %v6966, %v6965
      %v6970 = vsel %vm669, %v6967, 0
      %v6973 = vsel %vm669, %v6968, 0
      %v6976 = vsel %vm862, %v6962, 0
      %6978 = vmatpush.bf16.msra.mxu0 0
      %6979 = vmatpush.bf16.msra.mxu0 0
      %6980 = vmatpush.bf16.msra.mxu0 0
      %6981 = vmatpush.bf16.msra.mxu0 0
      %6982 = vmatpush.bf16.msra.mxu0 0
      %6983 = vmatpush.bf16.msra.mxu0 0
      %6984 = vmatpush.bf16.msra.mxu0 0
      %6985 = vmatpush.bf16.msra.mxu0 %v6976
      %6986 = vmatmul.bf16.gmra.mxu0 %v6298
      %v6987 = vpop.f32.mrf.mxu0
      %v6988 = vadd.f32 0.0, %v6987
      %v6989 = vpop.f32.mrf.mxu0
      %v6990 = vadd.f32 0.0, %v6989
      %6991 = vmatmul.bf16.gmra.mxu0 %v6301
      %v6992 = vpop.f32.mrf.mxu0
      %v6993 = vadd.f32 0.0, %v6992
      %v6994 = vpop.f32.mrf.mxu0
      %v6995 = vadd.f32 0.0, %v6994
      %6996 = vmatmul.bf16.gmra.mxu0 %v6304
      %v6997 = vpop.f32.mrf.mxu0
      %v6998 = vadd.f32 0.0, %v6997
      %v6999 = vpop.f32.mrf.mxu0
      %v7000 = vadd.f32 0.0, %v6999
      %7001 = vmatmul.bf16.gmra.mxu0 %v6307
      %v7002 = vpop.f32.mrf.mxu0
      %v7003 = vadd.f32 0.0, %v7002
      %v7004 = vpop.f32.mrf.mxu0
      %v7005 = vadd.f32 0.0, %v7004
      %7006 = vmatmul.bf16.gmra.mxu0 %v6310
      %v7007 = vpop.f32.mrf.mxu0
      %v7008 = vadd.f32 0.0, %v7007
      %v7009 = vpop.f32.mrf.mxu0
      %v7010 = vadd.f32 0.0, %v7009
      %7011 = vmatmul.bf16.gmra.mxu0 %v6313
      %v7012 = vpop.f32.mrf.mxu0
      %v7013 = vadd.f32 0.0, %v7012
      %v7014 = vpop.f32.mrf.mxu0
      %v7015 = vadd.f32 0.0, %v7014
      %7016 = vmatmul.bf16.gmra.mxu0 %v6316
      %v7017 = vpop.f32.mrf.mxu0
      %v7018 = vadd.f32 0.0, %v7017
      %v7019 = vpop.f32.mrf.mxu0
      %v7020 = vadd.f32 0.0, %v7019
      %7021 = vmatmul.bf16.gmra.mxu0 %v6319
      %v7022 = vpop.f32.mrf.mxu0
      %v7023 = vadd.f32 0.0, %v7022
      %v7024 = vpop.f32.mrf.mxu0
      %v7025 = vadd.f32 0.0, %v7024
      %7026 = vmatmul.bf16.gmra.mxu0 %v6322
      %v7027 = vpop.f32.mrf.mxu0
      %v7028 = vadd.f32 0.0, %v7027
      %v7029 = vpop.f32.mrf.mxu0
      %v7030 = vadd.f32 0.0, %v7029
      %7031 = vmatmul.bf16.gmra.mxu0 %v6325
      %v7032 = vpop.f32.mrf.mxu0
      %v7033 = vadd.f32 0.0, %v7032
      %v7034 = vpop.f32.mrf.mxu0
      %v7035 = vadd.f32 0.0, %v7034
      %7036 = vmatmul.bf16.gmra.mxu0 %v6328
      %v7037 = vpop.f32.mrf.mxu0
      %v7038 = vadd.f32 0.0, %v7037
      %v7039 = vpop.f32.mrf.mxu0
      %v7040 = vadd.f32 0.0, %v7039
      %7041 = vmatmul.bf16.gmra.mxu0 %v6331
      %v7042 = vpop.f32.mrf.mxu0
      %v7043 = vadd.f32 0.0, %v7042
      %v7044 = vpop.f32.mrf.mxu0
      %v7045 = vadd.f32 0.0, %v7044
      %7046 = vmatmul.bf16.gmra.mxu0 %v6334
      %v7047 = vpop.f32.mrf.mxu0
      %v7048 = vadd.f32 0.0, %v7047
      %v7049 = vpop.f32.mrf.mxu0
      %v7050 = vadd.f32 0.0, %v7049
      %7051 = vmatmul.bf16.gmra.mxu0 %v6337
      %v7052 = vpop.f32.mrf.mxu0
      %v7053 = vadd.f32 0.0, %v7052
      %v7054 = vpop.f32.mrf.mxu0
      %v7055 = vadd.f32 0.0, %v7054
      %7056 = vmatmul.bf16.gmra.mxu0 %v6340
      %v7057 = vpop.f32.mrf.mxu0
      %v7058 = vadd.f32 0.0, %v7057
      %v7059 = vpop.f32.mrf.mxu0
      %v7060 = vadd.f32 0.0, %v7059
      %7061 = vmatmul.bf16.gmra.mxu0 %v6343
      %v7062 = vpop.f32.mrf.mxu0
      %v7063 = vadd.f32 0.0, %v7062
      %v7064 = vpop.f32.mrf.mxu0
      %v7065 = vadd.f32 0.0, %v7064
      %7066 = vmatmul.bf16.gmra.mxu0 %v6346
      %v7067 = vpop.f32.mrf.mxu0
      %v7068 = vadd.f32 0.0, %v7067
      %v7069 = vpop.f32.mrf.mxu0
      %v7070 = vadd.f32 0.0, %v7069
      %7071 = vmatmul.bf16.gmra.mxu0 %v6349
      %v7072 = vpop.f32.mrf.mxu0
      %v7073 = vadd.f32 0.0, %v7072
      %v7074 = vpop.f32.mrf.mxu0
      %v7075 = vadd.f32 0.0, %v7074
      %7076 = vmatmul.bf16.gmra.mxu0 %v6352
      %v7077 = vpop.f32.mrf.mxu0
      %v7078 = vadd.f32 0.0, %v7077
      %v7079 = vpop.f32.mrf.mxu0
      %v7080 = vadd.f32 0.0, %v7079
      %7081 = vmatmul.bf16.gmra.mxu0 %v6355
      %v7082 = vpop.f32.mrf.mxu0
      %v7083 = vadd.f32 0.0, %v7082
      %v7084 = vpop.f32.mrf.mxu0
      %v7085 = vadd.f32 0.0, %v7084
      %7086 = vmatmul.bf16.gmra.mxu0 %v6358
      %v7087 = vpop.f32.mrf.mxu0
      %v7088 = vadd.f32 0.0, %v7087
      %v7089 = vpop.f32.mrf.mxu0
      %v7090 = vadd.f32 0.0, %v7089
      %7091 = vmatmul.bf16.gmra.mxu0 %v6361
      %v7092 = vpop.f32.mrf.mxu0
      %v7093 = vadd.f32 0.0, %v7092
      %v7094 = vpop.f32.mrf.mxu0
      %v7095 = vadd.f32 0.0, %v7094
      %7096 = vmatmul.bf16.gmra.mxu0 %v6364
      %v7097 = vpop.f32.mrf.mxu0
      %v7098 = vadd.f32 0.0, %v7097
      %v7099 = vpop.f32.mrf.mxu0
      %v7100 = vadd.f32 0.0, %v7099
      %7101 = vmatmul.bf16.gmra.mxu0 %v6367
      %v7102 = vpop.f32.mrf.mxu0
      %v7103 = vadd.f32 0.0, %v7102
      %v7104 = vpop.f32.mrf.mxu0
      %v7105 = vadd.f32 0.0, %v7104
      %7106 = vmatmul.bf16.gmra.mxu0 %v6370
      %v7107 = vpop.f32.mrf.mxu0
      %v7108 = vadd.f32 0.0, %v7107
      %v7109 = vpop.f32.mrf.mxu0
      %v7110 = vadd.f32 0.0, %v7109
      %7111 = vmatmul.bf16.gmra.mxu0 %v6373
      %v7112 = vpop.f32.mrf.mxu0
      %v7113 = vadd.f32 0.0, %v7112
      %v7114 = vpop.f32.mrf.mxu0
      %v7115 = vadd.f32 0.0, %v7114
      %7116 = vmatmul.bf16.gmra.mxu0 %v6376
      %v7117 = vpop.f32.mrf.mxu0
      %v7118 = vadd.f32 0.0, %v7117
      %v7119 = vpop.f32.mrf.mxu0
      %v7120 = vadd.f32 0.0, %v7119
      %7121 = vmatmul.bf16.gmra.mxu0 %v6379
      %v7122 = vpop.f32.mrf.mxu0
      %v7123 = vadd.f32 0.0, %v7122
      %v7124 = vpop.f32.mrf.mxu0
      %v7125 = vadd.f32 0.0, %v7124
      %7126 = vmatmul.bf16.gmra.mxu0 %v6382
      %v7127 = vpop.f32.mrf.mxu0
      %v7128 = vadd.f32 0.0, %v7127
      %v7129 = vpop.f32.mrf.mxu0
      %v7130 = vadd.f32 0.0, %v7129
      %7131 = vmatmul.bf16.gmra.mxu0 %v6385
      %v7132 = vpop.f32.mrf.mxu0
      %v7133 = vadd.f32 0.0, %v7132
      %v7134 = vpop.f32.mrf.mxu0
      %v7135 = vadd.f32 0.0, %v7134
      %7136 = vmatmul.bf16.gmra.mxu0 %v6388
      %v7137 = vpop.f32.mrf.mxu0
      %v7138 = vadd.f32 0.0, %v7137
      %v7139 = vpop.f32.mrf.mxu0
      %v7140 = vadd.f32 0.0, %v7139
      %7141 = vmatmul.bf16.gmra.mxu0 %v6391
      %v7142 = vpop.f32.mrf.mxu0
      %v7143 = vadd.f32 0.0, %v7142
      %v7144 = vpop.f32.mrf.mxu0
      %v7145 = vadd.f32 0.0, %v7144
      %7146 = vmatmul.bf16.gmra.mxu0 %v6394
      %v7147 = vpop.f32.mrf.mxu0
      %v7148 = vadd.f32 0.0, %v7147
      %v7149 = vpop.f32.mrf.mxu0
      %v7150 = vadd.f32 0.0, %v7149
      %7151 = vmatmul.bf16.gmra.mxu0 %v6397
      %v7152 = vpop.f32.mrf.mxu0
      %v7153 = vadd.f32 0.0, %v7152
      %v7154 = vpop.f32.mrf.mxu0
      %v7155 = vadd.f32 0.0, %v7154
      %7156 = vmatmul.bf16.gmra.mxu0 %v6400
      %v7157 = vpop.f32.mrf.mxu0
      %v7158 = vadd.f32 0.0, %v7157
      %v7159 = vpop.f32.mrf.mxu0
      %v7160 = vadd.f32 0.0, %v7159
      %7161 = vmatmul.bf16.gmra.mxu0 %v6403
      %v7162 = vpop.f32.mrf.mxu0
      %v7163 = vadd.f32 0.0, %v7162
      %v7164 = vpop.f32.mrf.mxu0
      %v7165 = vadd.f32 0.0, %v7164
      %7166 = vmatmul.bf16.gmra.mxu0 %v6406
      %v7167 = vpop.f32.mrf.mxu0
      %v7168 = vadd.f32 0.0, %v7167
      %v7169 = vpop.f32.mrf.mxu0
      %v7170 = vadd.f32 0.0, %v7169
      %7171 = vmatmul.bf16.gmra.mxu0 %v6409
      %v7172 = vpop.f32.mrf.mxu0
      %v7173 = vadd.f32 0.0, %v7172
      %v7174 = vpop.f32.mrf.mxu0
      %v7175 = vadd.f32 0.0, %v7174
      %7176 = vmatmul.bf16.gmra.mxu0 %v6412
      %v7177 = vpop.f32.mrf.mxu0
      %v7178 = vadd.f32 0.0, %v7177
      %v7179 = vpop.f32.mrf.mxu0
      %v7180 = vadd.f32 0.0, %v7179
      %7181 = vmatmul.bf16.gmra.mxu0 %v6415
      %v7182 = vpop.f32.mrf.mxu0
      %v7183 = vadd.f32 0.0, %v7182
      %v7184 = vpop.f32.mrf.mxu0
      %v7185 = vadd.f32 0.0, %v7184
      %7186 = vmatmul.bf16.gmra.mxu0 %v6418
      %v7187 = vpop.f32.mrf.mxu0
      %v7188 = vadd.f32 0.0, %v7187
      %v7189 = vpop.f32.mrf.mxu0
      %v7190 = vadd.f32 0.0, %v7189
      %7191 = vmatmul.bf16.gmra.mxu0 %v6421
      %v7192 = vpop.f32.mrf.mxu0
      %v7193 = vadd.f32 0.0, %v7192
      %v7194 = vpop.f32.mrf.mxu0
      %v7195 = vadd.f32 0.0, %v7194
      %7196 = vmatmul.bf16.gmra.mxu0 %v6424
      %v7197 = vpop.f32.mrf.mxu0
      %v7198 = vadd.f32 0.0, %v7197
      %v7199 = vpop.f32.mrf.mxu0
      %v7200 = vadd.f32 0.0, %v7199
      %7201 = vmatmul.bf16.gmra.mxu0 %v6427
      %v7202 = vpop.f32.mrf.mxu0
      %v7203 = vadd.f32 0.0, %v7202
      %v7204 = vpop.f32.mrf.mxu0
      %v7205 = vadd.f32 0.0, %v7204
      %7206 = vmatmul.bf16.gmra.mxu0 %v6430
      %v7207 = vpop.f32.mrf.mxu0
      %v7208 = vadd.f32 0.0, %v7207
      %v7209 = vpop.f32.mrf.mxu0
      %v7210 = vadd.f32 0.0, %v7209
      %7211 = vmatmul.bf16.gmra.mxu0 %v6433
      %v7212 = vpop.f32.mrf.mxu0
      %v7213 = vadd.f32 0.0, %v7212
      %v7214 = vpop.f32.mrf.mxu0
      %v7215 = vadd.f32 0.0, %v7214
      %7216 = vmatmul.bf16.gmra.mxu0 %v6436
      %v7217 = vpop.f32.mrf.mxu0
      %v7218 = vadd.f32 0.0, %v7217
      %v7219 = vpop.f32.mrf.mxu0
      %v7220 = vadd.f32 0.0, %v7219
      %7221 = vmatmul.bf16.gmra.mxu0 %v6439
      %v7222 = vpop.f32.mrf.mxu0
      %v7223 = vadd.f32 0.0, %v7222
      %v7224 = vpop.f32.mrf.mxu0
      %v7225 = vadd.f32 0.0, %v7224
      %7226 = vmatmul.bf16.gmra.mxu0 %v6442
      %v7227 = vpop.f32.mrf.mxu0
      %v7228 = vadd.f32 0.0, %v7227
      %v7229 = vpop.f32.mrf.mxu0
      %v7230 = vadd.f32 0.0, %v7229
      %7231 = vmatmul.bf16.gmra.mxu0 %v6445
      %v7232 = vpop.f32.mrf.mxu0
      %v7233 = vadd.f32 0.0, %v7232
      %v7234 = vpop.f32.mrf.mxu0
      %v7235 = vadd.f32 0.0, %v7234
      %7236 = vmatmul.bf16.gmra.mxu0 %v6448
      %v7237 = vpop.f32.mrf.mxu0
      %v7238 = vadd.f32 0.0, %v7237
      %v7239 = vpop.f32.mrf.mxu0
      %v7240 = vadd.f32 0.0, %v7239
      %7241 = vmatmul.bf16.gmra.mxu0 %v6451
      %v7242 = vpop.f32.mrf.mxu0
      %v7243 = vadd.f32 0.0, %v7242
      %v7244 = vpop.f32.mrf.mxu0
      %v7245 = vadd.f32 0.0, %v7244
      %7246 = vmatmul.bf16.gmra.mxu0 %v6454
      %v7247 = vpop.f32.mrf.mxu0
      %v7248 = vadd.f32 0.0, %v7247
      %v7249 = vpop.f32.mrf.mxu0
      %v7250 = vadd.f32 0.0, %v7249
      %7251 = vmatmul.bf16.gmra.mxu0 %v6457
      %v7252 = vpop.f32.mrf.mxu0
      %v7253 = vadd.f32 0.0, %v7252
      %v7254 = vpop.f32.mrf.mxu0
      %v7255 = vadd.f32 0.0, %v7254
      %7256 = vmatmul.bf16.gmra.mxu0 %v6460
      %v7257 = vpop.f32.mrf.mxu0
      %v7258 = vadd.f32 0.0, %v7257
      %v7259 = vpop.f32.mrf.mxu0
      %v7260 = vadd.f32 0.0, %v7259
      %7261 = vmatmul.bf16.gmra.mxu0 %v6463
      %v7262 = vpop.f32.mrf.mxu0
      %v7263 = vadd.f32 0.0, %v7262
      %v7264 = vpop.f32.mrf.mxu0
      %v7265 = vadd.f32 0.0, %v7264
      %7266 = vmatmul.bf16.gmra.mxu0 %v6466
      %v7267 = vpop.f32.mrf.mxu0
      %v7268 = vadd.f32 0.0, %v7267
      %v7269 = vpop.f32.mrf.mxu0
      %v7270 = vadd.f32 0.0, %v7269
      %7271 = vmatmul.bf16.gmra.mxu0 %v6469
      %v7272 = vpop.f32.mrf.mxu0
      %v7273 = vadd.f32 0.0, %v7272
      %v7274 = vpop.f32.mrf.mxu0
      %v7275 = vadd.f32 0.0, %v7274
      %7276 = vmatmul.bf16.gmra.mxu0 %v6472
      %v7277 = vpop.f32.mrf.mxu0
      %v7278 = vadd.f32 0.0, %v7277
      %v7279 = vpop.f32.mrf.mxu0
      %v7280 = vadd.f32 0.0, %v7279
      %7281 = vmatmul.bf16.gmra.mxu0 %v6475
      %v7282 = vpop.f32.mrf.mxu0
      %v7283 = vadd.f32 0.0, %v7282
      %v7284 = vpop.f32.mrf.mxu0
      %v7285 = vadd.f32 0.0, %v7284
      %7286 = vmatmul.bf16.gmra.mxu0 %v6478
      %v7287 = vpop.f32.mrf.mxu0
      %v7288 = vadd.f32 0.0, %v7287
      %v7289 = vpop.f32.mrf.mxu0
      %v7290 = vadd.f32 0.0, %v7289
      %7291 = vmatmul.bf16.gmra.mxu0 %v6481
      %v7292 = vpop.f32.mrf.mxu0
      %v7293 = vadd.f32 0.0, %v7292
      %v7294 = vpop.f32.mrf.mxu0
      %v7295 = vadd.f32 0.0, %v7294
      %7296 = vmatmul.bf16.gmra.mxu0 %v6970
      %v7297 = vpop.f32.mrf.mxu0
      %v7298 = vadd.f32 0.0, %v7297
      %v7299 = vpop.f32.mrf.mxu0
      %v7300 = vadd.f32 0.0, %v7299
      %7301 = vmatmul.bf16.gmra.mxu0 %v6973
      %v7302 = vpop.f32.mrf.mxu0
      %v7303 = vadd.f32 0.0, %v7302
      %v7304 = vpop.f32.mrf.mxu0
      %v7305 = vadd.f32 0.0, %v7304
      %7306 = vdwg.mxu0
      %v7307 = vadd.f32 %v6815, %v6988
      %v7308 = vadd.f32 %v6816, %v6990
      %v7309 = vadd.f32 %v6817, %v6993
      %v7310 = vadd.f32 %v6818, %v6995
      %v7311 = vadd.f32 %v6819, %v6998
      %v7312 = vadd.f32 %v6820, %v7000
      %v7313 = vadd.f32 %v6821, %v7003
      %v7314 = vadd.f32 %v6822, %v7005
      %v7315 = vadd.f32 %v6823, %v7008
      %v7316 = vadd.f32 %v6824, %v7010
      %v7317 = vadd.f32 %v6825, %v7013
      %v7318 = vadd.f32 %v6826, %v7015
      %v7319 = vadd.f32 %v6827, %v7018
      %v7320 = vadd.f32 %v6828, %v7020
      %v7321 = vadd.f32 %v6829, %v7023
      %v7322 = vadd.f32 %v6830, %v7025
      %v7323 = vadd.f32 %v6831, %v7028
      %v7324 = vadd.f32 %v6832, %v7030
      %v7325 = vadd.f32 %v6833, %v7033
      %v7326 = vadd.f32 %v6834, %v7035
      %v7327 = vadd.f32 %v6835, %v7038
      %v7328 = vadd.f32 %v6836, %v7040
      %v7329 = vadd.f32 %v6837, %v7043
      %v7330 = vadd.f32 %v6838, %v7045
      %v7331 = vadd.f32 %v6839, %v7048
      %v7332 = vadd.f32 %v6840, %v7050
      %v7333 = vadd.f32 %v6841, %v7053
      %v7334 = vadd.f32 %v6842, %v7055
      %v7335 = vadd.f32 %v6843, %v7058
      %v7336 = vadd.f32 %v6844, %v7060
      %v7337 = vadd.f32 %v6845, %v7063
      %v7338 = vadd.f32 %v6846, %v7065
      %v7339 = vadd.f32 %v6847, %v7068
      %v7340 = vadd.f32 %v6848, %v7070
      %v7341 = vadd.f32 %v6849, %v7073
      %v7342 = vadd.f32 %v6850, %v7075
      %v7343 = vadd.f32 %v6851, %v7078
      %v7344 = vadd.f32 %v6852, %v7080
      %v7345 = vadd.f32 %v6853, %v7083
      %v7346 = vadd.f32 %v6854, %v7085
      %v7347 = vadd.f32 %v6855, %v7088
      %v7348 = vadd.f32 %v6856, %v7090
      %v7349 = vadd.f32 %v6857, %v7093
      %v7350 = vadd.f32 %v6858, %v7095
      %v7351 = vadd.f32 %v6859, %v7098
      %v7352 = vadd.f32 %v6860, %v7100
      %v7353 = vadd.f32 %v6861, %v7103
      %v7354 = vadd.f32 %v6862, %v7105
      %v7355 = vadd.f32 %v6863, %v7108
      %v7356 = vadd.f32 %v6864, %v7110
      %v7357 = vadd.f32 %v6865, %v7113
      %v7358 = vadd.f32 %v6866, %v7115
      %v7359 = vadd.f32 %v6867, %v7118
      %v7360 = vadd.f32 %v6868, %v7120
      %v7361 = vadd.f32 %v6869, %v7123
      %v7362 = vadd.f32 %v6870, %v7125
      %v7363 = vadd.f32 %v6871, %v7128
      %v7364 = vadd.f32 %v6872, %v7130
      %v7365 = vadd.f32 %v6873, %v7133
      %v7366 = vadd.f32 %v6874, %v7135
      %v7367 = vadd.f32 %v6875, %v7138
      %v7368 = vadd.f32 %v6876, %v7140
      %v7369 = vadd.f32 %v6877, %v7143
      %v7370 = vadd.f32 %v6878, %v7145
      %v7371 = vadd.f32 %v6879, %v7148
      %v7372 = vadd.f32 %v6880, %v7150
      %v7373 = vadd.f32 %v6881, %v7153
      %v7374 = vadd.f32 %v6882, %v7155
      %v7375 = vadd.f32 %v6883, %v7158
      %v7376 = vadd.f32 %v6884, %v7160
      %v7377 = vadd.f32 %v6885, %v7163
      %v7378 = vadd.f32 %v6886, %v7165
      %v7379 = vadd.f32 %v6887, %v7168
      %v7380 = vadd.f32 %v6888, %v7170
      %v7381 = vadd.f32 %v6889, %v7173
      %v7382 = vadd.f32 %v6890, %v7175
      %v7383 = vadd.f32 %v6891, %v7178
      %v7384 = vadd.f32 %v6892, %v7180
      %v7385 = vadd.f32 %v6893, %v7183
      %v7386 = vadd.f32 %v6894, %v7185
      %v7387 = vadd.f32 %v6895, %v7188
      %v7388 = vadd.f32 %v6896, %v7190
      %v7389 = vadd.f32 %v6897, %v7193
      %v7390 = vadd.f32 %v6898, %v7195
      %v7391 = vadd.f32 %v6899, %v7198
      %v7392 = vadd.f32 %v6900, %v7200
      %v7393 = vadd.f32 %v6901, %v7203
      %v7394 = vadd.f32 %v6902, %v7205
      %v7395 = vadd.f32 %v6903, %v7208
      %v7396 = vadd.f32 %v6904, %v7210
      %v7397 = vadd.f32 %v6905, %v7213
      %v7398 = vadd.f32 %v6906, %v7215
      %v7399 = vadd.f32 %v6907, %v7218
      %v7400 = vadd.f32 %v6908, %v7220
      %v7401 = vadd.f32 %v6909, %v7223
      %v7402 = vadd.f32 %v6910, %v7225
      %v7403 = vadd.f32 %v6911, %v7228
      %v7404 = vadd.f32 %v6912, %v7230
      %v7405 = vadd.f32 %v6913, %v7233
      %v7406 = vadd.f32 %v6914, %v7235
      %v7407 = vadd.f32 %v6915, %v7238
      %v7408 = vadd.f32 %v6916, %v7240
      %v7409 = vadd.f32 %v6917, %v7243
      %v7410 = vadd.f32 %v6918, %v7245
      %v7411 = vadd.f32 %v6919, %v7248
      %v7412 = vadd.f32 %v6920, %v7250
      %v7413 = vadd.f32 %v6921, %v7253
      %v7414 = vadd.f32 %v6922, %v7255
      %v7415 = vadd.f32 %v6923, %v7258
      %v7416 = vadd.f32 %v6924, %v7260
      %v7417 = vadd.f32 %v6925, %v7263
      %v7418 = vadd.f32 %v6926, %v7265
      %v7419 = vadd.f32 %v6927, %v7268
      %v7420 = vadd.f32 %v6928, %v7270
      %v7421 = vadd.f32 %v6929, %v7273
      %v7422 = vadd.f32 %v6930, %v7275
      %v7423 = vadd.f32 %v6931, %v7278
      %v7424 = vadd.f32 %v6932, %v7280
      %v7425 = vadd.f32 %v6933, %v7283
      %v7426 = vadd.f32 %v6934, %v7285
      %v7427 = vadd.f32 %v6935, %v7288
      %v7428 = vadd.f32 %v6936, %v7290
      %v7429 = vadd.f32 %v6937, %v7293
      %v7430 = vadd.f32 %v6938, %v7295
      %v7431 = vadd.f32 %v6939, %v7298
      %v7432 = vadd.f32 %v6940, %v7300
      %v7433 = vadd.f32 %v6941, %v7303
      %v7434 = vadd.f32 %v6942, %v7305
      %v7440 = vrot.slane %v5517, 5
      %v7441 = vrot.slane %v7440, 4
      %v7442 = vrot.slane %v2187, 5
      %v7443 = vsel %vm5680, %v7441, %v7442
      %v7444 = vrot.slane %v7442, 4
      %v7445 = vrot.slane %v2188, 5
      %v7446 = vsel %vm5680, %v7444, %v7445
      %v7447 = vrot.slane %v7445, 4
      %v7448 = vrot.slane %v2189, 5
      %v7449 = vsel %vm5680, %v7447, %v7448
      %v7450 = vrot.slane %v7448, 4
      %v7451 = vrot.slane %v2190, 5
      %v7452 = vsel %vm5680, %v7450, %v7451
      %s7453 = scalar_lea.vmem %s1, 32
      %v7454 = vld [vmem:[%s7453] sm:$0xf]
      %v7455 = vunpack.c.l.b16 %v7443
      %v7456 = vunpack.c.l.b16 %v7446
      %v7457 = vunpack.c.l.b16 %v7449
      %v7458 = vunpack.c.l.b16 %v7452
      %v7459 = vpack.c.b16 %v7456, %v7455
      %v7460 = vpack.c.b16 %v7458, %v7457
      %v7462 = vsel %vm669, %v7459, 0
      %v7465 = vsel %vm669, %v7460, 0
      %v7468 = vsel %vm862, %v7454, 0
      %7470 = vmatpush.bf16.msra.mxu0 0
      %7471 = vmatpush.bf16.msra.mxu0 0
      %7472 = vmatpush.bf16.msra.mxu0 0
      %7473 = vmatpush.bf16.msra.mxu0 0
      %7474 = vmatpush.bf16.msra.mxu0 0
      %7475 = vmatpush.bf16.msra.mxu0 0
      %7476 = vmatpush.bf16.msra.mxu0 0
      %7477 = vmatpush.bf16.msra.mxu0 %v7468
      %7478 = vmatmul.bf16.gmra.mxu0 %v6304
      %v7479 = vpop.f32.mrf.mxu0
      %v7480 = vadd.f32 0.0, %v7479
      %v7481 = vpop.f32.mrf.mxu0
      %v7482 = vadd.f32 0.0, %v7481
      %7483 = vmatmul.bf16.gmra.mxu0 %v6307
      %v7484 = vpop.f32.mrf.mxu0
      %v7485 = vadd.f32 0.0, %v7484
      %v7486 = vpop.f32.mrf.mxu0
      %v7487 = vadd.f32 0.0, %v7486
      %7488 = vmatmul.bf16.gmra.mxu0 %v6310
      %v7489 = vpop.f32.mrf.mxu0
      %v7490 = vadd.f32 0.0, %v7489
      %v7491 = vpop.f32.mrf.mxu0
      %v7492 = vadd.f32 0.0, %v7491
      %7493 = vmatmul.bf16.gmra.mxu0 %v6313
      %v7494 = vpop.f32.mrf.mxu0
      %v7495 = vadd.f32 0.0, %v7494
      %v7496 = vpop.f32.mrf.mxu0
      %v7497 = vadd.f32 0.0, %v7496
      %7498 = vmatmul.bf16.gmra.mxu0 %v6316
      %v7499 = vpop.f32.mrf.mxu0
      %v7500 = vadd.f32 0.0, %v7499
      %v7501 = vpop.f32.mrf.mxu0
      %v7502 = vadd.f32 0.0, %v7501
      %7503 = vmatmul.bf16.gmra.mxu0 %v6319
      %v7504 = vpop.f32.mrf.mxu0
      %v7505 = vadd.f32 0.0, %v7504
      %v7506 = vpop.f32.mrf.mxu0
      %v7507 = vadd.f32 0.0, %v7506
      %7508 = vmatmul.bf16.gmra.mxu0 %v6322
      %v7509 = vpop.f32.mrf.mxu0
      %v7510 = vadd.f32 0.0, %v7509
      %v7511 = vpop.f32.mrf.mxu0
      %v7512 = vadd.f32 0.0, %v7511
      %7513 = vmatmul.bf16.gmra.mxu0 %v6325
      %v7514 = vpop.f32.mrf.mxu0
      %v7515 = vadd.f32 0.0, %v7514
      %v7516 = vpop.f32.mrf.mxu0
      %v7517 = vadd.f32 0.0, %v7516
      %7518 = vmatmul.bf16.gmra.mxu0 %v6328
      %v7519 = vpop.f32.mrf.mxu0
      %v7520 = vadd.f32 0.0, %v7519
      %v7521 = vpop.f32.mrf.mxu0
      %v7522 = vadd.f32 0.0, %v7521
      %7523 = vmatmul.bf16.gmra.mxu0 %v6331
      %v7524 = vpop.f32.mrf.mxu0
      %v7525 = vadd.f32 0.0, %v7524
      %v7526 = vpop.f32.mrf.mxu0
      %v7527 = vadd.f32 0.0, %v7526
      %7528 = vmatmul.bf16.gmra.mxu0 %v6334
      %v7529 = vpop.f32.mrf.mxu0
      %v7530 = vadd.f32 0.0, %v7529
      %v7531 = vpop.f32.mrf.mxu0
      %v7532 = vadd.f32 0.0, %v7531
      %7533 = vmatmul.bf16.gmra.mxu0 %v6337
      %v7534 = vpop.f32.mrf.mxu0
      %v7535 = vadd.f32 0.0, %v7534
      %v7536 = vpop.f32.mrf.mxu0
      %v7537 = vadd.f32 0.0, %v7536
      %7538 = vmatmul.bf16.gmra.mxu0 %v6340
      %v7539 = vpop.f32.mrf.mxu0
      %v7540 = vadd.f32 0.0, %v7539
      %v7541 = vpop.f32.mrf.mxu0
      %v7542 = vadd.f32 0.0, %v7541
      %7543 = vmatmul.bf16.gmra.mxu0 %v6343
      %v7544 = vpop.f32.mrf.mxu0
      %v7545 = vadd.f32 0.0, %v7544
      %v7546 = vpop.f32.mrf.mxu0
      %v7547 = vadd.f32 0.0, %v7546
      %7548 = vmatmul.bf16.gmra.mxu0 %v6346
      %v7549 = vpop.f32.mrf.mxu0
      %v7550 = vadd.f32 0.0, %v7549
      %v7551 = vpop.f32.mrf.mxu0
      %v7552 = vadd.f32 0.0, %v7551
      %7553 = vmatmul.bf16.gmra.mxu0 %v6349
      %v7554 = vpop.f32.mrf.mxu0
      %v7555 = vadd.f32 0.0, %v7554
      %v7556 = vpop.f32.mrf.mxu0
      %v7557 = vadd.f32 0.0, %v7556
      %7558 = vmatmul.bf16.gmra.mxu0 %v6352
      %v7559 = vpop.f32.mrf.mxu0
      %v7560 = vadd.f32 0.0, %v7559
      %v7561 = vpop.f32.mrf.mxu0
      %v7562 = vadd.f32 0.0, %v7561
      %7563 = vmatmul.bf16.gmra.mxu0 %v6355
      %v7564 = vpop.f32.mrf.mxu0
      %v7565 = vadd.f32 0.0, %v7564
      %v7566 = vpop.f32.mrf.mxu0
      %v7567 = vadd.f32 0.0, %v7566
      %7568 = vmatmul.bf16.gmra.mxu0 %v6358
      %v7569 = vpop.f32.mrf.mxu0
      %v7570 = vadd.f32 0.0, %v7569
      %v7571 = vpop.f32.mrf.mxu0
      %v7572 = vadd.f32 0.0, %v7571
      %7573 = vmatmul.bf16.gmra.mxu0 %v6361
      %v7574 = vpop.f32.mrf.mxu0
      %v7575 = vadd.f32 0.0, %v7574
      %v7576 = vpop.f32.mrf.mxu0
      %v7577 = vadd.f32 0.0, %v7576
      %7578 = vmatmul.bf16.gmra.mxu0 %v6364
      %v7579 = vpop.f32.mrf.mxu0
      %v7580 = vadd.f32 0.0, %v7579
      %v7581 = vpop.f32.mrf.mxu0
      %v7582 = vadd.f32 0.0, %v7581
      %7583 = vmatmul.bf16.gmra.mxu0 %v6367
      %v7584 = vpop.f32.mrf.mxu0
      %v7585 = vadd.f32 0.0, %v7584
      %v7586 = vpop.f32.mrf.mxu0
      %v7587 = vadd.f32 0.0, %v7586
      %7588 = vmatmul.bf16.gmra.mxu0 %v6370
      %v7589 = vpop.f32.mrf.mxu0
      %v7590 = vadd.f32 0.0, %v7589
      %v7591 = vpop.f32.mrf.mxu0
      %v7592 = vadd.f32 0.0, %v7591
      %7593 = vmatmul.bf16.gmra.mxu0 %v6373
      %v7594 = vpop.f32.mrf.mxu0
      %v7595 = vadd.f32 0.0, %v7594
      %v7596 = vpop.f32.mrf.mxu0
      %v7597 = vadd.f32 0.0, %v7596
      %7598 = vmatmul.bf16.gmra.mxu0 %v6376
      %v7599 = vpop.f32.mrf.mxu0
      %v7600 = vadd.f32 0.0, %v7599
      %v7601 = vpop.f32.mrf.mxu0
      %v7602 = vadd.f32 0.0, %v7601
      %7603 = vmatmul.bf16.gmra.mxu0 %v6379
      %v7604 = vpop.f32.mrf.mxu0
      %v7605 = vadd.f32 0.0, %v7604
      %v7606 = vpop.f32.mrf.mxu0
      %v7607 = vadd.f32 0.0, %v7606
      %7608 = vmatmul.bf16.gmra.mxu0 %v6382
      %v7609 = vpop.f32.mrf.mxu0
      %v7610 = vadd.f32 0.0, %v7609
      %v7611 = vpop.f32.mrf.mxu0
      %v7612 = vadd.f32 0.0, %v7611
      %7613 = vmatmul.bf16.gmra.mxu0 %v6385
      %v7614 = vpop.f32.mrf.mxu0
      %v7615 = vadd.f32 0.0, %v7614
      %v7616 = vpop.f32.mrf.mxu0
      %v7617 = vadd.f32 0.0, %v7616
      %7618 = vmatmul.bf16.gmra.mxu0 %v6388
      %v7619 = vpop.f32.mrf.mxu0
      %v7620 = vadd.f32 0.0, %v7619
      %v7621 = vpop.f32.mrf.mxu0
      %v7622 = vadd.f32 0.0, %v7621
      %7623 = vmatmul.bf16.gmra.mxu0 %v6391
      %v7624 = vpop.f32.mrf.mxu0
      %v7625 = vadd.f32 0.0, %v7624
      %v7626 = vpop.f32.mrf.mxu0
      %v7627 = vadd.f32 0.0, %v7626
      %7628 = vmatmul.bf16.gmra.mxu0 %v6394
      %v7629 = vpop.f32.mrf.mxu0
      %v7630 = vadd.f32 0.0, %v7629
      %v7631 = vpop.f32.mrf.mxu0
      %v7632 = vadd.f32 0.0, %v7631
      %7633 = vmatmul.bf16.gmra.mxu0 %v6397
      %v7634 = vpop.f32.mrf.mxu0
      %v7635 = vadd.f32 0.0, %v7634
      %v7636 = vpop.f32.mrf.mxu0
      %v7637 = vadd.f32 0.0, %v7636
      %7638 = vmatmul.bf16.gmra.mxu0 %v6400
      %v7639 = vpop.f32.mrf.mxu0
      %v7640 = vadd.f32 0.0, %v7639
      %v7641 = vpop.f32.mrf.mxu0
      %v7642 = vadd.f32 0.0, %v7641
      %7643 = vmatmul.bf16.gmra.mxu0 %v6403
      %v7644 = vpop.f32.mrf.mxu0
      %v7645 = vadd.f32 0.0, %v7644
      %v7646 = vpop.f32.mrf.mxu0
      %v7647 = vadd.f32 0.0, %v7646
      %7648 = vmatmul.bf16.gmra.mxu0 %v6406
      %v7649 = vpop.f32.mrf.mxu0
      %v7650 = vadd.f32 0.0, %v7649
      %v7651 = vpop.f32.mrf.mxu0
      %v7652 = vadd.f32 0.0, %v7651
      %7653 = vmatmul.bf16.gmra.mxu0 %v6409
      %v7654 = vpop.f32.mrf.mxu0
      %v7655 = vadd.f32 0.0, %v7654
      %v7656 = vpop.f32.mrf.mxu0
      %v7657 = vadd.f32 0.0, %v7656
      %7658 = vmatmul.bf16.gmra.mxu0 %v6412
      %v7659 = vpop.f32.mrf.mxu0
      %v7660 = vadd.f32 0.0, %v7659
      %v7661 = vpop.f32.mrf.mxu0
      %v7662 = vadd.f32 0.0, %v7661
      %7663 = vmatmul.bf16.gmra.mxu0 %v6415
      %v7664 = vpop.f32.mrf.mxu0
      %v7665 = vadd.f32 0.0, %v7664
      %v7666 = vpop.f32.mrf.mxu0
      %v7667 = vadd.f32 0.0, %v7666
      %7668 = vmatmul.bf16.gmra.mxu0 %v6418
      %v7669 = vpop.f32.mrf.mxu0
      %v7670 = vadd.f32 0.0, %v7669
      %v7671 = vpop.f32.mrf.mxu0
      %v7672 = vadd.f32 0.0, %v7671
      %7673 = vmatmul.bf16.gmra.mxu0 %v6421
      %v7674 = vpop.f32.mrf.mxu0
      %v7675 = vadd.f32 0.0, %v7674
      %v7676 = vpop.f32.mrf.mxu0
      %v7677 = vadd.f32 0.0, %v7676
      %7678 = vmatmul.bf16.gmra.mxu0 %v6424
      %v7679 = vpop.f32.mrf.mxu0
      %v7680 = vadd.f32 0.0, %v7679
      %v7681 = vpop.f32.mrf.mxu0
      %v7682 = vadd.f32 0.0, %v7681
      %7683 = vmatmul.bf16.gmra.mxu0 %v6427
      %v7684 = vpop.f32.mrf.mxu0
      %v7685 = vadd.f32 0.0, %v7684
      %v7686 = vpop.f32.mrf.mxu0
      %v7687 = vadd.f32 0.0, %v7686
      %7688 = vmatmul.bf16.gmra.mxu0 %v6430
      %v7689 = vpop.f32.mrf.mxu0
      %v7690 = vadd.f32 0.0, %v7689
      %v7691 = vpop.f32.mrf.mxu0
      %v7692 = vadd.f32 0.0, %v7691
      %7693 = vmatmul.bf16.gmra.mxu0 %v6433
      %v7694 = vpop.f32.mrf.mxu0
      %v7695 = vadd.f32 0.0, %v7694
      %v7696 = vpop.f32.mrf.mxu0
      %v7697 = vadd.f32 0.0, %v7696
      %7698 = vmatmul.bf16.gmra.mxu0 %v6436
      %v7699 = vpop.f32.mrf.mxu0
      %v7700 = vadd.f32 0.0, %v7699
      %v7701 = vpop.f32.mrf.mxu0
      %v7702 = vadd.f32 0.0, %v7701
      %7703 = vmatmul.bf16.gmra.mxu0 %v6439
      %v7704 = vpop.f32.mrf.mxu0
      %v7705 = vadd.f32 0.0, %v7704
      %v7706 = vpop.f32.mrf.mxu0
      %v7707 = vadd.f32 0.0, %v7706
      %7708 = vmatmul.bf16.gmra.mxu0 %v6442
      %v7709 = vpop.f32.mrf.mxu0
      %v7710 = vadd.f32 0.0, %v7709
      %v7711 = vpop.f32.mrf.mxu0
      %v7712 = vadd.f32 0.0, %v7711
      %7713 = vmatmul.bf16.gmra.mxu0 %v6445
      %v7714 = vpop.f32.mrf.mxu0
      %v7715 = vadd.f32 0.0, %v7714
      %v7716 = vpop.f32.mrf.mxu0
      %v7717 = vadd.f32 0.0, %v7716
      %7718 = vmatmul.bf16.gmra.mxu0 %v6448
      %v7719 = vpop.f32.mrf.mxu0
      %v7720 = vadd.f32 0.0, %v7719
      %v7721 = vpop.f32.mrf.mxu0
      %v7722 = vadd.f32 0.0, %v7721
      %7723 = vmatmul.bf16.gmra.mxu0 %v6451
      %v7724 = vpop.f32.mrf.mxu0
      %v7725 = vadd.f32 0.0, %v7724
      %v7726 = vpop.f32.mrf.mxu0
      %v7727 = vadd.f32 0.0, %v7726
      %7728 = vmatmul.bf16.gmra.mxu0 %v6454
      %v7729 = vpop.f32.mrf.mxu0
      %v7730 = vadd.f32 0.0, %v7729
      %v7731 = vpop.f32.mrf.mxu0
      %v7732 = vadd.f32 0.0, %v7731
      %7733 = vmatmul.bf16.gmra.mxu0 %v6457
      %v7734 = vpop.f32.mrf.mxu0
      %v7735 = vadd.f32 0.0, %v7734
      %v7736 = vpop.f32.mrf.mxu0
      %v7737 = vadd.f32 0.0, %v7736
      %7738 = vmatmul.bf16.gmra.mxu0 %v6460
      %v7739 = vpop.f32.mrf.mxu0
      %v7740 = vadd.f32 0.0, %v7739
      %v7741 = vpop.f32.mrf.mxu0
      %v7742 = vadd.f32 0.0, %v7741
      %7743 = vmatmul.bf16.gmra.mxu0 %v6463
      %v7744 = vpop.f32.mrf.mxu0
      %v7745 = vadd.f32 0.0, %v7744
      %v7746 = vpop.f32.mrf.mxu0
      %v7747 = vadd.f32 0.0, %v7746
      %7748 = vmatmul.bf16.gmra.mxu0 %v6466
      %v7749 = vpop.f32.mrf.mxu0
      %v7750 = vadd.f32 0.0, %v7749
      %v7751 = vpop.f32.mrf.mxu0
      %v7752 = vadd.f32 0.0, %v7751
      %7753 = vmatmul.bf16.gmra.mxu0 %v6469
      %v7754 = vpop.f32.mrf.mxu0
      %v7755 = vadd.f32 0.0, %v7754
      %v7756 = vpop.f32.mrf.mxu0
      %v7757 = vadd.f32 0.0, %v7756
      %7758 = vmatmul.bf16.gmra.mxu0 %v6472
      %v7759 = vpop.f32.mrf.mxu0
      %v7760 = vadd.f32 0.0, %v7759
      %v7761 = vpop.f32.mrf.mxu0
      %v7762 = vadd.f32 0.0, %v7761
      %7763 = vmatmul.bf16.gmra.mxu0 %v6475
      %v7764 = vpop.f32.mrf.mxu0
      %v7765 = vadd.f32 0.0, %v7764
      %v7766 = vpop.f32.mrf.mxu0
      %v7767 = vadd.f32 0.0, %v7766
      %7768 = vmatmul.bf16.gmra.mxu0 %v6478
      %v7769 = vpop.f32.mrf.mxu0
      %v7770 = vadd.f32 0.0, %v7769
      %v7771 = vpop.f32.mrf.mxu0
      %v7772 = vadd.f32 0.0, %v7771
      %7773 = vmatmul.bf16.gmra.mxu0 %v6481
      %v7774 = vpop.f32.mrf.mxu0
      %v7775 = vadd.f32 0.0, %v7774
      %v7776 = vpop.f32.mrf.mxu0
      %v7777 = vadd.f32 0.0, %v7776
      %7778 = vmatmul.bf16.gmra.mxu0 %v6970
      %v7779 = vpop.f32.mrf.mxu0
      %v7780 = vadd.f32 0.0, %v7779
      %v7781 = vpop.f32.mrf.mxu0
      %v7782 = vadd.f32 0.0, %v7781
      %7783 = vmatmul.bf16.gmra.mxu0 %v6973
      %v7784 = vpop.f32.mrf.mxu0
      %v7785 = vadd.f32 0.0, %v7784
      %v7786 = vpop.f32.mrf.mxu0
      %v7787 = vadd.f32 0.0, %v7786
      %7788 = vmatmul.bf16.gmra.mxu0 %v7462
      %v7789 = vpop.f32.mrf.mxu0
      %v7790 = vadd.f32 0.0, %v7789
      %v7791 = vpop.f32.mrf.mxu0
      %v7792 = vadd.f32 0.0, %v7791
      %7793 = vmatmul.bf16.gmra.mxu0 %v7465
      %v7794 = vpop.f32.mrf.mxu0
      %v7795 = vadd.f32 0.0, %v7794
      %v7796 = vpop.f32.mrf.mxu0
      %v7797 = vadd.f32 0.0, %v7796
      %7798 = vdwg.mxu0
      %v7799 = vadd.f32 %v7307, %v7480
      %v7800 = vadd.f32 %v7308, %v7482
      %v7801 = vadd.f32 %v7309, %v7485
      %v7802 = vadd.f32 %v7310, %v7487
      %v7803 = vadd.f32 %v7311, %v7490
      %v7804 = vadd.f32 %v7312, %v7492
      %v7805 = vadd.f32 %v7313, %v7495
      %v7806 = vadd.f32 %v7314, %v7497
      %v7807 = vadd.f32 %v7315, %v7500
      %v7808 = vadd.f32 %v7316, %v7502
      %v7809 = vadd.f32 %v7317, %v7505
      %v7810 = vadd.f32 %v7318, %v7507
      %v7811 = vadd.f32 %v7319, %v7510
      %v7812 = vadd.f32 %v7320, %v7512
      %v7813 = vadd.f32 %v7321, %v7515
      %v7814 = vadd.f32 %v7322, %v7517
      %v7815 = vadd.f32 %v7323, %v7520
      %v7816 = vadd.f32 %v7324, %v7522
      %v7817 = vadd.f32 %v7325, %v7525
      %v7818 = vadd.f32 %v7326, %v7527
      %v7819 = vadd.f32 %v7327, %v7530
      %v7820 = vadd.f32 %v7328, %v7532
      %v7821 = vadd.f32 %v7329, %v7535
      %v7822 = vadd.f32 %v7330, %v7537
      %v7823 = vadd.f32 %v7331, %v7540
      %v7824 = vadd.f32 %v7332, %v7542
      %v7825 = vadd.f32 %v7333, %v7545
      %v7826 = vadd.f32 %v7334, %v7547
      %v7827 = vadd.f32 %v7335, %v7550
      %v7828 = vadd.f32 %v7336, %v7552
      %v7829 = vadd.f32 %v7337, %v7555
      %v7830 = vadd.f32 %v7338, %v7557
      %v7831 = vadd.f32 %v7339, %v7560
      %v7832 = vadd.f32 %v7340, %v7562
      %v7833 = vadd.f32 %v7341, %v7565
      %v7834 = vadd.f32 %v7342, %v7567
      %v7835 = vadd.f32 %v7343, %v7570
      %v7836 = vadd.f32 %v7344, %v7572
      %v7837 = vadd.f32 %v7345, %v7575
      %v7838 = vadd.f32 %v7346, %v7577
      %v7839 = vadd.f32 %v7347, %v7580
      %v7840 = vadd.f32 %v7348, %v7582
      %v7841 = vadd.f32 %v7349, %v7585
      %v7842 = vadd.f32 %v7350, %v7587
      %v7843 = vadd.f32 %v7351, %v7590
      %v7844 = vadd.f32 %v7352, %v7592
      %v7845 = vadd.f32 %v7353, %v7595
      %v7846 = vadd.f32 %v7354, %v7597
      %v7847 = vadd.f32 %v7355, %v7600
      %v7848 = vadd.f32 %v7356, %v7602
      %v7849 = vadd.f32 %v7357, %v7605
      %v7850 = vadd.f32 %v7358, %v7607
      %v7851 = vadd.f32 %v7359, %v7610
      %v7852 = vadd.f32 %v7360, %v7612
      %v7853 = vadd.f32 %v7361, %v7615
      %v7854 = vadd.f32 %v7362, %v7617
      %v7855 = vadd.f32 %v7363, %v7620
      %v7856 = vadd.f32 %v7364, %v7622
      %v7857 = vadd.f32 %v7365, %v7625
      %v7858 = vadd.f32 %v7366, %v7627
      %v7859 = vadd.f32 %v7367, %v7630
      %v7860 = vadd.f32 %v7368, %v7632
      %v7861 = vadd.f32 %v7369, %v7635
      %v7862 = vadd.f32 %v7370, %v7637
      %v7863 = vadd.f32 %v7371, %v7640
      %v7864 = vadd.f32 %v7372, %v7642
      %v7865 = vadd.f32 %v7373, %v7645
      %v7866 = vadd.f32 %v7374, %v7647
      %v7867 = vadd.f32 %v7375, %v7650
      %v7868 = vadd.f32 %v7376, %v7652
      %v7869 = vadd.f32 %v7377, %v7655
      %v7870 = vadd.f32 %v7378, %v7657
      %v7871 = vadd.f32 %v7379, %v7660
      %v7872 = vadd.f32 %v7380, %v7662
      %v7873 = vadd.f32 %v7381, %v7665
      %v7874 = vadd.f32 %v7382, %v7667
      %v7875 = vadd.f32 %v7383, %v7670
      %v7876 = vadd.f32 %v7384, %v7672
      %v7877 = vadd.f32 %v7385, %v7675
      %v7878 = vadd.f32 %v7386, %v7677
      %v7879 = vadd.f32 %v7387, %v7680
      %v7880 = vadd.f32 %v7388, %v7682
      %v7881 = vadd.f32 %v7389, %v7685
      %v7882 = vadd.f32 %v7390, %v7687
      %v7883 = vadd.f32 %v7391, %v7690
      %v7884 = vadd.f32 %v7392, %v7692
      %v7885 = vadd.f32 %v7393, %v7695
      %v7886 = vadd.f32 %v7394, %v7697
      %v7887 = vadd.f32 %v7395, %v7700
      %v7888 = vadd.f32 %v7396, %v7702
      %v7889 = vadd.f32 %v7397, %v7705
      %v7890 = vadd.f32 %v7398, %v7707
      %v7891 = vadd.f32 %v7399, %v7710
      %v7892 = vadd.f32 %v7400, %v7712
      %v7893 = vadd.f32 %v7401, %v7715
      %v7894 = vadd.f32 %v7402, %v7717
      %v7895 = vadd.f32 %v7403, %v7720
      %v7896 = vadd.f32 %v7404, %v7722
      %v7897 = vadd.f32 %v7405, %v7725
      %v7898 = vadd.f32 %v7406, %v7727
      %v7899 = vadd.f32 %v7407, %v7730
      %v7900 = vadd.f32 %v7408, %v7732
      %v7901 = vadd.f32 %v7409, %v7735
      %v7902 = vadd.f32 %v7410, %v7737
      %v7903 = vadd.f32 %v7411, %v7740
      %v7904 = vadd.f32 %v7412, %v7742
      %v7905 = vadd.f32 %v7413, %v7745
      %v7906 = vadd.f32 %v7414, %v7747
      %v7907 = vadd.f32 %v7415, %v7750
      %v7908 = vadd.f32 %v7416, %v7752
      %v7909 = vadd.f32 %v7417, %v7755
      %v7910 = vadd.f32 %v7418, %v7757
      %v7911 = vadd.f32 %v7419, %v7760
      %v7912 = vadd.f32 %v7420, %v7762
      %v7913 = vadd.f32 %v7421, %v7765
      %v7914 = vadd.f32 %v7422, %v7767
      %v7915 = vadd.f32 %v7423, %v7770
      %v7916 = vadd.f32 %v7424, %v7772
      %v7917 = vadd.f32 %v7425, %v7775
      %v7918 = vadd.f32 %v7426, %v7777
      %v7919 = vadd.f32 %v7427, %v7780
      %v7920 = vadd.f32 %v7428, %v7782
      %v7921 = vadd.f32 %v7429, %v7785
      %v7922 = vadd.f32 %v7430, %v7787
      %v7923 = vadd.f32 %v7431, %v7790
      %v7924 = vadd.f32 %v7432, %v7792
      %v7925 = vadd.f32 %v7433, %v7795
      %v7926 = vadd.f32 %v7434, %v7797
      %v7927 = vld [vmem:[%s2] sm:$0x1]
      %v7929 = vperm.slane %v7927, 0
      %v7931 = vadd.f32 %v7799, %v7929
      %v7932 = vadd.f32 %v7800, %v7929
      %v7933 = vadd.f32 %v7801, %v7929
      %v7934 = vadd.f32 %v7802, %v7929
      %v7935 = vadd.f32 %v7803, %v7929
      %v7936 = vadd.f32 %v7804, %v7929
      %v7937 = vadd.f32 %v7805, %v7929
      %v7938 = vadd.f32 %v7806, %v7929
      %v7939 = vadd.f32 %v7807, %v7929
      %v7940 = vadd.f32 %v7808, %v7929
      %v7941 = vadd.f32 %v7809, %v7929
      %v7942 = vadd.f32 %v7810, %v7929
      %v7943 = vadd.f32 %v7811, %v7929
      %v7944 = vadd.f32 %v7812, %v7929
      %v7945 = vadd.f32 %v7813, %v7929
      %v7946 = vadd.f32 %v7814, %v7929
      %v7947 = vadd.f32 %v7815, %v7929
      %v7948 = vadd.f32 %v7816, %v7929
      %v7949 = vadd.f32 %v7817, %v7929
      %v7950 = vadd.f32 %v7818, %v7929
      %v7951 = vadd.f32 %v7819, %v7929
      %v7952 = vadd.f32 %v7820, %v7929
      %v7953 = vadd.f32 %v7821, %v7929
      %v7954 = vadd.f32 %v7822, %v7929
      %v7955 = vadd.f32 %v7823, %v7929
      %v7956 = vadd.f32 %v7824, %v7929
      %v7957 = vadd.f32 %v7825, %v7929
      %v7958 = vadd.f32 %v7826, %v7929
      %v7959 = vadd.f32 %v7827, %v7929
      %v7960 = vadd.f32 %v7828, %v7929
      %v7961 = vadd.f32 %v7829, %v7929
      %v7962 = vadd.f32 %v7830, %v7929
      %v7963 = vadd.f32 %v7831, %v7929
      %v7964 = vadd.f32 %v7832, %v7929
      %v7965 = vadd.f32 %v7833, %v7929
      %v7966 = vadd.f32 %v7834, %v7929
      %v7967 = vadd.f32 %v7835, %v7929
      %v7968 = vadd.f32 %v7836, %v7929
      %v7969 = vadd.f32 %v7837, %v7929
      %v7970 = vadd.f32 %v7838, %v7929
      %v7971 = vadd.f32 %v7839, %v7929
      %v7972 = vadd.f32 %v7840, %v7929
      %v7973 = vadd.f32 %v7841, %v7929
      %v7974 = vadd.f32 %v7842, %v7929
      %v7975 = vadd.f32 %v7843, %v7929
      %v7976 = vadd.f32 %v7844, %v7929
      %v7977 = vadd.f32 %v7845, %v7929
      %v7978 = vadd.f32 %v7846, %v7929
      %v7979 = vadd.f32 %v7847, %v7929
      %v7980 = vadd.f32 %v7848, %v7929
      %v7981 = vadd.f32 %v7849, %v7929
      %v7982 = vadd.f32 %v7850, %v7929
      %v7983 = vadd.f32 %v7851, %v7929
      %v7984 = vadd.f32 %v7852, %v7929
      %v7985 = vadd.f32 %v7853, %v7929
      %v7986 = vadd.f32 %v7854, %v7929
      %v7987 = vadd.f32 %v7855, %v7929
      %v7988 = vadd.f32 %v7856, %v7929
      %v7989 = vadd.f32 %v7857, %v7929
      %v7990 = vadd.f32 %v7858, %v7929
      %v7991 = vadd.f32 %v7859, %v7929
      %v7992 = vadd.f32 %v7860, %v7929
      %v7993 = vadd.f32 %v7861, %v7929
      %v7994 = vadd.f32 %v7862, %v7929
      %v7995 = vadd.f32 %v7863, %v7929
      %v7996 = vadd.f32 %v7864, %v7929
      %v7997 = vadd.f32 %v7865, %v7929
      %v7998 = vadd.f32 %v7866, %v7929
      %v7999 = vadd.f32 %v7867, %v7929
      %v8000 = vadd.f32 %v7868, %v7929
      %v8001 = vadd.f32 %v7869, %v7929
      %v8002 = vadd.f32 %v7870, %v7929
      %v8003 = vadd.f32 %v7871, %v7929
      %v8004 = vadd.f32 %v7872, %v7929
      %v8005 = vadd.f32 %v7873, %v7929
      %v8006 = vadd.f32 %v7874, %v7929
      %v8007 = vadd.f32 %v7875, %v7929
      %v8008 = vadd.f32 %v7876, %v7929
      %v8009 = vadd.f32 %v7877, %v7929
      %v8010 = vadd.f32 %v7878, %v7929
      %v8011 = vadd.f32 %v7879, %v7929
      %v8012 = vadd.f32 %v7880, %v7929
      %v8013 = vadd.f32 %v7881, %v7929
      %v8014 = vadd.f32 %v7882, %v7929
      %v8015 = vadd.f32 %v7883, %v7929
      %v8016 = vadd.f32 %v7884, %v7929
      %v8017 = vadd.f32 %v7885, %v7929
      %v8018 = vadd.f32 %v7886, %v7929
      %v8019 = vadd.f32 %v7887, %v7929
      %v8020 = vadd.f32 %v7888, %v7929
      %v8021 = vadd.f32 %v7889, %v7929
      %v8022 = vadd.f32 %v7890, %v7929
      %v8023 = vadd.f32 %v7891, %v7929
      %v8024 = vadd.f32 %v7892, %v7929
      %v8025 = vadd.f32 %v7893, %v7929
      %v8026 = vadd.f32 %v7894, %v7929
      %v8027 = vadd.f32 %v7895, %v7929
      %v8028 = vadd.f32 %v7896, %v7929
      %v8029 = vadd.f32 %v7897, %v7929
      %v8030 = vadd.f32 %v7898, %v7929
      %v8031 = vadd.f32 %v7899, %v7929
      %v8032 = vadd.f32 %v7900, %v7929
      %v8033 = vadd.f32 %v7901, %v7929
      %v8034 = vadd.f32 %v7902, %v7929
      %v8035 = vadd.f32 %v7903, %v7929
      %v8036 = vadd.f32 %v7904, %v7929
      %v8037 = vadd.f32 %v7905, %v7929
      %v8038 = vadd.f32 %v7906, %v7929
      %v8039 = vadd.f32 %v7907, %v7929
      %v8040 = vadd.f32 %v7908, %v7929
      %v8041 = vadd.f32 %v7909, %v7929
      %v8042 = vadd.f32 %v7910, %v7929
      %v8043 = vadd.f32 %v7911, %v7929
      %v8044 = vadd.f32 %v7912, %v7929
      %v8045 = vadd.f32 %v7913, %v7929
      %v8046 = vadd.f32 %v7914, %v7929
      %v8047 = vadd.f32 %v7915, %v7929
      %v8048 = vadd.f32 %v7916, %v7929
      %v8049 = vadd.f32 %v7917, %v7929
      %v8050 = vadd.f32 %v7918, %v7929
      %v8051 = vadd.f32 %v7919, %v7929
      %v8052 = vadd.f32 %v7920, %v7929
      %v8053 = vadd.f32 %v7921, %v7929
      %v8054 = vadd.f32 %v7922, %v7929
      %v8055 = vadd.f32 %v7923, %v7929
      %v8056 = vadd.f32 %v7924, %v7929
      %v8057 = vadd.f32 %v7925, %v7929
      %v8058 = vadd.f32 %v7926, %v7929
      %v8059 = vmax.f32 %v7931, 0.0
      %v8060 = vmax.f32 %v7932, 0.0
      %v8061 = vmax.f32 %v7933, 0.0
      %v8062 = vmax.f32 %v7934, 0.0
      %v8063 = vmax.f32 %v7935, 0.0
      %v8064 = vmax.f32 %v7936, 0.0
      %v8065 = vmax.f32 %v7937, 0.0
      %v8066 = vmax.f32 %v7938, 0.0
      %v8067 = vmax.f32 %v7939, 0.0
      %v8068 = vmax.f32 %v7940, 0.0
      %v8069 = vmax.f32 %v7941, 0.0
      %v8070 = vmax.f32 %v7942, 0.0
      %v8071 = vmax.f32 %v7943, 0.0
      %v8072 = vmax.f32 %v7944, 0.0
      %v8073 = vmax.f32 %v7945, 0.0
      %v8074 = vmax.f32 %v7946, 0.0
      %v8075 = vmax.f32 %v7947, 0.0
      %v8076 = vmax.f32 %v7948, 0.0
      %v8077 = vmax.f32 %v7949, 0.0
      %v8078 = vmax.f32 %v7950, 0.0
      %v8079 = vmax.f32 %v7951, 0.0
      %v8080 = vmax.f32 %v7952, 0.0
      %v8081 = vmax.f32 %v7953, 0.0
      %v8082 = vmax.f32 %v7954, 0.0
      %v8083 = vmax.f32 %v7955, 0.0
      %v8084 = vmax.f32 %v7956, 0.0
      %v8085 = vmax.f32 %v7957, 0.0
      %v8086 = vmax.f32 %v7958, 0.0
      %v8087 = vmax.f32 %v7959, 0.0
      %v8088 = vmax.f32 %v7960, 0.0
      %v8089 = vmax.f32 %v7961, 0.0
      %v8090 = vmax.f32 %v7962, 0.0
      %v8091 = vmax.f32 %v7963, 0.0
      %v8092 = vmax.f32 %v7964, 0.0
      %v8093 = vmax.f32 %v7965, 0.0
      %v8094 = vmax.f32 %v7966, 0.0
      %v8095 = vmax.f32 %v7967, 0.0
      %v8096 = vmax.f32 %v7968, 0.0
      %v8097 = vmax.f32 %v7969, 0.0
      %v8098 = vmax.f32 %v7970, 0.0
      %v8099 = vmax.f32 %v7971, 0.0
      %v8100 = vmax.f32 %v7972, 0.0
      %v8101 = vmax.f32 %v7973, 0.0
      %v8102 = vmax.f32 %v7974, 0.0
      %v8103 = vmax.f32 %v7975, 0.0
      %v8104 = vmax.f32 %v7976, 0.0
      %v8105 = vmax.f32 %v7977, 0.0
      %v8106 = vmax.f32 %v7978, 0.0
      %v8107 = vmax.f32 %v7979, 0.0
      %v8108 = vmax.f32 %v7980, 0.0
      %v8109 = vmax.f32 %v7981, 0.0
      %v8110 = vmax.f32 %v7982, 0.0
      %v8111 = vmax.f32 %v7983, 0.0
      %v8112 = vmax.f32 %v7984, 0.0
      %v8113 = vmax.f32 %v7985, 0.0
      %v8114 = vmax.f32 %v7986, 0.0
      %v8115 = vmax.f32 %v7987, 0.0
      %v8116 = vmax.f32 %v7988, 0.0
      %v8117 = vmax.f32 %v7989, 0.0
      %v8118 = vmax.f32 %v7990, 0.0
      %v8119 = vmax.f32 %v7991, 0.0
      %v8120 = vmax.f32 %v7992, 0.0
      %v8121 = vmax.f32 %v7993, 0.0
      %v8122 = vmax.f32 %v7994, 0.0
      %v8123 = vmax.f32 %v7995, 0.0
      %v8124 = vmax.f32 %v7996, 0.0
      %v8125 = vmax.f32 %v7997, 0.0
      %v8126 = vmax.f32 %v7998, 0.0
      %v8127 = vmax.f32 %v7999, 0.0
      %v8128 = vmax.f32 %v8000, 0.0
      %v8129 = vmax.f32 %v8001, 0.0
      %v8130 = vmax.f32 %v8002, 0.0
      %v8131 = vmax.f32 %v8003, 0.0
      %v8132 = vmax.f32 %v8004, 0.0
      %v8133 = vmax.f32 %v8005, 0.0
      %v8134 = vmax.f32 %v8006, 0.0
      %v8135 = vmax.f32 %v8007, 0.0
      %v8136 = vmax.f32 %v8008, 0.0
      %v8137 = vmax.f32 %v8009, 0.0
      %v8138 = vmax.f32 %v8010, 0.0
      %v8139 = vmax.f32 %v8011, 0.0
      %v8140 = vmax.f32 %v8012, 0.0
      %v8141 = vmax.f32 %v8013, 0.0
      %v8142 = vmax.f32 %v8014, 0.0
      %v8143 = vmax.f32 %v8015, 0.0
      %v8144 = vmax.f32 %v8016, 0.0
      %v8145 = vmax.f32 %v8017, 0.0
      %v8146 = vmax.f32 %v8018, 0.0
      %v8147 = vmax.f32 %v8019, 0.0
      %v8148 = vmax.f32 %v8020, 0.0
      %v8149 = vmax.f32 %v8021, 0.0
      %v8150 = vmax.f32 %v8022, 0.0
      %v8151 = vmax.f32 %v8023, 0.0
      %v8152 = vmax.f32 %v8024, 0.0
      %v8153 = vmax.f32 %v8025, 0.0
      %v8154 = vmax.f32 %v8026, 0.0
      %v8155 = vmax.f32 %v8027, 0.0
      %v8156 = vmax.f32 %v8028, 0.0
      %v8157 = vmax.f32 %v8029, 0.0
      %v8158 = vmax.f32 %v8030, 0.0
      %v8159 = vmax.f32 %v8031, 0.0
      %v8160 = vmax.f32 %v8032, 0.0
      %v8161 = vmax.f32 %v8033, 0.0
      %v8162 = vmax.f32 %v8034, 0.0
      %v8163 = vmax.f32 %v8035, 0.0
      %v8164 = vmax.f32 %v8036, 0.0
      %v8165 = vmax.f32 %v8037, 0.0
      %v8166 = vmax.f32 %v8038, 0.0
      %v8167 = vmax.f32 %v8039, 0.0
      %v8168 = vmax.f32 %v8040, 0.0
      %v8169 = vmax.f32 %v8041, 0.0
      %v8170 = vmax.f32 %v8042, 0.0
      %v8171 = vmax.f32 %v8043, 0.0
      %v8172 = vmax.f32 %v8044, 0.0
      %v8173 = vmax.f32 %v8045, 0.0
      %v8174 = vmax.f32 %v8046, 0.0
      %v8175 = vmax.f32 %v8047, 0.0
      %v8176 = vmax.f32 %v8048, 0.0
      %v8177 = vmax.f32 %v8049, 0.0
      %v8178 = vmax.f32 %v8050, 0.0
      %v8179 = vmax.f32 %v8051, 0.0
      %v8180 = vmax.f32 %v8052, 0.0
      %v8181 = vmax.f32 %v8053, 0.0
      %v8182 = vmax.f32 %v8054, 0.0
      %v8183 = vmax.f32 %v8055, 0.0
      %v8184 = vmax.f32 %v8056, 0.0
      %v8185 = vmax.f32 %v8057, 0.0
      %v8186 = vmax.f32 %v8058, 0.0
      %v8187 = vpack.c.bf16 %v8059, %v8059
      %v8188 = vpack.c.bf16 %v8060, %v8060
      %v8189 = vpack.c.bf16 %v8061, %v8061
      %v8190 = vpack.c.bf16 %v8062, %v8062
      %v8191 = vpack.c.bf16 %v8063, %v8063
      %v8192 = vpack.c.bf16 %v8064, %v8064
      %v8193 = vpack.c.bf16 %v8065, %v8065
      %v8194 = vpack.c.bf16 %v8066, %v8066
      %v8195 = vpack.c.bf16 %v8067, %v8067
      %v8196 = vpack.c.bf16 %v8068, %v8068
      %v8197 = vpack.c.bf16 %v8069, %v8069
      %v8198 = vpack.c.bf16 %v8070, %v8070
      %v8199 = vpack.c.bf16 %v8071, %v8071
      %v8200 = vpack.c.bf16 %v8072, %v8072
      %v8201 = vpack.c.bf16 %v8073, %v8073
      %v8202 = vpack.c.bf16 %v8074, %v8074
      %v8203 = vpack.c.bf16 %v8075, %v8075
      %v8204 = vpack.c.bf16 %v8076, %v8076
      %v8205 = vpack.c.bf16 %v8077, %v8077
      %v8206 = vpack.c.bf16 %v8078, %v8078
      %v8207 = vpack.c.bf16 %v8079, %v8079
      %v8208 = vpack.c.bf16 %v8080, %v8080
      %v8209 = vpack.c.bf16 %v8081, %v8081
      %v8210 = vpack.c.bf16 %v8082, %v8082
      %v8211 = vpack.c.bf16 %v8083, %v8083
      %v8212 = vpack.c.bf16 %v8084, %v8084
      %v8213 = vpack.c.bf16 %v8085, %v8085
      %v8214 = vpack.c.bf16 %v8086, %v8086
      %v8215 = vpack.c.bf16 %v8087, %v8087
      %v8216 = vpack.c.bf16 %v8088, %v8088
      %v8217 = vpack.c.bf16 %v8089, %v8089
      %v8218 = vpack.c.bf16 %v8090, %v8090
      %v8219 = vpack.c.bf16 %v8091, %v8091
      %v8220 = vpack.c.bf16 %v8092, %v8092
      %v8221 = vpack.c.bf16 %v8093, %v8093
      %v8222 = vpack.c.bf16 %v8094, %v8094
      %v8223 = vpack.c.bf16 %v8095, %v8095
      %v8224 = vpack.c.bf16 %v8096, %v8096
      %v8225 = vpack.c.bf16 %v8097, %v8097
      %v8226 = vpack.c.bf16 %v8098, %v8098
      %v8227 = vpack.c.bf16 %v8099, %v8099
      %v8228 = vpack.c.bf16 %v8100, %v8100
      %v8229 = vpack.c.bf16 %v8101, %v8101
      %v8230 = vpack.c.bf16 %v8102, %v8102
      %v8231 = vpack.c.bf16 %v8103, %v8103
      %v8232 = vpack.c.bf16 %v8104, %v8104
      %v8233 = vpack.c.bf16 %v8105, %v8105
      %v8234 = vpack.c.bf16 %v8106, %v8106
      %v8235 = vpack.c.bf16 %v8107, %v8107
      %v8236 = vpack.c.bf16 %v8108, %v8108
      %v8237 = vpack.c.bf16 %v8109, %v8109
      %v8238 = vpack.c.bf16 %v8110, %v8110
      %v8239 = vpack.c.bf16 %v8111, %v8111
      %v8240 = vpack.c.bf16 %v8112, %v8112
      %v8241 = vpack.c.bf16 %v8113, %v8113
      %v8242 = vpack.c.bf16 %v8114, %v8114
      %v8243 = vpack.c.bf16 %v8115, %v8115
      %v8244 = vpack.c.bf16 %v8116, %v8116
      %v8245 = vpack.c.bf16 %v8117, %v8117
      %v8246 = vpack.c.bf16 %v8118, %v8118
      %v8247 = vpack.c.bf16 %v8119, %v8119
      %v8248 = vpack.c.bf16 %v8120, %v8120
      %v8249 = vpack.c.bf16 %v8121, %v8121
      %v8250 = vpack.c.bf16 %v8122, %v8122
      %v8251 = vpack.c.bf16 %v8123, %v8123
      %v8252 = vpack.c.bf16 %v8124, %v8124
      %v8253 = vpack.c.bf16 %v8125, %v8125
      %v8254 = vpack.c.bf16 %v8126, %v8126
      %v8255 = vpack.c.bf16 %v8127, %v8127
      %v8256 = vpack.c.bf16 %v8128, %v8128
      %v8257 = vpack.c.bf16 %v8129, %v8129
      %v8258 = vpack.c.bf16 %v8130, %v8130
      %v8259 = vpack.c.bf16 %v8131, %v8131
      %v8260 = vpack.c.bf16 %v8132, %v8132
      %v8261 = vpack.c.bf16 %v8133, %v8133
      %v8262 = vpack.c.bf16 %v8134, %v8134
      %v8263 = vpack.c.bf16 %v8135, %v8135
      %v8264 = vpack.c.bf16 %v8136, %v8136
      %v8265 = vpack.c.bf16 %v8137, %v8137
      %v8266 = vpack.c.bf16 %v8138, %v8138
      %v8267 = vpack.c.bf16 %v8139, %v8139
      %v8268 = vpack.c.bf16 %v8140, %v8140
      %v8269 = vpack.c.bf16 %v8141, %v8141
      %v8270 = vpack.c.bf16 %v8142, %v8142
      %v8271 = vpack.c.bf16 %v8143, %v8143
      %v8272 = vpack.c.bf16 %v8144, %v8144
      %v8273 = vpack.c.bf16 %v8145, %v8145
      %v8274 = vpack.c.bf16 %v8146, %v8146
      %v8275 = vpack.c.bf16 %v8147, %v8147
      %v8276 = vpack.c.bf16 %v8148, %v8148
      %v8277 = vpack.c.bf16 %v8149, %v8149
      %v8278 = vpack.c.bf16 %v8150, %v8150
      %v8279 = vpack.c.bf16 %v8151, %v8151
      %v8280 = vpack.c.bf16 %v8152, %v8152
      %v8281 = vpack.c.bf16 %v8153, %v8153
      %v8282 = vpack.c.bf16 %v8154, %v8154
      %v8283 = vpack.c.bf16 %v8155, %v8155
      %v8284 = vpack.c.bf16 %v8156, %v8156
      %v8285 = vpack.c.bf16 %v8157, %v8157
      %v8286 = vpack.c.bf16 %v8158, %v8158
      %v8287 = vpack.c.bf16 %v8159, %v8159
      %v8288 = vpack.c.bf16 %v8160, %v8160
      %v8289 = vpack.c.bf16 %v8161, %v8161
      %v8290 = vpack.c.bf16 %v8162, %v8162
      %v8291 = vpack.c.bf16 %v8163, %v8163
      %v8292 = vpack.c.bf16 %v8164, %v8164
      %v8293 = vpack.c.bf16 %v8165, %v8165
      %v8294 = vpack.c.bf16 %v8166, %v8166
      %v8295 = vpack.c.bf16 %v8167, %v8167
      %v8296 = vpack.c.bf16 %v8168, %v8168
      %v8297 = vpack.c.bf16 %v8169, %v8169
      %v8298 = vpack.c.bf16 %v8170, %v8170
      %v8299 = vpack.c.bf16 %v8171, %v8171
      %v8300 = vpack.c.bf16 %v8172, %v8172
      %v8301 = vpack.c.bf16 %v8173, %v8173
      %v8302 = vpack.c.bf16 %v8174, %v8174
      %v8303 = vpack.c.bf16 %v8175, %v8175
      %v8304 = vpack.c.bf16 %v8176, %v8176
      %v8305 = vpack.c.bf16 %v8177, %v8177
      %v8306 = vpack.c.bf16 %v8178, %v8178
      %v8307 = vpack.c.bf16 %v8179, %v8179
      %v8308 = vpack.c.bf16 %v8180, %v8180
      %v8309 = vpack.c.bf16 %v8181, %v8181
      %v8310 = vpack.c.bf16 %v8182, %v8182
      %v8311 = vpack.c.bf16 %v8183, %v8183
      %v8312 = vpack.c.bf16 %v8184, %v8184
      %v8313 = vpack.c.bf16 %v8185, %v8185
      %v8314 = vpack.c.bf16 %v8186, %v8186
      %vm8315 = vcmask 60416
      %8316 = vst.msk [vmem:[%s204] sm:$0xf] %vm8315, %v8187
      %8317 = vst.msk [vmem:[%s204 + $0x4] sm:$0xf] %vm8315, %v8188
      %8318 = vst.msk [vmem:[%s204 + $0x8] sm:$0xf] %vm8315, %v8189
      %8319 = vst.msk [vmem:[%s204 + $0xc] sm:$0xf] %vm8315, %v8190
      %8320 = vst.msk [vmem:[%s204 + $0x10] sm:$0xf] %vm8315, %v8191
      %8321 = vst.msk [vmem:[%s204 + $0x14] sm:$0xf] %vm8315, %v8192
      %8322 = vst.msk [vmem:[%s204 + $0x18] sm:$0xf] %vm8315, %v8193
      %8323 = vst.msk [vmem:[%s204 + $0x1c] sm:$0xf] %vm8315, %v8194
      %8324 = vst.msk [vmem:[%s204 + $0x20] sm:$0xf] %vm8315, %v8195
      %8325 = vst.msk [vmem:[%s204 + $0x24] sm:$0xf] %vm8315, %v8196
      %8326 = vst.msk [vmem:[%s204 + $0x28] sm:$0xf] %vm8315, %v8197
      %8327 = vst.msk [vmem:[%s204 + $0x2c] sm:$0xf] %vm8315, %v8198
      %8328 = vst.msk [vmem:[%s204 + $0x30] sm:$0xf] %vm8315, %v8199
      %8329 = vst.msk [vmem:[%s204 + $0x34] sm:$0xf] %vm8315, %v8200
      %8330 = vst.msk [vmem:[%s204 + $0x38] sm:$0xf] %vm8315, %v8201
      %8331 = vst.msk [vmem:[%s204 + $0x3c] sm:$0xf] %vm8315, %v8202
      %8332 = vst.msk [vmem:[%s204 + $0x40] sm:$0xf] %vm8315, %v8203
      %8333 = vst.msk [vmem:[%s204 + $0x44] sm:$0xf] %vm8315, %v8204
      %8334 = vst.msk [vmem:[%s204 + $0x48] sm:$0xf] %vm8315, %v8205
      %8335 = vst.msk [vmem:[%s204 + $0x4c] sm:$0xf] %vm8315, %v8206
      %8336 = vst.msk [vmem:[%s204 + $0x50] sm:$0xf] %vm8315, %v8207
      %8337 = vst.msk [vmem:[%s204 + $0x54] sm:$0xf] %vm8315, %v8208
      %8338 = vst.msk [vmem:[%s204 + $0x58] sm:$0xf] %vm8315, %v8209
      %8339 = vst.msk [vmem:[%s204 + $0x5c] sm:$0xf] %vm8315, %v8210
      %8340 = vst.msk [vmem:[%s204 + $0x60] sm:$0xf] %vm8315, %v8211
      %8341 = vst.msk [vmem:[%s204 + $0x64] sm:$0xf] %vm8315, %v8212
      %8342 = vst.msk [vmem:[%s204 + $0x68] sm:$0xf] %vm8315, %v8213
      %8343 = vst.msk [vmem:[%s204 + $0x6c] sm:$0xf] %vm8315, %v8214
      %8344 = vst.msk [vmem:[%s204 + $0x70] sm:$0xf] %vm8315, %v8215
      %8345 = vst.msk [vmem:[%s204 + $0x74] sm:$0xf] %vm8315, %v8216
      %8346 = vst.msk [vmem:[%s204 + $0x78] sm:$0xf] %vm8315, %v8217
      %8347 = vst.msk [vmem:[%s204 + $0x7c] sm:$0xf] %vm8315, %v8218
      %8348 = vst.msk [vmem:[%s204 + $0x80] sm:$0xf] %vm8315, %v8219
      %8349 = vst.msk [vmem:[%s204 + $0x84] sm:$0xf] %vm8315, %v8220
      %8350 = vst.msk [vmem:[%s204 + $0x88] sm:$0xf] %vm8315, %v8221
      %8351 = vst.msk [vmem:[%s204 + $0x8c] sm:$0xf] %vm8315, %v8222
      %8352 = vst.msk [vmem:[%s204 + $0x90] sm:$0xf] %vm8315, %v8223
      %8353 = vst.msk [vmem:[%s204 + $0x94] sm:$0xf] %vm8315, %v8224
      %8354 = vst.msk [vmem:[%s204 + $0x98] sm:$0xf] %vm8315, %v8225
      %8355 = vst.msk [vmem:[%s204 + $0x9c] sm:$0xf] %vm8315, %v8226
      %8356 = vst.msk [vmem:[%s204 + $0xa0] sm:$0xf] %vm8315, %v8227
      %8357 = vst.msk [vmem:[%s204 + $0xa4] sm:$0xf] %vm8315, %v8228
      %8358 = vst.msk [vmem:[%s204 + $0xa8] sm:$0xf] %vm8315, %v8229
      %8359 = vst.msk [vmem:[%s204 + $0xac] sm:$0xf] %vm8315, %v8230
      %8360 = vst.msk [vmem:[%s204 + $0xb0] sm:$0xf] %vm8315, %v8231
      %8361 = vst.msk [vmem:[%s204 + $0xb4] sm:$0xf] %vm8315, %v8232
      %8362 = vst.msk [vmem:[%s204 + $0xb8] sm:$0xf] %vm8315, %v8233
      %8363 = vst.msk [vmem:[%s204 + $0xbc] sm:$0xf] %vm8315, %v8234
      %8364 = vst.msk [vmem:[%s204 + $0xc0] sm:$0xf] %vm8315, %v8235
      %8365 = vst.msk [vmem:[%s204 + $0xc4] sm:$0xf] %vm8315, %v8236
      %8366 = vst.msk [vmem:[%s204 + $0xc8] sm:$0xf] %vm8315, %v8237
      %8367 = vst.msk [vmem:[%s204 + $0xcc] sm:$0xf] %vm8315, %v8238
      %8368 = vst.msk [vmem:[%s204 + $0xd0] sm:$0xf] %vm8315, %v8239
      %8369 = vst.msk [vmem:[%s204 + $0xd4] sm:$0xf] %vm8315, %v8240
      %8370 = vst.msk [vmem:[%s204 + $0xd8] sm:$0xf] %vm8315, %v8241
      %8371 = vst.msk [vmem:[%s204 + $0xdc] sm:$0xf] %vm8315, %v8242
      %8372 = vst.msk [vmem:[%s204 + $0xe0] sm:$0xf] %vm8315, %v8243
      %8373 = vst.msk [vmem:[%s204 + $0xe4] sm:$0xf] %vm8315, %v8244
      %8374 = vst.msk [vmem:[%s204 + $0xe8] sm:$0xf] %vm8315, %v8245
      %8375 = vst.msk [vmem:[%s204 + $0xec] sm:$0xf] %vm8315, %v8246
      %8376 = vst.msk [vmem:[%s204 + $0xf0] sm:$0xf] %vm8315, %v8247
      %8377 = vst.msk [vmem:[%s204 + $0xf4] sm:$0xf] %vm8315, %v8248
      %8378 = vst.msk [vmem:[%s204 + $0xf8] sm:$0xf] %vm8315, %v8249
      %8379 = vst.msk [vmem:[%s204 + $0xfc] sm:$0xf] %vm8315, %v8250
      %8380 = vst.msk [vmem:[%s204 + $0x100] sm:$0xf] %vm8315, %v8251
      %8381 = vst.msk [vmem:[%s204 + $0x104] sm:$0xf] %vm8315, %v8252
      %8382 = vst.msk [vmem:[%s204 + $0x108] sm:$0xf] %vm8315, %v8253
      %8383 = vst.msk [vmem:[%s204 + $0x10c] sm:$0xf] %vm8315, %v8254
      %8384 = vst.msk [vmem:[%s204 + $0x110] sm:$0xf] %vm8315, %v8255
      %8385 = vst.msk [vmem:[%s204 + $0x114] sm:$0xf] %vm8315, %v8256
      %8386 = vst.msk [vmem:[%s204 + $0x118] sm:$0xf] %vm8315, %v8257
      %8387 = vst.msk [vmem:[%s204 + $0x11c] sm:$0xf] %vm8315, %v8258
      %8388 = vst.msk [vmem:[%s204 + $0x120] sm:$0xf] %vm8315, %v8259
      %8389 = vst.msk [vmem:[%s204 + $0x124] sm:$0xf] %vm8315, %v8260
      %8390 = vst.msk [vmem:[%s204 + $0x128] sm:$0xf] %vm8315, %v8261
      %8391 = vst.msk [vmem:[%s204 + $0x12c] sm:$0xf] %vm8315, %v8262
      %8392 = vst.msk [vmem:[%s204 + $0x130] sm:$0xf] %vm8315, %v8263
      %8393 = vst.msk [vmem:[%s204 + $0x134] sm:$0xf] %vm8315, %v8264
      %8394 = vst.msk [vmem:[%s204 + $0x138] sm:$0xf] %vm8315, %v8265
      %8395 = vst.msk [vmem:[%s204 + $0x13c] sm:$0xf] %vm8315, %v8266
      %8396 = vst.msk [vmem:[%s204 + $0x140] sm:$0xf] %vm8315, %v8267
      %8397 = vst.msk [vmem:[%s204 + $0x144] sm:$0xf] %vm8315, %v8268
      %8398 = vst.msk [vmem:[%s204 + $0x148] sm:$0xf] %vm8315, %v8269
      %8399 = vst.msk [vmem:[%s204 + $0x14c] sm:$0xf] %vm8315, %v8270
      %8400 = vst.msk [vmem:[%s204 + $0x150] sm:$0xf] %vm8315, %v8271
      %8401 = vst.msk [vmem:[%s204 + $0x154] sm:$0xf] %vm8315, %v8272
      %8402 = vst.msk [vmem:[%s204 + $0x158] sm:$0xf] %vm8315, %v8273
      %8403 = vst.msk [vmem:[%s204 + $0x15c] sm:$0xf] %vm8315, %v8274
      %8404 = vst.msk [vmem:[%s204 + $0x160] sm:$0xf] %vm8315, %v8275
      %8405 = vst.msk [vmem:[%s204 + $0x164] sm:$0xf] %vm8315, %v8276
      %8406 = vst.msk [vmem:[%s204 + $0x168] sm:$0xf] %vm8315, %v8277
      %8407 = vst.msk [vmem:[%s204 + $0x16c] sm:$0xf] %vm8315, %v8278
      %8408 = vst.msk [vmem:[%s204 + $0x170] sm:$0xf] %vm8315, %v8279
      %8409 = vst.msk [vmem:[%s204 + $0x174] sm:$0xf] %vm8315, %v8280
      %8410 = vst.msk [vmem:[%s204 + $0x178] sm:$0xf] %vm8315, %v8281
      %8411 = vst.msk [vmem:[%s204 + $0x17c] sm:$0xf] %vm8315, %v8282
      %8412 = vst.msk [vmem:[%s204 + $0x180] sm:$0xf] %vm8315, %v8283
      %8413 = vst.msk [vmem:[%s204 + $0x184] sm:$0xf] %vm8315, %v8284
      %8414 = vst.msk [vmem:[%s204 + $0x188] sm:$0xf] %vm8315, %v8285
      %8415 = vst.msk [vmem:[%s204 + $0x18c] sm:$0xf] %vm8315, %v8286
      %8416 = vst.msk [vmem:[%s204 + $0x190] sm:$0xf] %vm8315, %v8287
      %8417 = vst.msk [vmem:[%s204 + $0x194] sm:$0xf] %vm8315, %v8288
      %8418 = vst.msk [vmem:[%s204 + $0x198] sm:$0xf] %vm8315, %v8289
      %8419 = vst.msk [vmem:[%s204 + $0x19c] sm:$0xf] %vm8315, %v8290
      %8420 = vst.msk [vmem:[%s204 + $0x1a0] sm:$0xf] %vm8315, %v8291
      %8421 = vst.msk [vmem:[%s204 + $0x1a4] sm:$0xf] %vm8315, %v8292
      %8422 = vst.msk [vmem:[%s204 + $0x1a8] sm:$0xf] %vm8315, %v8293
      %8423 = vst.msk [vmem:[%s204 + $0x1ac] sm:$0xf] %vm8315, %v8294
      %8424 = vst.msk [vmem:[%s204 + $0x1b0] sm:$0xf] %vm8315, %v8295
      %8425 = vst.msk [vmem:[%s204 + $0x1b4] sm:$0xf] %vm8315, %v8296
      %8426 = vst.msk [vmem:[%s204 + $0x1b8] sm:$0xf] %vm8315, %v8297
      %8427 = vst.msk [vmem:[%s204 + $0x1bc] sm:$0xf] %vm8315, %v8298
      %8428 = vst.msk [vmem:[%s204 + $0x1c0] sm:$0xf] %vm8315, %v8299
      %8429 = vst.msk [vmem:[%s204 + $0x1c4] sm:$0xf] %vm8315, %v8300
      %8430 = vst.msk [vmem:[%s204 + $0x1c8] sm:$0xf] %vm8315, %v8301
      %8431 = vst.msk [vmem:[%s204 + $0x1cc] sm:$0xf] %vm8315, %v8302
      %8432 = vst.msk [vmem:[%s204 + $0x1d0] sm:$0xf] %vm8315, %v8303
      %8433 = vst.msk [vmem:[%s204 + $0x1d4] sm:$0xf] %vm8315, %v8304
      %8434 = vst.msk [vmem:[%s204 + $0x1d8] sm:$0xf] %vm8315, %v8305
      %8435 = vst.msk [vmem:[%s204 + $0x1dc] sm:$0xf] %vm8315, %v8306
      %8436 = vst.msk [vmem:[%s204 + $0x1e0] sm:$0xf] %vm8315, %v8307
      %8437 = vst.msk [vmem:[%s204 + $0x1e4] sm:$0xf] %vm8315, %v8308
      %8438 = vst.msk [vmem:[%s204 + $0x1e8] sm:$0xf] %vm8315, %v8309
      %8439 = vst.msk [vmem:[%s204 + $0x1ec] sm:$0xf] %vm8315, %v8310
      %8440 = vst.msk [vmem:[%s204 + $0x1f0] sm:$0xf] %vm8315, %v8311
      %8441 = vst.msk [vmem:[%s204 + $0x1f4] sm:$0xf] %vm8315, %v8312
      %8442 = vst.msk [vmem:[%s204 + $0x1f8] sm:$0xf] %vm8315, %v8313
      %8443 = vst.msk [vmem:[%s204 + $0x1fc] sm:$0xf] %vm8315, %v8314
      %8444 = vxpose.xlu0.b32.start [1/16] %v8059, 128
      %8445 = vxpose.xlu0.b32.cont [2/16] %v8060, 128
      %8446 = vxpose.xlu0.b32.cont [3/16] %v8061, 128
      %8447 = vxpose.xlu0.b32.cont [4/16] %v8062, 128
      %8448 = vxpose.xlu0.b32.cont [5/16] %v8063, 128
      %8449 = vxpose.xlu0.b32.cont [6/16] %v8064, 128
      %8450 = vxpose.xlu0.b32.cont [7/16] %v8065, 128
      %8451 = vxpose.xlu0.b32.cont [8/16] %v8066, 128
      %8452 = vxpose.xlu0.b32.cont [9/16] %v8067, 128
      %8453 = vxpose.xlu0.b32.cont [10/16] %v8068, 128
      %8454 = vxpose.xlu0.b32.cont [11/16] %v8069, 128
      %8455 = vxpose.xlu0.b32.cont [12/16] %v8070, 128
      %8456 = vxpose.xlu0.b32.cont [13/16] %v8071, 128
      %8457 = vxpose.xlu0.b32.cont [14/16] %v8072, 128
      %8458 = vxpose.xlu0.b32.cont [15/16] %v8073, 128
      %8459 = vxpose.xlu0.b32.end [16/16] %v8074, 128
      %v8460 = vpop.trf.xlu0
      %v8461 = vpop.trf.xlu0
      %v8462 = vpop.trf.xlu0
      %v8463 = vpop.trf.xlu0
      %v8464 = vpop.trf.xlu0
      %v8465 = vpop.trf.xlu0
      %v8466 = vpop.trf.xlu0
      %v8467 = vpop.trf.xlu0
      %v8468 = vpop.trf.xlu0
      %v8469 = vpop.trf.xlu0
      %v8470 = vpop.trf.xlu0
      %v8471 = vpop.trf.xlu0
      %v8472 = vpop.trf.xlu0
      %v8473 = vpop.trf.xlu0
      %v8474 = vpop.trf.xlu0
      %v8475 = vpop.trf.xlu0
      %8476 = vxpose.xlu0.b32.start [1/16] %v8075, 128
      %8477 = vxpose.xlu0.b32.cont [2/16] %v8076, 128
      %8478 = vxpose.xlu0.b32.cont [3/16] %v8077, 128
      %8479 = vxpose.xlu0.b32.cont [4/16] %v8078, 128
      %8480 = vxpose.xlu0.b32.cont [5/16] %v8079, 128
      %8481 = vxpose.xlu0.b32.cont [6/16] %v8080, 128
      %8482 = vxpose.xlu0.b32.cont [7/16] %v8081, 128
      %8483 = vxpose.xlu0.b32.cont [8/16] %v8082, 128
      %8484 = vxpose.xlu0.b32.cont [9/16] %v8083, 128
      %8485 = vxpose.xlu0.b32.cont [10/16] %v8084, 128
      %8486 = vxpose.xlu0.b32.cont [11/16] %v8085, 128
      %8487 = vxpose.xlu0.b32.cont [12/16] %v8086, 128
      %8488 = vxpose.xlu0.b32.cont [13/16] %v8087, 128
      %8489 = vxpose.xlu0.b32.cont [14/16] %v8088, 128
      %8490 = vxpose.xlu0.b32.cont [15/16] %v8089, 128
      %8491 = vxpose.xlu0.b32.end [16/16] %v8090, 128
      %v8492 = vpop.trf.xlu0
      %v8493 = vpop.trf.xlu0
      %v8494 = vpop.trf.xlu0
      %v8495 = vpop.trf.xlu0
      %v8496 = vpop.trf.xlu0
      %v8497 = vpop.trf.xlu0
      %v8498 = vpop.trf.xlu0
      %v8499 = vpop.trf.xlu0
      %v8500 = vpop.trf.xlu0
      %v8501 = vpop.trf.xlu0
      %v8502 = vpop.trf.xlu0
      %v8503 = vpop.trf.xlu0
      %v8504 = vpop.trf.xlu0
      %v8505 = vpop.trf.xlu0
      %v8506 = vpop.trf.xlu0
      %v8507 = vpop.trf.xlu0
      %8508 = vxpose.xlu0.b32.start [1/16] %v8091, 128
      %8509 = vxpose.xlu0.b32.cont [2/16] %v8092, 128
      %8510 = vxpose.xlu0.b32.cont [3/16] %v8093, 128
      %8511 = vxpose.xlu0.b32.cont [4/16] %v8094, 128
      %8512 = vxpose.xlu0.b32.cont [5/16] %v8095, 128
      %8513 = vxpose.xlu0.b32.cont [6/16] %v8096, 128
      %8514 = vxpose.xlu0.b32.cont [7/16] %v8097, 128
      %8515 = vxpose.xlu0.b32.cont [8/16] %v8098, 128
      %8516 = vxpose.xlu0.b32.cont [9/16] %v8099, 128
      %8517 = vxpose.xlu0.b32.cont [10/16] %v8100, 128
      %8518 = vxpose.xlu0.b32.cont [11/16] %v8101, 128
      %8519 = vxpose.xlu0.b32.cont [12/16] %v8102, 128
      %8520 = vxpose.xlu0.b32.cont [13/16] %v8103, 128
      %8521 = vxpose.xlu0.b32.cont [14/16] %v8104, 128
      %8522 = vxpose.xlu0.b32.cont [15/16] %v8105, 128
      %8523 = vxpose.xlu0.b32.end [16/16] %v8106, 128
      %v8524 = vpop.trf.xlu0
      %v8525 = vpop.trf.xlu0
      %v8526 = vpop.trf.xlu0
      %v8527 = vpop.trf.xlu0
      %v8528 = vpop.trf.xlu0
      %v8529 = vpop.trf.xlu0
      %v8530 = vpop.trf.xlu0
      %v8531 = vpop.trf.xlu0
      %v8532 = vpop.trf.xlu0
      %v8533 = vpop.trf.xlu0
      %v8534 = vpop.trf.xlu0
      %v8535 = vpop.trf.xlu0
      %v8536 = vpop.trf.xlu0
      %v8537 = vpop.trf.xlu0
      %v8538 = vpop.trf.xlu0
      %v8539 = vpop.trf.xlu0
      %8540 = vxpose.xlu0.b32.start [1/16] %v8107, 128
      %8541 = vxpose.xlu0.b32.cont [2/16] %v8108, 128
      %8542 = vxpose.xlu0.b32.cont [3/16] %v8109, 128
      %8543 = vxpose.xlu0.b32.cont [4/16] %v8110, 128
      %8544 = vxpose.xlu0.b32.cont [5/16] %v8111, 128
      %8545 = vxpose.xlu0.b32.cont [6/16] %v8112, 128
      %8546 = vxpose.xlu0.b32.cont [7/16] %v8113, 128
      %8547 = vxpose.xlu0.b32.cont [8/16] %v8114, 128
      %8548 = vxpose.xlu0.b32.cont [9/16] %v8115, 128
      %8549 = vxpose.xlu0.b32.cont [10/16] %v8116, 128
      %8550 = vxpose.xlu0.b32.cont [11/16] %v8117, 128
      %8551 = vxpose.xlu0.b32.cont [12/16] %v8118, 128
      %8552 = vxpose.xlu0.b32.cont [13/16] %v8119, 128
      %8553 = vxpose.xlu0.b32.cont [14/16] %v8120, 128
      %8554 = vxpose.xlu0.b32.cont [15/16] %v8121, 128
      %8555 = vxpose.xlu0.b32.end [16/16] %v8122, 128
      %v8556 = vpop.trf.xlu0
      %v8557 = vpop.trf.xlu0
      %v8558 = vpop.trf.xlu0
      %v8559 = vpop.trf.xlu0
      %v8560 = vpop.trf.xlu0
      %v8561 = vpop.trf.xlu0
      %v8562 = vpop.trf.xlu0
      %v8563 = vpop.trf.xlu0
      %v8564 = vpop.trf.xlu0
      %v8565 = vpop.trf.xlu0
      %v8566 = vpop.trf.xlu0
      %v8567 = vpop.trf.xlu0
      %v8568 = vpop.trf.xlu0
      %v8569 = vpop.trf.xlu0
      %v8570 = vpop.trf.xlu0
      %v8571 = vpop.trf.xlu0
      %8572 = vxpose.xlu0.b32.start [1/16] %v8123, 128
      %8573 = vxpose.xlu0.b32.cont [2/16] %v8124, 128
      %8574 = vxpose.xlu0.b32.cont [3/16] %v8125, 128
      %8575 = vxpose.xlu0.b32.cont [4/16] %v8126, 128
      %8576 = vxpose.xlu0.b32.cont [5/16] %v8127, 128
      %8577 = vxpose.xlu0.b32.cont [6/16] %v8128, 128
      %8578 = vxpose.xlu0.b32.cont [7/16] %v8129, 128
      %8579 = vxpose.xlu0.b32.cont [8/16] %v8130, 128
      %8580 = vxpose.xlu0.b32.cont [9/16] %v8131, 128
      %8581 = vxpose.xlu0.b32.cont [10/16] %v8132, 128
      %8582 = vxpose.xlu0.b32.cont [11/16] %v8133, 128
      %8583 = vxpose.xlu0.b32.cont [12/16] %v8134, 128
      %8584 = vxpose.xlu0.b32.cont [13/16] %v8135, 128
      %8585 = vxpose.xlu0.b32.cont [14/16] %v8136, 128
      %8586 = vxpose.xlu0.b32.cont [15/16] %v8137, 128
      %8587 = vxpose.xlu0.b32.end [16/16] %v8138, 128
      %v8588 = vpop.trf.xlu0
      %v8589 = vpop.trf.xlu0
      %v8590 = vpop.trf.xlu0
      %v8591 = vpop.trf.xlu0
      %v8592 = vpop.trf.xlu0
      %v8593 = vpop.trf.xlu0
      %v8594 = vpop.trf.xlu0
      %v8595 = vpop.trf.xlu0
      %v8596 = vpop.trf.xlu0
      %v8597 = vpop.trf.xlu0
      %v8598 = vpop.trf.xlu0
      %v8599 = vpop.trf.xlu0
      %v8600 = vpop.trf.xlu0
      %v8601 = vpop.trf.xlu0
      %v8602 = vpop.trf.xlu0
      %v8603 = vpop.trf.xlu0
      %8604 = vxpose.xlu0.b32.start [1/16] %v8139, 128
      %8605 = vxpose.xlu0.b32.cont [2/16] %v8140, 128
      %8606 = vxpose.xlu0.b32.cont [3/16] %v8141, 128
      %8607 = vxpose.xlu0.b32.cont [4/16] %v8142, 128
      %8608 = vxpose.xlu0.b32.cont [5/16] %v8143, 128
      %8609 = vxpose.xlu0.b32.cont [6/16] %v8144, 128
      %8610 = vxpose.xlu0.b32.cont [7/16] %v8145, 128
      %8611 = vxpose.xlu0.b32.cont [8/16] %v8146, 128
      %8612 = vxpose.xlu0.b32.cont [9/16] %v8147, 128
      %8613 = vxpose.xlu0.b32.cont [10/16] %v8148, 128
      %8614 = vxpose.xlu0.b32.cont [11/16] %v8149, 128
      %8615 = vxpose.xlu0.b32.cont [12/16] %v8150, 128
      %8616 = vxpose.xlu0.b32.cont [13/16] %v8151, 128
      %8617 = vxpose.xlu0.b32.cont [14/16] %v8152, 128
      %8618 = vxpose.xlu0.b32.cont [15/16] %v8153, 128
      %8619 = vxpose.xlu0.b32.end [16/16] %v8154, 128
      %v8620 = vpop.trf.xlu0
      %v8621 = vpop.trf.xlu0
      %v8622 = vpop.trf.xlu0
      %v8623 = vpop.trf.xlu0
      %v8624 = vpop.trf.xlu0
      %v8625 = vpop.trf.xlu0
      %v8626 = vpop.trf.xlu0
      %v8627 = vpop.trf.xlu0
      %v8628 = vpop.trf.xlu0
      %v8629 = vpop.trf.xlu0
      %v8630 = vpop.trf.xlu0
      %v8631 = vpop.trf.xlu0
      %v8632 = vpop.trf.xlu0
      %v8633 = vpop.trf.xlu0
      %v8634 = vpop.trf.xlu0
      %v8635 = vpop.trf.xlu0
      %8636 = vxpose.xlu0.b32.start [1/16] %v8155, 128
      %8637 = vxpose.xlu0.b32.cont [2/16] %v8156, 128
      %8638 = vxpose.xlu0.b32.cont [3/16] %v8157, 128
      %8639 = vxpose.xlu0.b32.cont [4/16] %v8158, 128
      %8640 = vxpose.xlu0.b32.cont [5/16] %v8159, 128
      %8641 = vxpose.xlu0.b32.cont [6/16] %v8160, 128
      %8642 = vxpose.xlu0.b32.cont [7/16] %v8161, 128
      %8643 = vxpose.xlu0.b32.cont [8/16] %v8162, 128
      %8644 = vxpose.xlu0.b32.cont [9/16] %v8163, 128
      %8645 = vxpose.xlu0.b32.cont [10/16] %v8164, 128
      %8646 = vxpose.xlu0.b32.cont [11/16] %v8165, 128
      %8647 = vxpose.xlu0.b32.cont [12/16] %v8166, 128
      %8648 = vxpose.xlu0.b32.cont [13/16] %v8167, 128
      %8649 = vxpose.xlu0.b32.cont [14/16] %v8168, 128
      %8650 = vxpose.xlu0.b32.cont [15/16] %v8169, 128
      %8651 = vxpose.xlu0.b32.end [16/16] %v8170, 128
      %v8652 = vpop.trf.xlu0
      %v8653 = vpop.trf.xlu0
      %v8654 = vpop.trf.xlu0
      %v8655 = vpop.trf.xlu0
      %v8656 = vpop.trf.xlu0
      %v8657 = vpop.trf.xlu0
      %v8658 = vpop.trf.xlu0
      %v8659 = vpop.trf.xlu0
      %v8660 = vpop.trf.xlu0
      %v8661 = vpop.trf.xlu0
      %v8662 = vpop.trf.xlu0
      %v8663 = vpop.trf.xlu0
      %v8664 = vpop.trf.xlu0
      %v8665 = vpop.trf.xlu0
      %v8666 = vpop.trf.xlu0
      %v8667 = vpop.trf.xlu0
      %8668 = vxpose.xlu0.b32.start [1/16] %v8171, 128
      %8669 = vxpose.xlu0.b32.cont [2/16] %v8172, 128
      %8670 = vxpose.xlu0.b32.cont [3/16] %v8173, 128
      %8671 = vxpose.xlu0.b32.cont [4/16] %v8174, 128
      %8672 = vxpose.xlu0.b32.cont [5/16] %v8175, 128
      %8673 = vxpose.xlu0.b32.cont [6/16] %v8176, 128
      %8674 = vxpose.xlu0.b32.cont [7/16] %v8177, 128
      %8675 = vxpose.xlu0.b32.cont [8/16] %v8178, 128
      %8676 = vxpose.xlu0.b32.cont [9/16] %v8179, 128
      %8677 = vxpose.xlu0.b32.cont [10/16] %v8180, 128
      %8678 = vxpose.xlu0.b32.cont [11/16] %v8181, 128
      %8679 = vxpose.xlu0.b32.cont [12/16] %v8182, 128
      %8680 = vxpose.xlu0.b32.cont [13/16] %v8183, 128
      %8681 = vxpose.xlu0.b32.cont [14/16] %v8184, 128
      %8682 = vxpose.xlu0.b32.cont [15/16] %v8185, 128
      %8683 = vxpose.xlu0.b32.end [16/16] %v8186, 128
      %v8684 = vpop.trf.xlu0
      %v8685 = vpop.trf.xlu0
      %v8686 = vpop.trf.xlu0
      %v8687 = vpop.trf.xlu0
      %v8688 = vpop.trf.xlu0
      %v8689 = vpop.trf.xlu0
      %v8690 = vpop.trf.xlu0
      %v8691 = vpop.trf.xlu0
      %v8692 = vpop.trf.xlu0
      %v8693 = vpop.trf.xlu0
      %v8694 = vpop.trf.xlu0
      %v8695 = vpop.trf.xlu0
      %v8696 = vpop.trf.xlu0
      %v8697 = vpop.trf.xlu0
      %v8698 = vpop.trf.xlu0
      %v8699 = vpop.trf.xlu0
      %8700 = vmatpush.msra.mxu0 %v8074
      %8701 = vmatpush.msra.mxu0 %v8073
      %8702 = vmatpush.msra.mxu0 %v8072
      %8703 = vmatpush.msra.mxu0 %v8071
      %8704 = vmatpush.msra.mxu0 %v8070
      %8705 = vmatpush.msra.mxu0 %v8069
      %8706 = vmatpush.msra.mxu0 %v8068
      %8707 = vmatpush.msra.mxu0 %v8067
      %8708 = vmatpush.msra.mxu0 %v8066
      %8709 = vmatpush.msra.mxu0 %v8065
      %8710 = vmatpush.msra.mxu0 %v8064
      %8711 = vmatpush.msra.mxu0 %v8063
      %8712 = vmatpush.msra.mxu0 %v8062
      %8713 = vmatpush.msra.mxu0 %v8061
      %8714 = vmatpush.msra.mxu0 %v8060
      %8715 = vmatpush.msra.mxu0 %v8059
      %8716 = vmatmul.f32.gmra.mxu0 %v8460
      %v8717 = vpop.f32.mrf.mxu0
      %v8718 = vadd.f32 0.0, %v8717
      %8719 = vdwg.mxu0
      %8720 = vmatpush.msra.mxu0 %v8090
      %8721 = vmatpush.msra.mxu0 %v8089
      %8722 = vmatpush.msra.mxu0 %v8088
      %8723 = vmatpush.msra.mxu0 %v8087
      %8724 = vmatpush.msra.mxu0 %v8086
      %8725 = vmatpush.msra.mxu0 %v8085
      %8726 = vmatpush.msra.mxu0 %v8084
      %8727 = vmatpush.msra.mxu0 %v8083
      %8728 = vmatpush.msra.mxu0 %v8082
      %8729 = vmatpush.msra.mxu0 %v8081
      %8730 = vmatpush.msra.mxu0 %v8080
      %8731 = vmatpush.msra.mxu0 %v8079
      %8732 = vmatpush.msra.mxu0 %v8078
      %8733 = vmatpush.msra.mxu0 %v8077
      %8734 = vmatpush.msra.mxu0 %v8076
      %8735 = vmatpush.msra.mxu0 %v8075
      %8736 = vmatmul.f32.gmra.mxu0 %v8492
      %v8737 = vpop.f32.mrf.mxu0
      %v8738 = vadd.f32 %v8718, %v8737
      %8739 = vdwg.mxu0
      %8740 = vmatpush.msra.mxu0 %v8106
      %8741 = vmatpush.msra.mxu0 %v8105
      %8742 = vmatpush.msra.mxu0 %v8104
      %8743 = vmatpush.msra.mxu0 %v8103
      %8744 = vmatpush.msra.mxu0 %v8102
      %8745 = vmatpush.msra.mxu0 %v8101
      %8746 = vmatpush.msra.mxu0 %v8100
      %8747 = vmatpush.msra.mxu0 %v8099
      %8748 = vmatpush.msra.mxu0 %v8098
      %8749 = vmatpush.msra.mxu0 %v8097
      %8750 = vmatpush.msra.mxu0 %v8096
      %8751 = vmatpush.msra.mxu0 %v8095
      %8752 = vmatpush.msra.mxu0 %v8094
      %8753 = vmatpush.msra.mxu0 %v8093
      %8754 = vmatpush.msra.mxu0 %v8092
      %8755 = vmatpush.msra.mxu0 %v8091
      %8756 = vmatmul.f32.gmra.mxu0 %v8524
      %v8757 = vpop.f32.mrf.mxu0
      %v8758 = vadd.f32 %v8738, %v8757
      %8759 = vdwg.mxu0
      %8760 = vmatpush.msra.mxu0 %v8122
      %8761 = vmatpush.msra.mxu0 %v8121
      %8762 = vmatpush.msra.mxu0 %v8120
      %8763 = vmatpush.msra.mxu0 %v8119
      %8764 = vmatpush.msra.mxu0 %v8118
      %8765 = vmatpush.msra.mxu0 %v8117
      %8766 = vmatpush.msra.mxu0 %v8116
      %8767 = vmatpush.msra.mxu0 %v8115
      %8768 = vmatpush.msra.mxu0 %v8114
      %8769 = vmatpush.msra.mxu0 %v8113
      %8770 = vmatpush.msra.mxu0 %v8112
      %8771 = vmatpush.msra.mxu0 %v8111
      %8772 = vmatpush.msra.mxu0 %v8110
      %8773 = vmatpush.msra.mxu0 %v8109
      %8774 = vmatpush.msra.mxu0 %v8108
      %8775 = vmatpush.msra.mxu0 %v8107
      %8776 = vmatmul.f32.gmra.mxu0 %v8556
      %v8777 = vpop.f32.mrf.mxu0
      %v8778 = vadd.f32 %v8758, %v8777
      %8779 = vdwg.mxu0
      %8780 = vmatpush.msra.mxu0 %v8138
      %8781 = vmatpush.msra.mxu0 %v8137
      %8782 = vmatpush.msra.mxu0 %v8136
      %8783 = vmatpush.msra.mxu0 %v8135
      %8784 = vmatpush.msra.mxu0 %v8134
      %8785 = vmatpush.msra.mxu0 %v8133
      %8786 = vmatpush.msra.mxu0 %v8132
      %8787 = vmatpush.msra.mxu0 %v8131
      %8788 = vmatpush.msra.mxu0 %v8130
      %8789 = vmatpush.msra.mxu0 %v8129
      %8790 = vmatpush.msra.mxu0 %v8128
      %8791 = vmatpush.msra.mxu0 %v8127
      %8792 = vmatpush.msra.mxu0 %v8126
      %8793 = vmatpush.msra.mxu0 %v8125
      %8794 = vmatpush.msra.mxu0 %v8124
      %8795 = vmatpush.msra.mxu0 %v8123
      %8796 = vmatmul.f32.gmra.mxu0 %v8588
      %v8797 = vpop.f32.mrf.mxu0
      %v8798 = vadd.f32 %v8778, %v8797
      %8799 = vdwg.mxu0
      %8800 = vmatpush.msra.mxu0 %v8154
      %8801 = vmatpush.msra.mxu0 %v8153
      %8802 = vmatpush.msra.mxu0 %v8152
      %8803 = vmatpush.msra.mxu0 %v8151
      %8804 = vmatpush.msra.mxu0 %v8150
      %8805 = vmatpush.msra.mxu0 %v8149
      %8806 = vmatpush.msra.mxu0 %v8148
      %8807 = vmatpush.msra.mxu0 %v8147
      %8808 = vmatpush.msra.mxu0 %v8146
      %8809 = vmatpush.msra.mxu0 %v8145
      %8810 = vmatpush.msra.mxu0 %v8144
      %8811 = vmatpush.msra.mxu0 %v8143
      %8812 = vmatpush.msra.mxu0 %v8142
      %8813 = vmatpush.msra.mxu0 %v8141
      %8814 = vmatpush.msra.mxu0 %v8140
      %8815 = vmatpush.msra.mxu0 %v8139
      %8816 = vmatmul.f32.gmra.mxu0 %v8620
      %v8817 = vpop.f32.mrf.mxu0
      %v8818 = vadd.f32 %v8798, %v8817
      %8819 = vdwg.mxu0
      %8820 = vmatpush.msra.mxu0 %v8170
      %8821 = vmatpush.msra.mxu0 %v8169
      %8822 = vmatpush.msra.mxu0 %v8168
      %8823 = vmatpush.msra.mxu0 %v8167
      %8824 = vmatpush.msra.mxu0 %v8166
      %8825 = vmatpush.msra.mxu0 %v8165
      %8826 = vmatpush.msra.mxu0 %v8164
      %8827 = vmatpush.msra.mxu0 %v8163
      %8828 = vmatpush.msra.mxu0 %v8162
      %8829 = vmatpush.msra.mxu0 %v8161
      %8830 = vmatpush.msra.mxu0 %v8160
      %8831 = vmatpush.msra.mxu0 %v8159
      %8832 = vmatpush.msra.mxu0 %v8158
      %8833 = vmatpush.msra.mxu0 %v8157
      %8834 = vmatpush.msra.mxu0 %v8156
      %8835 = vmatpush.msra.mxu0 %v8155
      %8836 = vmatmul.f32.gmra.mxu0 %v8652
      %v8837 = vpop.f32.mrf.mxu0
      %v8838 = vadd.f32 %v8818, %v8837
      %8839 = vdwg.mxu0
      %8840 = vmatpush.msra.mxu0 %v8186
      %8841 = vmatpush.msra.mxu0 %v8185
      %8842 = vmatpush.msra.mxu0 %v8184
      %8843 = vmatpush.msra.mxu0 %v8183
      %8844 = vmatpush.msra.mxu0 %v8182
      %8845 = vmatpush.msra.mxu0 %v8181
      %8846 = vmatpush.msra.mxu0 %v8180
      %8847 = vmatpush.msra.mxu0 %v8179
      %8848 = vmatpush.msra.mxu0 %v8178
      %8849 = vmatpush.msra.mxu0 %v8177
      %8850 = vmatpush.msra.mxu0 %v8176
      %8851 = vmatpush.msra.mxu0 %v8175
      %8852 = vmatpush.msra.mxu0 %v8174
      %8853 = vmatpush.msra.mxu0 %v8173
      %8854 = vmatpush.msra.mxu0 %v8172
      %8855 = vmatpush.msra.mxu0 %v8171
      %8856 = vmatmul.f32.gmra.mxu0 %v8684
      %v8857 = vpop.f32.mrf.mxu0
      %v8858 = vadd.f32 %v8838, %v8857
      %8859 = vdwg.mxu0
      %8860 = vst.msk [vmem:[%s208] sm:$0xff] %vm669, %v8858
      %p8861 = scmp.lt.s32.totalorder %s16, 3
      %s8862 = scalar_select %p8861, %s16, 3
      %s8863 = smul.addr %s8862, 128
      %s8864 = smul.addr %s8863, 4
      %s8865 = scalar_lea.vmem %s3, %s8864
      %p8866 = scmp.lt.s32.totalorder %s16, 3
      %s8867 = scalar_select %p8866, %s16, 3
      %s8868 = smul.addr %s8867, 8
      %s8869 = scalar_lea.vmem %s4, %s8868
      // Predicated region
      $region33: #{style_feature_loss.3} parent=31 // pred_check
        %p8870 = pneg %p102
      $region34: #{style_feature_loss.3} parent=31 // pred_check_branch
        %8872 = sbr.rel (%p8870) target = $region36
      $region35: #{style_feature_loss.3} parent=31 // pred_region
        _
      $region36: #{style_feature_loss.3} parent=31 // pred_fallthru
        _
      // Predicated region
      $region37: #{style_feature_loss.3} parent=31 // pred_check
        %p8873 = pneg %p128
      $region38: #{style_feature_loss.3} parent=31 // pred_check_branch
        %8875 = sbr.rel (%p8873) target = $region40
      $region39: #{style_feature_loss.3} parent=31 // pred_region
        _
      $region40: #{style_feature_loss.3} parent=31 // pred_fallthru
        _
    $region32: #{style_feature_loss.3} parent=5 // pred_fallthru
      _
    %p8876 = scmp.le.s32.totalorder 2, %s11
    // Predicated region
    $region41: #{style_feature_loss.3} parent=5 // pred_check
      %p8877 = pneg %p8876
    $region42: #{style_feature_loss.3} parent=5 // pred_check_branch
      %8879 = sbr.rel (%p8877) target = $region44
    $region43: #{style_feature_loss.3} parent=5 // pred_region
      %s8880 = ssub.s32 %s11, 2
      // Predicated region
      $region45: #{style_feature_loss.3} parent=43 // pred_check
        %p8881 = pneg %p108
      $region46: #{style_feature_loss.3} parent=43 // pred_check_branch
        %8883 = sbr.rel (%p8881) target = $region48
      $region47: #{style_feature_loss.3} parent=43 // pred_region
        %p8884 = scmp.lt.s32.totalorder %s17, 3
        %s8885 = scalar_select %p8884, %s17, 3
        %s8886 = smul.addr %s8885, 128
        %s8887 = smul.addr %s8886, 4
        %s8888 = scalar_lea.vmem %s3, %s8887
      $region48: #{style_feature_loss.3} parent=43 // pred_fallthru
        _
      // Predicated region
      $region49: #{style_feature_loss.3} parent=43 // pred_check
        %p8889 = pneg %p134
      $region50: #{style_feature_loss.3} parent=43 // pred_check_branch
        %8891 = sbr.rel (%p8889) target = $region52
      $region51: #{style_feature_loss.3} parent=43 // pred_region
        %p8892 = scmp.lt.s32.totalorder %s17, 3
        %s8893 = scalar_select %p8892, %s17, 3
        %s8894 = smul.addr %s8893, 8
        %s8895 = scalar_lea.vmem %s4, %s8894
      $region52: #{style_feature_loss.3} parent=43 // pred_fallthru
        _
    $region44: #{style_feature_loss.3} parent=5 // pred_fallthru
      _
  $region6: #{style_feature_loss.3} parent=0 // loop_footer
    %s15 = sadd.s32 1, %s11
  $region7: #{style_feature_loss.3} parent=0 // loop_footer_branch
    %10 = sbr.rel target = $region3
  $region8: #{style_feature_loss.3} parent=0 // loop_exit
    _

// kernel: style_feature_loss.5
$region0: #{style_feature_loss.5}
  #allocation0 [shape = 'u32[]', space=smem, size = 0x4, offset = 0x4, fixed_abs, tag = 'smem constant byte address 0x4 - core index']
  #allocation1 [shape = 'u32[72,128]{1,0:T(1,128)}', space=vmem, size = 0x9000, scoped, tag = 'internal scratch']
  %s0 = inlined_call_operand.vmem [shape: bf16[4,10,10,16], index: 0, kind: input, shape index: {}]
  %s1 = inlined_call_operand.vmem [shape: bf16[9,16,32], index: 1, kind: input, shape index: {}]
  %s2 = inlined_call_operand.vmem [shape: f32[1,32], index: 2, kind: input, shape index: {}]
  %s3 = inlined_call_operand.hbm [shape: bf16[4,8,8,32], index: 3, kind: output, shape index: {0}]
  %s4 = inlined_call_operand.vmem [shape: f32[4,32,32], index: 4, kind: output, shape index: {1}]
  %5 = xla_tuple %s3, %s4
  %s6 = sld [smem:[#allocation0]]
  $region53: #{style_feature_loss.5} parent=0
    _
  %s8 = ssub.s32 1, %s6
  %s9 = scalar_select 0, %s8, %s6
  $region1: #{style_feature_loss.5} parent=0
    #allocation2 [shape = 'u8[32768]{0}', space=vmem, size = 0x8000, scoped, tag = 'output window, operand 0']
    #allocation3 [shape = 's32[2]{0}', space=sflag, size = 0x8, scoped, tag = 'scoped memory for style_feature_loss.5']
    %10 = vsyncpa [#allocation3], 0
    %s11 = scalar_lea.sflag [#allocation3], 1
    %12 = vsyncpa %s11, 0
    loop: start=0, step=1, limit=6
    $region2: #{style_feature_loss.5} parent=1 // loop_pre_header
      _
    $region3: #{style_feature_loss.5} parent=1 // loop_header
      %s14 = sphi 0, %s18
      %p15 = scmp.ge.s32.totalorder %s14, 6
      %s24 = sphi 0, %s26
      %s27 = sphi 0, %s24
      %s28 = sphi 0, %s27
      %s44 = sphi 0, %s28
      %s48 = sphi 0, %s48
      %s50 = sphi 0, %s48
      %s51 = sphi 0, %s50
      %s65 = sphi 0, %s51
      %s69 = sphi 0, %s69
      %s71 = sphi 0, %s69
      %s72 = sphi 0, %s71
      %s86 = sphi 0, %s72
      %s92 = sphi 0, %s94
      %s95 = sphi 0, %s92
      %s96 = sphi 0, %s95
      %s112 = sphi 0, %s96
      %s118 = sphi 0, %s120
      %s121 = sphi 0, %s118
      %s122 = sphi 0, %s121
      %s138 = sphi 0, %s122
    $region4: #{style_feature_loss.5} parent=1 // loop_header_branch
      %17 = sbr.rel (%p15) target = $region8
    $region5: #{style_feature_loss.5} parent=1 // loop_body
      %s19 = ssub.s32 %s14, 1
      %s20 = ssub.s32 %s14, 2
      %s21 = sadd.s32 %s14, 1
      %s22 = ssub.s32 %s14, %s21
      %p23 = scmp.eq.s32.totalorder %s22, 0
      %s25 = sadd.s32 %s24, 1
      %s26 = scalar_select %p23, %s24, %s25
      %p29 = pneg %p23
      %p30 = scmp.eq.s32.totalorder %s14, 3
      %p31 = por %p29, %p30
      %p32 = scmp.ne.s32.totalorder %s24, %s27
      %p33 = scmp.eq.s32.totalorder %s14, 0
      %p34 = por %p32, %p33
      %p35 = scmp.ne.s32.totalorder %s24, %s27
      %p36 = scmp.eq.s32.totalorder %s19, 3
      %p37 = por %p35, %p36
      %p38 = scmp.ne.s32.totalorder %s27, %s28
      %p39 = scmp.eq.s32.totalorder %s19, 0
      %p40 = por %p38, %p39
      %p41 = scmp.ne.s32.totalorder %s27, %s28
      %p42 = scmp.eq.s32.totalorder %s20, 3
      %p43 = por %p41, %p42
      %p45 = scmp.ne.s32.totalorder %s28, %s44
      %p46 = scmp.eq.s32.totalorder %s20, 0
      %p47 = por %p45, %p46
      %s49 = sadd.s32 %s48, 1
      %p52 = scmp.eq.s32.totalorder %s14, 3
      %p53 = scmp.ne.s32.totalorder %s48, %s50
      %p54 = scmp.eq.s32.totalorder %s14, 0
      %p55 = por %p53, %p54
      %p56 = scmp.ne.s32.totalorder %s48, %s50
      %p57 = scmp.eq.s32.totalorder %s19, 3
      %p58 = por %p56, %p57
      %p59 = scmp.ne.s32.totalorder %s50, %s51
      %p60 = scmp.eq.s32.totalorder %s19, 0
      %p61 = por %p59, %p60
      %p62 = scmp.ne.s32.totalorder %s50, %s51
      %p63 = scmp.eq.s32.totalorder %s20, 3
      %p64 = por %p62, %p63
      %p66 = scmp.ne.s32.totalorder %s51, %s65
      %p67 = scmp.eq.s32.totalorder %s20, 0
      %p68 = por %p66, %p67
      %s70 = sadd.s32 %s69, 1
      %p73 = scmp.eq.s32.totalorder %s14, 3
      %p74 = scmp.ne.s32.totalorder %s69, %s71
      %p75 = scmp.eq.s32.totalorder %s14, 0
      %p76 = por %p74, %p75
      %p77 = scmp.ne.s32.totalorder %s69, %s71
      %p78 = scmp.eq.s32.totalorder %s19, 3
      %p79 = por %p77, %p78
      %p80 = scmp.ne.s32.totalorder %s71, %s72
      %p81 = scmp.eq.s32.totalorder %s19, 0
      %p82 = por %p80, %p81
      %p83 = scmp.ne.s32.totalorder %s71, %s72
      %p84 = scmp.eq.s32.totalorder %s20, 3
      %p85 = por %p83, %p84
      %p87 = scmp.ne.s32.totalorder %s72, %s86
      %p88 = scmp.eq.s32.totalorder %s20, 0
      %p89 = por %p87, %p88
      %s90 = ssub.s32 %s14, %s21
      %p91 = scmp.eq.s32.totalorder %s90, 0
      %s93 = sadd.s32 %s92, 1
      %s94 = scalar_select %p91, %s92, %s93
      %p97 = pneg %p91
      %p98 = scmp.eq.s32.totalorder %s14, 3
      %p99 = por %p97, %p98
      %p100 = scmp.ne.s32.totalorder %s92, %s95
      %p101 = scmp.eq.s32.totalorder %s14, 0
      %p102 = por %p100, %p101
      %p103 = scmp.ne.s32.totalorder %s92, %s95
      %p104 = scmp.eq.s32.totalorder %s19, 3
      %p105 = por %p103, %p104
      %p106 = scmp.ne.s32.totalorder %s95, %s96
      %p107 = scmp.eq.s32.totalorder %s19, 0
      %p108 = por %p106, %p107
      %p109 = scmp.ne.s32.totalorder %s95, %s96
      %p110 = scmp.eq.s32.totalorder %s20, 3
      %p111 = por %p109, %p110
      %p113 = scmp.ne.s32.totalorder %s96, %s112
      %p114 = scmp.eq.s32.totalorder %s20, 0
      %p115 = por %p113, %p114
      %s116 = ssub.s32 %s14, %s21
      %p117 = scmp.eq.s32.totalorder %s116, 0
      %s119 = sadd.s32 %s118, 1
      %s120 = scalar_select %p117, %s118, %s119
      %p123 = pneg %p117
      %p124 = scmp.eq.s32.totalorder %s14, 3
      %p125 = por %p123, %p124
      %p126 = scmp.ne.s32.totalorder %s118, %s121
      %p127 = scmp.eq.s32.totalorder %s14, 0
      %p128 = por %p126, %p127
      %p129 = scmp.ne.s32.totalorder %s118, %s121
      %p130 = scmp.eq.s32.totalorder %s19, 3
      %p131 = por %p129, %p130
      %p132 = scmp.ne.s32.totalorder %s121, %s122
      %p133 = scmp.eq.s32.totalorder %s19, 0
      %p134 = por %p132, %p133
      %p135 = scmp.ne.s32.totalorder %s121, %s122
      %p136 = scmp.eq.s32.totalorder %s20, 3
      %p137 = por %p135, %p136
      %p139 = scmp.ne.s32.totalorder %s122, %s138
      %p140 = scmp.eq.s32.totalorder %s20, 0
      %p141 = por %p139, %p140
      %p142 = scmp.le.s32.totalorder 1, %s14
      %p143 = scmp.lt.s32.totalorder %s14, 5
      %p144 = pnand %p142, %p143
      %p145 = pneg %p144
      // Predicated region
      $region9: #{style_feature_loss.5} parent=5 // pred_check
        _
      $region10: #{style_feature_loss.5} parent=5 // pred_check_branch
        %147 = sbr.rel (%p144) target = $region12
      $region11: #{style_feature_loss.5} parent=5 // pred_region
        %s148 = ssub.s32 %s14, 1
        // Predicated region
        $region13: #{style_feature_loss.5} parent=11 // pred_check
          %p149 = pneg %p61
        $region14: #{style_feature_loss.5} parent=11 // pred_check_branch
          %151 = sbr.rel (%p149) target = $region16
        $region15: #{style_feature_loss.5} parent=11 // pred_region
          _
        $region16: #{style_feature_loss.5} parent=11 // pred_fallthru
          _
        // Predicated region
        $region17: #{style_feature_loss.5} parent=11 // pred_check
          %p152 = pneg %p82
        $region18: #{style_feature_loss.5} parent=11 // pred_check_branch
          %154 = sbr.rel (%p152) target = $region20
        $region19: #{style_feature_loss.5} parent=11 // pred_region
          _
        $region20: #{style_feature_loss.5} parent=11 // pred_fallthru
          _
      $region12: #{style_feature_loss.5} parent=5 // pred_fallthru
        _
      %p155 = scmp.lt.s32.totalorder %s14, 4
      // Predicated region
      $region21: #{style_feature_loss.5} parent=5 // pred_check
        %p156 = pneg %p155
      $region22: #{style_feature_loss.5} parent=5 // pred_check_branch
        %158 = sbr.rel (%p156) target = $region24
      $region23: #{style_feature_loss.5} parent=5 // pred_region
        // Predicated region
        $region25: #{style_feature_loss.5} parent=23 // pred_check
          %p159 = pneg %p34
        $region26: #{style_feature_loss.5} parent=23 // pred_check_branch
          %161 = sbr.rel (%p159) target = $region28
        $region27: #{style_feature_loss.5} parent=23 // pred_region
          %p162 = scmp.lt.s32.totalorder %s14, 3
          %s163 = scalar_select %p162, %s14, 3
          %s164 = smul.addr %s163, 20
          %s165 = smul.addr %s164, 4
          %s166 = scalar_lea.vmem %s0, %s165
        $region28: #{style_feature_loss.5} parent=23 // pred_fallthru
          _
      $region24: #{style_feature_loss.5} parent=5 // pred_fallthru
        _
      %p167 = scmp.le.s32.totalorder 1, %s14
      %p168 = scmp.lt.s32.totalorder %s14, 5
      %p169 = pnand %p167, %p168
      %p170 = pneg %p169
      // Predicated region
      $region29: #{style_feature_loss.5} parent=5 // pred_check
        _
      $region30: #{style_feature_loss.5} parent=5 // pred_check_branch
        %172 = sbr.rel (%p169) target = $region32
      $region31: #{style_feature_loss.5} parent=5 // pred_region
        %s173 = ssub.s32 %s14, 1
        %p174 = scmp.lt.s32.totalorder %s19, 3
        %s175 = scalar_select %p174, %s19, 3
        %s176 = smul.addr %s175, 20
        %s177 = smul.addr %s176, 4
        %s178 = scalar_lea.vmem %s0, %s177
        %p179 = pneg %p40
        %p180 = pneg %p37
        %p181 = pneg %p61
        %p182 = pneg %p58
        %p183 = pneg %p82
        %p184 = pneg %p79
        %p185 = pneg %p108
        %p186 = pneg %p105
        %s187 = sand.u32 %s95, 1
        %s188 = scalar_lea.sflag [#allocation3], %s187
        %s189 = sand.u32 %s95, 1
        %s190 = smul.addr %s189, 32
        %s191 = scalar_lea.vmem [#allocation2], %s190
        %p192 = pneg %p134
        %p193 = pneg %p131
        %p194 = scmp.lt.s32.totalorder %s19, 3
        %s195 = scalar_select %p194, %s19, 3
        %s196 = smul.addr %s195, 4
        %s197 = smul.addr %s196, 8
        %s198 = scalar_lea.vmem %s4, %s197
        %p199 = scmp.lt.s32.totalorder %s19, 3
        %s200 = scalar_select %p199, %s19, 3
        %s201 = smul.addr %s200, 20
        %s202 = smul.addr %s201, 4
        %s203 = scalar_lea.vmem %s0, %s202
        %p204 = scmp.lt.s32.totalorder %s19, 3
        %s205 = scalar_select %p204, %s19, 3
        %s206 = smul.addr %s205, 4
        %s207 = smul.addr %s206, 8
        %s208 = scalar_lea.vmem %s4, %s207
        %v210 = vld [vmem:[%s203] sm:$0xf]
        %v211 = vld [vmem:[%s203 + $0x8] sm:$0xf]
        %v212 = vld [vmem:[%s203 + $0x10] sm:$0xf]
        %v213 = vld [vmem:[%s203 + $0x18] sm:$0xf]
        %v214 = vld [vmem:[%s203 + $0x20] sm:$0xf]
        %v215 = vld [vmem:[%s203 + $0x28] sm:$0xf]
        %v216 = vld [vmem:[%s203 + $0x30] sm:$0xf]
        %v217 = vld [vmem:[%s203 + $0x38] sm:$0xf]
        %v218 = vld [vmem:[%s203 + $0x40] sm:$0xf]
        %v219 = vld [vmem:[%s203 + $0x48] sm:$0xf]
        %v220 = vld [vmem:[%s1] sm:$0xf]
        %v221 = vld [vmem:[%s1 + $0x4] sm:$0xf]
        %s222 = scalar_lea.vmem %s1, 24
        %v223 = vld [vmem:[%s222] sm:$0xf]
        %v224 = vld [vmem:[%s222 + $0x4] sm:$0xf]
        %v233 = vunpack.c.l.b16 %v211
        %v234 = vunpack.c.l.b16 %v212
        %v235 = vunpack.c.l.b16 %v213
        %v236 = vunpack.c.l.b16 %v214
        %v237 = vunpack.c.l.b16 %v215
        %v238 = vunpack.c.l.b16 %v216
        %v239 = vunpack.c.l.b16 %v217
        %v240 = vunpack.c.l.b16 %v218
        %v241 = vpack.c.b16 %v234, %v233
        %v242 = vpack.c.b16 %v236, %v235
        %v243 = vpack.c.b16 %v238, %v237
        %v244 = vpack.c.b16 %v240, %v239
        %v247 = vunpack.c.l.b16 %v223
        %v248 = vunpack.c.l.b16 %v224
        %v249 = vpack.c.b16 %v248, %v247
        %vm251 = vcmask 130048
        %v253 = vsel %vm251, %v241, 0
        %v256 = vsel %vm251, %v242, 0
        %v259 = vsel %vm251, %v243, 0
        %v262 = vsel %vm251, %v244, 0
        %264 = vmatpush.bf16.msra.mxu0 0
        %265 = vmatpush.bf16.msra.mxu0 0
        %266 = vmatpush.bf16.msra.mxu0 0
        %267 = vmatpush.bf16.msra.mxu0 0
        %268 = vmatpush.bf16.msra.mxu0 0
        %269 = vmatpush.bf16.msra.mxu0 0
        %270 = vmatpush.bf16.msra.mxu0 0
        %271 = vmatpush.bf16.msra.mxu0 %v249
        %272 = vmatmul.bf16.gmra.mxu0 %v253
        %v273 = vpop.f32.mrf.mxu0
        %v274 = vadd.f32 0.0, %v273
        %v275 = vpop.f32.mrf.mxu0
        %v276 = vadd.f32 0.0, %v275
        %277 = vmatmul.bf16.gmra.mxu0 %v256
        %v278 = vpop.f32.mrf.mxu0
        %v279 = vadd.f32 0.0, %v278
        %v280 = vpop.f32.mrf.mxu0
        %v281 = vadd.f32 0.0, %v280
        %282 = vmatmul.bf16.gmra.mxu0 %v259
        %v283 = vpop.f32.mrf.mxu0
        %v284 = vadd.f32 0.0, %v283
        %v285 = vpop.f32.mrf.mxu0
        %v286 = vadd.f32 0.0, %v285
        %287 = vmatmul.bf16.gmra.mxu0 %v262
        %v288 = vpop.f32.mrf.mxu0
        %v289 = vadd.f32 0.0, %v288
        %v290 = vpop.f32.mrf.mxu0
        %v291 = vadd.f32 0.0, %v290
        %292 = vdwg.mxu0
        %v294 = vunpack.c.l.b16 %v210
        %v295 = vpack.c.b16 %v233, %v294
        %v296 = vpack.c.b16 %v235, %v234
        %v297 = vpack.c.b16 %v237, %v236
        %v298 = vpack.c.b16 %v239, %v238
        %v301 = vunpack.c.l.b16 %v220
        %v302 = vunpack.c.l.b16 %v221
        %v303 = vpack.c.b16 %v302, %v301
        %v306 = vsel %vm251, %v295, 0
        %v309 = vsel %vm251, %v296, 0
        %v312 = vsel %vm251, %v297, 0
        %v315 = vsel %vm251, %v298, 0
        %317 = vmatpush.bf16.msra.mxu0 0
        %318 = vmatpush.bf16.msra.mxu0 0
        %319 = vmatpush.bf16.msra.mxu0 0
        %320 = vmatpush.bf16.msra.mxu0 0
        %321 = vmatpush.bf16.msra.mxu0 0
        %322 = vmatpush.bf16.msra.mxu0 0
        %323 = vmatpush.bf16.msra.mxu0 0
        %324 = vmatpush.bf16.msra.mxu0 %v303
        %325 = vmatmul.bf16.gmra.mxu0 %v306
        %v326 = vpop.f32.mrf.mxu0
        %v327 = vadd.f32 %v274, %v326
        %v328 = vpop.f32.mrf.mxu0
        %v329 = vadd.f32 %v276, %v328
        %330 = vmatmul.bf16.gmra.mxu0 %v309
        %v331 = vpop.f32.mrf.mxu0
        %v332 = vadd.f32 %v279, %v331
        %v333 = vpop.f32.mrf.mxu0
        %v334 = vadd.f32 %v281, %v333
        %335 = vmatmul.bf16.gmra.mxu0 %v312
        %v336 = vpop.f32.mrf.mxu0
        %v337 = vadd.f32 %v284, %v336
        %v338 = vpop.f32.mrf.mxu0
        %v339 = vadd.f32 %v286, %v338
        %340 = vmatmul.bf16.gmra.mxu0 %v315
        %v341 = vpop.f32.mrf.mxu0
        %v342 = vadd.f32 %v289, %v341
        %v343 = vpop.f32.mrf.mxu0
        %v344 = vadd.f32 %v291, %v343
        %345 = vdwg.mxu0
        %s346 = scalar_lea.vmem %s1, 48
        %v347 = vld [vmem:[%s346] sm:$0xf]
        %v348 = vld [vmem:[%s346 + $0x4] sm:$0xf]
        %v350 = vunpack.c.l.b16 %v219
        %v351 = vpack.c.b16 %v350, %v240
        %v354 = vunpack.c.l.b16 %v347
        %v355 = vunpack.c.l.b16 %v348
        %v356 = vpack.c.b16 %v355, %v354
        %v359 = vsel %vm251, %v351, 0
        %361 = vmatpush.bf16.msra.mxu0 0
        %362 = vmatpush.bf16.msra.mxu0 0
        %363 = vmatpush.bf16.msra.mxu0 0
        %364 = vmatpush.bf16.msra.mxu0 0
        %365 = vmatpush.bf16.msra.mxu0 0
        %366 = vmatpush.bf16.msra.mxu0 0
        %367 = vmatpush.bf16.msra.mxu0 0
        %368 = vmatpush.bf16.msra.mxu0 %v356
        %369 = vmatmul.bf16.gmra.mxu0 %v309
        %v370 = vpop.f32.mrf.mxu0
        %v371 = vadd.f32 0.0, %v370
        %v372 = vpop.f32.mrf.mxu0
        %v373 = vadd.f32 0.0, %v372
        %374 = vmatmul.bf16.gmra.mxu0 %v312
        %v375 = vpop.f32.mrf.mxu0
        %v376 = vadd.f32 0.0, %v375
        %v377 = vpop.f32.mrf.mxu0
        %v378 = vadd.f32 0.0, %v377
        %379 = vmatmul.bf16.gmra.mxu0 %v315
        %v380 = vpop.f32.mrf.mxu0
        %v381 = vadd.f32 0.0, %v380
        %v382 = vpop.f32.mrf.mxu0
        %v383 = vadd.f32 0.0, %v382
        %384 = vmatmul.bf16.gmra.mxu0 %v359
        %v385 = vpop.f32.mrf.mxu0
        %v386 = vadd.f32 0.0, %v385
        %v387 = vpop.f32.mrf.mxu0
        %v388 = vadd.f32 0.0, %v387
        %389 = vdwg.mxu0
        %v390 = vadd.f32 %v327, %v371
        %v391 = vadd.f32 %v329, %v373
        %v392 = vadd.f32 %v332, %v376
        %v393 = vadd.f32 %v334, %v378
        %v394 = vadd.f32 %v337, %v381
        %v395 = vadd.f32 %v339, %v383
        %v396 = vadd.f32 %v342, %v386
        %v397 = vadd.f32 %v344, %v388
        %v398 = vld [vmem:[%s203] sm:$0xf]
        %v399 = vld [vmem:[%s203 + $0x4] sm:$0x1]
        %v400 = vld [vmem:[%s203 + $0x8] sm:$0xf]
        %v401 = vld [vmem:[%s203 + $0xc] sm:$0x1]
        %v402 = vld [vmem:[%s203 + $0x10] sm:$0xf]
        %v403 = vld [vmem:[%s203 + $0x14] sm:$0x1]
        %v404 = vld [vmem:[%s203 + $0x18] sm:$0xf]
        %v405 = vld [vmem:[%s203 + $0x1c] sm:$0x1]
        %v406 = vld [vmem:[%s203 + $0x20] sm:$0xf]
        %v407 = vld [vmem:[%s203 + $0x24] sm:$0x1]
        %v408 = vld [vmem:[%s203 + $0x28] sm:$0xf]
        %v409 = vld [vmem:[%s203 + $0x2c] sm:$0x1]
        %v410 = vld [vmem:[%s203 + $0x30] sm:$0xf]
        %v411 = vld [vmem:[%s203 + $0x34] sm:$0x1]
        %v412 = vld [vmem:[%s203 + $0x38] sm:$0xf]
        %v413 = vld [vmem:[%s203 + $0x3c] sm:$0x1]
        %v414 = vld [vmem:[%s203 + $0x40] sm:$0xf]
        %v415 = vld [vmem:[%s203 + $0x44] sm:$0x1]
        %v416 = vld [vmem:[%s203 + $0x48] sm:$0xf]
        %v417 = vld [vmem:[%s203 + $0x4c] sm:$0x1]
        %vm418 = vsmask.f32 3328
        %vm419 = vsmask.f32 7440
        %vm420 = vmor %vm418, %vm419
        %v422 = vshrl.u32 %v398, 16
        %v424 = vrot.slane %v422, 4
        %v425 = vshll.u32 %v398, 16
        %v427 = vrot.slane %v425, 5
        %v428 = vor.u32 %v424, %v427
        %v429 = vrot.slane %v428, 4
        %v431 = vshll.u32 %v399, 16
        %v433 = vrot.slane %v431, 5
        %v434 = vsel %vm420, %v429, %v433
        %v436 = vshrl.u32 %v400, 16
        %v438 = vrot.slane %v436, 4
        %v439 = vshll.u32 %v400, 16
        %v441 = vrot.slane %v439, 5
        %v442 = vor.u32 %v438, %v441
        %v443 = vrot.slane %v442, 4
        %v445 = vshll.u32 %v401, 16
        %v447 = vrot.slane %v445, 5
        %v448 = vsel %vm420, %v443, %v447
        %v450 = vshrl.u32 %v402, 16
        %v452 = vrot.slane %v450, 4
        %v453 = vshll.u32 %v402, 16
        %v455 = vrot.slane %v453, 5
        %v456 = vor.u32 %v452, %v455
        %v457 = vrot.slane %v456, 4
        %v459 = vshll.u32 %v403, 16
        %v461 = vrot.slane %v459, 5
        %v462 = vsel %vm420, %v457, %v461
        %v464 = vshrl.u32 %v404, 16
        %v466 = vrot.slane %v464, 4
        %v467 = vshll.u32 %v404, 16
        %v469 = vrot.slane %v467, 5
        %v470 = vor.u32 %v466, %v469
        %v471 = vrot.slane %v470, 4
        %v473 = vshll.u32 %v405, 16
        %v475 = vrot.slane %v473, 5
        %v476 = vsel %vm420, %v471, %v475
        %v478 = vshrl.u32 %v406, 16
        %v480 = vrot.slane %v478, 4
        %v481 = vshll.u32 %v406, 16
        %v483 = vrot.slane %v481, 5
        %v484 = vor.u32 %v480, %v483
        %v485 = vrot.slane %v484, 4
        %v487 = vshll.u32 %v407, 16
        %v489 = vrot.slane %v487, 5
        %v490 = vsel %vm420, %v485, %v489
        %v492 = vshrl.u32 %v408, 16
        %v494 = vrot.slane %v492, 4
        %v495 = vshll.u32 %v408, 16
        %v497 = vrot.slane %v495, 5
        %v498 = vor.u32 %v494, %v497
        %v499 = vrot.slane %v498, 4
        %v501 = vshll.u32 %v409, 16
        %v503 = vrot.slane %v501, 5
        %v504 = vsel %vm420, %v499, %v503
        %v506 = vshrl.u32 %v410, 16
        %v508 = vrot.slane %v506, 4
        %v509 = vshll.u32 %v410, 16
        %v511 = vrot.slane %v509, 5
        %v512 = vor.u32 %v508, %v511
        %v513 = vrot.slane %v512, 4
        %v515 = vshll.u32 %v411, 16
        %v517 = vrot.slane %v515, 5
        %v518 = vsel %vm420, %v513, %v517
        %v520 = vshrl.u32 %v412, 16
        %v522 = vrot.slane %v520, 4
        %v523 = vshll.u32 %v412, 16
        %v525 = vrot.slane %v523, 5
        %v526 = vor.u32 %v522, %v525
        %v527 = vrot.slane %v526, 4
        %v529 = vshll.u32 %v413, 16
        %v531 = vrot.slane %v529, 5
        %v532 = vsel %vm420, %v527, %v531
        %s533 = scalar_lea.vmem %s1, 8
        %v534 = vld [vmem:[%s533] sm:$0xf]
        %v535 = vld [vmem:[%s533 + $0x4] sm:$0xf]
        %v536 = vunpack.c.l.b16 %v434
        %v537 = vunpack.c.l.b16 %v448
        %v538 = vunpack.c.l.b16 %v462
        %v539 = vunpack.c.l.b16 %v476
        %v540 = vunpack.c.l.b16 %v490
        %v541 = vunpack.c.l.b16 %v504
        %v542 = vunpack.c.l.b16 %v518
        %v543 = vunpack.c.l.b16 %v532
        %v544 = vpack.c.b16 %v537, %v536
        %v545 = vpack.c.b16 %v539, %v538
        %v546 = vpack.c.b16 %v541, %v540
        %v547 = vpack.c.b16 %v543, %v542
        %v550 = vunpack.c.l.b16 %v534
        %v551 = vunpack.c.l.b16 %v535
        %v552 = vpack.c.b16 %v551, %v550
        %v555 = vsel %vm251, %v544, 0
        %v558 = vsel %vm251, %v545, 0
        %v561 = vsel %vm251, %v546, 0
        %v564 = vsel %vm251, %v547, 0
        %566 = vmatpush.bf16.msra.mxu0 0
        %567 = vmatpush.bf16.msra.mxu0 0
        %568 = vmatpush.bf16.msra.mxu0 0
        %569 = vmatpush.bf16.msra.mxu0 0
        %570 = vmatpush.bf16.msra.mxu0 0
        %571 = vmatpush.bf16.msra.mxu0 0
        %572 = vmatpush.bf16.msra.mxu0 0
        %573 = vmatpush.bf16.msra.mxu0 %v552
        %574 = vmatmul.bf16.gmra.mxu0 %v555
        %v575 = vpop.f32.mrf.mxu0
        %v576 = vadd.f32 0.0, %v575
        %v577 = vpop.f32.mrf.mxu0
        %v578 = vadd.f32 0.0, %v577
        %579 = vmatmul.bf16.gmra.mxu0 %v558
        %v580 = vpop.f32.mrf.mxu0
        %v581 = vadd.f32 0.0, %v580
        %v582 = vpop.f32.mrf.mxu0
        %v583 = vadd.f32 0.0, %v582
        %584 = vmatmul.bf16.gmra.mxu0 %v561
        %v585 = vpop.f32.mrf.mxu0
        %v586 = vadd.f32 0.0, %v585
        %v587 = vpop.f32.mrf.mxu0
        %v588 = vadd.f32 0.0, %v587
        %589 = vmatmul.bf16.gmra.mxu0 %v564
        %v590 = vpop.f32.mrf.mxu0
        %v591 = vadd.f32 0.0, %v590
        %v592 = vpop.f32.mrf.mxu0
        %v593 = vadd.f32 0.0, %v592
        %594 = vdwg.mxu0
        %v595 = vadd.f32 %v390, %v576
        %v596 = vadd.f32 %v391, %v578
        %v597 = vadd.f32 %v392, %v581
        %v598 = vadd.f32 %v393, %v583
        %v599 = vadd.f32 %v394, %v586
        %v600 = vadd.f32 %v395, %v588
        %v601 = vadd.f32 %v396, %v591
        %v602 = vadd.f32 %v397, %v593
        %v604 = vshrl.u32 %v414, 16
        %v606 = vrot.slane %v604, 4
        %v607 = vshll.u32 %v414, 16
        %v609 = vrot.slane %v607, 5
        %v610 = vor.u32 %v606, %v609
        %v611 = vrot.slane %v610, 4
        %v613 = vshll.u32 %v415, 16
        %v615 = vrot.slane %v613, 5
        %v616 = vsel %vm420, %v611, %v615
        %s617 = scalar_lea.vmem %s1, 32
        %v618 = vld [vmem:[%s617] sm:$0xf]
        %v619 = vld [vmem:[%s617 + $0x4] sm:$0xf]
        %v620 = vunpack.c.l.b16 %v616
        %v621 = vpack.c.b16 %v538, %v537
        %v622 = vpack.c.b16 %v540, %v539
        %v623 = vpack.c.b16 %v542, %v541
        %v624 = vpack.c.b16 %v620, %v543
        %v627 = vunpack.c.l.b16 %v618
        %v628 = vunpack.c.l.b16 %v619
        %v629 = vpack.c.b16 %v628, %v627
        %v632 = vsel %vm251, %v621, 0
        %v635 = vsel %vm251, %v622, 0
        %v638 = vsel %vm251, %v623, 0
        %v641 = vsel %vm251, %v624, 0
        %643 = vmatpush.bf16.msra.mxu0 0
        %644 = vmatpush.bf16.msra.mxu0 0
        %645 = vmatpush.bf16.msra.mxu0 0
        %646 = vmatpush.bf16.msra.mxu0 0
        %647 = vmatpush.bf16.msra.mxu0 0
        %648 = vmatpush.bf16.msra.mxu0 0
        %649 = vmatpush.bf16.msra.mxu0 0
        %650 = vmatpush.bf16.msra.mxu0 %v629
        %651 = vmatmul.bf16.gmra.mxu0 %v632
        %v652 = vpop.f32.mrf.mxu0
        %v653 = vadd.f32 0.0, %v652
        %v654 = vpop.f32.mrf.mxu0
        %v655 = vadd.f32 0.0, %v654
        %656 = vmatmul.bf16.gmra.mxu0 %v635
        %v657 = vpop.f32.mrf.mxu0
        %v658 = vadd.f32 0.0, %v657
        %v659 = vpop.f32.mrf.mxu0
        %v660 = vadd.f32 0.0, %v659
        %661 = vmatmul.bf16.gmra.mxu0 %v638
        %v662 = vpop.f32.mrf.mxu0
        %v663 = vadd.f32 0.0, %v662
        %v664 = vpop.f32.mrf.mxu0
        %v665 = vadd.f32 0.0, %v664
        %666 = vmatmul.bf16.gmra.mxu0 %v641
        %v667 = vpop.f32.mrf.mxu0
        %v668 = vadd.f32 0.0, %v667
        %v669 = vpop.f32.mrf.mxu0
        %v670 = vadd.f32 0.0, %v669
        %671 = vdwg.mxu0
        %v672 = vadd.f32 %v595, %v653
        %v673 = vadd.f32 %v596, %v655
        %v674 = vadd.f32 %v597, %v658
        %v675 = vadd.f32 %v598, %v660
        %v676 = vadd.f32 %v599, %v663
        %v677 = vadd.f32 %v600, %v665
        %v678 = vadd.f32 %v601, %v668
        %v679 = vadd.f32 %v602, %v670
        %v681 = vshrl.u32 %v416, 16
        %v683 = vrot.slane %v681, 4
        %v684 = vshll.u32 %v416, 16
        %v686 = vrot.slane %v684, 5
        %v687 = vor.u32 %v683, %v686
        %v688 = vrot.slane %v687, 4
        %v690 = vshll.u32 %v417, 16
        %v692 = vrot.slane %v690, 5
        %v693 = vsel %vm420, %v688, %v692
        %s694 = scalar_lea.vmem %s1, 56
        %v695 = vld [vmem:[%s694] sm:$0xf]
        %v696 = vld [vmem:[%s694 + $0x4] sm:$0xf]
        %v697 = vunpack.c.l.b16 %v693
        %v698 = vpack.c.b16 %v697, %v620
        %v701 = vunpack.c.l.b16 %v695
        %v702 = vunpack.c.l.b16 %v696
        %v703 = vpack.c.b16 %v702, %v701
        %v706 = vsel %vm251, %v698, 0
        %708 = vmatpush.bf16.msra.mxu0 0
        %709 = vmatpush.bf16.msra.mxu0 0
        %710 = vmatpush.bf16.msra.mxu0 0
        %711 = vmatpush.bf16.msra.mxu0 0
        %712 = vmatpush.bf16.msra.mxu0 0
        %713 = vmatpush.bf16.msra.mxu0 0
        %714 = vmatpush.bf16.msra.mxu0 0
        %715 = vmatpush.bf16.msra.mxu0 %v703
        %716 = vmatmul.bf16.gmra.mxu0 %v558
        %v717 = vpop.f32.mrf.mxu0
        %v718 = vadd.f32 0.0, %v717
        %v719 = vpop.f32.mrf.mxu0
        %v720 = vadd.f32 0.0, %v719
        %721 = vmatmul.bf16.gmra.mxu0 %v561
        %v722 = vpop.f32.mrf.mxu0
        %v723 = vadd.f32 0.0, %v722
        %v724 = vpop.f32.mrf.mxu0
        %v725 = vadd.f32 0.0, %v724
        %726 = vmatmul.bf16.gmra.mxu0 %v564
        %v727 = vpop.f32.mrf.mxu0
        %v728 = vadd.f32 0.0, %v727
        %v729 = vpop.f32.mrf.mxu0
        %v730 = vadd.f32 0.0, %v729
        %731 = vmatmul.bf16.gmra.mxu0 %v706
        %v732 = vpop.f32.mrf.mxu0
        %v733 = vadd.f32 0.0, %v732
        %v734 = vpop.f32.mrf.mxu0
        %v735 = vadd.f32 0.0, %v734
        %736 = vdwg.mxu0
        %v737 = vadd.f32 %v672, %v718
        %v738 = vadd.f32 %v673, %v720
        %v739 = vadd.f32 %v674, %v723
        %v740 = vadd.f32 %v675, %v725
        %v741 = vadd.f32 %v676, %v728
        %v742 = vadd.f32 %v677, %v730
        %v743 = vadd.f32 %v678, %v733
        %v744 = vadd.f32 %v679, %v735
        %v745 = vld [vmem:[%s203] sm:$0xe]
        %v746 = vld [vmem:[%s203 + $0x8] sm:$0xe]
        %v747 = vld [vmem:[%s203 + $0x10] sm:$0xe]
        %v748 = vld [vmem:[%s203 + $0x18] sm:$0xe]
        %v749 = vld [vmem:[%s203 + $0x20] sm:$0xe]
        %v750 = vld [vmem:[%s203 + $0x28] sm:$0xe]
        %v751 = vld [vmem:[%s203 + $0x30] sm:$0xe]
        %v752 = vld [vmem:[%s203 + $0x38] sm:$0xe]
        %v753 = vld [vmem:[%s203 + $0x40] sm:$0xe]
        %v754 = vld [vmem:[%s203 + $0x48] sm:$0xe]
        %vm771 = vcmask 1042432
        %vm772 = vcmask 1046532
        %vm773 = vmor %vm771, %vm772
        %v774 = vrot.slane %v745, 5
        %v775 = vrot.slane %v774, 4
        %v776 = vrot.slane %v399, 5
        %v777 = vsel %vm773, %v775, %v776
        %v778 = vrot.slane %v746, 5
        %v779 = vrot.slane %v778, 4
        %v780 = vrot.slane %v401, 5
        %v781 = vsel %vm773, %v779, %v780
        %v782 = vrot.slane %v747, 5
        %v783 = vrot.slane %v782, 4
        %v784 = vrot.slane %v403, 5
        %v785 = vsel %vm773, %v783, %v784
        %v786 = vrot.slane %v748, 5
        %v787 = vrot.slane %v786, 4
        %v788 = vrot.slane %v405, 5
        %v789 = vsel %vm773, %v787, %v788
        %v790 = vrot.slane %v749, 5
        %v791 = vrot.slane %v790, 4
        %v792 = vrot.slane %v407, 5
        %v793 = vsel %vm773, %v791, %v792
        %v794 = vrot.slane %v750, 5
        %v795 = vrot.slane %v794, 4
        %v796 = vrot.slane %v409, 5
        %v797 = vsel %vm773, %v795, %v796
        %v798 = vrot.slane %v751, 5
        %v799 = vrot.slane %v798, 4
        %v800 = vrot.slane %v411, 5
        %v801 = vsel %vm773, %v799, %v800
        %v802 = vrot.slane %v752, 5
        %v803 = vrot.slane %v802, 4
        %v804 = vrot.slane %v413, 5
        %v805 = vsel %vm773, %v803, %v804
        %s806 = scalar_lea.vmem %s1, 16
        %v807 = vld [vmem:[%s806] sm:$0xf]
        %v808 = vld [vmem:[%s806 + $0x4] sm:$0xf]
        %v809 = vunpack.c.l.b16 %v777
        %v810 = vunpack.c.l.b16 %v781
        %v811 = vunpack.c.l.b16 %v785
        %v812 = vunpack.c.l.b16 %v789
        %v813 = vunpack.c.l.b16 %v793
        %v814 = vunpack.c.l.b16 %v797
        %v815 = vunpack.c.l.b16 %v801
        %v816 = vunpack.c.l.b16 %v805
        %v817 = vpack.c.b16 %v810, %v809
        %v818 = vpack.c.b16 %v812, %v811
        %v819 = vpack.c.b16 %v814, %v813
        %v820 = vpack.c.b16 %v816, %v815
        %v823 = vunpack.c.l.b16 %v807
        %v824 = vunpack.c.l.b16 %v808
        %v825 = vpack.c.b16 %v824, %v823
        %v828 = vsel %vm251, %v817, 0
        %v831 = vsel %vm251, %v818, 0
        %v834 = vsel %vm251, %v819, 0
        %v837 = vsel %vm251, %v820, 0
        %839 = vmatpush.bf16.msra.mxu0 0
        %840 = vmatpush.bf16.msra.mxu0 0
        %841 = vmatpush.bf16.msra.mxu0 0
        %842 = vmatpush.bf16.msra.mxu0 0
        %843 = vmatpush.bf16.msra.mxu0 0
        %844 = vmatpush.bf16.msra.mxu0 0
        %845 = vmatpush.bf16.msra.mxu0 0
        %846 = vmatpush.bf16.msra.mxu0 %v825
        %847 = vmatmul.bf16.gmra.mxu0 %v828
        %v848 = vpop.f32.mrf.mxu0
        %v849 = vadd.f32 0.0, %v848
        %v850 = vpop.f32.mrf.mxu0
        %v851 = vadd.f32 0.0, %v850
        %852 = vmatmul.bf16.gmra.mxu0 %v831
        %v853 = vpop.f32.mrf.mxu0
        %v854 = vadd.f32 0.0, %v853
        %v855 = vpop.f32.mrf.mxu0
        %v856 = vadd.f32 0.0, %v855
        %857 = vmatmul.bf16.gmra.mxu0 %v834
        %v858 = vpop.f32.mrf.mxu0
        %v859 = vadd.f32 0.0, %v858
        %v860 = vpop.f32.mrf.mxu0
        %v861 = vadd.f32 0.0, %v860
        %862 = vmatmul.bf16.gmra.mxu0 %v837
        %v863 = vpop.f32.mrf.mxu0
        %v864 = vadd.f32 0.0, %v863
        %v865 = vpop.f32.mrf.mxu0
        %v866 = vadd.f32 0.0, %v865
        %867 = vdwg.mxu0
        %v868 = vadd.f32 %v737, %v849
        %v869 = vadd.f32 %v738, %v851
        %v870 = vadd.f32 %v739, %v854
        %v871 = vadd.f32 %v740, %v856
        %v872 = vadd.f32 %v741, %v859
        %v873 = vadd.f32 %v742, %v861
        %v874 = vadd.f32 %v743, %v864
        %v875 = vadd.f32 %v744, %v866
        %v878 = vrot.slane %v753, 5
        %v879 = vrot.slane %v878, 4
        %v880 = vrot.slane %v415, 5
        %v881 = vsel %vm773, %v879, %v880
        %s882 = scalar_lea.vmem %s1, 40
        %v883 = vld [vmem:[%s882] sm:$0xf]
        %v884 = vld [vmem:[%s882 + $0x4] sm:$0xf]
        %v885 = vunpack.c.l.b16 %v881
        %v886 = vpack.c.b16 %v811, %v810
        %v887 = vpack.c.b16 %v813, %v812
        %v888 = vpack.c.b16 %v815, %v814
        %v889 = vpack.c.b16 %v885, %v816
        %v892 = vunpack.c.l.b16 %v883
        %v893 = vunpack.c.l.b16 %v884
        %v894 = vpack.c.b16 %v893, %v892
        %v897 = vsel %vm251, %v886, 0
        %v900 = vsel %vm251, %v887, 0
        %v903 = vsel %vm251, %v888, 0
        %v906 = vsel %vm251, %v889, 0
        %908 = vmatpush.bf16.msra.mxu0 0
        %909 = vmatpush.bf16.msra.mxu0 0
        %910 = vmatpush.bf16.msra.mxu0 0
        %911 = vmatpush.bf16.msra.mxu0 0
        %912 = vmatpush.bf16.msra.mxu0 0
        %913 = vmatpush.bf16.msra.mxu0 0
        %914 = vmatpush.bf16.msra.mxu0 0
        %915 = vmatpush.bf16.msra.mxu0 %v894
        %916 = vmatmul.bf16.gmra.mxu0 %v897
        %v917 = vpop.f32.mrf.mxu0
        %v918 = vadd.f32 0.0, %v917
        %v919 = vpop.f32.mrf.mxu0
        %v920 = vadd.f32 0.0, %v919
        %921 = vmatmul.bf16.gmra.mxu0 %v900
        %v922 = vpop.f32.mrf.mxu0
        %v923 = vadd.f32 0.0, %v922
        %v924 = vpop.f32.mrf.mxu0
        %v925 = vadd.f32 0.0, %v924
        %926 = vmatmul.bf16.gmra.mxu0 %v903
        %v927 = vpop.f32.mrf.mxu0
        %v928 = vadd.f32 0.0, %v927
        %v929 = vpop.f32.mrf.mxu0
        %v930 = vadd.f32 0.0, %v929
        %931 = vmatmul.bf16.gmra.mxu0 %v906
        %v932 = vpop.f32.mrf.mxu0
        %v933 = vadd.f32 0.0, %v932
        %v934 = vpop.f32.mrf.mxu0
        %v935 = vadd.f32 0.0, %v934
        %936 = vdwg.mxu0
        %v937 = vadd.f32 %v868, %v918
        %v938 = vadd.f32 %v869, %v920
        %v939 = vadd.f32 %v870, %v923
        %v940 = vadd.f32 %v871, %v925
        %v941 = vadd.f32 %v872, %v928
        %v942 = vadd.f32 %v873, %v930
        %v943 = vadd.f32 %v874, %v933
        %v944 = vadd.f32 %v875, %v935
        %v947 = vrot.slane %v754, 5
        %v948 = vrot.slane %v947, 4
        %v949 = vrot.slane %v417, 5
        %v950 = vsel %vm773, %v948, %v949
        %s951 = scalar_lea.vmem %s1, 64
        %v952 = vld [vmem:[%s951] sm:$0xf]
        %v953 = vld [vmem:[%s951 + $0x4] sm:$0xf]
        %v954 = vunpack.c.l.b16 %v950
        %v955 = vpack.c.b16 %v954, %v885
        %v958 = vunpack.c.l.b16 %v952
        %v959 = vunpack.c.l.b16 %v953
        %v960 = vpack.c.b16 %v959, %v958
        %v963 = vsel %vm251, %v955, 0
        %965 = vmatpush.bf16.msra.mxu0 0
        %966 = vmatpush.bf16.msra.mxu0 0
        %967 = vmatpush.bf16.msra.mxu0 0
        %968 = vmatpush.bf16.msra.mxu0 0
        %969 = vmatpush.bf16.msra.mxu0 0
        %970 = vmatpush.bf16.msra.mxu0 0
        %971 = vmatpush.bf16.msra.mxu0 0
        %972 = vmatpush.bf16.msra.mxu0 %v960
        %973 = vmatmul.bf16.gmra.mxu0 %v831
        %v974 = vpop.f32.mrf.mxu0
        %v975 = vadd.f32 0.0, %v974
        %v976 = vpop.f32.mrf.mxu0
        %v977 = vadd.f32 0.0, %v976
        %978 = vmatmul.bf16.gmra.mxu0 %v834
        %v979 = vpop.f32.mrf.mxu0
        %v980 = vadd.f32 0.0, %v979
        %v981 = vpop.f32.mrf.mxu0
        %v982 = vadd.f32 0.0, %v981
        %983 = vmatmul.bf16.gmra.mxu0 %v837
        %v984 = vpop.f32.mrf.mxu0
        %v985 = vadd.f32 0.0, %v984
        %v986 = vpop.f32.mrf.mxu0
        %v987 = vadd.f32 0.0, %v986
        %988 = vmatmul.bf16.gmra.mxu0 %v963
        %v989 = vpop.f32.mrf.mxu0
        %v990 = vadd.f32 0.0, %v989
        %v991 = vpop.f32.mrf.mxu0
        %v992 = vadd.f32 0.0, %v991
        %993 = vdwg.mxu0
        %v994 = vadd.f32 %v937, %v975
        %v995 = vadd.f32 %v938, %v977
        %v996 = vadd.f32 %v939, %v980
        %v997 = vadd.f32 %v940, %v982
        %v998 = vadd.f32 %v941, %v985
        %v999 = vadd.f32 %v942, %v987
        %v1000 = vadd.f32 %v943, %v990
        %v1001 = vadd.f32 %v944, %v992
        %v1002 = vld [vmem:[%s2] sm:$0x1]
        %v1004 = vperm.slane %v1002, 0
        %v1006 = vadd.f32 %v994, %v1004
        %v1007 = vadd.f32 %v995, %v1004
        %v1008 = vadd.f32 %v996, %v1004
        %v1009 = vadd.f32 %v997, %v1004
        %v1010 = vadd.f32 %v998, %v1004
        %v1011 = vadd.f32 %v999, %v1004
        %v1012 = vadd.f32 %v1000, %v1004
        %v1013 = vadd.f32 %v1001, %v1004
        %v1014 = vmax.f32 %v1006, 0.0
        %v1015 = vmax.f32 %v1007, 0.0
        %v1016 = vmax.f32 %v1008, 0.0
        %v1017 = vmax.f32 %v1009, 0.0
        %v1018 = vmax.f32 %v1010, 0.0
        %v1019 = vmax.f32 %v1011, 0.0
        %v1020 = vmax.f32 %v1012, 0.0
        %v1021 = vmax.f32 %v1013, 0.0
        %v1022 = vpack.c.bf16 %v1014, %v1014
        %v1023 = vpack.c.bf16 %v1015, %v1015
        %v1024 = vpack.c.bf16 %v1016, %v1016
        %v1025 = vpack.c.bf16 %v1017, %v1017
        %v1026 = vpack.c.bf16 %v1018, %v1018
        %v1027 = vpack.c.bf16 %v1019, %v1019
        %v1028 = vpack.c.bf16 %v1020, %v1020
        %v1029 = vpack.c.bf16 %v1021, %v1021
        %vm1030 = vcmask 257024
        %1031 = vst.msk [vmem:[%s191] sm:$0xf] %vm1030, %v1022
        %1032 = vst.msk [vmem:[%s191 + $0x4] sm:$0xf] %vm1030, %v1023
        %1033 = vst.msk [vmem:[%s191 + $0x8] sm:$0xf] %vm1030, %v1024
        %1034 = vst.msk [vmem:[%s191 + $0xc] sm:$0xf] %vm1030, %v1025
        %1035 = vst.msk [vmem:[%s191 + $0x10] sm:$0xf] %vm1030, %v1026
        %1036 = vst.msk [vmem:[%s191 + $0x14] sm:$0xf] %vm1030, %v1027
        %1037 = vst.msk [vmem:[%s191 + $0x18] sm:$0xf] %vm1030, %v1028
        %1038 = vst.msk [vmem:[%s191 + $0x1c] sm:$0xf] %vm1030, %v1029
        %1039 = vxpose.xlu0.b32.start [1/16] %v1014, 128
        %1040 = vxpose.xlu0.b32.cont [2/16] %v1015, 128
        %1041 = vxpose.xlu0.b32.cont [3/16] %v1016, 128
        %1042 = vxpose.xlu0.b32.cont [4/16] %v1017, 128
        %1043 = vxpose.xlu0.b32.cont [5/16] %v1018, 128
        %1044 = vxpose.xlu0.b32.cont [6/16] %v1019, 128
        %1045 = vxpose.xlu0.b32.cont [7/16] %v1020, 128
        %1046 = vxpose.xlu0.b32.cont [8/16] %v1021, 128
        %1047 = vxpose.xlu0.b32.cont [9/16] 0.0, 128
        %1048 = vxpose.xlu0.b32.cont [10/16] 0.0, 128
        %1049 = vxpose.xlu0.b32.cont [11/16] 0.0, 128
        %1050 = vxpose.xlu0.b32.cont [12/16] 0.0, 128
        %1051 = vxpose.xlu0.b32.cont [13/16] 0.0, 128
        %1052 = vxpose.xlu0.b32.cont [14/16] 0.0, 128
        %1053 = vxpose.xlu0.b32.cont [15/16] 0.0, 128
        %1054 = vxpose.xlu0.b32.end [16/16] 0.0, 128
        %v1055 = vpop.trf.xlu0
        %v1056 = vpop.trf.xlu0
        %v1057 = vpop.trf.xlu0
        %v1058 = vpop.trf.xlu0
        %v1059 = vpop.trf.xlu0
        %v1060 = vpop.trf.xlu0
        %v1061 = vpop.trf.xlu0
        %v1062 = vpop.trf.xlu0
        %v1063 = vpop.trf.xlu0
        %v1064 = vpop.trf.xlu0
        %v1065 = vpop.trf.xlu0
        %v1066 = vpop.trf.xlu0
        %v1067 = vpop.trf.xlu0
        %v1068 = vpop.trf.xlu0
        %v1069 = vpop.trf.xlu0
        %v1070 = vpop.trf.xlu0
        %vm1071 = vcmask 523264
        %v1073 = vsel %vm1071, %v1055, 0
        %v1076 = vsel %vm1071, %v1056, 0
        %v1079 = vsel %vm1071, %v1057, 0
        %v1082 = vsel %vm1071, %v1058, 0
        %1084 = vmatpush.msra.mxu0 0.0
        %1085 = vmatpush.msra.mxu0 0.0
        %1086 = vmatpush.msra.mxu0 0.0
        %1087 = vmatpush.msra.mxu0 0.0
        %1088 = vmatpush.msra.mxu0 0.0
        %1089 = vmatpush.msra.mxu0 0.0
        %1090 = vmatpush.msra.mxu0 0.0
        %1091 = vmatpush.msra.mxu0 0.0
        %1092 = vmatpush.msra.mxu0 %v1021
        %1093 = vmatpush.msra.mxu0 %v1020
        %1094 = vmatpush.msra.mxu0 %v1019
        %1095 = vmatpush.msra.mxu0 %v1018
        %1096 = vmatpush.msra.mxu0 %v1017
        %1097 = vmatpush.msra.mxu0 %v1016
        %1098 = vmatpush.msra.mxu0 %v1015
        %1099 = vmatpush.msra.mxu0 %v1014
        %1100 = vmatmul.f32.gmra.mxu0 %v1073
        %v1101 = vpop.f32.mrf.mxu0
        %v1102 = vadd.f32 0.0, %v1101
        %1103 = vmatmul.f32.gmra.mxu0 %v1076
        %v1104 = vpop.f32.mrf.mxu0
        %v1105 = vadd.f32 0.0, %v1104
        %1106 = vmatmul.f32.gmra.mxu0 %v1079
        %v1107 = vpop.f32.mrf.mxu0
        %v1108 = vadd.f32 0.0, %v1107
        %1109 = vmatmul.f32.gmra.mxu0 %v1082
        %v1110 = vpop.f32.mrf.mxu0
        %v1111 = vadd.f32 0.0, %v1110
        %1112 = vdwg.mxu0
        %vm1113 = vcmask 261120
        %1114 = vst.msk [vmem:[%s208] sm:$0xff] %vm1113, %v1102
        %1115 = vst.msk [vmem:[%s208 + $0x8] sm:$0xff] %vm1113, %v1105
        %1116 = vst.msk [vmem:[%s208 + $0x10] sm:$0xff] %vm1113, %v1108
        %1117 = vst.msk [vmem:[%s208 + $0x18] sm:$0xff] %vm1113, %v1111
        %s1118 = sand.u32 %s95, 1
        %s1119 = scalar_lea.sflag [#allocation3], %s1118
        %s1120 = sand.u32 %s95, 1
        %s1121 = smul.addr %s1120, 32
        %s1122 = scalar_lea.vmem [#allocation2], %s1121
        %p1123 = scmp.lt.s32.totalorder %s19, 3
        %s1124 = scalar_select %p1123, %s19, 3
        %s1125 = smul.addr %s1124, 4
        %s1126 = smul.addr %s1125, 8
        %s1127 = scalar_lea.vmem %s4, %s1126
        // Predicated region
        $region33: #{style_feature_loss.5} parent=31 // pred_check
          %p1128 = pneg %p105
        $region34: #{style_feature_loss.5} parent=31 // pred_check_branch
          %1130 = sbr.rel (%p1128) target = $region36
        $region35: #{style_feature_loss.5} parent=31 // pred_region
          %1132 = vsyncadd %s1119, 0
          %s1133 = smul.addr %s19, 8
          %s1134 = smul.addr %s1133, 4
          %s1135 = scalar_lea.hbm %s3, %s1134
          %s1136 = sshll.u32 %s1122, 4
          %s1137 = int_to_ptr.vmem [resolvable:$true] %s1136
          %s1138 = sshll.u32 %s1135, 4
          %s1139 = int_to_ptr.hbm [resolvable:$true] %s1138
          %1144 = dma.vmem_to_hbm [thread:$0]  %s1137, 512, %s1139, %s1119, 64, 64, 4
        $region36: #{style_feature_loss.5} parent=31 // pred_fallthru
          _
        // Predicated region
        $region37: #{style_feature_loss.5} parent=31 // pred_check
          %p1145 = pneg %p131
        $region38: #{style_feature_loss.5} parent=31 // pred_check_branch
          %1147 = sbr.rel (%p1145) target = $region40
        $region39: #{style_feature_loss.5} parent=31 // pred_region
          _
        $region40: #{style_feature_loss.5} parent=31 // pred_fallthru
          _
      $region32: #{style_feature_loss.5} parent=5 // pred_fallthru
        _
      %p1148 = scmp.le.s32.totalorder 2, %s14
      // Predicated region
      $region41: #{style_feature_loss.5} parent=5 // pred_check
        %p1149 = pneg %p1148
      $region42: #{style_feature_loss.5} parent=5 // pred_check_branch
        %1151 = sbr.rel (%p1149) target = $region44
      $region43: #{style_feature_loss.5} parent=5 // pred_region
        %s1152 = ssub.s32 %s14, 2
        // Predicated region
        $region45: #{style_feature_loss.5} parent=43 // pred_check
          %p1153 = pneg %p111
        $region46: #{style_feature_loss.5} parent=43 // pred_check_branch
          %1155 = sbr.rel (%p1153) target = $region48
        $region47: #{style_feature_loss.5} parent=43 // pred_region
          %s1156 = sand.u32 %s96, 1
          %s1157 = scalar_lea.sflag [#allocation3], %s1156
          %s1158 = sand.u32 %s96, 1
          %s1159 = smul.addr %s1158, 32
          %s1160 = scalar_lea.vmem [#allocation2], %s1159
          %1162 = dma.done %s1157, 512
        $region48: #{style_feature_loss.5} parent=43 // pred_fallthru
          _
        // Predicated region
        $region49: #{style_feature_loss.5} parent=43 // pred_check
          %p1163 = pneg %p137
        $region50: #{style_feature_loss.5} parent=43 // pred_check_branch
          %1165 = sbr.rel (%p1163) target = $region52
        $region51: #{style_feature_loss.5} parent=43 // pred_region
          %p1166 = scmp.lt.s32.totalorder %s20, 3
          %s1167 = scalar_select %p1166, %s20, 3
          %s1168 = smul.addr %s1167, 4
          %s1169 = smul.addr %s1168, 8
          %s1170 = scalar_lea.vmem %s4, %s1169
        $region52: #{style_feature_loss.5} parent=43 // pred_fallthru
          _
      $region44: #{style_feature_loss.5} parent=5 // pred_fallthru
        _
    $region6: #{style_feature_loss.5} parent=1 // loop_footer
      %s18 = sadd.s32 1, %s14
    $region7: #{style_feature_loss.5} parent=1 // loop_footer_branch
      %13 = sbr.rel target = $region3
    $region8: #{style_feature_loss.5} parent=1 // loop_exit
      _
    %1171 = vsyncpa [#allocation3], 1
    %s1172 = scalar_lea.sflag [#allocation3], 1
    %1173 = vsyncpa %s1172, 1

</llo_original>
